<compile_context>
chip_gen: v7x
topology: tpu7x:2x2x1
jax: 0.10.0
libtpu: 0.0.40
codegen_flags: <defaults>
</compile_context>

<pallas_src>
import functools
import math

import numpy as np
import jax
import jax.numpy as jnp
from jax import lax
from jax.experimental import pallas as pl
from jax.experimental.pallas import tpu as pltpu

# ----------------------------------------------------------------------------
# Small deterministic test configuration (consistent with the module)
# ----------------------------------------------------------------------------
DIM = 32            # channels (dim)
NUM_HEADS = 4
WINDOW = 16         # window_size == min(input_resolution) -> one window/image
H_IMG = 16
W_IMG = 16
BATCH = 2
FFN_FACTOR = 2.0    # hidden_features = 64
PRIOR_DIM = 256     # k_v feature size (nn.Linear(256, dim*2))
EPS = 1e-5


# ----------------------------------------------------------------------------
# In-kernel exact GELU (erf formulation, matches F.gelu default)
# ----------------------------------------------------------------------------
def _erf(x):
    # Abramowitz & Stegun 7.1.26 polynomial (|err| < 1.5e-7); only ops with
    # guaranteed Mosaic lowerings (exp / mul / add / abs / where / div).
    a1, a2, a3, a4, a5 = 0.254829592, -0.284496736, 1.421413741, -1.453152027, 1.061405429
    p = 0.3275911
    ax = jnp.abs(x)
    t = 1.0 / (1.0 + p * ax)
    poly = ((((a5 * t + a4) * t + a3) * t + a2) * t + a1) * t
    y = 1.0 - poly * jnp.exp(-ax * ax)
    return jnp.where(x >= 0, y, -y)


def _gelu_exact(x):
    return 0.5 * x * (1.0 + _erf(x * (1.0 / math.sqrt(2.0))))


# ----------------------------------------------------------------------------
# Kernel 1: fused norm1 + PL_MSA (prior modulation, q/kv, rel-pos bias,
#           per-head softmax, out-proj) + residual.  One grid step per batch.
# ----------------------------------------------------------------------------
def _attn_block_kernel(x_ref, akv_ref, pix_ref, wln_ref, bln_ref,
                       wq_ref, bq_ref, wk_ref, bk_ref, wv_ref, bv_ref,
                       perm_ref, bmv_ref, relb_ref, wp_ref, bp_ref,
                       o_ref, *, num_heads, m_kv):
    f32 = jnp.float32
    x = x_ref[0]                                  # (n, c) token view of NCHW memory
    pix = pix_ref[...]                            # (n, n) per-pixel averaging matrix

    # ---- norm1: channel LayerNorm of the true NCHW tensor, in token layout --
    mu = jnp.dot(pix, x, preferred_element_type=f32)
    xc = x - mu
    var = jnp.dot(pix, xc * xc, preferred_element_type=f32)
    a = xc * lax.rsqrt(var + EPS) * wln_ref[...] + bln_ref[...]

    # ---- PL_MSA prior modulation (per minor index of the viewed tensor) -----
    mod = a * akv_ref[0, 0:1, :] + akv_ref[0, 1:2, :]

    # ---- projections (1/sqrt(d) pre-folded into wq/bq; k/v weights are
    #      column-tiled so the head grouping below needs no concatenation) ----
    q = jnp.dot(mod, wq_ref[...], preferred_element_type=f32) + bq_ref[...]   # (n, c)
    km = jnp.dot(mod, wk_ref[...], preferred_element_type=f32) + bk_ref[...]  # (n, c)
    vm = jnp.dot(mod, wv_ref[...], preferred_element_type=f32) + bv_ref[...]  # (n, c)

    # ---- permuted-window 2x2 space-to-depth head grouping (permutation
    #      matmul) + block-diagonal K^T / V via a constant 0/1 mask -----------
    perm = perm_ref[...]
    bmv = bmv_ref[...]
    kp = jnp.dot(perm, km, preferred_element_type=f32) * bmv    # (nh*m, c)
    vp = jnp.dot(perm, vm, preferred_element_type=f32) * bmv    # (nh*m, c)
    k_blk = kp.T                                                # (c, nh*m)

    # ---- lane-dense logits for all heads + relative position bias -----------
    logits = jnp.dot(q, k_blk, preferred_element_type=f32) + relb_ref[...]    # (n, nh*m)

    # ---- per-head softmax over each m-wide column block ----------------------
    probs = []
    for hh in range(num_heads):
        l = logits[:, hh * m_kv:(hh + 1) * m_kv]
        l = l - jnp.max(l, axis=-1, keepdims=True)
        e = jnp.exp(l)
        inv = pl.reciprocal(jnp.sum(e, axis=-1, keepdims=True), approx=True)
        probs.append(e * inv)
    p_all = jnp.concatenate(probs, axis=1)                                    # (n, nh*m)

    # ---- attn @ v (head-concatenated), output projection, residual ----------
    o_heads = jnp.dot(p_all, vp, preferred_element_type=f32)                  # (n, c)
    attn = jnp.dot(o_heads, wp_ref[...], preferred_element_type=f32) + bp_ref[...]
    o_ref[0] = x + attn


def _attention_stage(x_tok, akv, p, *, num_heads):
    b, n, c = x_tok.shape
    ncols = p["rel_bias_blk"].shape[1]
    m_kv = ncols // num_heads
    kern = functools.partial(_attn_block_kernel, num_heads=num_heads, m_kv=m_kv)
    bs = pl.BlockSpec
    return pl.pallas_call(
        kern,
        out_shape=jax.ShapeDtypeStruct((b, n, c), jnp.float32),
        grid=(b,),
        in_specs=[
            bs((1, n, c), lambda i: (i, 0, 0)),     # x tokens
            bs((1, 2, c), lambda i: (i, 0, 0)),     # prior modulation (kv1, kv2)
            bs((n, n), lambda i: (0, 0)),           # per-pixel averaging matrix
            bs((n, 1), lambda i: (0, 0)),           # ln1 weight per token row
            bs((n, 1), lambda i: (0, 0)),           # ln1 bias per token row
            bs((c, c), lambda i: (0, 0)),           # wq (scaled)
            bs((1, c), lambda i: (0, 0)),           # bq (scaled)
            bs((c, c), lambda i: (0, 0)),           # wk (column-tiled)
            bs((1, c), lambda i: (0, 0)),           # bk (column-tiled)
            bs((c, c), lambda i: (0, 0)),           # wv (column-tiled)
            bs((1, c), lambda i: (0, 0)),           # bv (column-tiled)
            bs((ncols, n), lambda i: (0, 0)),       # head-grouping permutation
            bs((ncols, c), lambda i: (0, 0)),       # block-diag 0/1 mask
            bs((n, ncols), lambda i: (0, 0)),       # relative position bias
            bs((c, c), lambda i: (0, 0)),           # proj weight
            bs((1, c), lambda i: (0, 0)),           # proj bias
        ],
        out_specs=bs((1, n, c), lambda i: (i, 0, 0)),
        compiler_params=pltpu.CompilerParams(dimension_semantics=("parallel",)),
    )(x_tok, akv, p["pix_avg"], p["ln1_w_rows"], p["ln1_b_rows"],
      p["wq_scaled"], p["bq_scaled"], p["wk_rep"], p["bk_rep"],
      p["wv_rep"], p["bv_rep"], p["head_perm"], p["bmask_v"],
      p["rel_bias_blk"], p["proj_w"], p["proj_b"])


# ----------------------------------------------------------------------------
# Kernel 2: fused norm2 + PG_FeedForward (prior modulation, project_in,
#           3x3 depthwise conv, GELU gate, project_out) + residual.
#           Output is written in (c, hw) layout -> lane-dense stores.
# ----------------------------------------------------------------------------
def _ffn_block_kernel(x_ref, fkv_ref, wln_ref, bln_ref, win_ref, dw_ref,
                      tap_ref, wout_ref, o_ref, *, width, hidden):
    f32 = jnp.float32
    x_chw = x_ref[0]                               # (c, hw)   lane-dense load
    x_cl = x_chw.T                                 # (hw, c)   channel-last

    # ---- norm2 (channel LayerNorm per pixel) ---------------------------------
    mu = jnp.mean(x_cl, axis=-1, keepdims=True)
    xc = x_cl - mu
    var = jnp.mean(xc * xc, axis=-1, keepdims=True)
    n2 = xc * lax.rsqrt(var + EPS) * wln_ref[...] + bln_ref[...]

    # ---- prior modulation + project_in (packed 2*hidden = 128 lanes) --------
    mod = n2 * fkv_ref[0, 0:1, :] + fkv_ref[0, 1:2, :]
    y = jnp.dot(mod, win_ref[...], preferred_element_type=f32)   # (hw, 2*hidden)

    # ---- 3x3 depthwise conv: 9 row rolls + precomputed boundary masks -------
    acc = jnp.zeros_like(y)
    idx = 0
    for dy in (-1, 0, 1):
        for dx in (-1, 0, 1):
            shift = dy * width + dx
            src = y if shift == 0 else jnp.roll(y, -shift, axis=0)
            acc = acc + src * tap_ref[:, idx:idx + 1] * dw_ref[idx:idx + 1, :]
            idx += 1

    # ---- GELU gate + project_out + residual; store back as (c, hw) ----------
    g = _gelu_exact(acc[:, 0:hidden]) * acc[:, hidden:2 * hidden]
    ffn_cl = jnp.dot(g, wout_ref[...], preferred_element_type=f32)  # (hw, c)
    o_ref[0] = x_chw + ffn_cl.T


def _ffn_stage(x1_chw, fkv, p, *, width):
    b, c, hw = x1_chw.shape
    hidden = p["wout"].shape[0]
    kern = functools.partial(_ffn_block_kernel, width=width, hidden=hidden)
    bs = pl.BlockSpec
    return pl.pallas_call(
        kern,
        out_shape=jax.ShapeDtypeStruct((b, c, hw), jnp.float32),
        grid=(b,),
        in_specs=[
            bs((1, c, hw), lambda i: (i, 0, 0)),    # x1 in (c, hw) layout
            bs((1, 2, c), lambda i: (i, 0, 0)),     # prior modulation (kv1, kv2)
            bs((1, c), lambda i: (0, 0)),           # ln2 weight
            bs((1, c), lambda i: (0, 0)),           # ln2 bias
            bs((c, 2 * hidden), lambda i: (0, 0)),  # packed project_in weight
            bs((9, 2 * hidden), lambda i: (0, 0)),  # packed depthwise taps
            bs((hw, 9), lambda i: (0, 0)),          # tap boundary masks
            bs((hidden, c), lambda i: (0, 0)),      # project_out weight
        ],
        out_specs=bs((1, c, hw), lambda i: (i, 0, 0)),
        compiler_params=pltpu.CompilerParams(dimension_semantics=("parallel",)),
    )(x1_chw, fkv, p["ln2_w"], p["ln2_b"], p["win_packed"], p["dw_packed"],
      p["tap_mask"], p["wout"])


# ----------------------------------------------------------------------------
# Full TransformerBlock forward
# ----------------------------------------------------------------------------
def transformer_block_forward(p, x, k_v, *, num_heads, window_size):
    del window_size  # single full-image window configuration (see prepare_params)
    b, c, h, w = x.shape
    n = h * w

    # Prior-to-modulation projections (tiny dense matmuls, once per call).
    akv = jnp.dot(k_v, p["attn_kernel_w"]).reshape(b, 2, c)
    fkv = jnp.dot(k_v, p["ffn_kernel_w"]).reshape(b, 2, c)

    # Literal `.view(b, h, w, c)` on the NCHW tensor == raw reshape: attention
    # consumes the flat NCHW buffer re-tiled into (h*w, c) "tokens".
    x_tok = x.reshape(b, n, c)
    x1_tok = _attention_stage(x_tok, akv, p, num_heads=num_heads)  # shortcut + attn

    # Literal `.view(b, c, h, w)`: same flat memory re-tiled as (c, h*w).
    x1_chw = x1_tok.reshape(b, c, n)
    out_chw = _ffn_stage(x1_chw, fkv, p, width=w)
    return out_chw.reshape(b, c, h, w), k_v


# ----------------------------------------------------------------------------
# Constant builders (same recipes as the PyTorch module's __init__)
# ----------------------------------------------------------------------------
def build_aligned_rel_position_index(pws):
    coords = np.stack(np.meshgrid(np.arange(pws), np.arange(pws), indexing="ij"))
    cf = coords.reshape(2, -1)
    rel = cf[:, :, None] - cf[:, None, :]
    rel = rel.transpose(1, 2, 0).copy()
    rel[:, :, 0] += pws - 1
    rel[:, :, 1] += pws - 1
    rel[:, :, 0] *= 2 * pws - 1
    idx = rel.sum(-1)                                    # (m, m)
    m = pws * pws
    aligned = np.tile(idx.reshape(pws, pws, 1, 1, m), (1, 1, 2, 2, 1))
    aligned = aligned.transpose(0, 2, 1, 3, 4).reshape(4 * m, m)
    return aligned.astype(np.int32)


def _kv_head_chain(a, pws, nh, d):
    # Literal replication of PL_MSA's kv reshape/permute chain (per window).
    m = pws * pws
    a = a.reshape(pws, 2, pws, 2, 2, (nh * d) // 4)
    a = a.transpose(0, 2, 4, 1, 3, 5)
    a = a.reshape(m, 2, nh, d)
    a = a.transpose(1, 2, 0, 3)                          # (2, nh, m, d)
    return a


# ----------------------------------------------------------------------------
# Synthetic raw parameters (shapes from the module) and packed/derived tensors
# ----------------------------------------------------------------------------
def init_raw_params(key, dim, num_heads, window_size, ffn_factor):
    hid = int(dim * ffn_factor)
    pws = window_size // 2
    ks = jax.random.split(key, 14)
    nrm = lambda k, shp, s=0.02: jax.random.normal(k, shp, jnp.float32) * s
    return {
        # LayerNorm (WithBias): torch init = ones / zeros
        "ln1_w": jnp.ones((dim,), jnp.float32),
        "ln1_b": jnp.zeros((dim,), jnp.float32),
        "ln2_w": jnp.ones((dim,), jnp.float32),
        "ln2_b": jnp.zeros((dim,), jnp.float32),
        # PL_MSA (linear weights stored (in, out))
        "attn_kernel_w": nrm(ks[0], (PRIOR_DIM, 2 * dim)),
        "q_w": nrm(ks[1], (dim, dim)),
        "q_b": nrm(ks[2], (1, dim)),
        "kv_w": nrm(ks[3], (dim, dim // 2)),
        "kv_b": nrm(ks[4], (1, dim // 2)),
        "proj_w": nrm(ks[5], (dim, dim)),
        "proj_b": nrm(ks[6], (1, dim)),
        "rpb_table": jax.random.truncated_normal(
            ks[7], -2.0, 2.0, ((2 * pws - 1) ** 2, num_heads), jnp.float32) * 0.02,
        # PG_FeedForward (conv bias = False); dw rows ordered (ky*3 + kx)
        "ffn_kernel_w": nrm(ks[8], (PRIOR_DIM, 2 * dim)),
        "win1": nrm(ks[9], (dim, hid)),
        "win2": nrm(ks[10], (dim, hid)),
        "dw1": nrm(ks[11], (9, hid)),
        "dw2": nrm(ks[12], (9, hid)),
        "wout": nrm(ks[13], (hid, dim)),
    }


def prepare_params(raw, *, dim, num_heads, window_size, h, w):
    c, nh, ws = dim, num_heads, window_size
    d = c // nh
    pws = ws // 2
    n = ws * ws
    m = pws * pws
    hw = h * w
    assert h == ws and w == ws, "fused kernels assume a single full-image window"
    assert hw % c == 0, "token relabelling requires c | h*w"
    assert nh == 4 and d == c // 4, "fused kv head-split assumes num_heads == 4"
    tpc = hw // c                                   # tokens per (true) channel

    # ---- norm1 constants in token layout ------------------------------------
    tok = np.arange(n)
    pix_avg = (tok[:, None] % tpc == tok[None, :] % tpc).astype(np.float32) / c
    ch_of_tok = tok // tpc

    # ---- head-grouping permutation for the kv space-to-depth reshape --------
    rows = np.broadcast_to(np.arange(n)[:, None], (n, c // 2)).copy()
    cols = np.broadcast_to(np.arange(c // 2)[None, :], (n, c // 2)).copy()
    rk = _kv_head_chain(rows, pws, nh, d)
    ck = _kv_head_chain(cols, pws, nh, d)
    assert np.all(ck[0] == np.arange(c // 4)[None, None, :])
    assert np.all(ck[1] == c // 4 + np.arange(c // 4)[None, None, :])
    assert np.all(rk[0] == rk[1]) and np.all(rk[0] == rk[0][:, :, :1])
    row_src = rk[0][:, :, 0].reshape(-1)            # (nh * m,)
    head_perm = np.zeros((nh * m, n), np.float32)
    head_perm[np.arange(nh * m), row_src] = 1.0

    ncols = nh * m
    bmask_v = (np.arange(ncols)[:, None] // m ==
               np.arange(c)[None, :] // d).astype(np.float32)      # (ncols, c)

    # ---- relative position bias, gathered & laid out per head block ---------
    aligned = build_aligned_rel_position_index(pws).reshape(-1)
    bias = jnp.take(raw["rpb_table"], jnp.asarray(aligned), axis=0)
    bias = jnp.transpose(bias.reshape(n, m, nh), (0, 2, 1)).reshape(n, nh * m)

    # ---- depthwise-conv boundary masks (pixel p, tap (dy, dx)) ---------------
    py, px = np.divmod(np.arange(hw), w)
    taps = []
    for dy in (-1, 0, 1):
        for dx in (-1, 0, 1):
            taps.append(((py + dy >= 0) & (py + dy < h) &
                         (px + dx >= 0) & (px + dx < w)).astype(np.float32))
    tap_mask = np.stack(taps, axis=1)               # (hw, 9)

    scale = float(d) ** (-0.5)
    return {
        # attention stage
        "pix_avg": jnp.asarray(pix_avg),
        "ln1_w_rows": raw["ln1_w"][ch_of_tok].reshape(n, 1),
        "ln1_b_rows": raw["ln1_b"][ch_of_tok].reshape(n, 1),
        "wq_scaled": raw["q_w"] * scale,
        "bq_scaled": raw["q_b"] * scale,
        "wk_rep": jnp.tile(raw["kv_w"][:, : c // 4], (1, nh)),
        "bk_rep": jnp.tile(raw["kv_b"][:, : c // 4], (1, nh)),
        "wv_rep": jnp.tile(raw["kv_w"][:, c // 4:], (1, nh)),
        "bv_rep": jnp.tile(raw["kv_b"][:, c // 4:], (1, nh)),
        "head_perm": jnp.asarray(head_perm),
        "bmask_v": jnp.asarray(bmask_v),
        "rel_bias_blk": bias,
        "proj_w": raw["proj_w"],
        "proj_b": raw["proj_b"],
        "attn_kernel_w": raw["attn_kernel_w"],
        # feed-forward stage
        "ln2_w": raw["ln2_w"].reshape(1, c),
        "ln2_b": raw["ln2_b"].reshape(1, c),
        "ffn_kernel_w": raw["ffn_kernel_w"],
        "win_packed": jnp.concatenate([raw["win1"], raw["win2"]], axis=1),
        "dw_packed": jnp.concatenate([raw["dw1"], raw["dw2"]], axis=1),
        "tap_mask": jnp.asarray(tap_mask),
        "wout": raw["wout"],
    }


if __name__ == "__main__":
    key = jax.random.PRNGKey(0)
    kx, kk, kp = jax.random.split(key, 3)
    x = jax.random.normal(kx, (BATCH, DIM, H_IMG, W_IMG), jnp.float32)
    k_v = jax.random.normal(kk, (BATCH, PRIOR_DIM), jnp.float32)
    raw = init_raw_params(kp, DIM, NUM_HEADS, WINDOW, FFN_FACTOR)
    params = prepare_params(raw, dim=DIM, num_heads=NUM_HEADS,
                            window_size=WINDOW, h=H_IMG, w=W_IMG)

    fwd = jax.jit(functools.partial(
        transformer_block_forward, num_heads=NUM_HEADS, window_size=WINDOW))
    out, kv_out = fwd(params, x, k_v)
    jax.block_until_ready(out)
    assert out.shape == (BATCH, DIM, H_IMG, W_IMG)
    assert kv_out.shape == (BATCH, PRIOR_DIM)
    assert bool(jnp.all(jnp.isfinite(out)))
    print("KERNEL_OK")
</pallas_src>

<mosaic_0001>
module attributes {stable_mosaic.version = 11 : i64} {
  func.func @_attn_block_kernel(%arg0: i32, %arg1: memref<1x256x32xf32, #tpu.memory_space<vmem>>, %arg2: memref<1x2x32xf32, #tpu.memory_space<vmem>>, %arg3: memref<256x256xf32, #tpu.memory_space<vmem>>, %arg4: memref<256x1xf32, #tpu.memory_space<vmem>>, %arg5: memref<256x1xf32, #tpu.memory_space<vmem>>, %arg6: memref<32x32xf32, #tpu.memory_space<vmem>>, %arg7: memref<1x32xf32, #tpu.memory_space<vmem>>, %arg8: memref<32x32xf32, #tpu.memory_space<vmem>>, %arg9: memref<1x32xf32, #tpu.memory_space<vmem>>, %arg10: memref<32x32xf32, #tpu.memory_space<vmem>>, %arg11: memref<1x32xf32, #tpu.memory_space<vmem>>, %arg12: memref<256x256xf32, #tpu.memory_space<vmem>>, %arg13: memref<256x32xf32, #tpu.memory_space<vmem>>, %arg14: memref<256x256xf32, #tpu.memory_space<vmem>>, %arg15: memref<32x32xf32, #tpu.memory_space<vmem>>, %arg16: memref<1x32xf32, #tpu.memory_space<vmem>>, %arg17: memref<1x256x32xf32, #tpu.memory_space<vmem>>) attributes {dimension_semantics = [#tpu.dimension_semantics<parallel>], iteration_bounds = array<i64: 2>, scalar_prefetch = 0 : i64, scratch_operands = 0 : i64, tpu.core_type = #tpu.core_type<tc>, window_params = [{transform_indices = @transform_0, window_bounds = array<i64: 1, 256, 32>}, {transform_indices = @transform_1, window_bounds = array<i64: 1, 2, 32>}, {pipeline_mode = #tpu.pipeline_mode<synchronous>, transform_indices = @transform_2, window_bounds = array<i64: 256, 256>}, {pipeline_mode = #tpu.pipeline_mode<synchronous>, transform_indices = @transform_3, window_bounds = array<i64: 256, 1>}, {pipeline_mode = #tpu.pipeline_mode<synchronous>, transform_indices = @transform_4, window_bounds = array<i64: 256, 1>}, {pipeline_mode = #tpu.pipeline_mode<synchronous>, transform_indices = @transform_5, window_bounds = array<i64: 32, 32>}, {pipeline_mode = #tpu.pipeline_mode<synchronous>, transform_indices = @transform_6, window_bounds = array<i64: 1, 32>}, {pipeline_mode = #tpu.pipeline_mode<synchronous>, transform_indices = @transform_7, window_bounds = array<i64: 32, 32>}, {pipeline_mode = #tpu.pipeline_mode<synchronous>, transform_indices = @transform_8, window_bounds = array<i64: 1, 32>}, {pipeline_mode = #tpu.pipeline_mode<synchronous>, transform_indices = @transform_9, window_bounds = array<i64: 32, 32>}, {pipeline_mode = #tpu.pipeline_mode<synchronous>, transform_indices = @transform_10, window_bounds = array<i64: 1, 32>}, {pipeline_mode = #tpu.pipeline_mode<synchronous>, transform_indices = @transform_11, window_bounds = array<i64: 256, 256>}, {pipeline_mode = #tpu.pipeline_mode<synchronous>, transform_indices = @transform_12, window_bounds = array<i64: 256, 32>}, {pipeline_mode = #tpu.pipeline_mode<synchronous>, transform_indices = @transform_13, window_bounds = array<i64: 256, 256>}, {pipeline_mode = #tpu.pipeline_mode<synchronous>, transform_indices = @transform_14, window_bounds = array<i64: 32, 32>}, {pipeline_mode = #tpu.pipeline_mode<synchronous>, transform_indices = @transform_15, window_bounds = array<i64: 1, 32>}, {transform_indices = @transform_16, window_bounds = array<i64: 1, 256, 32>}]} {
    %c0 = arith.constant 0 : index
    %c0_0 = arith.constant 0 : index
    %c0_1 = arith.constant 0 : index
    %0 = vector.load %arg1[%c0, %c0_0, %c0_1] : memref<1x256x32xf32, #tpu.memory_space<vmem>>, vector<1x256x32xf32>
    %1 = vector.shape_cast %0 : vector<1x256x32xf32> to vector<256x32xf32>
    %c0_2 = arith.constant 0 : index
    %c0_3 = arith.constant 0 : index
    %2 = vector.load %arg3[%c0_2, %c0_3] : memref<256x256xf32, #tpu.memory_space<vmem>>, vector<256x256xf32>
    %cst = arith.constant dense<0.000000e+00> : vector<256x32xf32>
    %3 = tpu.matmul %2, %1, %cst {dimension_numbers = #tpu.dot_dimension_numbers<[1], [0], [0], [1], [0, 0, 1, 1], [], []>} : vector<256x256xf32>, vector<256x32xf32>, vector<256x32xf32> -> vector<256x32xf32>
    %4 = arith.subf %1, %3 : vector<256x32xf32>
    %5 = arith.mulf %4, %4 : vector<256x32xf32>
    %cst_4 = arith.constant dense<0.000000e+00> : vector<256x32xf32>
    %6 = tpu.matmul %2, %5, %cst_4 {dimension_numbers = #tpu.dot_dimension_numbers<[1], [0], [0], [1], [0, 0, 1, 1], [], []>} : vector<256x256xf32>, vector<256x32xf32>, vector<256x32xf32> -> vector<256x32xf32>
    %cst_5 = arith.constant 9.99999974E-6 : f32
    %7 = vector.broadcast %cst_5 : f32 to vector<256x32xf32>
    %8 = arith.addf %6, %7 : vector<256x32xf32>
    %9 = math.rsqrt %8 : vector<256x32xf32>
    %10 = arith.mulf %4, %9 : vector<256x32xf32>
    %c0_6 = arith.constant 0 : index
    %c0_7 = arith.constant 0 : index
    %11 = vector.load %arg4[%c0_6, %c0_7] : memref<256x1xf32, #tpu.memory_space<vmem>>, vector<256x1xf32>
    %12 = vector.broadcast %11 : vector<256x1xf32> to vector<256x32xf32>
    %13 = arith.mulf %10, %12 : vector<256x32xf32>
    %c0_8 = arith.constant 0 : index
    %c0_9 = arith.constant 0 : index
    %14 = vector.load %arg5[%c0_8, %c0_9] : memref<256x1xf32, #tpu.memory_space<vmem>>, vector<256x1xf32>
    %15 = vector.broadcast %14 : vector<256x1xf32> to vector<256x32xf32>
    %16 = arith.addf %13, %15 : vector<256x32xf32>
    %c0_10 = arith.constant 0 : index
    %c0_11 = arith.constant 0 : index
    %c0_12 = arith.constant 0 : index
    %17 = vector.load %arg2[%c0_10, %c0_11, %c0_12] : memref<1x2x32xf32, #tpu.memory_space<vmem>>, vector<1x1x32xf32>
    %18 = vector.shape_cast %17 : vector<1x1x32xf32> to vector<1x32xf32>
    %19 = vector.broadcast %18 : vector<1x32xf32> to vector<256x32xf32>
    %20 = arith.mulf %16, %19 : vector<256x32xf32>
    %c0_13 = arith.constant 0 : index
    %c1 = arith.constant 1 : index
    %c0_14 = arith.constant 0 : index
    %21 = vector.load %arg2[%c0_13, %c1, %c0_14] : memref<1x2x32xf32, #tpu.memory_space<vmem>>, vector<1x1x32xf32>
    %22 = vector.shape_cast %21 : vector<1x1x32xf32> to vector<1x32xf32>
    %23 = vector.broadcast %22 : vector<1x32xf32> to vector<256x32xf32>
    %24 = arith.addf %20, %23 : vector<256x32xf32>
    %c0_15 = arith.constant 0 : index
    %c0_16 = arith.constant 0 : index
    %25 = vector.load %arg6[%c0_15, %c0_16] : memref<32x32xf32, #tpu.memory_space<vmem>>, vector<32x32xf32>
    %cst_17 = arith.constant dense<0.000000e+00> : vector<256x32xf32>
    %26 = tpu.matmul %24, %25, %cst_17 {dimension_numbers = #tpu.dot_dimension_numbers<[1], [0], [0], [1], [0, 0, 1, 1], [], []>} : vector<256x32xf32>, vector<32x32xf32>, vector<256x32xf32> -> vector<256x32xf32>
    %c0_18 = arith.constant 0 : index
    %c0_19 = arith.constant 0 : index
    %27 = vector.load %arg7[%c0_18, %c0_19] : memref<1x32xf32, #tpu.memory_space<vmem>>, vector<1x32xf32>
    %28 = vector.broadcast %27 : vector<1x32xf32> to vector<256x32xf32>
    %29 = arith.addf %26, %28 : vector<256x32xf32>
    %c0_20 = arith.constant 0 : index
    %c0_21 = arith.constant 0 : index
    %30 = vector.load %arg8[%c0_20, %c0_21] : memref<32x32xf32, #tpu.memory_space<vmem>>, vector<32x32xf32>
    %cst_22 = arith.constant dense<0.000000e+00> : vector<256x32xf32>
    %31 = tpu.matmul %24, %30, %cst_22 {dimension_numbers = #tpu.dot_dimension_numbers<[1], [0], [0], [1], [0, 0, 1, 1], [], []>} : vector<256x32xf32>, vector<32x32xf32>, vector<256x32xf32> -> vector<256x32xf32>
    %c0_23 = arith.constant 0 : index
    %c0_24 = arith.constant 0 : index
    %32 = vector.load %arg9[%c0_23, %c0_24] : memref<1x32xf32, #tpu.memory_space<vmem>>, vector<1x32xf32>
    %33 = vector.broadcast %32 : vector<1x32xf32> to vector<256x32xf32>
    %34 = arith.addf %31, %33 : vector<256x32xf32>
    %c0_25 = arith.constant 0 : index
    %c0_26 = arith.constant 0 : index
    %35 = vector.load %arg10[%c0_25, %c0_26] : memref<32x32xf32, #tpu.memory_space<vmem>>, vector<32x32xf32>
    %cst_27 = arith.constant dense<0.000000e+00> : vector<256x32xf32>
    %36 = tpu.matmul %24, %35, %cst_27 {dimension_numbers = #tpu.dot_dimension_numbers<[1], [0], [0], [1], [0, 0, 1, 1], [], []>} : vector<256x32xf32>, vector<32x32xf32>, vector<256x32xf32> -> vector<256x32xf32>
    %c0_28 = arith.constant 0 : index
    %c0_29 = arith.constant 0 : index
    %37 = vector.load %arg11[%c0_28, %c0_29] : memref<1x32xf32, #tpu.memory_space<vmem>>, vector<1x32xf32>
    %38 = vector.broadcast %37 : vector<1x32xf32> to vector<256x32xf32>
    %39 = arith.addf %36, %38 : vector<256x32xf32>
    %c0_30 = arith.constant 0 : index
    %c0_31 = arith.constant 0 : index
    %40 = vector.load %arg12[%c0_30, %c0_31] : memref<256x256xf32, #tpu.memory_space<vmem>>, vector<256x256xf32>
    %c0_32 = arith.constant 0 : index
    %c0_33 = arith.constant 0 : index
    %41 = vector.load %arg13[%c0_32, %c0_33] : memref<256x32xf32, #tpu.memory_space<vmem>>, vector<256x32xf32>
    %cst_34 = arith.constant dense<0.000000e+00> : vector<256x32xf32>
    %42 = tpu.matmul %40, %34, %cst_34 {dimension_numbers = #tpu.dot_dimension_numbers<[1], [0], [0], [1], [0, 0, 1, 1], [], []>} : vector<256x256xf32>, vector<256x32xf32>, vector<256x32xf32> -> vector<256x32xf32>
    %43 = arith.mulf %42, %41 : vector<256x32xf32>
    %cst_35 = arith.constant dense<0.000000e+00> : vector<256x32xf32>
    %44 = tpu.matmul %40, %39, %cst_35 {dimension_numbers = #tpu.dot_dimension_numbers<[1], [0], [0], [1], [0, 0, 1, 1], [], []>} : vector<256x256xf32>, vector<256x32xf32>, vector<256x32xf32> -> vector<256x32xf32>
    %45 = arith.mulf %44, %41 : vector<256x32xf32>
    %46 = tpu.transpose %43, [1, 0] : vector<256x32xf32> -> vector<32x256xf32>
    %cst_36 = arith.constant dense<0.000000e+00> : vector<256x256xf32>
    %47 = tpu.matmul %29, %46, %cst_36 {dimension_numbers = #tpu.dot_dimension_numbers<[1], [0], [0], [1], [0, 0, 1, 1], [], []>} : vector<256x32xf32>, vector<32x256xf32>, vector<256x256xf32> -> vector<256x256xf32>
    %c0_37 = arith.constant 0 : index
    %c0_38 = arith.constant 0 : index
    %48 = vector.load %arg14[%c0_37, %c0_38] : memref<256x256xf32, #tpu.memory_space<vmem>>, vector<256x256xf32>
    %49 = arith.addf %47, %48 : vector<256x256xf32>
    %50 = vector.extract_strided_slice %49 {offsets = [0, 0], sizes = [256, 64], strides = [1, 1]} : vector<256x256xf32> to vector<256x64xf32>
    %cst_39 = arith.constant dense<0xFF800000> : vector<256xf32>
    %51 = vector.multi_reduction <maximumf>, %50, %cst_39 [1] : vector<256x64xf32> to vector<256xf32>
    %52 = vector.shape_cast %51 : vector<256xf32> to vector<256x1xf32>
    %53 = vector.broadcast %52 : vector<256x1xf32> to vector<256x64xf32>
    %54 = arith.subf %50, %53 : vector<256x64xf32>
    %55 = math.exp %54 : vector<256x64xf32>
    %cst_40 = arith.constant dense<0.000000e+00> : vector<256xf32>
    %56 = vector.multi_reduction <add>, %55, %cst_40 [1] : vector<256x64xf32> to vector<256xf32>
    %57 = vector.shape_cast %56 : vector<256xf32> to vector<256x1xf32>
    %58 = tpu.reciprocal %57 {approx = true} : vector<256x1xf32> -> vector<256x1xf32>
    %59 = vector.broadcast %58 : vector<256x1xf32> to vector<256x64xf32>
    %60 = arith.mulf %55, %59 : vector<256x64xf32>
    %61 = vector.extract_strided_slice %49 {offsets = [0, 64], sizes = [256, 64], strides = [1, 1]} : vector<256x256xf32> to vector<256x64xf32>
    %cst_41 = arith.constant dense<0xFF800000> : vector<256xf32>
    %62 = vector.multi_reduction <maximumf>, %61, %cst_41 [1] : vector<256x64xf32> to vector<256xf32>
    %63 = vector.shape_cast %62 : vector<256xf32> to vector<256x1xf32>
    %64 = vector.broadcast %63 : vector<256x1xf32> to vector<256x64xf32>
    %65 = arith.subf %61, %64 : vector<256x64xf32>
    %66 = math.exp %65 : vector<256x64xf32>
    %cst_42 = arith.constant dense<0.000000e+00> : vector<256xf32>
    %67 = vector.multi_reduction <add>, %66, %cst_42 [1] : vector<256x64xf32> to vector<256xf32>
    %68 = vector.shape_cast %67 : vector<256xf32> to vector<256x1xf32>
    %69 = tpu.reciprocal %68 {approx = true} : vector<256x1xf32> -> vector<256x1xf32>
    %70 = vector.broadcast %69 : vector<256x1xf32> to vector<256x64xf32>
    %71 = arith.mulf %66, %70 : vector<256x64xf32>
    %72 = vector.extract_strided_slice %49 {offsets = [0, 128], sizes = [256, 64], strides = [1, 1]} : vector<256x256xf32> to vector<256x64xf32>
    %cst_43 = arith.constant dense<0xFF800000> : vector<256xf32>
    %73 = vector.multi_reduction <maximumf>, %72, %cst_43 [1] : vector<256x64xf32> to vector<256xf32>
    %74 = vector.shape_cast %73 : vector<256xf32> to vector<256x1xf32>
    %75 = vector.broadcast %74 : vector<256x1xf32> to vector<256x64xf32>
    %76 = arith.subf %72, %75 : vector<256x64xf32>
    %77 = math.exp %76 : vector<256x64xf32>
    %cst_44 = arith.constant dense<0.000000e+00> : vector<256xf32>
    %78 = vector.multi_reduction <add>, %77, %cst_44 [1] : vector<256x64xf32> to vector<256xf32>
    %79 = vector.shape_cast %78 : vector<256xf32> to vector<256x1xf32>
    %80 = tpu.reciprocal %79 {approx = true} : vector<256x1xf32> -> vector<256x1xf32>
    %81 = vector.broadcast %80 : vector<256x1xf32> to vector<256x64xf32>
    %82 = arith.mulf %77, %81 : vector<256x64xf32>
    %83 = vector.extract_strided_slice %49 {offsets = [0, 192], sizes = [256, 64], strides = [1, 1]} : vector<256x256xf32> to vector<256x64xf32>
    %cst_45 = arith.constant dense<0xFF800000> : vector<256xf32>
    %84 = vector.multi_reduction <maximumf>, %83, %cst_45 [1] : vector<256x64xf32> to vector<256xf32>
    %85 = vector.shape_cast %84 : vector<256xf32> to vector<256x1xf32>
    %86 = vector.broadcast %85 : vector<256x1xf32> to vector<256x64xf32>
    %87 = arith.subf %83, %86 : vector<256x64xf32>
    %88 = math.exp %87 : vector<256x64xf32>
    %cst_46 = arith.constant dense<0.000000e+00> : vector<256xf32>
    %89 = vector.multi_reduction <add>, %88, %cst_46 [1] : vector<256x64xf32> to vector<256xf32>
    %90 = vector.shape_cast %89 : vector<256xf32> to vector<256x1xf32>
    %91 = tpu.reciprocal %90 {approx = true} : vector<256x1xf32> -> vector<256x1xf32>
    %92 = vector.broadcast %91 : vector<256x1xf32> to vector<256x64xf32>
    %93 = arith.mulf %88, %92 : vector<256x64xf32>
    %94 = tpu.concatenate %60, %71, %82, %93 in 1 : vector<256x64xf32>, vector<256x64xf32>, vector<256x64xf32>, vector<256x64xf32> -> vector<256x256xf32>
    %cst_47 = arith.constant dense<0.000000e+00> : vector<256x32xf32>
    %95 = tpu.matmul %94, %45, %cst_47 {dimension_numbers = #tpu.dot_dimension_numbers<[1], [0], [0], [1], [0, 0, 1, 1], [], []>} : vector<256x256xf32>, vector<256x32xf32>, vector<256x32xf32> -> vector<256x32xf32>
    %c0_48 = arith.constant 0 : index
    %c0_49 = arith.constant 0 : index
    %96 = vector.load %arg15[%c0_48, %c0_49] : memref<32x32xf32, #tpu.memory_space<vmem>>, vector<32x32xf32>
    %cst_50 = arith.constant dense<0.000000e+00> : vector<256x32xf32>
    %97 = tpu.matmul %95, %96, %cst_50 {dimension_numbers = #tpu.dot_dimension_numbers<[1], [0], [0], [1], [0, 0, 1, 1], [], []>} : vector<256x32xf32>, vector<32x32xf32>, vector<256x32xf32> -> vector<256x32xf32>
    %c0_51 = arith.constant 0 : index
    %c0_52 = arith.constant 0 : index
    %98 = vector.load %arg16[%c0_51, %c0_52] : memref<1x32xf32, #tpu.memory_space<vmem>>, vector<1x32xf32>
    %99 = vector.broadcast %98 : vector<1x32xf32> to vector<256x32xf32>
    %100 = arith.addf %97, %99 : vector<256x32xf32>
    %101 = arith.addf %1, %100 : vector<256x32xf32>
    %c0_53 = arith.constant 0 : index
    %c0_54 = arith.constant 0 : index
    %c0_55 = arith.constant 0 : index
    %102 = vector.load %arg17[%c0_53, %c0_54, %c0_55] : memref<1x256x32xf32, #tpu.memory_space<vmem>>, vector<1x256x32xf32>
    %103 = vector.shape_cast %102 : vector<1x256x32xf32> to vector<256x32xf32>
    %104 = vector.shape_cast %101 : vector<256x32xf32> to vector<1x256x32xf32>
    tpu.vector_store %arg17[%c0_53, %c0_54, %c0_55], %104 {strides = array<i32>} : memref<1x256x32xf32, #tpu.memory_space<vmem>>, vector<1x256x32xf32>,
    return
  }
  func.func @transform_0(%arg0: i32) -> (i32, i32, i32) {
    %c0_i32 = arith.constant 0 : i32
    %c0_i32_0 = arith.constant 0 : i32
    %c0_i32_1 = arith.constant 0 : i32
    return %arg0, %c0_i32, %c0_i32_0 : i32, i32, i32
  }
  func.func @transform_1(%arg0: i32) -> (i32, i32, i32) {
    %c0_i32 = arith.constant 0 : i32
    %c0_i32_0 = arith.constant 0 : i32
    %c0_i32_1 = arith.constant 0 : i32
    return %arg0, %c0_i32, %c0_i32_0 : i32, i32, i32
  }
  func.func @transform_2(%arg0: i32) -> (i32, i32) {
    %c0_i32 = arith.constant 0 : i32
    %c0_i32_0 = arith.constant 0 : i32
    %c0_i32_1 = arith.constant 0 : i32
    return %c0_i32, %c0_i32_0 : i32, i32
  }
  func.func @transform_3(%arg0: i32) -> (i32, i32) {
    %c0_i32 = arith.constant 0 : i32
    %c0_i32_0 = arith.constant 0 : i32
    %c0_i32_1 = arith.constant 0 : i32
    return %c0_i32, %c0_i32_0 : i32, i32
  }
  func.func @transform_4(%arg0: i32) -> (i32, i32) {
    %c0_i32 = arith.constant 0 : i32
    %c0_i32_0 = arith.constant 0 : i32
    %c0_i32_1 = arith.constant 0 : i32
    return %c0_i32, %c0_i32_0 : i32, i32
  }
  func.func @transform_5(%arg0: i32) -> (i32, i32) {
    %c0_i32 = arith.constant 0 : i32
    %c0_i32_0 = arith.constant 0 : i32
    %c0_i32_1 = arith.constant 0 : i32
    return %c0_i32, %c0_i32_0 : i32, i32
  }
  func.func @transform_6(%arg0: i32) -> (i32, i32) {
    %c0_i32 = arith.constant 0 : i32
    %c0_i32_0 = arith.constant 0 : i32
    %c0_i32_1 = arith.constant 0 : i32
    return %c0_i32, %c0_i32_0 : i32, i32
  }
  func.func @transform_7(%arg0: i32) -> (i32, i32) {
    %c0_i32 = arith.constant 0 : i32
    %c0_i32_0 = arith.constant 0 : i32
    %c0_i32_1 = arith.constant 0 : i32
    return %c0_i32, %c0_i32_0 : i32, i32
  }
  func.func @transform_8(%arg0: i32) -> (i32, i32) {
    %c0_i32 = arith.constant 0 : i32
    %c0_i32_0 = arith.constant 0 : i32
    %c0_i32_1 = arith.constant 0 : i32
    return %c0_i32, %c0_i32_0 : i32, i32
  }
  func.func @transform_9(%arg0: i32) -> (i32, i32) {
    %c0_i32 = arith.constant 0 : i32
    %c0_i32_0 = arith.constant 0 : i32
    %c0_i32_1 = arith.constant 0 : i32
    return %c0_i32, %c0_i32_0 : i32, i32
  }
  func.func @transform_10(%arg0: i32) -> (i32, i32) {
    %c0_i32 = arith.constant 0 : i32
    %c0_i32_0 = arith.constant 0 : i32
    %c0_i32_1 = arith.constant 0 : i32
    return %c0_i32, %c0_i32_0 : i32, i32
  }
  func.func @transform_11(%arg0: i32) -> (i32, i32) {
    %c0_i32 = arith.constant 0 : i32
    %c0_i32_0 = arith.constant 0 : i32
    %c0_i32_1 = arith.constant 0 : i32
    return %c0_i32, %c0_i32_0 : i32, i32
  }
  func.func @transform_12(%arg0: i32) -> (i32, i32) {
    %c0_i32 = arith.constant 0 : i32
    %c0_i32_0 = arith.constant 0 : i32
    %c0_i32_1 = arith.constant 0 : i32
    return %c0_i32, %c0_i32_0 : i32, i32
  }
  func.func @transform_13(%arg0: i32) -> (i32, i32) {
    %c0_i32 = arith.constant 0 : i32
    %c0_i32_0 = arith.constant 0 : i32
    %c0_i32_1 = arith.constant 0 : i32
    return %c0_i32, %c0_i32_0 : i32, i32
  }
  func.func @transform_14(%arg0: i32) -> (i32, i32) {
    %c0_i32 = arith.constant 0 : i32
    %c0_i32_0 = arith.constant 0 : i32
    %c0_i32_1 = arith.constant 0 : i32
    return %c0_i32, %c0_i32_0 : i32, i32
  }
  func.func @transform_15(%arg0: i32) -> (i32, i32) {
    %c0_i32 = arith.constant 0 : i32
    %c0_i32_0 = arith.constant 0 : i32
    %c0_i32_1 = arith.constant 0 : i32
    return %c0_i32, %c0_i32_0 : i32, i32
  }
  func.func @transform_16(%arg0: i32) -> (i32, i32, i32) {
    %c0_i32 = arith.constant 0 : i32
    %c0_i32_0 = arith.constant 0 : i32
    %c0_i32_1 = arith.constant 0 : i32
    return %arg0, %c0_i32, %c0_i32_0 : i32, i32, i32
  }
}

module attributes {stable_mosaic.version = 11 : i64} {
  func.func @_ffn_block_kernel(%arg0: i32, %arg1: memref<1x32x256xf32, #tpu.memory_space<vmem>>, %arg2: memref<1x2x32xf32, #tpu.memory_space<vmem>>, %arg3: memref<1x32xf32, #tpu.memory_space<vmem>>, %arg4: memref<1x32xf32, #tpu.memory_space<vmem>>, %arg5: memref<32x128xf32, #tpu.memory_space<vmem>>, %arg6: memref<9x128xf32, #tpu.memory_space<vmem>>, %arg7: memref<256x9xf32, #tpu.memory_space<vmem>>, %arg8: memref<64x32xf32, #tpu.memory_space<vmem>>, %arg9: memref<1x32x256xf32, #tpu.memory_space<vmem>>) attributes {dimension_semantics = [#tpu.dimension_semantics<parallel>], iteration_bounds = array<i64: 2>, scalar_prefetch = 0 : i64, scratch_operands = 0 : i64, tpu.core_type = #tpu.core_type<tc>, window_params = [{transform_indices = @transform_0, window_bounds = array<i64: 1, 32, 256>}, {transform_indices = @transform_1, window_bounds = array<i64: 1, 2, 32>}, {pipeline_mode = #tpu.pipeline_mode<synchronous>, transform_indices = @transform_2, window_bounds = array<i64: 1, 32>}, {pipeline_mode = #tpu.pipeline_mode<synchronous>, transform_indices = @transform_3, window_bounds = array<i64: 1, 32>}, {pipeline_mode = #tpu.pipeline_mode<synchronous>, transform_indices = @transform_4, window_bounds = array<i64: 32, 128>}, {pipeline_mode = #tpu.pipeline_mode<synchronous>, transform_indices = @transform_5, window_bounds = array<i64: 9, 128>}, {pipeline_mode = #tpu.pipeline_mode<synchronous>, transform_indices = @transform_6, window_bounds = array<i64: 256, 9>}, {pipeline_mode = #tpu.pipeline_mode<synchronous>, transform_indices = @transform_7, window_bounds = array<i64: 64, 32>}, {transform_indices = @transform_8, window_bounds = array<i64: 1, 32, 256>}]} {
    %c0 = arith.constant 0 : index
    %c0_0 = arith.constant 0 : index
    %c0_1 = arith.constant 0 : index
    %0 = vector.load %arg1[%c0, %c0_0, %c0_1] : memref<1x32x256xf32, #tpu.memory_space<vmem>>, vector<1x32x256xf32>
    %1 = vector.shape_cast %0 : vector<1x32x256xf32> to vector<32x256xf32>
    %2 = tpu.transpose %1, [1, 0] : vector<32x256xf32> -> vector<256x32xf32>
    %cst = arith.constant dense<0.000000e+00> : vector<256xf32>
    %3 = vector.multi_reduction <add>, %2, %cst [1] : vector<256x32xf32> to vector<256xf32>
    %4 = vector.shape_cast %3 : vector<256xf32> to vector<256x1xf32>
    %cst_2 = arith.constant 3.200000e+01 : f32
    %5 = vector.broadcast %cst_2 : f32 to vector<256x1xf32>
    %6 = arith.divf %4, %5 : vector<256x1xf32>
    %7 = vector.broadcast %6 : vector<256x1xf32> to vector<256x32xf32>
    %8 = arith.subf %2, %7 : vector<256x32xf32>
    %9 = arith.mulf %8, %8 : vector<256x32xf32>
    %cst_3 = arith.constant dense<0.000000e+00> : vector<256xf32>
    %10 = vector.multi_reduction <add>, %9, %cst_3 [1] : vector<256x32xf32> to vector<256xf32>
    %11 = vector.shape_cast %10 : vector<256xf32> to vector<256x1xf32>
    %cst_4 = arith.constant 3.200000e+01 : f32
    %12 = vector.broadcast %cst_4 : f32 to vector<256x1xf32>
    %13 = arith.divf %11, %12 : vector<256x1xf32>
    %cst_5 = arith.constant 9.99999974E-6 : f32
    %14 = vector.broadcast %cst_5 : f32 to vector<256x1xf32>
    %15 = arith.addf %13, %14 : vector<256x1xf32>
    %16 = math.rsqrt %15 : vector<256x1xf32>
    %17 = vector.broadcast %16 : vector<256x1xf32> to vector<256x32xf32>
    %18 = arith.mulf %8, %17 : vector<256x32xf32>
    %c0_6 = arith.constant 0 : index
    %c0_7 = arith.constant 0 : index
    %19 = vector.load %arg3[%c0_6, %c0_7] : memref<1x32xf32, #tpu.memory_space<vmem>>, vector<1x32xf32>
    %20 = vector.broadcast %19 : vector<1x32xf32> to vector<256x32xf32>
    %21 = arith.mulf %18, %20 : vector<256x32xf32>
    %c0_8 = arith.constant 0 : index
    %c0_9 = arith.constant 0 : index
    %22 = vector.load %arg4[%c0_8, %c0_9] : memref<1x32xf32, #tpu.memory_space<vmem>>, vector<1x32xf32>
    %23 = vector.broadcast %22 : vector<1x32xf32> to vector<256x32xf32>
    %24 = arith.addf %21, %23 : vector<256x32xf32>
    %c0_10 = arith.constant 0 : index
    %c0_11 = arith.constant 0 : index
    %c0_12 = arith.constant 0 : index
    %25 = vector.load %arg2[%c0_10, %c0_11, %c0_12] : memref<1x2x32xf32, #tpu.memory_space<vmem>>, vector<1x1x32xf32>
    %26 = vector.shape_cast %25 : vector<1x1x32xf32> to vector<1x32xf32>
    %27 = vector.broadcast %26 : vector<1x32xf32> to vector<256x32xf32>
    %28 = arith.mulf %24, %27 : vector<256x32xf32>
    %c0_13 = arith.constant 0 : index
    %c1 = arith.constant 1 : index
    %c0_14 = arith.constant 0 : index
    %29 = vector.load %arg2[%c0_13, %c1, %c0_14] : memref<1x2x32xf32, #tpu.memory_space<vmem>>, vector<1x1x32xf32>
    %30 = vector.shape_cast %29 : vector<1x1x32xf32> to vector<1x32xf32>
    %31 = vector.broadcast %30 : vector<1x32xf32> to vector<256x32xf32>
    %32 = arith.addf %28, %31 : vector<256x32xf32>
    %c0_15 = arith.constant 0 : index
    %c0_16 = arith.constant 0 : index
    %33 = vector.load %arg5[%c0_15, %c0_16] : memref<32x128xf32, #tpu.memory_space<vmem>>, vector<32x128xf32>
    %cst_17 = arith.constant dense<0.000000e+00> : vector<256x128xf32>
    %34 = tpu.matmul %32, %33, %cst_17 {dimension_numbers = #tpu.dot_dimension_numbers<[1], [0], [0], [1], [0, 0, 1, 1], [], []>} : vector<256x32xf32>, vector<32x128xf32>, vector<256x128xf32> -> vector<256x128xf32>
    %cst_18 = arith.constant 0.000000e+00 : f32
    %35 = vector.broadcast %cst_18 : f32 to vector<256x128xf32>
    %36 = vector.extract_strided_slice %34 {offsets = [239, 0], sizes = [17, 128], strides = [1, 1]} : vector<256x128xf32> to vector<17x128xf32>
    %37 = vector.extract_strided_slice %34 {offsets = [0, 0], sizes = [239, 128], strides = [1, 1]} : vector<256x128xf32> to vector<239x128xf32>
    %38 = tpu.concatenate %36, %37 in 0 : vector<17x128xf32>, vector<239x128xf32> -> vector<256x128xf32>
    %c0_19 = arith.constant 0 : index
    %c0_20 = arith.constant 0 : index
    %39 = vector.load %arg7[%c0_19, %c0_20] : memref<256x9xf32, #tpu.memory_space<vmem>>, vector<256x1xf32>
    %40 = vector.broadcast %39 : vector<256x1xf32> to vector<256x128xf32>
    %41 = arith.mulf %38, %40 : vector<256x128xf32>
    %c0_21 = arith.constant 0 : index
    %c0_22 = arith.constant 0 : index
    %42 = vector.load %arg6[%c0_21, %c0_22] : memref<9x128xf32, #tpu.memory_space<vmem>>, vector<1x128xf32>
    %43 = vector.broadcast %42 : vector<1x128xf32> to vector<256x128xf32>
    %44 = arith.mulf %41, %43 : vector<256x128xf32>
    %45 = arith.addf %35, %44 : vector<256x128xf32>
    %46 = vector.extract_strided_slice %34 {offsets = [240, 0], sizes = [16, 128], strides = [1, 1]} : vector<256x128xf32> to vector<16x128xf32>
    %47 = vector.extract_strided_slice %34 {offsets = [0, 0], sizes = [240, 128], strides = [1, 1]} : vector<256x128xf32> to vector<240x128xf32>
    %48 = tpu.concatenate %46, %47 in 0 : vector<16x128xf32>, vector<240x128xf32> -> vector<256x128xf32>
    %c0_23 = arith.constant 0 : index
    %c1_24 = arith.constant 1 : index
    %49 = vector.load %arg7[%c0_23, %c1_24] : memref<256x9xf32, #tpu.memory_space<vmem>>, vector<256x1xf32>
    %50 = vector.broadcast %49 : vector<256x1xf32> to vector<256x128xf32>
    %51 = arith.mulf %48, %50 : vector<256x128xf32>
    %c1_25 = arith.constant 1 : index
    %c0_26 = arith.constant 0 : index
    %52 = vector.load %arg6[%c1_25, %c0_26] : memref<9x128xf32, #tpu.memory_space<vmem>>, vector<1x128xf32>
    %53 = vector.broadcast %52 : vector<1x128xf32> to vector<256x128xf32>
    %54 = arith.mulf %51, %53 : vector<256x128xf32>
    %55 = arith.addf %45, %54 : vector<256x128xf32>
    %56 = vector.extract_strided_slice %34 {offsets = [241, 0], sizes = [15, 128], strides = [1, 1]} : vector<256x128xf32> to vector<15x128xf32>
    %57 = vector.extract_strided_slice %34 {offsets = [0, 0], sizes = [241, 128], strides = [1, 1]} : vector<256x128xf32> to vector<241x128xf32>
    %58 = tpu.concatenate %56, %57 in 0 : vector<15x128xf32>, vector<241x128xf32> -> vector<256x128xf32>
    %c0_27 = arith.constant 0 : index
    %c2 = arith.constant 2 : index
    %59 = vector.load %arg7[%c0_27, %c2] : memref<256x9xf32, #tpu.memory_space<vmem>>, vector<256x1xf32>
    %60 = vector.broadcast %59 : vector<256x1xf32> to vector<256x128xf32>
    %61 = arith.mulf %58, %60 : vector<256x128xf32>
    %c2_28 = arith.constant 2 : index
    %c0_29 = arith.constant 0 : index
    %62 = vector.load %arg6[%c2_28, %c0_29] : memref<9x128xf32, #tpu.memory_space<vmem>>, vector<1x128xf32>
    %63 = vector.broadcast %62 : vector<1x128xf32> to vector<256x128xf32>
    %64 = arith.mulf %61, %63 : vector<256x128xf32>
    %65 = arith.addf %55, %64 : vector<256x128xf32>
    %66 = vector.extract_strided_slice %34 {offsets = [255, 0], sizes = [1, 128], strides = [1, 1]} : vector<256x128xf32> to vector<1x128xf32>
    %67 = vector.extract_strided_slice %34 {offsets = [0, 0], sizes = [255, 128], strides = [1, 1]} : vector<256x128xf32> to vector<255x128xf32>
    %68 = tpu.concatenate %66, %67 in 0 : vector<1x128xf32>, vector<255x128xf32> -> vector<256x128xf32>
    %c0_30 = arith.constant 0 : index
    %c3 = arith.constant 3 : index
    %69 = vector.load %arg7[%c0_30, %c3] : memref<256x9xf32, #tpu.memory_space<vmem>>, vector<256x1xf32>
    %70 = vector.broadcast %69 : vector<256x1xf32> to vector<256x128xf32>
    %71 = arith.mulf %68, %70 : vector<256x128xf32>
    %c3_31 = arith.constant 3 : index
    %c0_32 = arith.constant 0 : index
    %72 = vector.load %arg6[%c3_31, %c0_32] : memref<9x128xf32, #tpu.memory_space<vmem>>, vector<1x128xf32>
    %73 = vector.broadcast %72 : vector<1x128xf32> to vector<256x128xf32>
    %74 = arith.mulf %71, %73 : vector<256x128xf32>
    %75 = arith.addf %65, %74 : vector<256x128xf32>
    %c0_33 = arith.constant 0 : index
    %c4 = arith.constant 4 : index
    %76 = vector.load %arg7[%c0_33, %c4] : memref<256x9xf32, #tpu.memory_space<vmem>>, vector<256x1xf32>
    %77 = vector.broadcast %76 : vector<256x1xf32> to vector<256x128xf32>
    %78 = arith.mulf %34, %77 : vector<256x128xf32>
    %c4_34 = arith.constant 4 : index
    %c0_35 = arith.constant 0 : index
    %79 = vector.load %arg6[%c4_34, %c0_35] : memref<9x128xf32, #tpu.memory_space<vmem>>, vector<1x128xf32>
    %80 = vector.broadcast %79 : vector<1x128xf32> to vector<256x128xf32>
    %81 = arith.mulf %78, %80 : vector<256x128xf32>
    %82 = arith.addf %75, %81 : vector<256x128xf32>
    %83 = vector.extract_strided_slice %34 {offsets = [1, 0], sizes = [255, 128], strides = [1, 1]} : vector<256x128xf32> to vector<255x128xf32>
    %84 = vector.extract_strided_slice %34 {offsets = [0, 0], sizes = [1, 128], strides = [1, 1]} : vector<256x128xf32> to vector<1x128xf32>
    %85 = tpu.concatenate %83, %84 in 0 : vector<255x128xf32>, vector<1x128xf32> -> vector<256x128xf32>
    %c0_36 = arith.constant 0 : index
    %c5 = arith.constant 5 : index
    %86 = vector.load %arg7[%c0_36, %c5] : memref<256x9xf32, #tpu.memory_space<vmem>>, vector<256x1xf32>
    %87 = vector.broadcast %86 : vector<256x1xf32> to vector<256x128xf32>
    %88 = arith.mulf %85, %87 : vector<256x128xf32>
    %c5_37 = arith.constant 5 : index
    %c0_38 = arith.constant 0 : index
    %89 = vector.load %arg6[%c5_37, %c0_38] : memref<9x128xf32, #tpu.memory_space<vmem>>, vector<1x128xf32>
    %90 = vector.broadcast %89 : vector<1x128xf32> to vector<256x128xf32>
    %91 = arith.mulf %88, %90 : vector<256x128xf32>
    %92 = arith.addf %82, %91 : vector<256x128xf32>
    %93 = vector.extract_strided_slice %34 {offsets = [15, 0], sizes = [241, 128], strides = [1, 1]} : vector<256x128xf32> to vector<241x128xf32>
    %94 = vector.extract_strided_slice %34 {offsets = [0, 0], sizes = [15, 128], strides = [1, 1]} : vector<256x128xf32> to vector<15x128xf32>
    %95 = tpu.concatenate %93, %94 in 0 : vector<241x128xf32>, vector<15x128xf32> -> vector<256x128xf32>
    %c0_39 = arith.constant 0 : index
    %c6 = arith.constant 6 : index
    %96 = vector.load %arg7[%c0_39, %c6] : memref<256x9xf32, #tpu.memory_space<vmem>>, vector<256x1xf32>
    %97 = vector.broadcast %96 : vector<256x1xf32> to vector<256x128xf32>
    %98 = arith.mulf %95, %97 : vector<256x128xf32>
    %c6_40 = arith.constant 6 : index
    %c0_41 = arith.constant 0 : index
    %99 = vector.load %arg6[%c6_40, %c0_41] : memref<9x128xf32, #tpu.memory_space<vmem>>, vector<1x128xf32>
    %100 = vector.broadcast %99 : vector<1x128xf32> to vector<256x128xf32>
    %101 = arith.mulf %98, %100 : vector<256x128xf32>
    %102 = arith.addf %92, %101 : vector<256x128xf32>
    %103 = vector.extract_strided_slice %34 {offsets = [16, 0], sizes = [240, 128], strides = [1, 1]} : vector<256x128xf32> to vector<240x128xf32>
    %104 = vector.extract_strided_slice %34 {offsets = [0, 0], sizes = [16, 128], strides = [1, 1]} : vector<256x128xf32> to vector<16x128xf32>
    %105 = tpu.concatenate %103, %104 in 0 : vector<240x128xf32>, vector<16x128xf32> -> vector<256x128xf32>
    %c0_42 = arith.constant 0 : index
    %c7 = arith.constant 7 : index
    %106 = vector.load %arg7[%c0_42, %c7] : memref<256x9xf32, #tpu.memory_space<vmem>>, vector<256x1xf32>
    %107 = vector.broadcast %106 : vector<256x1xf32> to vector<256x128xf32>
    %108 = arith.mulf %105, %107 : vector<256x128xf32>
    %c7_43 = arith.constant 7 : index
    %c0_44 = arith.constant 0 : index
    %109 = vector.load %arg6[%c7_43, %c0_44] : memref<9x128xf32, #tpu.memory_space<vmem>>, vector<1x128xf32>
    %110 = vector.broadcast %109 : vector<1x128xf32> to vector<256x128xf32>
    %111 = arith.mulf %108, %110 : vector<256x128xf32>
    %112 = arith.addf %102, %111 : vector<256x128xf32>
    %113 = vector.extract_strided_slice %34 {offsets = [17, 0], sizes = [239, 128], strides = [1, 1]} : vector<256x128xf32> to vector<239x128xf32>
    %114 = vector.extract_strided_slice %34 {offsets = [0, 0], sizes = [17, 128], strides = [1, 1]} : vector<256x128xf32> to vector<17x128xf32>
    %115 = tpu.concatenate %113, %114 in 0 : vector<239x128xf32>, vector<17x128xf32> -> vector<256x128xf32>
    %c0_45 = arith.constant 0 : index
    %c8 = arith.constant 8 : index
    %116 = vector.load %arg7[%c0_45, %c8] : memref<256x9xf32, #tpu.memory_space<vmem>>, vector<256x1xf32>
    %117 = vector.broadcast %116 : vector<256x1xf32> to vector<256x128xf32>
    %118 = arith.mulf %115, %117 : vector<256x128xf32>
    %c8_46 = arith.constant 8 : index
    %c0_47 = arith.constant 0 : index
    %119 = vector.load %arg6[%c8_46, %c0_47] : memref<9x128xf32, #tpu.memory_space<vmem>>, vector<1x128xf32>
    %120 = vector.broadcast %119 : vector<1x128xf32> to vector<256x128xf32>
    %121 = arith.mulf %118, %120 : vector<256x128xf32>
    %122 = arith.addf %112, %121 : vector<256x128xf32>
    %123 = vector.extract_strided_slice %122 {offsets = [0, 0], sizes = [256, 64], strides = [1, 1]} : vector<256x128xf32> to vector<256x64xf32>
    %cst_48 = arith.constant 5.000000e-01 : f32
    %124 = vector.broadcast %cst_48 : f32 to vector<256x64xf32>
    %125 = arith.mulf %124, %123 : vector<256x64xf32>
    %cst_49 = arith.constant 0.707106769 : f32
    %126 = vector.broadcast %cst_49 : f32 to vector<256x64xf32>
    %127 = arith.mulf %123, %126 : vector<256x64xf32>
    %128 = math.absf %127 : vector<256x64xf32>
    %cst_50 = arith.constant 0.327591091 : f32
    %129 = vector.broadcast %cst_50 : f32 to vector<256x64xf32>
    %130 = arith.mulf %129, %128 : vector<256x64xf32>
    %cst_51 = arith.constant 1.000000e+00 : f32
    %131 = vector.broadcast %cst_51 : f32 to vector<256x64xf32>
    %132 = arith.addf %131, %130 : vector<256x64xf32>
    %cst_52 = arith.constant 1.000000e+00 : f32
    %133 = vector.broadcast %cst_52 : f32 to vector<256x64xf32>
    %134 = arith.divf %133, %132 : vector<256x64xf32>
    %cst_53 = arith.constant 1.06140542 : f32
    %135 = vector.broadcast %cst_53 : f32 to vector<256x64xf32>
    %136 = arith.mulf %135, %134 : vector<256x64xf32>
    %cst_54 = arith.constant -1.45315206 : f32
    %137 = vector.broadcast %cst_54 : f32 to vector<256x64xf32>
    %138 = arith.addf %136, %137 : vector<256x64xf32>
    %139 = arith.mulf %138, %134 : vector<256x64xf32>
    %cst_55 = arith.constant 1.42141378 : f32
    %140 = vector.broadcast %cst_55 : f32 to vector<256x64xf32>
    %141 = arith.addf %139, %140 : vector<256x64xf32>
    %142 = arith.mulf %141, %134 : vector<256x64xf32>
    %cst_56 = arith.constant -0.284496725 : f32
    %143 = vector.broadcast %cst_56 : f32 to vector<256x64xf32>
    %144 = arith.addf %142, %143 : vector<256x64xf32>
    %145 = arith.mulf %144, %134 : vector<256x64xf32>
    %cst_57 = arith.constant 0.254829586 : f32
    %146 = vector.broadcast %cst_57 : f32 to vector<256x64xf32>
    %147 = arith.addf %145, %146 : vector<256x64xf32>
    %148 = arith.mulf %147, %134 : vector<256x64xf32>
    %cst_58 = arith.constant 0.000000e+00 : f32
    %149 = vector.broadcast %cst_58 : f32 to vector<256x64xf32>
    %150 = arith.subf %149, %128 : vector<256x64xf32>
    %151 = arith.mulf %150, %128 : vector<256x64xf32>
    %152 = math.exp %151 : vector<256x64xf32>
    %153 = arith.mulf %148, %152 : vector<256x64xf32>
    %cst_59 = arith.constant 1.000000e+00 : f32
    %154 = vector.broadcast %cst_59 : f32 to vector<256x64xf32>
    %155 = arith.subf %154, %153 : vector<256x64xf32>
    %cst_60 = arith.constant 0.000000e+00 : f32
    %156 = vector.broadcast %cst_60 : f32 to vector<256x64xf32>
    %157 = arith.cmpf oge, %127, %156 : vector<256x64xf32>
    %cst_61 = arith.constant 0.000000e+00 : f32
    %158 = vector.broadcast %cst_61 : f32 to vector<256x64xf32>
    %159 = arith.subf %158, %155 : vector<256x64xf32>
    %160 = arith.select %157, %155, %159 : vector<256x64xi1>, vector<256x64xf32>
    %cst_62 = arith.constant 1.000000e+00 : f32
    %161 = vector.broadcast %cst_62 : f32 to vector<256x64xf32>
    %162 = arith.addf %161, %160 : vector<256x64xf32>
    %163 = arith.mulf %125, %162 : vector<256x64xf32>
    %164 = vector.extract_strided_slice %122 {offsets = [0, 64], sizes = [256, 64], strides = [1, 1]} : vector<256x128xf32> to vector<256x64xf32>
    %165 = arith.mulf %163, %164 : vector<256x64xf32>
    %c0_63 = arith.constant 0 : index
    %c0_64 = arith.constant 0 : index
    %166 = vector.load %arg8[%c0_63, %c0_64] : memref<64x32xf32, #tpu.memory_space<vmem>>, vector<64x32xf32>
    %cst_65 = arith.constant dense<0.000000e+00> : vector<256x32xf32>
    %167 = tpu.matmul %165, %166, %cst_65 {dimension_numbers = #tpu.dot_dimension_numbers<[1], [0], [0], [1], [0, 0, 1, 1], [], []>} : vector<256x64xf32>, vector<64x32xf32>, vector<256x32xf32> -> vector<256x32xf32>
    %168 = tpu.transpose %167, [1, 0] : vector<256x32xf32> -> vector<32x256xf32>
    %169 = arith.addf %1, %168 : vector<32x256xf32>
    %c0_66 = arith.constant 0 : index
    %c0_67 = arith.constant 0 : index
    %c0_68 = arith.constant 0 : index
    %170 = vector.load %arg9[%c0_66, %c0_67, %c0_68] : memref<1x32x256xf32, #tpu.memory_space<vmem>>, vector<1x32x256xf32>
    %171 = vector.shape_cast %170 : vector<1x32x256xf32> to vector<32x256xf32>
    %172 = vector.shape_cast %169 : vector<32x256xf32> to vector<1x32x256xf32>
    tpu.vector_store %arg9[%c0_66, %c0_67, %c0_68], %172 {strides = array<i32>} : memref<1x32x256xf32, #tpu.memory_space<vmem>>, vector<1x32x256xf32>,
    return
  }
  func.func @transform_0(%arg0: i32) -> (i32, i32, i32) {
    %c0_i32 = arith.constant 0 : i32
    %c0_i32_0 = arith.constant 0 : i32
    %c0_i32_1 = arith.constant 0 : i32
    return %arg0, %c0_i32, %c0_i32_0 : i32, i32, i32
  }
  func.func @transform_1(%arg0: i32) -> (i32, i32, i32) {
    %c0_i32 = arith.constant 0 : i32
    %c0_i32_0 = arith.constant 0 : i32
    %c0_i32_1 = arith.constant 0 : i32
    return %arg0, %c0_i32, %c0_i32_0 : i32, i32, i32
  }
  func.func @transform_2(%arg0: i32) -> (i32, i32) {
    %c0_i32 = arith.constant 0 : i32
    %c0_i32_0 = arith.constant 0 : i32
    %c0_i32_1 = arith.constant 0 : i32
    return %c0_i32, %c0_i32_0 : i32, i32
  }
  func.func @transform_3(%arg0: i32) -> (i32, i32) {
    %c0_i32 = arith.constant 0 : i32
    %c0_i32_0 = arith.constant 0 : i32
    %c0_i32_1 = arith.constant 0 : i32
    return %c0_i32, %c0_i32_0 : i32, i32
  }
  func.func @transform_4(%arg0: i32) -> (i32, i32) {
    %c0_i32 = arith.constant 0 : i32
    %c0_i32_0 = arith.constant 0 : i32
    %c0_i32_1 = arith.constant 0 : i32
    return %c0_i32, %c0_i32_0 : i32, i32
  }
  func.func @transform_5(%arg0: i32) -> (i32, i32) {
    %c0_i32 = arith.constant 0 : i32
    %c0_i32_0 = arith.constant 0 : i32
    %c0_i32_1 = arith.constant 0 : i32
    return %c0_i32, %c0_i32_0 : i32, i32
  }
  func.func @transform_6(%arg0: i32) -> (i32, i32) {
    %c0_i32 = arith.constant 0 : i32
    %c0_i32_0 = arith.constant 0 : i32
    %c0_i32_1 = arith.constant 0 : i32
    return %c0_i32, %c0_i32_0 : i32, i32
  }
  func.func @transform_7(%arg0: i32) -> (i32, i32) {
    %c0_i32 = arith.constant 0 : i32
    %c0_i32_0 = arith.constant 0 : i32
    %c0_i32_1 = arith.constant 0 : i32
    return %c0_i32, %c0_i32_0 : i32, i32
  }
  func.func @transform_8(%arg0: i32) -> (i32, i32, i32) {
    %c0_i32 = arith.constant 0 : i32
    %c0_i32_0 = arith.constant 0 : i32
    %c0_i32_1 = arith.constant 0 : i32
    return %arg0, %c0_i32, %c0_i32_0 : i32, i32, i32
  }
}

</mosaic_0001>

<llo_original>
// kernel: transformer_block_forward.3
$region0: #{transformer_block_forward.3}
  #allocation0 [shape = 'u32[]', space=smem, size = 0x4, offset = 0x4, fixed_abs, tag = 'smem constant byte address 0x4 - core index']
  #allocation1 [shape = 'u32[144,128]{1,0:T(1,128)}', space=vmem, size = 0x12000, scoped, tag = 'internal scratch']
  %s0 = inlined_call_operand.vmem [shape: f32[2,32,256], index: 0, kind: input, shape index: {}]
  %s1 = inlined_call_operand.vmem [shape: f32[2,2,32], index: 1, kind: input, shape index: {}]
  %s2 = inlined_call_operand.vmem [shape: f32[1,32], index: 2, kind: input, shape index: {}]
  %s3 = inlined_call_operand.vmem [shape: f32[1,32], index: 3, kind: input, shape index: {}]
  %s4 = inlined_call_operand.vmem [shape: f32[32,128], index: 4, kind: input, shape index: {}]
  %s5 = inlined_call_operand.vmem [shape: f32[9,128], index: 5, kind: input, shape index: {}]
  %s6 = inlined_call_operand.vmem [shape: f32[256,9], index: 6, kind: input, shape index: {}]
  %s7 = inlined_call_operand.vmem [shape: f32[64,32], index: 7, kind: input, shape index: {}]
  %s8 = inlined_call_operand.vmem [shape: f32[2,32,256], index: 8, kind: output, shape index: {}]
  %s9 = sld [smem:[#allocation0]]
  $region65: #{transformer_block_forward.3} parent=0
    _
  %s11 = ssub.s32 1, %s9
  %s12 = scalar_select 0, %s11, %s9
  loop: start=0, step=1, limit=4
  $region2: #{transformer_block_forward.3} parent=0 // loop_pre_header
    _
  $region3: #{transformer_block_forward.3} parent=0 // loop_header
    %s14 = sphi 0, %s18
    %p15 = scmp.ge.s32.totalorder %s14, 4
    %s24 = sphi 0, %s26
    %s27 = sphi 0, %s24
    %s28 = sphi 0, %s27
    %s44 = sphi 0, %s28
    %s50 = sphi 0, %s52
    %s53 = sphi 0, %s50
    %s54 = sphi 0, %s53
    %s70 = sphi 0, %s54
    %s74 = sphi 0, %s74
    %s76 = sphi 0, %s74
    %s77 = sphi 0, %s76
    %s91 = sphi 0, %s77
    %s95 = sphi 0, %s95
    %s97 = sphi 0, %s95
    %s98 = sphi 0, %s97
    %s112 = sphi 0, %s98
    %s116 = sphi 0, %s116
    %s118 = sphi 0, %s116
    %s119 = sphi 0, %s118
    %s133 = sphi 0, %s119
    %s137 = sphi 0, %s137
    %s139 = sphi 0, %s137
    %s140 = sphi 0, %s139
    %s154 = sphi 0, %s140
    %s158 = sphi 0, %s158
    %s160 = sphi 0, %s158
    %s161 = sphi 0, %s160
    %s175 = sphi 0, %s161
    %s179 = sphi 0, %s179
    %s181 = sphi 0, %s179
    %s182 = sphi 0, %s181
    %s196 = sphi 0, %s182
    %s202 = sphi 0, %s204
    %s205 = sphi 0, %s202
    %s206 = sphi 0, %s205
    %s222 = sphi 0, %s206
  $region4: #{transformer_block_forward.3} parent=0 // loop_header_branch
    %17 = sbr.rel (%p15) target = $region8
  $region5: #{transformer_block_forward.3} parent=0 // loop_body
    %s19 = ssub.s32 %s14, 1
    %s20 = ssub.s32 %s14, 2
    %s21 = sadd.s32 %s14, 1
    %s22 = ssub.s32 %s14, %s21
    %p23 = scmp.eq.s32.totalorder %s22, 0
    %s25 = sadd.s32 %s24, 1
    %s26 = scalar_select %p23, %s24, %s25
    %p29 = pneg %p23
    %p30 = scmp.eq.s32.totalorder %s14, 1
    %p31 = por %p29, %p30
    %p32 = scmp.ne.s32.totalorder %s24, %s27
    %p33 = scmp.eq.s32.totalorder %s14, 0
    %p34 = por %p32, %p33
    %p35 = scmp.ne.s32.totalorder %s24, %s27
    %p36 = scmp.eq.s32.totalorder %s19, 1
    %p37 = por %p35, %p36
    %p38 = scmp.ne.s32.totalorder %s27, %s28
    %p39 = scmp.eq.s32.totalorder %s19, 0
    %p40 = por %p38, %p39
    %p41 = scmp.ne.s32.totalorder %s27, %s28
    %p42 = scmp.eq.s32.totalorder %s20, 1
    %p43 = por %p41, %p42
    %p45 = scmp.ne.s32.totalorder %s28, %s44
    %p46 = scmp.eq.s32.totalorder %s20, 0
    %p47 = por %p45, %p46
    %s48 = ssub.s32 %s14, %s21
    %p49 = scmp.eq.s32.totalorder %s48, 0
    %s51 = sadd.s32 %s50, 1
    %s52 = scalar_select %p49, %s50, %s51
    %p55 = pneg %p49
    %p56 = scmp.eq.s32.totalorder %s14, 1
    %p57 = por %p55, %p56
    %p58 = scmp.ne.s32.totalorder %s50, %s53
    %p59 = scmp.eq.s32.totalorder %s14, 0
    %p60 = por %p58, %p59
    %p61 = scmp.ne.s32.totalorder %s50, %s53
    %p62 = scmp.eq.s32.totalorder %s19, 1
    %p63 = por %p61, %p62
    %p64 = scmp.ne.s32.totalorder %s53, %s54
    %p65 = scmp.eq.s32.totalorder %s19, 0
    %p66 = por %p64, %p65
    %p67 = scmp.ne.s32.totalorder %s53, %s54
    %p68 = scmp.eq.s32.totalorder %s20, 1
    %p69 = por %p67, %p68
    %p71 = scmp.ne.s32.totalorder %s54, %s70
    %p72 = scmp.eq.s32.totalorder %s20, 0
    %p73 = por %p71, %p72
    %s75 = sadd.s32 %s74, 1
    %p78 = scmp.eq.s32.totalorder %s14, 1
    %p79 = scmp.ne.s32.totalorder %s74, %s76
    %p80 = scmp.eq.s32.totalorder %s14, 0
    %p81 = por %p79, %p80
    %p82 = scmp.ne.s32.totalorder %s74, %s76
    %p83 = scmp.eq.s32.totalorder %s19, 1
    %p84 = por %p82, %p83
    %p85 = scmp.ne.s32.totalorder %s76, %s77
    %p86 = scmp.eq.s32.totalorder %s19, 0
    %p87 = por %p85, %p86
    %p88 = scmp.ne.s32.totalorder %s76, %s77
    %p89 = scmp.eq.s32.totalorder %s20, 1
    %p90 = por %p88, %p89
    %p92 = scmp.ne.s32.totalorder %s77, %s91
    %p93 = scmp.eq.s32.totalorder %s20, 0
    %p94 = por %p92, %p93
    %s96 = sadd.s32 %s95, 1
    %p99 = scmp.eq.s32.totalorder %s14, 1
    %p100 = scmp.ne.s32.totalorder %s95, %s97
    %p101 = scmp.eq.s32.totalorder %s14, 0
    %p102 = por %p100, %p101
    %p103 = scmp.ne.s32.totalorder %s95, %s97
    %p104 = scmp.eq.s32.totalorder %s19, 1
    %p105 = por %p103, %p104
    %p106 = scmp.ne.s32.totalorder %s97, %s98
    %p107 = scmp.eq.s32.totalorder %s19, 0
    %p108 = por %p106, %p107
    %p109 = scmp.ne.s32.totalorder %s97, %s98
    %p110 = scmp.eq.s32.totalorder %s20, 1
    %p111 = por %p109, %p110
    %p113 = scmp.ne.s32.totalorder %s98, %s112
    %p114 = scmp.eq.s32.totalorder %s20, 0
    %p115 = por %p113, %p114
    %s117 = sadd.s32 %s116, 1
    %p120 = scmp.eq.s32.totalorder %s14, 1
    %p121 = scmp.ne.s32.totalorder %s116, %s118
    %p122 = scmp.eq.s32.totalorder %s14, 0
    %p123 = por %p121, %p122
    %p124 = scmp.ne.s32.totalorder %s116, %s118
    %p125 = scmp.eq.s32.totalorder %s19, 1
    %p126 = por %p124, %p125
    %p127 = scmp.ne.s32.totalorder %s118, %s119
    %p128 = scmp.eq.s32.totalorder %s19, 0
    %p129 = por %p127, %p128
    %p130 = scmp.ne.s32.totalorder %s118, %s119
    %p131 = scmp.eq.s32.totalorder %s20, 1
    %p132 = por %p130, %p131
    %p134 = scmp.ne.s32.totalorder %s119, %s133
    %p135 = scmp.eq.s32.totalorder %s20, 0
    %p136 = por %p134, %p135
    %s138 = sadd.s32 %s137, 1
    %p141 = scmp.eq.s32.totalorder %s14, 1
    %p142 = scmp.ne.s32.totalorder %s137, %s139
    %p143 = scmp.eq.s32.totalorder %s14, 0
    %p144 = por %p142, %p143
    %p145 = scmp.ne.s32.totalorder %s137, %s139
    %p146 = scmp.eq.s32.totalorder %s19, 1
    %p147 = por %p145, %p146
    %p148 = scmp.ne.s32.totalorder %s139, %s140
    %p149 = scmp.eq.s32.totalorder %s19, 0
    %p150 = por %p148, %p149
    %p151 = scmp.ne.s32.totalorder %s139, %s140
    %p152 = scmp.eq.s32.totalorder %s20, 1
    %p153 = por %p151, %p152
    %p155 = scmp.ne.s32.totalorder %s140, %s154
    %p156 = scmp.eq.s32.totalorder %s20, 0
    %p157 = por %p155, %p156
    %s159 = sadd.s32 %s158, 1
    %p162 = scmp.eq.s32.totalorder %s14, 1
    %p163 = scmp.ne.s32.totalorder %s158, %s160
    %p164 = scmp.eq.s32.totalorder %s14, 0
    %p165 = por %p163, %p164
    %p166 = scmp.ne.s32.totalorder %s158, %s160
    %p167 = scmp.eq.s32.totalorder %s19, 1
    %p168 = por %p166, %p167
    %p169 = scmp.ne.s32.totalorder %s160, %s161
    %p170 = scmp.eq.s32.totalorder %s19, 0
    %p171 = por %p169, %p170
    %p172 = scmp.ne.s32.totalorder %s160, %s161
    %p173 = scmp.eq.s32.totalorder %s20, 1
    %p174 = por %p172, %p173
    %p176 = scmp.ne.s32.totalorder %s161, %s175
    %p177 = scmp.eq.s32.totalorder %s20, 0
    %p178 = por %p176, %p177
    %s180 = sadd.s32 %s179, 1
    %p183 = scmp.eq.s32.totalorder %s14, 1
    %p184 = scmp.ne.s32.totalorder %s179, %s181
    %p185 = scmp.eq.s32.totalorder %s14, 0
    %p186 = por %p184, %p185
    %p187 = scmp.ne.s32.totalorder %s179, %s181
    %p188 = scmp.eq.s32.totalorder %s19, 1
    %p189 = por %p187, %p188
    %p190 = scmp.ne.s32.totalorder %s181, %s182
    %p191 = scmp.eq.s32.totalorder %s19, 0
    %p192 = por %p190, %p191
    %p193 = scmp.ne.s32.totalorder %s181, %s182
    %p194 = scmp.eq.s32.totalorder %s20, 1
    %p195 = por %p193, %p194
    %p197 = scmp.ne.s32.totalorder %s182, %s196
    %p198 = scmp.eq.s32.totalorder %s20, 0
    %p199 = por %p197, %p198
    %s200 = ssub.s32 %s14, %s21
    %p201 = scmp.eq.s32.totalorder %s200, 0
    %s203 = sadd.s32 %s202, 1
    %s204 = scalar_select %p201, %s202, %s203
    %p207 = pneg %p201
    %p208 = scmp.eq.s32.totalorder %s14, 1
    %p209 = por %p207, %p208
    %p210 = scmp.ne.s32.totalorder %s202, %s205
    %p211 = scmp.eq.s32.totalorder %s14, 0
    %p212 = por %p210, %p211
    %p213 = scmp.ne.s32.totalorder %s202, %s205
    %p214 = scmp.eq.s32.totalorder %s19, 1
    %p215 = por %p213, %p214
    %p216 = scmp.ne.s32.totalorder %s205, %s206
    %p217 = scmp.eq.s32.totalorder %s19, 0
    %p218 = por %p216, %p217
    %p219 = scmp.ne.s32.totalorder %s205, %s206
    %p220 = scmp.eq.s32.totalorder %s20, 1
    %p221 = por %p219, %p220
    %p223 = scmp.ne.s32.totalorder %s206, %s222
    %p224 = scmp.eq.s32.totalorder %s20, 0
    %p225 = por %p223, %p224
    %p226 = scmp.le.s32.totalorder 1, %s14
    %p227 = scmp.lt.s32.totalorder %s14, 3
    %p228 = pnand %p226, %p227
    %p229 = pneg %p228
    // Predicated region
    $region9: #{transformer_block_forward.3} parent=5 // pred_check
      _
    $region10: #{transformer_block_forward.3} parent=5 // pred_check_branch
      %231 = sbr.rel (%p228) target = $region12
    $region11: #{transformer_block_forward.3} parent=5 // pred_region
      %s232 = ssub.s32 %s14, 1
      // Predicated region
      $region13: #{transformer_block_forward.3} parent=11 // pred_check
        %p233 = pneg %p87
      $region14: #{transformer_block_forward.3} parent=11 // pred_check_branch
        %235 = sbr.rel (%p233) target = $region16
      $region15: #{transformer_block_forward.3} parent=11 // pred_region
        _
      $region16: #{transformer_block_forward.3} parent=11 // pred_fallthru
        _
      // Predicated region
      $region17: #{transformer_block_forward.3} parent=11 // pred_check
        %p236 = pneg %p108
      $region18: #{transformer_block_forward.3} parent=11 // pred_check_branch
        %238 = sbr.rel (%p236) target = $region20
      $region19: #{transformer_block_forward.3} parent=11 // pred_region
        _
      $region20: #{transformer_block_forward.3} parent=11 // pred_fallthru
        _
      // Predicated region
      $region21: #{transformer_block_forward.3} parent=11 // pred_check
        %p239 = pneg %p129
      $region22: #{transformer_block_forward.3} parent=11 // pred_check_branch
        %241 = sbr.rel (%p239) target = $region24
      $region23: #{transformer_block_forward.3} parent=11 // pred_region
        _
      $region24: #{transformer_block_forward.3} parent=11 // pred_fallthru
        _
      // Predicated region
      $region25: #{transformer_block_forward.3} parent=11 // pred_check
        %p242 = pneg %p150
      $region26: #{transformer_block_forward.3} parent=11 // pred_check_branch
        %244 = sbr.rel (%p242) target = $region28
      $region27: #{transformer_block_forward.3} parent=11 // pred_region
        _
      $region28: #{transformer_block_forward.3} parent=11 // pred_fallthru
        _
      // Predicated region
      $region29: #{transformer_block_forward.3} parent=11 // pred_check
        %p245 = pneg %p171
      $region30: #{transformer_block_forward.3} parent=11 // pred_check_branch
        %247 = sbr.rel (%p245) target = $region32
      $region31: #{transformer_block_forward.3} parent=11 // pred_region
        _
      $region32: #{transformer_block_forward.3} parent=11 // pred_fallthru
        _
      // Predicated region
      $region33: #{transformer_block_forward.3} parent=11 // pred_check
        %p248 = pneg %p192
      $region34: #{transformer_block_forward.3} parent=11 // pred_check_branch
        %250 = sbr.rel (%p248) target = $region36
      $region35: #{transformer_block_forward.3} parent=11 // pred_region
        _
      $region36: #{transformer_block_forward.3} parent=11 // pred_fallthru
        _
    $region12: #{transformer_block_forward.3} parent=5 // pred_fallthru
      _
    %p251 = scmp.lt.s32.totalorder %s14, 2
    // Predicated region
    $region37: #{transformer_block_forward.3} parent=5 // pred_check
      %p252 = pneg %p251
    $region38: #{transformer_block_forward.3} parent=5 // pred_check_branch
      %254 = sbr.rel (%p252) target = $region40
    $region39: #{transformer_block_forward.3} parent=5 // pred_region
      // Predicated region
      $region41: #{transformer_block_forward.3} parent=39 // pred_check
        %p255 = pneg %p34
      $region42: #{transformer_block_forward.3} parent=39 // pred_check_branch
        %257 = sbr.rel (%p255) target = $region44
      $region43: #{transformer_block_forward.3} parent=39 // pred_region
        %p258 = scmp.lt.s32.totalorder %s14, 1
        %s259 = scalar_select %p258, %s14, 1
        %s260 = smul.addr %s259, 8
        %s261 = smul.addr %s260, 8
        %s262 = scalar_lea.vmem %s0, %s261
      $region44: #{transformer_block_forward.3} parent=39 // pred_fallthru
        _
      // Predicated region
      $region45: #{transformer_block_forward.3} parent=39 // pred_check
        %p263 = pneg %p60
      $region46: #{transformer_block_forward.3} parent=39 // pred_check_branch
        %265 = sbr.rel (%p263) target = $region48
      $region47: #{transformer_block_forward.3} parent=39 // pred_region
        %p266 = scmp.lt.s32.totalorder %s14, 1
        %s267 = scalar_select %p266, %s14, 1
        %s268 = smul.addr %s267, 2
        %s269 = scalar_lea.vmem %s1, %s268
      $region48: #{transformer_block_forward.3} parent=39 // pred_fallthru
        _
    $region40: #{transformer_block_forward.3} parent=5 // pred_fallthru
      _
    %p270 = scmp.le.s32.totalorder 1, %s14
    %p271 = scmp.lt.s32.totalorder %s14, 3
    %p272 = pnand %p270, %p271
    %p273 = pneg %p272
    // Predicated region
    $region49: #{transformer_block_forward.3} parent=5 // pred_check
      _
    $region50: #{transformer_block_forward.3} parent=5 // pred_check_branch
      %275 = sbr.rel (%p272) target = $region52
    $region51: #{transformer_block_forward.3} parent=5 // pred_region
      %s276 = ssub.s32 %s14, 1
      %p277 = scmp.lt.s32.totalorder %s19, 1
      %s278 = scalar_select %p277, %s19, 1
      %s279 = smul.addr %s278, 8
      %s280 = smul.addr %s279, 8
      %s281 = scalar_lea.vmem %s0, %s280
      %p282 = pneg %p40
      %p283 = pneg %p37
      %p284 = scmp.lt.s32.totalorder %s19, 1
      %s285 = scalar_select %p284, %s19, 1
      %s286 = smul.addr %s285, 2
      %s287 = scalar_lea.vmem %s1, %s286
      %p288 = pneg %p66
      %p289 = pneg %p63
      %p290 = pneg %p87
      %p291 = pneg %p84
      %p292 = pneg %p108
      %p293 = pneg %p105
      %p294 = pneg %p129
      %p295 = pneg %p126
      %p296 = pneg %p150
      %p297 = pneg %p147
      %p298 = pneg %p171
      %p299 = pneg %p168
      %p300 = pneg %p192
      %p301 = pneg %p189
      %p302 = pneg %p218
      %p303 = pneg %p215
      %p304 = scmp.lt.s32.totalorder %s19, 1
      %s305 = scalar_select %p304, %s19, 1
      %s306 = smul.addr %s305, 8
      %s307 = smul.addr %s306, 8
      %s308 = scalar_lea.vmem %s8, %s307
      %p309 = scmp.lt.s32.totalorder %s19, 1
      %s310 = scalar_select %p309, %s19, 1
      %s311 = smul.addr %s310, 8
      %s312 = smul.addr %s311, 8
      %s313 = scalar_lea.vmem %s0, %s312
      %p314 = scmp.lt.s32.totalorder %s19, 1
      %s315 = scalar_select %p314, %s19, 1
      %s316 = smul.addr %s315, 2
      %s317 = scalar_lea.vmem %s1, %s316
      %p318 = scmp.lt.s32.totalorder %s19, 1
      %s319 = scalar_select %p318, %s19, 1
      %s320 = smul.addr %s319, 8
      %s321 = smul.addr %s320, 8
      %s322 = scalar_lea.vmem %s8, %s321
      %v323 = vld [vmem:[%s313] sm:$0xff]
      %v324 = vld [vmem:[%s313 + $0x8] sm:$0xff]
      %v325 = vld [vmem:[%s313 + $0x10] sm:$0xff]
      %v326 = vld [vmem:[%s313 + $0x18] sm:$0xff]
      %v327 = vld [vmem:[%s313 + $0x20] sm:$0xff]
      %v328 = vld [vmem:[%s313 + $0x28] sm:$0xff]
      %v329 = vld [vmem:[%s313 + $0x30] sm:$0xff]
      %v330 = vld [vmem:[%s313 + $0x38] sm:$0xff]
      %331 = vxpose.xlu0.b32.start [1/16] %v323, 128
      %332 = vxpose.xlu0.b32.cont [2/16] %v325, 128
      %333 = vxpose.xlu0.b32.cont [3/16] %v327, 128
      %334 = vxpose.xlu0.b32.cont [4/16] %v329, 128
      %335 = vxpose.xlu0.b32.cont [5/16] 0.0, 128
      %336 = vxpose.xlu0.b32.cont [6/16] 0.0, 128
      %337 = vxpose.xlu0.b32.cont [7/16] 0.0, 128
      %338 = vxpose.xlu0.b32.cont [8/16] 0.0, 128
      %339 = vxpose.xlu0.b32.cont [9/16] 0.0, 128
      %340 = vxpose.xlu0.b32.cont [10/16] 0.0, 128
      %341 = vxpose.xlu0.b32.cont [11/16] 0.0, 128
      %342 = vxpose.xlu0.b32.cont [12/16] 0.0, 128
      %343 = vxpose.xlu0.b32.cont [13/16] 0.0, 128
      %344 = vxpose.xlu0.b32.cont [14/16] 0.0, 128
      %345 = vxpose.xlu0.b32.cont [15/16] 0.0, 128
      %346 = vxpose.xlu0.b32.end [16/16] 0.0, 128
      %v347 = vpop.trf.xlu0
      %v348 = vpop.trf.xlu0
      %v349 = vpop.trf.xlu0
      %v350 = vpop.trf.xlu0
      %v351 = vpop.trf.xlu0
      %v352 = vpop.trf.xlu0
      %v353 = vpop.trf.xlu0
      %v354 = vpop.trf.xlu0
      %v355 = vpop.trf.xlu0
      %v356 = vpop.trf.xlu0
      %v357 = vpop.trf.xlu0
      %v358 = vpop.trf.xlu0
      %v359 = vpop.trf.xlu0
      %v360 = vpop.trf.xlu0
      %v361 = vpop.trf.xlu0
      %v362 = vpop.trf.xlu0
      %363 = vxpose.xlu0.b32.start [1/16] %v324, 128
      %364 = vxpose.xlu0.b32.cont [2/16] %v326, 128
      %365 = vxpose.xlu0.b32.cont [3/16] %v328, 128
      %366 = vxpose.xlu0.b32.cont [4/16] %v330, 128
      %367 = vxpose.xlu0.b32.cont [5/16] 0.0, 128
      %368 = vxpose.xlu0.b32.cont [6/16] 0.0, 128
      %369 = vxpose.xlu0.b32.cont [7/16] 0.0, 128
      %370 = vxpose.xlu0.b32.cont [8/16] 0.0, 128
      %371 = vxpose.xlu0.b32.cont [9/16] 0.0, 128
      %372 = vxpose.xlu0.b32.cont [10/16] 0.0, 128
      %373 = vxpose.xlu0.b32.cont [11/16] 0.0, 128
      %374 = vxpose.xlu0.b32.cont [12/16] 0.0, 128
      %375 = vxpose.xlu0.b32.cont [13/16] 0.0, 128
      %376 = vxpose.xlu0.b32.cont [14/16] 0.0, 128
      %377 = vxpose.xlu0.b32.cont [15/16] 0.0, 128
      %378 = vxpose.xlu0.b32.end [16/16] 0.0, 128
      %v379 = vpop.trf.xlu0
      %v380 = vpop.trf.xlu0
      %v381 = vpop.trf.xlu0
      %v382 = vpop.trf.xlu0
      %v383 = vpop.trf.xlu0
      %v384 = vpop.trf.xlu0
      %v385 = vpop.trf.xlu0
      %v386 = vpop.trf.xlu0
      %v387 = vpop.trf.xlu0
      %v388 = vpop.trf.xlu0
      %v389 = vpop.trf.xlu0
      %v390 = vpop.trf.xlu0
      %v391 = vpop.trf.xlu0
      %v392 = vpop.trf.xlu0
      %v393 = vpop.trf.xlu0
      %v394 = vpop.trf.xlu0
      %vm395 = vcmask 261120
      %v396 = vsel %vm395, %v347, 0.0
      %397 = vadd.xlane.f32.xlu0 %v396
      %v398 = vpop.xlane.xlu0 %397
      %v399 = vsel %vm395, %v348, 0.0
      %400 = vadd.xlane.f32.xlu0 %v399
      %v401 = vpop.xlane.xlu0 %400
      %v402 = vsel %vm395, %v349, 0.0
      %403 = vadd.xlane.f32.xlu0 %v402
      %v404 = vpop.xlane.xlu0 %403
      %v405 = vsel %vm395, %v350, 0.0
      %406 = vadd.xlane.f32.xlu0 %v405
      %v407 = vpop.xlane.xlu0 %406
      %v408 = vsel %vm395, %v351, 0.0
      %409 = vadd.xlane.f32.xlu0 %v408
      %v410 = vpop.xlane.xlu0 %409
      %v411 = vsel %vm395, %v352, 0.0
      %412 = vadd.xlane.f32.xlu0 %v411
      %v413 = vpop.xlane.xlu0 %412
      %v414 = vsel %vm395, %v353, 0.0
      %415 = vadd.xlane.f32.xlu0 %v414
      %v416 = vpop.xlane.xlu0 %415
      %v417 = vsel %vm395, %v354, 0.0
      %418 = vadd.xlane.f32.xlu0 %v417
      %v419 = vpop.xlane.xlu0 %418
      %v420 = vsel %vm395, %v355, 0.0
      %421 = vadd.xlane.f32.xlu0 %v420
      %v422 = vpop.xlane.xlu0 %421
      %v423 = vsel %vm395, %v356, 0.0
      %424 = vadd.xlane.f32.xlu0 %v423
      %v425 = vpop.xlane.xlu0 %424
      %v426 = vsel %vm395, %v357, 0.0
      %427 = vadd.xlane.f32.xlu0 %v426
      %v428 = vpop.xlane.xlu0 %427
      %v429 = vsel %vm395, %v358, 0.0
      %430 = vadd.xlane.f32.xlu0 %v429
      %v431 = vpop.xlane.xlu0 %430
      %v432 = vsel %vm395, %v359, 0.0
      %433 = vadd.xlane.f32.xlu0 %v432
      %v434 = vpop.xlane.xlu0 %433
      %v435 = vsel %vm395, %v360, 0.0
      %436 = vadd.xlane.f32.xlu0 %v435
      %v437 = vpop.xlane.xlu0 %436
      %v438 = vsel %vm395, %v361, 0.0
      %439 = vadd.xlane.f32.xlu0 %v438
      %v440 = vpop.xlane.xlu0 %439
      %v441 = vsel %vm395, %v362, 0.0
      %442 = vadd.xlane.f32.xlu0 %v441
      %v443 = vpop.xlane.xlu0 %442
      %v444 = vsel %vm395, %v379, 0.0
      %445 = vadd.xlane.f32.xlu0 %v444
      %v446 = vpop.xlane.xlu0 %445
      %v447 = vsel %vm395, %v380, 0.0
      %448 = vadd.xlane.f32.xlu0 %v447
      %v449 = vpop.xlane.xlu0 %448
      %v450 = vsel %vm395, %v381, 0.0
      %451 = vadd.xlane.f32.xlu0 %v450
      %v452 = vpop.xlane.xlu0 %451
      %v453 = vsel %vm395, %v382, 0.0
      %454 = vadd.xlane.f32.xlu0 %v453
      %v455 = vpop.xlane.xlu0 %454
      %v456 = vsel %vm395, %v383, 0.0
      %457 = vadd.xlane.f32.xlu0 %v456
      %v458 = vpop.xlane.xlu0 %457
      %v459 = vsel %vm395, %v384, 0.0
      %460 = vadd.xlane.f32.xlu0 %v459
      %v461 = vpop.xlane.xlu0 %460
      %v462 = vsel %vm395, %v385, 0.0
      %463 = vadd.xlane.f32.xlu0 %v462
      %v464 = vpop.xlane.xlu0 %463
      %v465 = vsel %vm395, %v386, 0.0
      %466 = vadd.xlane.f32.xlu0 %v465
      %v467 = vpop.xlane.xlu0 %466
      %v468 = vsel %vm395, %v387, 0.0
      %469 = vadd.xlane.f32.xlu0 %v468
      %v470 = vpop.xlane.xlu0 %469
      %v471 = vsel %vm395, %v388, 0.0
      %472 = vadd.xlane.f32.xlu0 %v471
      %v473 = vpop.xlane.xlu0 %472
      %v474 = vsel %vm395, %v389, 0.0
      %475 = vadd.xlane.f32.xlu0 %v474
      %v476 = vpop.xlane.xlu0 %475
      %v477 = vsel %vm395, %v390, 0.0
      %478 = vadd.xlane.f32.xlu0 %v477
      %v479 = vpop.xlane.xlu0 %478
      %v480 = vsel %vm395, %v391, 0.0
      %481 = vadd.xlane.f32.xlu0 %v480
      %v482 = vpop.xlane.xlu0 %481
      %v483 = vsel %vm395, %v392, 0.0
      %484 = vadd.xlane.f32.xlu0 %v483
      %v485 = vpop.xlane.xlu0 %484
      %v486 = vsel %vm395, %v393, 0.0
      %487 = vadd.xlane.f32.xlu0 %v486
      %v488 = vpop.xlane.xlu0 %487
      %v489 = vsel %vm395, %v394, 0.0
      %490 = vadd.xlane.f32.xlu0 %v489
      %v491 = vpop.xlane.xlu0 %490
      %v492 = vrcp.pop 32.0
      %v493 = vmul.f32 %v398, %v492
      %v494 = vmul.f32 %v401, %v492
      %v495 = vmul.f32 %v404, %v492
      %v496 = vmul.f32 %v407, %v492
      %v497 = vmul.f32 %v410, %v492
      %v498 = vmul.f32 %v413, %v492
      %v499 = vmul.f32 %v416, %v492
      %v500 = vmul.f32 %v419, %v492
      %v501 = vmul.f32 %v422, %v492
      %v502 = vmul.f32 %v425, %v492
      %v503 = vmul.f32 %v428, %v492
      %v504 = vmul.f32 %v431, %v492
      %v505 = vmul.f32 %v434, %v492
      %v506 = vmul.f32 %v437, %v492
      %v507 = vmul.f32 %v440, %v492
      %v508 = vmul.f32 %v443, %v492
      %v509 = vmul.f32 %v446, %v492
      %v510 = vmul.f32 %v449, %v492
      %v511 = vmul.f32 %v452, %v492
      %v512 = vmul.f32 %v455, %v492
      %v513 = vmul.f32 %v458, %v492
      %v514 = vmul.f32 %v461, %v492
      %v515 = vmul.f32 %v464, %v492
      %v516 = vmul.f32 %v467, %v492
      %v517 = vmul.f32 %v470, %v492
      %v518 = vmul.f32 %v473, %v492
      %v519 = vmul.f32 %v476, %v492
      %v520 = vmul.f32 %v479, %v492
      %v521 = vmul.f32 %v482, %v492
      %v522 = vmul.f32 %v485, %v492
      %v523 = vmul.f32 %v488, %v492
      %v524 = vmul.f32 %v491, %v492
      %v525 = vsub.f32 %v347, %v493
      %v526 = vsub.f32 %v348, %v494
      %v527 = vsub.f32 %v349, %v495
      %v528 = vsub.f32 %v350, %v496
      %v529 = vsub.f32 %v351, %v497
      %v530 = vsub.f32 %v352, %v498
      %v531 = vsub.f32 %v353, %v499
      %v532 = vsub.f32 %v354, %v500
      %v533 = vsub.f32 %v355, %v501
      %v534 = vsub.f32 %v356, %v502
      %v535 = vsub.f32 %v357, %v503
      %v536 = vsub.f32 %v358, %v504
      %v537 = vsub.f32 %v359, %v505
      %v538 = vsub.f32 %v360, %v506
      %v539 = vsub.f32 %v361, %v507
      %v540 = vsub.f32 %v362, %v508
      %v541 = vsub.f32 %v379, %v509
      %v542 = vsub.f32 %v380, %v510
      %v543 = vsub.f32 %v381, %v511
      %v544 = vsub.f32 %v382, %v512
      %v545 = vsub.f32 %v383, %v513
      %v546 = vsub.f32 %v384, %v514
      %v547 = vsub.f32 %v385, %v515
      %v548 = vsub.f32 %v386, %v516
      %v549 = vsub.f32 %v387, %v517
      %v550 = vsub.f32 %v388, %v518
      %v551 = vsub.f32 %v389, %v519
      %v552 = vsub.f32 %v390, %v520
      %v553 = vsub.f32 %v391, %v521
      %v554 = vsub.f32 %v392, %v522
      %v555 = vsub.f32 %v393, %v523
      %v556 = vsub.f32 %v394, %v524
      %v557 = vmul.f32 %v525, %v525
      %v558 = vmul.f32 %v526, %v526
      %v559 = vmul.f32 %v527, %v527
      %v560 = vmul.f32 %v528, %v528
      %v561 = vmul.f32 %v529, %v529
      %v562 = vmul.f32 %v530, %v530
      %v563 = vmul.f32 %v531, %v531
      %v564 = vmul.f32 %v532, %v532
      %v565 = vmul.f32 %v533, %v533
      %v566 = vmul.f32 %v534, %v534
      %v567 = vmul.f32 %v535, %v535
      %v568 = vmul.f32 %v536, %v536
      %v569 = vmul.f32 %v537, %v537
      %v570 = vmul.f32 %v538, %v538
      %v571 = vmul.f32 %v539, %v539
      %v572 = vmul.f32 %v540, %v540
      %v573 = vmul.f32 %v541, %v541
      %v574 = vmul.f32 %v542, %v542
      %v575 = vmul.f32 %v543, %v543
      %v576 = vmul.f32 %v544, %v544
      %v577 = vmul.f32 %v545, %v545
      %v578 = vmul.f32 %v546, %v546
      %v579 = vmul.f32 %v547, %v547
      %v580 = vmul.f32 %v548, %v548
      %v581 = vmul.f32 %v549, %v549
      %v582 = vmul.f32 %v550, %v550
      %v583 = vmul.f32 %v551, %v551
      %v584 = vmul.f32 %v552, %v552
      %v585 = vmul.f32 %v553, %v553
      %v586 = vmul.f32 %v554, %v554
      %v587 = vmul.f32 %v555, %v555
      %v588 = vmul.f32 %v556, %v556
      %v589 = vsel %vm395, %v557, 0.0
      %590 = vadd.xlane.f32.xlu0 %v589
      %v591 = vpop.xlane.xlu0 %590
      %v592 = vsel %vm395, %v558, 0.0
      %593 = vadd.xlane.f32.xlu0 %v592
      %v594 = vpop.xlane.xlu0 %593
      %v595 = vsel %vm395, %v559, 0.0
      %596 = vadd.xlane.f32.xlu0 %v595
      %v597 = vpop.xlane.xlu0 %596
      %v598 = vsel %vm395, %v560, 0.0
      %599 = vadd.xlane.f32.xlu0 %v598
      %v600 = vpop.xlane.xlu0 %599
      %v601 = vsel %vm395, %v561, 0.0
      %602 = vadd.xlane.f32.xlu0 %v601
      %v603 = vpop.xlane.xlu0 %602
      %v604 = vsel %vm395, %v562, 0.0
      %605 = vadd.xlane.f32.xlu0 %v604
      %v606 = vpop.xlane.xlu0 %605
      %v607 = vsel %vm395, %v563, 0.0
      %608 = vadd.xlane.f32.xlu0 %v607
      %v609 = vpop.xlane.xlu0 %608
      %v610 = vsel %vm395, %v564, 0.0
      %611 = vadd.xlane.f32.xlu0 %v610
      %v612 = vpop.xlane.xlu0 %611
      %v613 = vsel %vm395, %v565, 0.0
      %614 = vadd.xlane.f32.xlu0 %v613
      %v615 = vpop.xlane.xlu0 %614
      %v616 = vsel %vm395, %v566, 0.0
      %617 = vadd.xlane.f32.xlu0 %v616
      %v618 = vpop.xlane.xlu0 %617
      %v619 = vsel %vm395, %v567, 0.0
      %620 = vadd.xlane.f32.xlu0 %v619
      %v621 = vpop.xlane.xlu0 %620
      %v622 = vsel %vm395, %v568, 0.0
      %623 = vadd.xlane.f32.xlu0 %v622
      %v624 = vpop.xlane.xlu0 %623
      %v625 = vsel %vm395, %v569, 0.0
      %626 = vadd.xlane.f32.xlu0 %v625
      %v627 = vpop.xlane.xlu0 %626
      %v628 = vsel %vm395, %v570, 0.0
      %629 = vadd.xlane.f32.xlu0 %v628
      %v630 = vpop.xlane.xlu0 %629
      %v631 = vsel %vm395, %v571, 0.0
      %632 = vadd.xlane.f32.xlu0 %v631
      %v633 = vpop.xlane.xlu0 %632
      %v634 = vsel %vm395, %v572, 0.0
      %635 = vadd.xlane.f32.xlu0 %v634
      %v636 = vpop.xlane.xlu0 %635
      %v637 = vsel %vm395, %v573, 0.0
      %638 = vadd.xlane.f32.xlu0 %v637
      %v639 = vpop.xlane.xlu0 %638
      %v640 = vsel %vm395, %v574, 0.0
      %641 = vadd.xlane.f32.xlu0 %v640
      %v642 = vpop.xlane.xlu0 %641
      %v643 = vsel %vm395, %v575, 0.0
      %644 = vadd.xlane.f32.xlu0 %v643
      %v645 = vpop.xlane.xlu0 %644
      %v646 = vsel %vm395, %v576, 0.0
      %647 = vadd.xlane.f32.xlu0 %v646
      %v648 = vpop.xlane.xlu0 %647
      %v649 = vsel %vm395, %v577, 0.0
      %650 = vadd.xlane.f32.xlu0 %v649
      %v651 = vpop.xlane.xlu0 %650
      %v652 = vsel %vm395, %v578, 0.0
      %653 = vadd.xlane.f32.xlu0 %v652
      %v654 = vpop.xlane.xlu0 %653
      %v655 = vsel %vm395, %v579, 0.0
      %656 = vadd.xlane.f32.xlu0 %v655
      %v657 = vpop.xlane.xlu0 %656
      %v658 = vsel %vm395, %v580, 0.0
      %659 = vadd.xlane.f32.xlu0 %v658
      %v660 = vpop.xlane.xlu0 %659
      %v661 = vsel %vm395, %v581, 0.0
      %662 = vadd.xlane.f32.xlu0 %v661
      %v663 = vpop.xlane.xlu0 %662
      %v664 = vsel %vm395, %v582, 0.0
      %665 = vadd.xlane.f32.xlu0 %v664
      %v666 = vpop.xlane.xlu0 %665
      %v667 = vsel %vm395, %v583, 0.0
      %668 = vadd.xlane.f32.xlu0 %v667
      %v669 = vpop.xlane.xlu0 %668
      %v670 = vsel %vm395, %v584, 0.0
      %671 = vadd.xlane.f32.xlu0 %v670
      %v672 = vpop.xlane.xlu0 %671
      %v673 = vsel %vm395, %v585, 0.0
      %674 = vadd.xlane.f32.xlu0 %v673
      %v675 = vpop.xlane.xlu0 %674
      %v676 = vsel %vm395, %v586, 0.0
      %677 = vadd.xlane.f32.xlu0 %v676
      %v678 = vpop.xlane.xlu0 %677
      %v679 = vsel %vm395, %v587, 0.0
      %680 = vadd.xlane.f32.xlu0 %v679
      %v681 = vpop.xlane.xlu0 %680
      %v682 = vsel %vm395, %v588, 0.0
      %683 = vadd.xlane.f32.xlu0 %v682
      %v684 = vpop.xlane.xlu0 %683
      %v685 = vmul.f32 %v591, %v492
      %v686 = vmul.f32 %v594, %v492
      %v687 = vmul.f32 %v597, %v492
      %v688 = vmul.f32 %v600, %v492
      %v689 = vmul.f32 %v603, %v492
      %v690 = vmul.f32 %v606, %v492
      %v691 = vmul.f32 %v609, %v492
      %v692 = vmul.f32 %v612, %v492
      %v693 = vmul.f32 %v615, %v492
      %v694 = vmul.f32 %v618, %v492
      %v695 = vmul.f32 %v621, %v492
      %v696 = vmul.f32 %v624, %v492
      %v697 = vmul.f32 %v627, %v492
      %v698 = vmul.f32 %v630, %v492
      %v699 = vmul.f32 %v633, %v492
      %v700 = vmul.f32 %v636, %v492
      %v701 = vmul.f32 %v639, %v492
      %v702 = vmul.f32 %v642, %v492
      %v703 = vmul.f32 %v645, %v492
      %v704 = vmul.f32 %v648, %v492
      %v705 = vmul.f32 %v651, %v492
      %v706 = vmul.f32 %v654, %v492
      %v707 = vmul.f32 %v657, %v492
      %v708 = vmul.f32 %v660, %v492
      %v709 = vmul.f32 %v663, %v492
      %v710 = vmul.f32 %v666, %v492
      %v711 = vmul.f32 %v669, %v492
      %v712 = vmul.f32 %v672, %v492
      %v713 = vmul.f32 %v675, %v492
      %v714 = vmul.f32 %v678, %v492
      %v715 = vmul.f32 %v681, %v492
      %v716 = vmul.f32 %v684, %v492
      %v717 = vadd.f32 %v685, 1e-05
      %v718 = vadd.f32 %v686, 1e-05
      %v719 = vadd.f32 %v687, 1e-05
      %v720 = vadd.f32 %v688, 1e-05
      %v721 = vadd.f32 %v689, 1e-05
      %v722 = vadd.f32 %v690, 1e-05
      %v723 = vadd.f32 %v691, 1e-05
      %v724 = vadd.f32 %v692, 1e-05
      %v725 = vadd.f32 %v693, 1e-05
      %v726 = vadd.f32 %v694, 1e-05
      %v727 = vadd.f32 %v695, 1e-05
      %v728 = vadd.f32 %v696, 1e-05
      %v729 = vadd.f32 %v697, 1e-05
      %v730 = vadd.f32 %v698, 1e-05
      %v731 = vadd.f32 %v699, 1e-05
      %v732 = vadd.f32 %v700, 1e-05
      %v733 = vadd.f32 %v701, 1e-05
      %v734 = vadd.f32 %v702, 1e-05
      %v735 = vadd.f32 %v703, 1e-05
      %v736 = vadd.f32 %v704, 1e-05
      %v737 = vadd.f32 %v705, 1e-05
      %v738 = vadd.f32 %v706, 1e-05
      %v739 = vadd.f32 %v707, 1e-05
      %v740 = vadd.f32 %v708, 1e-05
      %v741 = vadd.f32 %v709, 1e-05
      %v742 = vadd.f32 %v710, 1e-05
      %v743 = vadd.f32 %v711, 1e-05
      %v744 = vadd.f32 %v712, 1e-05
      %v745 = vadd.f32 %v713, 1e-05
      %v746 = vadd.f32 %v714, 1e-05
      %v747 = vadd.f32 %v715, 1e-05
      %v748 = vadd.f32 %v716, 1e-05
      %v749 = vrsqrt.pop %v717
      %v750 = vrsqrt.pop %v718
      %v751 = vrsqrt.pop %v719
      %v752 = vrsqrt.pop %v720
      %v753 = vrsqrt.pop %v721
      %v754 = vrsqrt.pop %v722
      %v755 = vrsqrt.pop %v723
      %v756 = vrsqrt.pop %v724
      %v757 = vrsqrt.pop %v725
      %v758 = vrsqrt.pop %v726
      %v759 = vrsqrt.pop %v727
      %v760 = vrsqrt.pop %v728
      %v761 = vrsqrt.pop %v729
      %v762 = vrsqrt.pop %v730
      %v763 = vrsqrt.pop %v731
      %v764 = vrsqrt.pop %v732
      %v765 = vrsqrt.pop %v733
      %v766 = vrsqrt.pop %v734
      %v767 = vrsqrt.pop %v735
      %v768 = vrsqrt.pop %v736
      %v769 = vrsqrt.pop %v737
      %v770 = vrsqrt.pop %v738
      %v771 = vrsqrt.pop %v739
      %v772 = vrsqrt.pop %v740
      %v773 = vrsqrt.pop %v741
      %v774 = vrsqrt.pop %v742
      %v775 = vrsqrt.pop %v743
      %v776 = vrsqrt.pop %v744
      %v777 = vrsqrt.pop %v745
      %v778 = vrsqrt.pop %v746
      %v779 = vrsqrt.pop %v747
      %v780 = vrsqrt.pop %v748
      %v781 = vmul.f32 %v525, %v749
      %v782 = vmul.f32 %v526, %v750
      %v783 = vmul.f32 %v527, %v751
      %v784 = vmul.f32 %v528, %v752
      %v785 = vmul.f32 %v529, %v753
      %v786 = vmul.f32 %v530, %v754
      %v787 = vmul.f32 %v531, %v755
      %v788 = vmul.f32 %v532, %v756
      %v789 = vmul.f32 %v533, %v757
      %v790 = vmul.f32 %v534, %v758
      %v791 = vmul.f32 %v535, %v759
      %v792 = vmul.f32 %v536, %v760
      %v793 = vmul.f32 %v537, %v761
      %v794 = vmul.f32 %v538, %v762
      %v795 = vmul.f32 %v539, %v763
      %v796 = vmul.f32 %v540, %v764
      %v797 = vmul.f32 %v541, %v765
      %v798 = vmul.f32 %v542, %v766
      %v799 = vmul.f32 %v543, %v767
      %v800 = vmul.f32 %v544, %v768
      %v801 = vmul.f32 %v545, %v769
      %v802 = vmul.f32 %v546, %v770
      %v803 = vmul.f32 %v547, %v771
      %v804 = vmul.f32 %v548, %v772
      %v805 = vmul.f32 %v549, %v773
      %v806 = vmul.f32 %v550, %v774
      %v807 = vmul.f32 %v551, %v775
      %v808 = vmul.f32 %v552, %v776
      %v809 = vmul.f32 %v553, %v777
      %v810 = vmul.f32 %v554, %v778
      %v811 = vmul.f32 %v555, %v779
      %v812 = vmul.f32 %v556, %v780
      %v813 = vld [vmem:[%s2] sm:$0x1]
      %v815 = vlaneseq
      %v816 = vshrl.u32 %v815, 7
      %v817 = vsub.s32 0, %v816
      %v818 = vrot.slane %v813, %v817
      %v820 = vmul.f32 %v781, %v818
      %v821 = vmul.f32 %v782, %v818
      %v822 = vmul.f32 %v783, %v818
      %v823 = vmul.f32 %v784, %v818
      %v824 = vmul.f32 %v785, %v818
      %v825 = vmul.f32 %v786, %v818
      %v826 = vmul.f32 %v787, %v818
      %v827 = vmul.f32 %v788, %v818
      %v828 = vmul.f32 %v789, %v818
      %v829 = vmul.f32 %v790, %v818
      %v830 = vmul.f32 %v791, %v818
      %v831 = vmul.f32 %v792, %v818
      %v832 = vmul.f32 %v793, %v818
      %v833 = vmul.f32 %v794, %v818
      %v834 = vmul.f32 %v795, %v818
      %v835 = vmul.f32 %v796, %v818
      %v836 = vmul.f32 %v797, %v818
      %v837 = vmul.f32 %v798, %v818
      %v838 = vmul.f32 %v799, %v818
      %v839 = vmul.f32 %v800, %v818
      %v840 = vmul.f32 %v801, %v818
      %v841 = vmul.f32 %v802, %v818
      %v842 = vmul.f32 %v803, %v818
      %v843 = vmul.f32 %v804, %v818
      %v844 = vmul.f32 %v805, %v818
      %v845 = vmul.f32 %v806, %v818
      %v846 = vmul.f32 %v807, %v818
      %v847 = vmul.f32 %v808, %v818
      %v848 = vmul.f32 %v809, %v818
      %v849 = vmul.f32 %v810, %v818
      %v850 = vmul.f32 %v811, %v818
      %v851 = vmul.f32 %v812, %v818
      %v852 = vld [vmem:[%s3] sm:$0x1]
      %v854 = vlaneseq
      %v855 = vshrl.u32 %v854, 7
      %v856 = vsub.s32 0, %v855
      %v857 = vrot.slane %v852, %v856
      %v859 = vadd.f32 %v820, %v857
      %v860 = vadd.f32 %v821, %v857
      %v861 = vadd.f32 %v822, %v857
      %v862 = vadd.f32 %v823, %v857
      %v863 = vadd.f32 %v824, %v857
      %v864 = vadd.f32 %v825, %v857
      %v865 = vadd.f32 %v826, %v857
      %v866 = vadd.f32 %v827, %v857
      %v867 = vadd.f32 %v828, %v857
      %v868 = vadd.f32 %v829, %v857
      %v869 = vadd.f32 %v830, %v857
      %v870 = vadd.f32 %v831, %v857
      %v871 = vadd.f32 %v832, %v857
      %v872 = vadd.f32 %v833, %v857
      %v873 = vadd.f32 %v834, %v857
      %v874 = vadd.f32 %v835, %v857
      %v875 = vadd.f32 %v836, %v857
      %v876 = vadd.f32 %v837, %v857
      %v877 = vadd.f32 %v838, %v857
      %v878 = vadd.f32 %v839, %v857
      %v879 = vadd.f32 %v840, %v857
      %v880 = vadd.f32 %v841, %v857
      %v881 = vadd.f32 %v842, %v857
      %v882 = vadd.f32 %v843, %v857
      %v883 = vadd.f32 %v844, %v857
      %v884 = vadd.f32 %v845, %v857
      %v885 = vadd.f32 %v846, %v857
      %v886 = vadd.f32 %v847, %v857
      %v887 = vadd.f32 %v848, %v857
      %v888 = vadd.f32 %v849, %v857
      %v889 = vadd.f32 %v850, %v857
      %v890 = vadd.f32 %v851, %v857
      %v891 = vld [vmem:[%s317] sm:$0x1]
      %v892 = vlaneseq
      %v893 = vshrl.u32 %v892, 7
      %v894 = vsub.s32 0, %v893
      %v895 = vrot.slane %v891, %v894
      %v896 = vmul.f32 %v859, %v895
      %v897 = vmul.f32 %v860, %v895
      %v898 = vmul.f32 %v861, %v895
      %v899 = vmul.f32 %v862, %v895
      %v900 = vmul.f32 %v863, %v895
      %v901 = vmul.f32 %v864, %v895
      %v902 = vmul.f32 %v865, %v895
      %v903 = vmul.f32 %v866, %v895
      %v904 = vmul.f32 %v867, %v895
      %v905 = vmul.f32 %v868, %v895
      %v906 = vmul.f32 %v869, %v895
      %v907 = vmul.f32 %v870, %v895
      %v908 = vmul.f32 %v871, %v895
      %v909 = vmul.f32 %v872, %v895
      %v910 = vmul.f32 %v873, %v895
      %v911 = vmul.f32 %v874, %v895
      %v912 = vmul.f32 %v875, %v895
      %v913 = vmul.f32 %v876, %v895
      %v914 = vmul.f32 %v877, %v895
      %v915 = vmul.f32 %v878, %v895
      %v916 = vmul.f32 %v879, %v895
      %v917 = vmul.f32 %v880, %v895
      %v918 = vmul.f32 %v881, %v895
      %v919 = vmul.f32 %v882, %v895
      %v920 = vmul.f32 %v883, %v895
      %v921 = vmul.f32 %v884, %v895
      %v922 = vmul.f32 %v885, %v895
      %v923 = vmul.f32 %v886, %v895
      %v924 = vmul.f32 %v887, %v895
      %v925 = vmul.f32 %v888, %v895
      %v926 = vmul.f32 %v889, %v895
      %v927 = vmul.f32 %v890, %v895
      %v928 = vld [vmem:[%s317 + $0x1] sm:$0x1]
      %v929 = vlaneseq
      %v930 = vshrl.u32 %v929, 7
      %v931 = vsub.s32 0, %v930
      %v932 = vrot.slane %v928, %v931
      %v933 = vadd.f32 %v896, %v932
      %v934 = vadd.f32 %v897, %v932
      %v935 = vadd.f32 %v898, %v932
      %v936 = vadd.f32 %v899, %v932
      %v937 = vadd.f32 %v900, %v932
      %v938 = vadd.f32 %v901, %v932
      %v939 = vadd.f32 %v902, %v932
      %v940 = vadd.f32 %v903, %v932
      %v941 = vadd.f32 %v904, %v932
      %v942 = vadd.f32 %v905, %v932
      %v943 = vadd.f32 %v906, %v932
      %v944 = vadd.f32 %v907, %v932
      %v945 = vadd.f32 %v908, %v932
      %v946 = vadd.f32 %v909, %v932
      %v947 = vadd.f32 %v910, %v932
      %v948 = vadd.f32 %v911, %v932
      %v949 = vadd.f32 %v912, %v932
      %v950 = vadd.f32 %v913, %v932
      %v951 = vadd.f32 %v914, %v932
      %v952 = vadd.f32 %v915, %v932
      %v953 = vadd.f32 %v916, %v932
      %v954 = vadd.f32 %v917, %v932
      %v955 = vadd.f32 %v918, %v932
      %v956 = vadd.f32 %v919, %v932
      %v957 = vadd.f32 %v920, %v932
      %v958 = vadd.f32 %v921, %v932
      %v959 = vadd.f32 %v922, %v932
      %v960 = vadd.f32 %v923, %v932
      %v961 = vadd.f32 %v924, %v932
      %v962 = vadd.f32 %v925, %v932
      %v963 = vadd.f32 %v926, %v932
      %v964 = vadd.f32 %v927, %v932
      %v965 = vld [vmem:[%s4] sm:$0xff]
      %v966 = vld [vmem:[%s4 + $0x8] sm:$0xff]
      %v967 = vld [vmem:[%s4 + $0x10] sm:$0xff]
      %v968 = vld [vmem:[%s4 + $0x18] sm:$0xff]
      %v970 = vsel %vm395, %v933, 0
      %v973 = vsel %vm395, %v934, 0
      %v976 = vsel %vm395, %v935, 0
      %v979 = vsel %vm395, %v936, 0
      %v982 = vsel %vm395, %v937, 0
      %v985 = vsel %vm395, %v938, 0
      %v988 = vsel %vm395, %v939, 0
      %v991 = vsel %vm395, %v940, 0
      %v994 = vsel %vm395, %v941, 0
      %v997 = vsel %vm395, %v942, 0
      %v1000 = vsel %vm395, %v943, 0
      %v1003 = vsel %vm395, %v944, 0
      %v1006 = vsel %vm395, %v945, 0
      %v1009 = vsel %vm395, %v946, 0
      %v1012 = vsel %vm395, %v947, 0
      %v1015 = vsel %vm395, %v948, 0
      %v1018 = vsel %vm395, %v949, 0
      %v1021 = vsel %vm395, %v950, 0
      %v1024 = vsel %vm395, %v951, 0
      %v1027 = vsel %vm395, %v952, 0
      %v1030 = vsel %vm395, %v953, 0
      %v1033 = vsel %vm395, %v954, 0
      %v1036 = vsel %vm395, %v955, 0
      %v1039 = vsel %vm395, %v956, 0
      %v1042 = vsel %vm395, %v957, 0
      %v1045 = vsel %vm395, %v958, 0
      %v1048 = vsel %vm395, %v959, 0
      %v1051 = vsel %vm395, %v960, 0
      %v1054 = vsel %vm395, %v961, 0
      %v1057 = vsel %vm395, %v962, 0
      %v1060 = vsel %vm395, %v963, 0
      %v1063 = vsel %vm395, %v964, 0
      %1065 = vmatprep.subr.mxu0 0.0
      %1066 = vmatpush1.msra.mxu0 %v965
      %1067 = vmatprep.subr.mxu0 0.0
      %1068 = vmatpush1.msra.mxu0 %v966
      %1069 = vmatprep.subr.mxu0 0.0
      %1070 = vmatpush1.msra.mxu0 %v967
      %1071 = vmatprep.subr.mxu0 0.0
      %1072 = vmatpush1.msra.mxu0 %v968
      %1073 = vmatprep.subr.mxu0 0.0
      %1074 = vmatpush1.msra.mxu0 0.0
      %1075 = vmatprep.subr.mxu0 0.0
      %1076 = vmatpush1.msra.mxu0 0.0
      %1077 = vmatprep.subr.mxu0 0.0
      %1078 = vmatpush1.msra.mxu0 0.0
      %1079 = vmatprep.subr.mxu0 0.0
      %1080 = vmatpush1.msra.mxu0 0.0
      %1081 = vmatprep.subr.mxu0 0.0
      %1082 = vmatpush1.msra.mxu0 0.0
      %1083 = vmatprep.subr.mxu0 0.0
      %1084 = vmatpush1.msra.mxu0 0.0
      %1085 = vmatprep.subr.mxu0 0.0
      %1086 = vmatpush1.msra.mxu0 0.0
      %1087 = vmatprep.subr.mxu0 0.0
      %1088 = vmatpush1.msra.mxu0 0.0
      %1089 = vmatprep.subr.mxu0 0.0
      %1090 = vmatpush1.msra.mxu0 0.0
      %1091 = vmatprep.subr.mxu0 0.0
      %1092 = vmatpush1.msra.mxu0 0.0
      %1093 = vmatprep.subr.mxu0 0.0
      %1094 = vmatpush1.msra.mxu0 0.0
      %1095 = vmatprep.subr.mxu0 0.0
      %1096 = vmatpush1.msra.mxu0 0.0
      %1097 = vmatprep.subr.mxu0 0.0
      %1098 = vmatpush1.msra.mxu0 0.0
      %1099 = vmatprep.subr.mxu0 0.0
      %1100 = vmatpush1.msra.mxu0 0.0
      %1101 = vmatprep.subr.mxu0 0.0
      %1102 = vmatpush1.msra.mxu0 0.0
      %1103 = vmatprep.subr.mxu0 0.0
      %1104 = vmatpush1.msra.mxu0 0.0
      %1105 = vmatprep.subr.mxu0 0.0
      %1106 = vmatpush1.msra.mxu0 0.0
      %1107 = vmatprep.subr.mxu0 0.0
      %1108 = vmatpush1.msra.mxu0 0.0
      %1109 = vmatprep.subr.mxu0 0.0
      %1110 = vmatpush1.msra.mxu0 0.0
      %1111 = vmatprep.subr.mxu0 0.0
      %1112 = vmatpush1.msra.mxu0 0.0
      %1113 = vmatprep.subr.mxu0 0.0
      %1114 = vmatpush1.msra.mxu0 0.0
      %1115 = vmatprep.subr.mxu0 0.0
      %1116 = vmatpush1.msra.mxu0 0.0
      %1117 = vmatprep.subr.mxu0 0.0
      %1118 = vmatpush1.msra.mxu0 0.0
      %1119 = vmatprep.subr.mxu0 0.0
      %1120 = vmatpush1.msra.mxu0 0.0
      %1121 = vmatprep.subr.mxu0 0.0
      %1122 = vmatpush1.msra.mxu0 0.0
      %1123 = vmatprep.subr.mxu0 0.0
      %1124 = vmatpush1.msra.mxu0 0.0
      %1125 = vmatprep.subr.mxu0 0.0
      %1126 = vmatpush1.msra.mxu0 0.0
      %1127 = vmatprep.subr.mxu0 0.0
      %1128 = vmatpush1.msra.mxu0 0.0
      %1129 = vmatprep.mubr.f32.mxu0 0.0
      %1130 = vmatmul.mubr.f32.gmra.mrb[0].mxu0 %v970
      %v1131 = vpop.f32.mrb[0].mxu0
      %v1132 = vadd.f32 0.0, %v1131
      %v1133 = vpop.f32.mrb[0].mxu0
      %1134 = vmatprep.mubr.f32.mxu0 0.0
      %1135 = vmatmul.mubr.f32.gmra.mrb[0].mxu0 %v973
      %v1136 = vpop.f32.mrb[0].mxu0
      %v1137 = vadd.f32 0.0, %v1136
      %v1138 = vpop.f32.mrb[0].mxu0
      %1139 = vmatprep.mubr.f32.mxu0 0.0
      %1140 = vmatmul.mubr.f32.gmra.mrb[0].mxu0 %v976
      %v1141 = vpop.f32.mrb[0].mxu0
      %v1142 = vadd.f32 0.0, %v1141
      %v1143 = vpop.f32.mrb[0].mxu0
      %1144 = vmatprep.mubr.f32.mxu0 0.0
      %1145 = vmatmul.mubr.f32.gmra.mrb[0].mxu0 %v979
      %v1146 = vpop.f32.mrb[0].mxu0
      %v1147 = vadd.f32 0.0, %v1146
      %v1148 = vpop.f32.mrb[0].mxu0
      %1149 = vmatprep.mubr.f32.mxu0 0.0
      %1150 = vmatmul.mubr.f32.gmra.mrb[0].mxu0 %v982
      %v1151 = vpop.f32.mrb[0].mxu0
      %v1152 = vadd.f32 0.0, %v1151
      %v1153 = vpop.f32.mrb[0].mxu0
      %1154 = vmatprep.mubr.f32.mxu0 0.0
      %1155 = vmatmul.mubr.f32.gmra.mrb[0].mxu0 %v985
      %v1156 = vpop.f32.mrb[0].mxu0
      %v1157 = vadd.f32 0.0, %v1156
      %v1158 = vpop.f32.mrb[0].mxu0
      %1159 = vmatprep.mubr.f32.mxu0 0.0
      %1160 = vmatmul.mubr.f32.gmra.mrb[0].mxu0 %v988
      %v1161 = vpop.f32.mrb[0].mxu0
      %v1162 = vadd.f32 0.0, %v1161
      %v1163 = vpop.f32.mrb[0].mxu0
      %1164 = vmatprep.mubr.f32.mxu0 0.0
      %1165 = vmatmul.mubr.f32.gmra.mrb[0].mxu0 %v991
      %v1166 = vpop.f32.mrb[0].mxu0
      %v1167 = vadd.f32 0.0, %v1166
      %v1168 = vpop.f32.mrb[0].mxu0
      %1169 = vmatprep.mubr.f32.mxu0 0.0
      %1170 = vmatmul.mubr.f32.gmra.mrb[0].mxu0 %v994
      %v1171 = vpop.f32.mrb[0].mxu0
      %v1172 = vadd.f32 0.0, %v1171
      %v1173 = vpop.f32.mrb[0].mxu0
      %1174 = vmatprep.mubr.f32.mxu0 0.0
      %1175 = vmatmul.mubr.f32.gmra.mrb[0].mxu0 %v997
      %v1176 = vpop.f32.mrb[0].mxu0
      %v1177 = vadd.f32 0.0, %v1176
      %v1178 = vpop.f32.mrb[0].mxu0
      %1179 = vmatprep.mubr.f32.mxu0 0.0
      %1180 = vmatmul.mubr.f32.gmra.mrb[0].mxu0 %v1000
      %v1181 = vpop.f32.mrb[0].mxu0
      %v1182 = vadd.f32 0.0, %v1181
      %v1183 = vpop.f32.mrb[0].mxu0
      %1184 = vmatprep.mubr.f32.mxu0 0.0
      %1185 = vmatmul.mubr.f32.gmra.mrb[0].mxu0 %v1003
      %v1186 = vpop.f32.mrb[0].mxu0
      %v1187 = vadd.f32 0.0, %v1186
      %v1188 = vpop.f32.mrb[0].mxu0
      %1189 = vmatprep.mubr.f32.mxu0 0.0
      %1190 = vmatmul.mubr.f32.gmra.mrb[0].mxu0 %v1006
      %v1191 = vpop.f32.mrb[0].mxu0
      %v1192 = vadd.f32 0.0, %v1191
      %v1193 = vpop.f32.mrb[0].mxu0
      %1194 = vmatprep.mubr.f32.mxu0 0.0
      %1195 = vmatmul.mubr.f32.gmra.mrb[0].mxu0 %v1009
      %v1196 = vpop.f32.mrb[0].mxu0
      %v1197 = vadd.f32 0.0, %v1196
      %v1198 = vpop.f32.mrb[0].mxu0
      %1199 = vmatprep.mubr.f32.mxu0 0.0
      %1200 = vmatmul.mubr.f32.gmra.mrb[0].mxu0 %v1012
      %v1201 = vpop.f32.mrb[0].mxu0
      %v1202 = vadd.f32 0.0, %v1201
      %v1203 = vpop.f32.mrb[0].mxu0
      %1204 = vmatprep.mubr.f32.mxu0 0.0
      %1205 = vmatmul.mubr.f32.gmra.mrb[0].mxu0 %v1015
      %v1206 = vpop.f32.mrb[0].mxu0
      %v1207 = vadd.f32 0.0, %v1206
      %v1208 = vpop.f32.mrb[0].mxu0
      %1209 = vmatprep.mubr.f32.mxu0 0.0
      %1210 = vmatmul.mubr.f32.gmra.mrb[0].mxu0 %v1018
      %v1211 = vpop.f32.mrb[0].mxu0
      %v1212 = vadd.f32 0.0, %v1211
      %v1213 = vpop.f32.mrb[0].mxu0
      %1214 = vmatprep.mubr.f32.mxu0 0.0
      %1215 = vmatmul.mubr.f32.gmra.mrb[0].mxu0 %v1021
      %v1216 = vpop.f32.mrb[0].mxu0
      %v1217 = vadd.f32 0.0, %v1216
      %v1218 = vpop.f32.mrb[0].mxu0
      %1219 = vmatprep.mubr.f32.mxu0 0.0
      %1220 = vmatmul.mubr.f32.gmra.mrb[0].mxu0 %v1024
      %v1221 = vpop.f32.mrb[0].mxu0
      %v1222 = vadd.f32 0.0, %v1221
      %v1223 = vpop.f32.mrb[0].mxu0
      %1224 = vmatprep.mubr.f32.mxu0 0.0
      %1225 = vmatmul.mubr.f32.gmra.mrb[0].mxu0 %v1027
      %v1226 = vpop.f32.mrb[0].mxu0
      %v1227 = vadd.f32 0.0, %v1226
      %v1228 = vpop.f32.mrb[0].mxu0
      %1229 = vmatprep.mubr.f32.mxu0 0.0
      %1230 = vmatmul.mubr.f32.gmra.mrb[0].mxu0 %v1030
      %v1231 = vpop.f32.mrb[0].mxu0
      %v1232 = vadd.f32 0.0, %v1231
      %v1233 = vpop.f32.mrb[0].mxu0
      %1234 = vmatprep.mubr.f32.mxu0 0.0
      %1235 = vmatmul.mubr.f32.gmra.mrb[0].mxu0 %v1033
      %v1236 = vpop.f32.mrb[0].mxu0
      %v1237 = vadd.f32 0.0, %v1236
      %v1238 = vpop.f32.mrb[0].mxu0
      %1239 = vmatprep.mubr.f32.mxu0 0.0
      %1240 = vmatmul.mubr.f32.gmra.mrb[0].mxu0 %v1036
      %v1241 = vpop.f32.mrb[0].mxu0
      %v1242 = vadd.f32 0.0, %v1241
      %v1243 = vpop.f32.mrb[0].mxu0
      %1244 = vmatprep.mubr.f32.mxu0 0.0
      %1245 = vmatmul.mubr.f32.gmra.mrb[0].mxu0 %v1039
      %v1246 = vpop.f32.mrb[0].mxu0
      %v1247 = vadd.f32 0.0, %v1246
      %v1248 = vpop.f32.mrb[0].mxu0
      %1249 = vmatprep.mubr.f32.mxu0 0.0
      %1250 = vmatmul.mubr.f32.gmra.mrb[0].mxu0 %v1042
      %v1251 = vpop.f32.mrb[0].mxu0
      %v1252 = vadd.f32 0.0, %v1251
      %v1253 = vpop.f32.mrb[0].mxu0
      %1254 = vmatprep.mubr.f32.mxu0 0.0
      %1255 = vmatmul.mubr.f32.gmra.mrb[0].mxu0 %v1045
      %v1256 = vpop.f32.mrb[0].mxu0
      %v1257 = vadd.f32 0.0, %v1256
      %v1258 = vpop.f32.mrb[0].mxu0
      %1259 = vmatprep.mubr.f32.mxu0 0.0
      %1260 = vmatmul.mubr.f32.gmra.mrb[0].mxu0 %v1048
      %v1261 = vpop.f32.mrb[0].mxu0
      %v1262 = vadd.f32 0.0, %v1261
      %v1263 = vpop.f32.mrb[0].mxu0
      %1264 = vmatprep.mubr.f32.mxu0 0.0
      %1265 = vmatmul.mubr.f32.gmra.mrb[0].mxu0 %v1051
      %v1266 = vpop.f32.mrb[0].mxu0
      %v1267 = vadd.f32 0.0, %v1266
      %v1268 = vpop.f32.mrb[0].mxu0
      %1269 = vmatprep.mubr.f32.mxu0 0.0
      %1270 = vmatmul.mubr.f32.gmra.mrb[0].mxu0 %v1054
      %v1271 = vpop.f32.mrb[0].mxu0
      %v1272 = vadd.f32 0.0, %v1271
      %v1273 = vpop.f32.mrb[0].mxu0
      %1274 = vmatprep.mubr.f32.mxu0 0.0
      %1275 = vmatmul.mubr.f32.gmra.mrb[0].mxu0 %v1057
      %v1276 = vpop.f32.mrb[0].mxu0
      %v1277 = vadd.f32 0.0, %v1276
      %v1278 = vpop.f32.mrb[0].mxu0
      %1279 = vmatprep.mubr.f32.mxu0 0.0
      %1280 = vmatmul.mubr.f32.gmra.mrb[0].mxu0 %v1060
      %v1281 = vpop.f32.mrb[0].mxu0
      %v1282 = vadd.f32 0.0, %v1281
      %v1283 = vpop.f32.mrb[0].mxu0
      %1284 = vmatprep.mubr.f32.mxu0 0.0
      %1285 = vmatmul.mubr.f32.gmra.mrb[0].mxu0 %v1063
      %v1286 = vpop.f32.mrb[0].mxu0
      %v1287 = vadd.f32 0.0, %v1286
      %v1288 = vpop.f32.mrb[0].mxu0
      %1289 = vdwg.mxu0
      %vm1293 = vcmask 1040384
      %v1294 = vrot.slane %v1277, 7
      %v1295 = vrot.slane %v1282, 7
      %v1296 = vsel %vm1293, %v1294, %v1295
      %v1297 = vrot.slane %v1287, 7
      %v1298 = vsel %vm1293, %v1295, %v1297
      %v1331 = vrot.slane %v1132, 7
      %v1332 = vrot.slane %v1137, 7
      %v1333 = vsel %vm1293, %v1331, %v1332
      %v1334 = vrot.slane %v1142, 7
      %v1335 = vsel %vm1293, %v1332, %v1334
      %v1336 = vrot.slane %v1147, 7
      %v1337 = vsel %vm1293, %v1334, %v1336
      %v1338 = vrot.slane %v1152, 7
      %v1339 = vsel %vm1293, %v1336, %v1338
      %v1340 = vrot.slane %v1157, 7
      %v1341 = vsel %vm1293, %v1338, %v1340
      %v1342 = vrot.slane %v1162, 7
      %v1343 = vsel %vm1293, %v1340, %v1342
      %v1344 = vrot.slane %v1167, 7
      %v1345 = vsel %vm1293, %v1342, %v1344
      %v1346 = vrot.slane %v1172, 7
      %v1347 = vsel %vm1293, %v1344, %v1346
      %v1348 = vrot.slane %v1177, 7
      %v1349 = vsel %vm1293, %v1346, %v1348
      %v1350 = vrot.slane %v1182, 7
      %v1351 = vsel %vm1293, %v1348, %v1350
      %v1352 = vrot.slane %v1187, 7
      %v1353 = vsel %vm1293, %v1350, %v1352
      %v1354 = vrot.slane %v1192, 7
      %v1355 = vsel %vm1293, %v1352, %v1354
      %v1356 = vrot.slane %v1197, 7
      %v1357 = vsel %vm1293, %v1354, %v1356
      %v1358 = vrot.slane %v1202, 7
      %v1359 = vsel %vm1293, %v1356, %v1358
      %v1360 = vrot.slane %v1207, 7
      %v1361 = vsel %vm1293, %v1358, %v1360
      %v1362 = vrot.slane %v1212, 7
      %v1363 = vsel %vm1293, %v1360, %v1362
      %v1364 = vrot.slane %v1217, 7
      %v1365 = vsel %vm1293, %v1362, %v1364
      %v1366 = vrot.slane %v1222, 7
      %v1367 = vsel %vm1293, %v1364, %v1366
      %v1368 = vrot.slane %v1227, 7
      %v1369 = vsel %vm1293, %v1366, %v1368
      %v1370 = vrot.slane %v1232, 7
      %v1371 = vsel %vm1293, %v1368, %v1370
      %v1372 = vrot.slane %v1237, 7
      %v1373 = vsel %vm1293, %v1370, %v1372
      %v1374 = vrot.slane %v1242, 7
      %v1375 = vsel %vm1293, %v1372, %v1374
      %v1376 = vrot.slane %v1247, 7
      %v1377 = vsel %vm1293, %v1374, %v1376
      %v1378 = vrot.slane %v1252, 7
      %v1379 = vsel %vm1293, %v1376, %v1378
      %v1380 = vrot.slane %v1257, 7
      %v1381 = vsel %vm1293, %v1378, %v1380
      %v1382 = vrot.slane %v1262, 7
      %v1383 = vsel %vm1293, %v1380, %v1382
      %v1384 = vrot.slane %v1267, 7
      %v1385 = vsel %vm1293, %v1382, %v1384
      %v1386 = vrot.slane %v1272, 7
      %v1387 = vsel %vm1293, %v1384, %v1386
      %v1388 = vsel %vm1293, %v1386, %v1294
      %v1419 = vsel %vm1293, %v1297, %v1331
      %v1420 = vld [vmem:[%s6] sm:$0xff]
      %v1421 = vld [vmem:[%s6 + $0x8] sm:$0xff]
      %v1422 = vld [vmem:[%s6 + $0x10] sm:$0xff]
      %v1423 = vld [vmem:[%s6 + $0x18] sm:$0xff]
      %v1424 = vld [vmem:[%s6 + $0x20] sm:$0xff]
      %v1425 = vld [vmem:[%s6 + $0x28] sm:$0xff]
      %v1426 = vld [vmem:[%s6 + $0x30] sm:$0xff]
      %v1427 = vld [vmem:[%s6 + $0x38] sm:$0xff]
      %v1428 = vld [vmem:[%s6 + $0x40] sm:$0xff]
      %v1429 = vld [vmem:[%s6 + $0x48] sm:$0xff]
      %v1430 = vld [vmem:[%s6 + $0x50] sm:$0xff]
      %v1431 = vld [vmem:[%s6 + $0x58] sm:$0xff]
      %v1432 = vld [vmem:[%s6 + $0x60] sm:$0xff]
      %v1433 = vld [vmem:[%s6 + $0x68] sm:$0xff]
      %v1434 = vld [vmem:[%s6 + $0x70] sm:$0xff]
      %v1435 = vld [vmem:[%s6 + $0x78] sm:$0xff]
      %v1436 = vld [vmem:[%s6 + $0x80] sm:$0xff]
      %v1437 = vld [vmem:[%s6 + $0x88] sm:$0xff]
      %v1438 = vld [vmem:[%s6 + $0x90] sm:$0xff]
      %v1439 = vld [vmem:[%s6 + $0x98] sm:$0xff]
      %v1440 = vld [vmem:[%s6 + $0xa0] sm:$0xff]
      %v1441 = vld [vmem:[%s6 + $0xa8] sm:$0xff]
      %v1442 = vld [vmem:[%s6 + $0xb0] sm:$0xff]
      %v1443 = vld [vmem:[%s6 + $0xb8] sm:$0xff]
      %v1444 = vld [vmem:[%s6 + $0xc0] sm:$0xff]
      %v1445 = vld [vmem:[%s6 + $0xc8] sm:$0xff]
      %v1446 = vld [vmem:[%s6 + $0xd0] sm:$0xff]
      %v1447 = vld [vmem:[%s6 + $0xd8] sm:$0xff]
      %v1448 = vld [vmem:[%s6 + $0xe0] sm:$0xff]
      %v1449 = vld [vmem:[%s6 + $0xe8] sm:$0xff]
      %v1450 = vld [vmem:[%s6 + $0xf0] sm:$0xff]
      %v1451 = vld [vmem:[%s6 + $0xf8] sm:$0xff]
      %1453 = vset.pattern.permute.xlu0 0
      %1454 = vperm.xlu0 %1453, %v1420
      %v1455 = vpop.permute.xlu0 %1454
      %1458 = vset.pattern.permute.xlu0 0
      %1459 = vperm.xlu0 %1458, %v1421
      %v1460 = vpop.permute.xlu0 %1459
      %1463 = vset.pattern.permute.xlu0 0
      %1464 = vperm.xlu0 %1463, %v1422
      %v1465 = vpop.permute.xlu0 %1464
      %1468 = vset.pattern.permute.xlu0 0
      %1469 = vperm.xlu0 %1468, %v1423
      %v1470 = vpop.permute.xlu0 %1469
      %1473 = vset.pattern.permute.xlu0 0
      %1474 = vperm.xlu0 %1473, %v1424
      %v1475 = vpop.permute.xlu0 %1474
      %1478 = vset.pattern.permute.xlu0 0
      %1479 = vperm.xlu0 %1478, %v1425
      %v1480 = vpop.permute.xlu0 %1479
      %1483 = vset.pattern.permute.xlu0 0
      %1484 = vperm.xlu0 %1483, %v1426
      %v1485 = vpop.permute.xlu0 %1484
      %1488 = vset.pattern.permute.xlu0 0
      %1489 = vperm.xlu0 %1488, %v1427
      %v1490 = vpop.permute.xlu0 %1489
      %1493 = vset.pattern.permute.xlu0 0
      %1494 = vperm.xlu0 %1493, %v1428
      %v1495 = vpop.permute.xlu0 %1494
      %1498 = vset.pattern.permute.xlu0 0
      %1499 = vperm.xlu0 %1498, %v1429
      %v1500 = vpop.permute.xlu0 %1499
      %1503 = vset.pattern.permute.xlu0 0
      %1504 = vperm.xlu0 %1503, %v1430
      %v1505 = vpop.permute.xlu0 %1504
      %1508 = vset.pattern.permute.xlu0 0
      %1509 = vperm.xlu0 %1508, %v1431
      %v1510 = vpop.permute.xlu0 %1509
      %1513 = vset.pattern.permute.xlu0 0
      %1514 = vperm.xlu0 %1513, %v1432
      %v1515 = vpop.permute.xlu0 %1514
      %1518 = vset.pattern.permute.xlu0 0
      %1519 = vperm.xlu0 %1518, %v1433
      %v1520 = vpop.permute.xlu0 %1519
      %1523 = vset.pattern.permute.xlu0 0
      %1524 = vperm.xlu0 %1523, %v1434
      %v1525 = vpop.permute.xlu0 %1524
      %1528 = vset.pattern.permute.xlu0 0
      %1529 = vperm.xlu0 %1528, %v1435
      %v1530 = vpop.permute.xlu0 %1529
      %1533 = vset.pattern.permute.xlu0 0
      %1534 = vperm.xlu0 %1533, %v1436
      %v1535 = vpop.permute.xlu0 %1534
      %1538 = vset.pattern.permute.xlu0 0
      %1539 = vperm.xlu0 %1538, %v1437
      %v1540 = vpop.permute.xlu0 %1539
      %1543 = vset.pattern.permute.xlu0 0
      %1544 = vperm.xlu0 %1543, %v1438
      %v1545 = vpop.permute.xlu0 %1544
      %1548 = vset.pattern.permute.xlu0 0
      %1549 = vperm.xlu0 %1548, %v1439
      %v1550 = vpop.permute.xlu0 %1549
      %1553 = vset.pattern.permute.xlu0 0
      %1554 = vperm.xlu0 %1553, %v1440
      %v1555 = vpop.permute.xlu0 %1554
      %1558 = vset.pattern.permute.xlu0 0
      %1559 = vperm.xlu0 %1558, %v1441
      %v1560 = vpop.permute.xlu0 %1559
      %1563 = vset.pattern.permute.xlu0 0
      %1564 = vperm.xlu0 %1563, %v1442
      %v1565 = vpop.permute.xlu0 %1564
      %1568 = vset.pattern.permute.xlu0 0
      %1569 = vperm.xlu0 %1568, %v1443
      %v1570 = vpop.permute.xlu0 %1569
      %1573 = vset.pattern.permute.xlu0 0
      %1574 = vperm.xlu0 %1573, %v1444
      %v1575 = vpop.permute.xlu0 %1574
      %1578 = vset.pattern.permute.xlu0 0
      %1579 = vperm.xlu0 %1578, %v1445
      %v1580 = vpop.permute.xlu0 %1579
      %1583 = vset.pattern.permute.xlu0 0
      %1584 = vperm.xlu0 %1583, %v1446
      %v1585 = vpop.permute.xlu0 %1584
      %1588 = vset.pattern.permute.xlu0 0
      %1589 = vperm.xlu0 %1588, %v1447
      %v1590 = vpop.permute.xlu0 %1589
      %1593 = vset.pattern.permute.xlu0 0
      %1594 = vperm.xlu0 %1593, %v1448
      %v1595 = vpop.permute.xlu0 %1594
      %1598 = vset.pattern.permute.xlu0 0
      %1599 = vperm.xlu0 %1598, %v1449
      %v1600 = vpop.permute.xlu0 %1599
      %1603 = vset.pattern.permute.xlu0 0
      %1604 = vperm.xlu0 %1603, %v1450
      %v1605 = vpop.permute.xlu0 %1604
      %1608 = vset.pattern.permute.xlu0 0
      %1609 = vperm.xlu0 %1608, %v1451
      %v1610 = vpop.permute.xlu0 %1609
      %v1612 = vmul.f32 %v1296, %v1455
      %v1613 = vmul.f32 %v1298, %v1460
      %v1614 = vmul.f32 %v1419, %v1465
      %v1615 = vmul.f32 %v1333, %v1470
      %v1616 = vmul.f32 %v1335, %v1475
      %v1617 = vmul.f32 %v1337, %v1480
      %v1618 = vmul.f32 %v1339, %v1485
      %v1619 = vmul.f32 %v1341, %v1490
      %v1620 = vmul.f32 %v1343, %v1495
      %v1621 = vmul.f32 %v1345, %v1500
      %v1622 = vmul.f32 %v1347, %v1505
      %v1623 = vmul.f32 %v1349, %v1510
      %v1624 = vmul.f32 %v1351, %v1515
      %v1625 = vmul.f32 %v1353, %v1520
      %v1626 = vmul.f32 %v1355, %v1525
      %v1627 = vmul.f32 %v1357, %v1530
      %v1628 = vmul.f32 %v1359, %v1535
      %v1629 = vmul.f32 %v1361, %v1540
      %v1630 = vmul.f32 %v1363, %v1545
      %v1631 = vmul.f32 %v1365, %v1550
      %v1632 = vmul.f32 %v1367, %v1555
      %v1633 = vmul.f32 %v1369, %v1560
      %v1634 = vmul.f32 %v1371, %v1565
      %v1635 = vmul.f32 %v1373, %v1570
      %v1636 = vmul.f32 %v1375, %v1575
      %v1637 = vmul.f32 %v1377, %v1580
      %v1638 = vmul.f32 %v1379, %v1585
      %v1639 = vmul.f32 %v1381, %v1590
      %v1640 = vmul.f32 %v1383, %v1595
      %v1641 = vmul.f32 %v1385, %v1600
      %v1642 = vmul.f32 %v1387, %v1605
      %v1643 = vmul.f32 %v1388, %v1610
      %v1644 = vld [vmem:[%s5] sm:$0x1]
      %v1645 = vlaneseq
      %v1646 = vshrl.u32 %v1645, 7
      %v1647 = vsub.s32 0, %v1646
      %v1648 = vrot.slane %v1644, %v1647
      %v1649 = vmul.f32 %v1612, %v1648
      %v1650 = vmul.f32 %v1613, %v1648
      %v1651 = vmul.f32 %v1614, %v1648
      %v1652 = vmul.f32 %v1615, %v1648
      %v1653 = vmul.f32 %v1616, %v1648
      %v1654 = vmul.f32 %v1617, %v1648
      %v1655 = vmul.f32 %v1618, %v1648
      %v1656 = vmul.f32 %v1619, %v1648
      %v1657 = vmul.f32 %v1620, %v1648
      %v1658 = vmul.f32 %v1621, %v1648
      %v1659 = vmul.f32 %v1622, %v1648
      %v1660 = vmul.f32 %v1623, %v1648
      %v1661 = vmul.f32 %v1624, %v1648
      %v1662 = vmul.f32 %v1625, %v1648
      %v1663 = vmul.f32 %v1626, %v1648
      %v1664 = vmul.f32 %v1627, %v1648
      %v1665 = vmul.f32 %v1628, %v1648
      %v1666 = vmul.f32 %v1629, %v1648
      %v1667 = vmul.f32 %v1630, %v1648
      %v1668 = vmul.f32 %v1631, %v1648
      %v1669 = vmul.f32 %v1632, %v1648
      %v1670 = vmul.f32 %v1633, %v1648
      %v1671 = vmul.f32 %v1634, %v1648
      %v1672 = vmul.f32 %v1635, %v1648
      %v1673 = vmul.f32 %v1636, %v1648
      %v1674 = vmul.f32 %v1637, %v1648
      %v1675 = vmul.f32 %v1638, %v1648
      %v1676 = vmul.f32 %v1639, %v1648
      %v1677 = vmul.f32 %v1640, %v1648
      %v1678 = vmul.f32 %v1641, %v1648
      %v1679 = vmul.f32 %v1642, %v1648
      %v1680 = vmul.f32 %v1643, %v1648
      %v1681 = vadd.f32 %v1649, 0.0
      %v1682 = vadd.f32 %v1650, 0.0
      %v1683 = vadd.f32 %v1651, 0.0
      %v1684 = vadd.f32 %v1652, 0.0
      %v1685 = vadd.f32 %v1653, 0.0
      %v1686 = vadd.f32 %v1654, 0.0
      %v1687 = vadd.f32 %v1655, 0.0
      %v1688 = vadd.f32 %v1656, 0.0
      %v1689 = vadd.f32 %v1657, 0.0
      %v1690 = vadd.f32 %v1658, 0.0
      %v1691 = vadd.f32 %v1659, 0.0
      %v1692 = vadd.f32 %v1660, 0.0
      %v1693 = vadd.f32 %v1661, 0.0
      %v1694 = vadd.f32 %v1662, 0.0
      %v1695 = vadd.f32 %v1663, 0.0
      %v1696 = vadd.f32 %v1664, 0.0
      %v1697 = vadd.f32 %v1665, 0.0
      %v1698 = vadd.f32 %v1666, 0.0
      %v1699 = vadd.f32 %v1667, 0.0
      %v1700 = vadd.f32 %v1668, 0.0
      %v1701 = vadd.f32 %v1669, 0.0
      %v1702 = vadd.f32 %v1670, 0.0
      %v1703 = vadd.f32 %v1671, 0.0
      %v1704 = vadd.f32 %v1672, 0.0
      %v1705 = vadd.f32 %v1673, 0.0
      %v1706 = vadd.f32 %v1674, 0.0
      %v1707 = vadd.f32 %v1675, 0.0
      %v1708 = vadd.f32 %v1676, 0.0
      %v1709 = vadd.f32 %v1677, 0.0
      %v1710 = vadd.f32 %v1678, 0.0
      %v1711 = vadd.f32 %v1679, 0.0
      %v1712 = vadd.f32 %v1680, 0.0
      %1713 = vset.pattern.permute.xlu0 1
      %1714 = vperm.xlu0 %1713, %v1420
      %v1715 = vpop.permute.xlu0 %1714
      %1717 = vset.pattern.permute.xlu0 1
      %1718 = vperm.xlu0 %1717, %v1421
      %v1719 = vpop.permute.xlu0 %1718
      %1721 = vset.pattern.permute.xlu0 1
      %1722 = vperm.xlu0 %1721, %v1422
      %v1723 = vpop.permute.xlu0 %1722
      %1725 = vset.pattern.permute.xlu0 1
      %1726 = vperm.xlu0 %1725, %v1423
      %v1727 = vpop.permute.xlu0 %1726
      %1729 = vset.pattern.permute.xlu0 1
      %1730 = vperm.xlu0 %1729, %v1424
      %v1731 = vpop.permute.xlu0 %1730
      %1733 = vset.pattern.permute.xlu0 1
      %1734 = vperm.xlu0 %1733, %v1425
      %v1735 = vpop.permute.xlu0 %1734
      %1737 = vset.pattern.permute.xlu0 1
      %1738 = vperm.xlu0 %1737, %v1426
      %v1739 = vpop.permute.xlu0 %1738
      %1741 = vset.pattern.permute.xlu0 1
      %1742 = vperm.xlu0 %1741, %v1427
      %v1743 = vpop.permute.xlu0 %1742
      %1745 = vset.pattern.permute.xlu0 1
      %1746 = vperm.xlu0 %1745, %v1428
      %v1747 = vpop.permute.xlu0 %1746
      %1749 = vset.pattern.permute.xlu0 1
      %1750 = vperm.xlu0 %1749, %v1429
      %v1751 = vpop.permute.xlu0 %1750
      %1753 = vset.pattern.permute.xlu0 1
      %1754 = vperm.xlu0 %1753, %v1430
      %v1755 = vpop.permute.xlu0 %1754
      %1757 = vset.pattern.permute.xlu0 1
      %1758 = vperm.xlu0 %1757, %v1431
      %v1759 = vpop.permute.xlu0 %1758
      %1761 = vset.pattern.permute.xlu0 1
      %1762 = vperm.xlu0 %1761, %v1432
      %v1763 = vpop.permute.xlu0 %1762
      %1765 = vset.pattern.permute.xlu0 1
      %1766 = vperm.xlu0 %1765, %v1433
      %v1767 = vpop.permute.xlu0 %1766
      %1769 = vset.pattern.permute.xlu0 1
      %1770 = vperm.xlu0 %1769, %v1434
      %v1771 = vpop.permute.xlu0 %1770
      %1773 = vset.pattern.permute.xlu0 1
      %1774 = vperm.xlu0 %1773, %v1435
      %v1775 = vpop.permute.xlu0 %1774
      %1777 = vset.pattern.permute.xlu0 1
      %1778 = vperm.xlu0 %1777, %v1436
      %v1779 = vpop.permute.xlu0 %1778
      %1781 = vset.pattern.permute.xlu0 1
      %1782 = vperm.xlu0 %1781, %v1437
      %v1783 = vpop.permute.xlu0 %1782
      %1785 = vset.pattern.permute.xlu0 1
      %1786 = vperm.xlu0 %1785, %v1438
      %v1787 = vpop.permute.xlu0 %1786
      %1789 = vset.pattern.permute.xlu0 1
      %1790 = vperm.xlu0 %1789, %v1439
      %v1791 = vpop.permute.xlu0 %1790
      %1793 = vset.pattern.permute.xlu0 1
      %1794 = vperm.xlu0 %1793, %v1440
      %v1795 = vpop.permute.xlu0 %1794
      %1797 = vset.pattern.permute.xlu0 1
      %1798 = vperm.xlu0 %1797, %v1441
      %v1799 = vpop.permute.xlu0 %1798
      %1801 = vset.pattern.permute.xlu0 1
      %1802 = vperm.xlu0 %1801, %v1442
      %v1803 = vpop.permute.xlu0 %1802
      %1805 = vset.pattern.permute.xlu0 1
      %1806 = vperm.xlu0 %1805, %v1443
      %v1807 = vpop.permute.xlu0 %1806
      %1809 = vset.pattern.permute.xlu0 1
      %1810 = vperm.xlu0 %1809, %v1444
      %v1811 = vpop.permute.xlu0 %1810
      %1813 = vset.pattern.permute.xlu0 1
      %1814 = vperm.xlu0 %1813, %v1445
      %v1815 = vpop.permute.xlu0 %1814
      %1817 = vset.pattern.permute.xlu0 1
      %1818 = vperm.xlu0 %1817, %v1446
      %v1819 = vpop.permute.xlu0 %1818
      %1821 = vset.pattern.permute.xlu0 1
      %1822 = vperm.xlu0 %1821, %v1447
      %v1823 = vpop.permute.xlu0 %1822
      %1825 = vset.pattern.permute.xlu0 1
      %1826 = vperm.xlu0 %1825, %v1448
      %v1827 = vpop.permute.xlu0 %1826
      %1829 = vset.pattern.permute.xlu0 1
      %1830 = vperm.xlu0 %1829, %v1449
      %v1831 = vpop.permute.xlu0 %1830
      %1833 = vset.pattern.permute.xlu0 1
      %1834 = vperm.xlu0 %1833, %v1450
      %v1835 = vpop.permute.xlu0 %1834
      %1837 = vset.pattern.permute.xlu0 1
      %1838 = vperm.xlu0 %1837, %v1451
      %v1839 = vpop.permute.xlu0 %1838
      %v1841 = vmul.f32 %v1282, %v1715
      %v1842 = vmul.f32 %v1287, %v1719
      %v1843 = vmul.f32 %v1132, %v1723
      %v1844 = vmul.f32 %v1137, %v1727
      %v1845 = vmul.f32 %v1142, %v1731
      %v1846 = vmul.f32 %v1147, %v1735
      %v1847 = vmul.f32 %v1152, %v1739
      %v1848 = vmul.f32 %v1157, %v1743
      %v1849 = vmul.f32 %v1162, %v1747
      %v1850 = vmul.f32 %v1167, %v1751
      %v1851 = vmul.f32 %v1172, %v1755
      %v1852 = vmul.f32 %v1177, %v1759
      %v1853 = vmul.f32 %v1182, %v1763
      %v1854 = vmul.f32 %v1187, %v1767
      %v1855 = vmul.f32 %v1192, %v1771
      %v1856 = vmul.f32 %v1197, %v1775
      %v1857 = vmul.f32 %v1202, %v1779
      %v1858 = vmul.f32 %v1207, %v1783
      %v1859 = vmul.f32 %v1212, %v1787
      %v1860 = vmul.f32 %v1217, %v1791
      %v1861 = vmul.f32 %v1222, %v1795
      %v1862 = vmul.f32 %v1227, %v1799
      %v1863 = vmul.f32 %v1232, %v1803
      %v1864 = vmul.f32 %v1237, %v1807
      %v1865 = vmul.f32 %v1242, %v1811
      %v1866 = vmul.f32 %v1247, %v1815
      %v1867 = vmul.f32 %v1252, %v1819
      %v1868 = vmul.f32 %v1257, %v1823
      %v1869 = vmul.f32 %v1262, %v1827
      %v1870 = vmul.f32 %v1267, %v1831
      %v1871 = vmul.f32 %v1272, %v1835
      %v1872 = vmul.f32 %v1277, %v1839
      %v1873 = vld [vmem:[%s5 + $0x1] sm:$0x1]
      %v1874 = vlaneseq
      %v1875 = vshrl.u32 %v1874, 7
      %v1876 = vsub.s32 0, %v1875
      %v1877 = vrot.slane %v1873, %v1876
      %v1878 = vmul.f32 %v1841, %v1877
      %v1879 = vmul.f32 %v1842, %v1877
      %v1880 = vmul.f32 %v1843, %v1877
      %v1881 = vmul.f32 %v1844, %v1877
      %v1882 = vmul.f32 %v1845, %v1877
      %v1883 = vmul.f32 %v1846, %v1877
      %v1884 = vmul.f32 %v1847, %v1877
      %v1885 = vmul.f32 %v1848, %v1877
      %v1886 = vmul.f32 %v1849, %v1877
      %v1887 = vmul.f32 %v1850, %v1877
      %v1888 = vmul.f32 %v1851, %v1877
      %v1889 = vmul.f32 %v1852, %v1877
      %v1890 = vmul.f32 %v1853, %v1877
      %v1891 = vmul.f32 %v1854, %v1877
      %v1892 = vmul.f32 %v1855, %v1877
      %v1893 = vmul.f32 %v1856, %v1877
      %v1894 = vmul.f32 %v1857, %v1877
      %v1895 = vmul.f32 %v1858, %v1877
      %v1896 = vmul.f32 %v1859, %v1877
      %v1897 = vmul.f32 %v1860, %v1877
      %v1898 = vmul.f32 %v1861, %v1877
      %v1899 = vmul.f32 %v1862, %v1877
      %v1900 = vmul.f32 %v1863, %v1877
      %v1901 = vmul.f32 %v1864, %v1877
      %v1902 = vmul.f32 %v1865, %v1877
      %v1903 = vmul.f32 %v1866, %v1877
      %v1904 = vmul.f32 %v1867, %v1877
      %v1905 = vmul.f32 %v1868, %v1877
      %v1906 = vmul.f32 %v1869, %v1877
      %v1907 = vmul.f32 %v1870, %v1877
      %v1908 = vmul.f32 %v1871, %v1877
      %v1909 = vmul.f32 %v1872, %v1877
      %v1910 = vadd.f32 %v1681, %v1878
      %v1911 = vadd.f32 %v1682, %v1879
      %v1912 = vadd.f32 %v1683, %v1880
      %v1913 = vadd.f32 %v1684, %v1881
      %v1914 = vadd.f32 %v1685, %v1882
      %v1915 = vadd.f32 %v1686, %v1883
      %v1916 = vadd.f32 %v1687, %v1884
      %v1917 = vadd.f32 %v1688, %v1885
      %v1918 = vadd.f32 %v1689, %v1886
      %v1919 = vadd.f32 %v1690, %v1887
      %v1920 = vadd.f32 %v1691, %v1888
      %v1921 = vadd.f32 %v1692, %v1889
      %v1922 = vadd.f32 %v1693, %v1890
      %v1923 = vadd.f32 %v1694, %v1891
      %v1924 = vadd.f32 %v1695, %v1892
      %v1925 = vadd.f32 %v1696, %v1893
      %v1926 = vadd.f32 %v1697, %v1894
      %v1927 = vadd.f32 %v1698, %v1895
      %v1928 = vadd.f32 %v1699, %v1896
      %v1929 = vadd.f32 %v1700, %v1897
      %v1930 = vadd.f32 %v1701, %v1898
      %v1931 = vadd.f32 %v1702, %v1899
      %v1932 = vadd.f32 %v1703, %v1900
      %v1933 = vadd.f32 %v1704, %v1901
      %v1934 = vadd.f32 %v1705, %v1902
      %v1935 = vadd.f32 %v1706, %v1903
      %v1936 = vadd.f32 %v1707, %v1904
      %v1937 = vadd.f32 %v1708, %v1905
      %v1938 = vadd.f32 %v1709, %v1906
      %v1939 = vadd.f32 %v1710, %v1907
      %v1940 = vadd.f32 %v1711, %v1908
      %v1941 = vadd.f32 %v1712, %v1909
      %vm1942 = vcmask 1046528
      %v1943 = vrot.slane %v1282, 1
      %v1944 = vrot.slane %v1287, 1
      %v1945 = vsel %vm1942, %v1943, %v1944
      %v1948 = vrot.slane %v1132, 1
      %v1949 = vrot.slane %v1137, 1
      %v1950 = vsel %vm1942, %v1948, %v1949
      %v1951 = vrot.slane %v1142, 1
      %v1952 = vsel %vm1942, %v1949, %v1951
      %v1953 = vrot.slane %v1147, 1
      %v1954 = vsel %vm1942, %v1951, %v1953
      %v1955 = vrot.slane %v1152, 1
      %v1956 = vsel %vm1942, %v1953, %v1955
      %v1957 = vrot.slane %v1157, 1
      %v1958 = vsel %vm1942, %v1955, %v1957
      %v1959 = vrot.slane %v1162, 1
      %v1960 = vsel %vm1942, %v1957, %v1959
      %v1961 = vrot.slane %v1167, 1
      %v1962 = vsel %vm1942, %v1959, %v1961
      %v1963 = vrot.slane %v1172, 1
      %v1964 = vsel %vm1942, %v1961, %v1963
      %v1965 = vrot.slane %v1177, 1
      %v1966 = vsel %vm1942, %v1963, %v1965
      %v1967 = vrot.slane %v1182, 1
      %v1968 = vsel %vm1942, %v1965, %v1967
      %v1969 = vrot.slane %v1187, 1
      %v1970 = vsel %vm1942, %v1967, %v1969
      %v1971 = vrot.slane %v1192, 1
      %v1972 = vsel %vm1942, %v1969, %v1971
      %v1973 = vrot.slane %v1197, 1
      %v1974 = vsel %vm1942, %v1971, %v1973
      %v1975 = vrot.slane %v1202, 1
      %v1976 = vsel %vm1942, %v1973, %v1975
      %v1977 = vrot.slane %v1207, 1
      %v1978 = vsel %vm1942, %v1975, %v1977
      %v1979 = vrot.slane %v1212, 1
      %v1980 = vsel %vm1942, %v1977, %v1979
      %v1981 = vrot.slane %v1217, 1
      %v1982 = vsel %vm1942, %v1979, %v1981
      %v1983 = vrot.slane %v1222, 1
      %v1984 = vsel %vm1942, %v1981, %v1983
      %v1985 = vrot.slane %v1227, 1
      %v1986 = vsel %vm1942, %v1983, %v1985
      %v1987 = vrot.slane %v1232, 1
      %v1988 = vsel %vm1942, %v1985, %v1987
      %v1989 = vrot.slane %v1237, 1
      %v1990 = vsel %vm1942, %v1987, %v1989
      %v1991 = vrot.slane %v1242, 1
      %v1992 = vsel %vm1942, %v1989, %v1991
      %v1993 = vrot.slane %v1247, 1
      %v1994 = vsel %vm1942, %v1991, %v1993
      %v1995 = vrot.slane %v1252, 1
      %v1996 = vsel %vm1942, %v1993, %v1995
      %v1997 = vrot.slane %v1257, 1
      %v1998 = vsel %vm1942, %v1995, %v1997
      %v1999 = vrot.slane %v1262, 1
      %v2000 = vsel %vm1942, %v1997, %v1999
      %v2001 = vrot.slane %v1267, 1
      %v2002 = vsel %vm1942, %v1999, %v2001
      %v2003 = vrot.slane %v1272, 1
      %v2004 = vsel %vm1942, %v2001, %v2003
      %v2005 = vrot.slane %v1277, 1
      %v2006 = vsel %vm1942, %v2003, %v2005
      %v2007 = vsel %vm1942, %v2005, %v1943
      %v2039 = vsel %vm1942, %v1944, %v1948
      %2040 = vset.pattern.permute.xlu0 2
      %2041 = vperm.xlu0 %2040, %v1420
      %v2042 = vpop.permute.xlu0 %2041
      %2044 = vset.pattern.permute.xlu0 2
      %2045 = vperm.xlu0 %2044, %v1421
      %v2046 = vpop.permute.xlu0 %2045
      %2048 = vset.pattern.permute.xlu0 2
      %2049 = vperm.xlu0 %2048, %v1422
      %v2050 = vpop.permute.xlu0 %2049
      %2052 = vset.pattern.permute.xlu0 2
      %2053 = vperm.xlu0 %2052, %v1423
      %v2054 = vpop.permute.xlu0 %2053
      %2056 = vset.pattern.permute.xlu0 2
      %2057 = vperm.xlu0 %2056, %v1424
      %v2058 = vpop.permute.xlu0 %2057
      %2060 = vset.pattern.permute.xlu0 2
      %2061 = vperm.xlu0 %2060, %v1425
      %v2062 = vpop.permute.xlu0 %2061
      %2064 = vset.pattern.permute.xlu0 2
      %2065 = vperm.xlu0 %2064, %v1426
      %v2066 = vpop.permute.xlu0 %2065
      %2068 = vset.pattern.permute.xlu0 2
      %2069 = vperm.xlu0 %2068, %v1427
      %v2070 = vpop.permute.xlu0 %2069
      %2072 = vset.pattern.permute.xlu0 2
      %2073 = vperm.xlu0 %2072, %v1428
      %v2074 = vpop.permute.xlu0 %2073
      %2076 = vset.pattern.permute.xlu0 2
      %2077 = vperm.xlu0 %2076, %v1429
      %v2078 = vpop.permute.xlu0 %2077
      %2080 = vset.pattern.permute.xlu0 2
      %2081 = vperm.xlu0 %2080, %v1430
      %v2082 = vpop.permute.xlu0 %2081
      %2084 = vset.pattern.permute.xlu0 2
      %2085 = vperm.xlu0 %2084, %v1431
      %v2086 = vpop.permute.xlu0 %2085
      %2088 = vset.pattern.permute.xlu0 2
      %2089 = vperm.xlu0 %2088, %v1432
      %v2090 = vpop.permute.xlu0 %2089
      %2092 = vset.pattern.permute.xlu0 2
      %2093 = vperm.xlu0 %2092, %v1433
      %v2094 = vpop.permute.xlu0 %2093
      %2096 = vset.pattern.permute.xlu0 2
      %2097 = vperm.xlu0 %2096, %v1434
      %v2098 = vpop.permute.xlu0 %2097
      %2100 = vset.pattern.permute.xlu0 2
      %2101 = vperm.xlu0 %2100, %v1435
      %v2102 = vpop.permute.xlu0 %2101
      %2104 = vset.pattern.permute.xlu0 2
      %2105 = vperm.xlu0 %2104, %v1436
      %v2106 = vpop.permute.xlu0 %2105
      %2108 = vset.pattern.permute.xlu0 2
      %2109 = vperm.xlu0 %2108, %v1437
      %v2110 = vpop.permute.xlu0 %2109
      %2112 = vset.pattern.permute.xlu0 2
      %2113 = vperm.xlu0 %2112, %v1438
      %v2114 = vpop.permute.xlu0 %2113
      %2116 = vset.pattern.permute.xlu0 2
      %2117 = vperm.xlu0 %2116, %v1439
      %v2118 = vpop.permute.xlu0 %2117
      %2120 = vset.pattern.permute.xlu0 2
      %2121 = vperm.xlu0 %2120, %v1440
      %v2122 = vpop.permute.xlu0 %2121
      %2124 = vset.pattern.permute.xlu0 2
      %2125 = vperm.xlu0 %2124, %v1441
      %v2126 = vpop.permute.xlu0 %2125
      %2128 = vset.pattern.permute.xlu0 2
      %2129 = vperm.xlu0 %2128, %v1442
      %v2130 = vpop.permute.xlu0 %2129
      %2132 = vset.pattern.permute.xlu0 2
      %2133 = vperm.xlu0 %2132, %v1443
      %v2134 = vpop.permute.xlu0 %2133
      %2136 = vset.pattern.permute.xlu0 2
      %2137 = vperm.xlu0 %2136, %v1444
      %v2138 = vpop.permute.xlu0 %2137
      %2140 = vset.pattern.permute.xlu0 2
      %2141 = vperm.xlu0 %2140, %v1445
      %v2142 = vpop.permute.xlu0 %2141
      %2144 = vset.pattern.permute.xlu0 2
      %2145 = vperm.xlu0 %2144, %v1446
      %v2146 = vpop.permute.xlu0 %2145
      %2148 = vset.pattern.permute.xlu0 2
      %2149 = vperm.xlu0 %2148, %v1447
      %v2150 = vpop.permute.xlu0 %2149
      %2152 = vset.pattern.permute.xlu0 2
      %2153 = vperm.xlu0 %2152, %v1448
      %v2154 = vpop.permute.xlu0 %2153
      %2156 = vset.pattern.permute.xlu0 2
      %2157 = vperm.xlu0 %2156, %v1449
      %v2158 = vpop.permute.xlu0 %2157
      %2160 = vset.pattern.permute.xlu0 2
      %2161 = vperm.xlu0 %2160, %v1450
      %v2162 = vpop.permute.xlu0 %2161
      %2164 = vset.pattern.permute.xlu0 2
      %2165 = vperm.xlu0 %2164, %v1451
      %v2166 = vpop.permute.xlu0 %2165
      %v2168 = vmul.f32 %v1945, %v2042
      %v2169 = vmul.f32 %v2039, %v2046
      %v2170 = vmul.f32 %v1950, %v2050
      %v2171 = vmul.f32 %v1952, %v2054
      %v2172 = vmul.f32 %v1954, %v2058
      %v2173 = vmul.f32 %v1956, %v2062
      %v2174 = vmul.f32 %v1958, %v2066
      %v2175 = vmul.f32 %v1960, %v2070
      %v2176 = vmul.f32 %v1962, %v2074
      %v2177 = vmul.f32 %v1964, %v2078
      %v2178 = vmul.f32 %v1966, %v2082
      %v2179 = vmul.f32 %v1968, %v2086
      %v2180 = vmul.f32 %v1970, %v2090
      %v2181 = vmul.f32 %v1972, %v2094
      %v2182 = vmul.f32 %v1974, %v2098
      %v2183 = vmul.f32 %v1976, %v2102
      %v2184 = vmul.f32 %v1978, %v2106
      %v2185 = vmul.f32 %v1980, %v2110
      %v2186 = vmul.f32 %v1982, %v2114
      %v2187 = vmul.f32 %v1984, %v2118
      %v2188 = vmul.f32 %v1986, %v2122
      %v2189 = vmul.f32 %v1988, %v2126
      %v2190 = vmul.f32 %v1990, %v2130
      %v2191 = vmul.f32 %v1992, %v2134
      %v2192 = vmul.f32 %v1994, %v2138
      %v2193 = vmul.f32 %v1996, %v2142
      %v2194 = vmul.f32 %v1998, %v2146
      %v2195 = vmul.f32 %v2000, %v2150
      %v2196 = vmul.f32 %v2002, %v2154
      %v2197 = vmul.f32 %v2004, %v2158
      %v2198 = vmul.f32 %v2006, %v2162
      %v2199 = vmul.f32 %v2007, %v2166
      %v2200 = vld [vmem:[%s5 + $0x2] sm:$0x1]
      %v2201 = vlaneseq
      %v2202 = vshrl.u32 %v2201, 7
      %v2203 = vsub.s32 0, %v2202
      %v2204 = vrot.slane %v2200, %v2203
      %v2205 = vmul.f32 %v2168, %v2204
      %v2206 = vmul.f32 %v2169, %v2204
      %v2207 = vmul.f32 %v2170, %v2204
      %v2208 = vmul.f32 %v2171, %v2204
      %v2209 = vmul.f32 %v2172, %v2204
      %v2210 = vmul.f32 %v2173, %v2204
      %v2211 = vmul.f32 %v2174, %v2204
      %v2212 = vmul.f32 %v2175, %v2204
      %v2213 = vmul.f32 %v2176, %v2204
      %v2214 = vmul.f32 %v2177, %v2204
      %v2215 = vmul.f32 %v2178, %v2204
      %v2216 = vmul.f32 %v2179, %v2204
      %v2217 = vmul.f32 %v2180, %v2204
      %v2218 = vmul.f32 %v2181, %v2204
      %v2219 = vmul.f32 %v2182, %v2204
      %v2220 = vmul.f32 %v2183, %v2204
      %v2221 = vmul.f32 %v2184, %v2204
      %v2222 = vmul.f32 %v2185, %v2204
      %v2223 = vmul.f32 %v2186, %v2204
      %v2224 = vmul.f32 %v2187, %v2204
      %v2225 = vmul.f32 %v2188, %v2204
      %v2226 = vmul.f32 %v2189, %v2204
      %v2227 = vmul.f32 %v2190, %v2204
      %v2228 = vmul.f32 %v2191, %v2204
      %v2229 = vmul.f32 %v2192, %v2204
      %v2230 = vmul.f32 %v2193, %v2204
      %v2231 = vmul.f32 %v2194, %v2204
      %v2232 = vmul.f32 %v2195, %v2204
      %v2233 = vmul.f32 %v2196, %v2204
      %v2234 = vmul.f32 %v2197, %v2204
      %v2235 = vmul.f32 %v2198, %v2204
      %v2236 = vmul.f32 %v2199, %v2204
      %v2237 = vadd.f32 %v1910, %v2205
      %v2238 = vadd.f32 %v1911, %v2206
      %v2239 = vadd.f32 %v1912, %v2207
      %v2240 = vadd.f32 %v1913, %v2208
      %v2241 = vadd.f32 %v1914, %v2209
      %v2242 = vadd.f32 %v1915, %v2210
      %v2243 = vadd.f32 %v1916, %v2211
      %v2244 = vadd.f32 %v1917, %v2212
      %v2245 = vadd.f32 %v1918, %v2213
      %v2246 = vadd.f32 %v1919, %v2214
      %v2247 = vadd.f32 %v1920, %v2215
      %v2248 = vadd.f32 %v1921, %v2216
      %v2249 = vadd.f32 %v1922, %v2217
      %v2250 = vadd.f32 %v1923, %v2218
      %v2251 = vadd.f32 %v1924, %v2219
      %v2252 = vadd.f32 %v1925, %v2220
      %v2253 = vadd.f32 %v1926, %v2221
      %v2254 = vadd.f32 %v1927, %v2222
      %v2255 = vadd.f32 %v1928, %v2223
      %v2256 = vadd.f32 %v1929, %v2224
      %v2257 = vadd.f32 %v1930, %v2225
      %v2258 = vadd.f32 %v1931, %v2226
      %v2259 = vadd.f32 %v1932, %v2227
      %v2260 = vadd.f32 %v1933, %v2228
      %v2261 = vadd.f32 %v1934, %v2229
      %v2262 = vadd.f32 %v1935, %v2230
      %v2263 = vadd.f32 %v1936, %v2231
      %v2264 = vadd.f32 %v1937, %v2232
      %v2265 = vadd.f32 %v1938, %v2233
      %v2266 = vadd.f32 %v1939, %v2234
      %v2267 = vadd.f32 %v1940, %v2235
      %v2268 = vadd.f32 %v1941, %v2236
      %2269 = vset.pattern.permute.xlu0 3
      %2270 = vperm.xlu0 %2269, %v1420
      %v2271 = vpop.permute.xlu0 %2270
      %2273 = vset.pattern.permute.xlu0 3
      %2274 = vperm.xlu0 %2273, %v1421
      %v2275 = vpop.permute.xlu0 %2274
      %2277 = vset.pattern.permute.xlu0 3
      %2278 = vperm.xlu0 %2277, %v1422
      %v2279 = vpop.permute.xlu0 %2278
      %2281 = vset.pattern.permute.xlu0 3
      %2282 = vperm.xlu0 %2281, %v1423
      %v2283 = vpop.permute.xlu0 %2282
      %2285 = vset.pattern.permute.xlu0 3
      %2286 = vperm.xlu0 %2285, %v1424
      %v2287 = vpop.permute.xlu0 %2286
      %2289 = vset.pattern.permute.xlu0 3
      %2290 = vperm.xlu0 %2289, %v1425
      %v2291 = vpop.permute.xlu0 %2290
      %2293 = vset.pattern.permute.xlu0 3
      %2294 = vperm.xlu0 %2293, %v1426
      %v2295 = vpop.permute.xlu0 %2294
      %2297 = vset.pattern.permute.xlu0 3
      %2298 = vperm.xlu0 %2297, %v1427
      %v2299 = vpop.permute.xlu0 %2298
      %2301 = vset.pattern.permute.xlu0 3
      %2302 = vperm.xlu0 %2301, %v1428
      %v2303 = vpop.permute.xlu0 %2302
      %2305 = vset.pattern.permute.xlu0 3
      %2306 = vperm.xlu0 %2305, %v1429
      %v2307 = vpop.permute.xlu0 %2306
      %2309 = vset.pattern.permute.xlu0 3
      %2310 = vperm.xlu0 %2309, %v1430
      %v2311 = vpop.permute.xlu0 %2310
      %2313 = vset.pattern.permute.xlu0 3
      %2314 = vperm.xlu0 %2313, %v1431
      %v2315 = vpop.permute.xlu0 %2314
      %2317 = vset.pattern.permute.xlu0 3
      %2318 = vperm.xlu0 %2317, %v1432
      %v2319 = vpop.permute.xlu0 %2318
      %2321 = vset.pattern.permute.xlu0 3
      %2322 = vperm.xlu0 %2321, %v1433
      %v2323 = vpop.permute.xlu0 %2322
      %2325 = vset.pattern.permute.xlu0 3
      %2326 = vperm.xlu0 %2325, %v1434
      %v2327 = vpop.permute.xlu0 %2326
      %2329 = vset.pattern.permute.xlu0 3
      %2330 = vperm.xlu0 %2329, %v1435
      %v2331 = vpop.permute.xlu0 %2330
      %2333 = vset.pattern.permute.xlu0 3
      %2334 = vperm.xlu0 %2333, %v1436
      %v2335 = vpop.permute.xlu0 %2334
      %2337 = vset.pattern.permute.xlu0 3
      %2338 = vperm.xlu0 %2337, %v1437
      %v2339 = vpop.permute.xlu0 %2338
      %2341 = vset.pattern.permute.xlu0 3
      %2342 = vperm.xlu0 %2341, %v1438
      %v2343 = vpop.permute.xlu0 %2342
      %2345 = vset.pattern.permute.xlu0 3
      %2346 = vperm.xlu0 %2345, %v1439
      %v2347 = vpop.permute.xlu0 %2346
      %2349 = vset.pattern.permute.xlu0 3
      %2350 = vperm.xlu0 %2349, %v1440
      %v2351 = vpop.permute.xlu0 %2350
      %2353 = vset.pattern.permute.xlu0 3
      %2354 = vperm.xlu0 %2353, %v1441
      %v2355 = vpop.permute.xlu0 %2354
      %2357 = vset.pattern.permute.xlu0 3
      %2358 = vperm.xlu0 %2357, %v1442
      %v2359 = vpop.permute.xlu0 %2358
      %2361 = vset.pattern.permute.xlu0 3
      %2362 = vperm.xlu0 %2361, %v1443
      %v2363 = vpop.permute.xlu0 %2362
      %2365 = vset.pattern.permute.xlu0 3
      %2366 = vperm.xlu0 %2365, %v1444
      %v2367 = vpop.permute.xlu0 %2366
      %2369 = vset.pattern.permute.xlu0 3
      %2370 = vperm.xlu0 %2369, %v1445
      %v2371 = vpop.permute.xlu0 %2370
      %2373 = vset.pattern.permute.xlu0 3
      %2374 = vperm.xlu0 %2373, %v1446
      %v2375 = vpop.permute.xlu0 %2374
      %2377 = vset.pattern.permute.xlu0 3
      %2378 = vperm.xlu0 %2377, %v1447
      %v2379 = vpop.permute.xlu0 %2378
      %2381 = vset.pattern.permute.xlu0 3
      %2382 = vperm.xlu0 %2381, %v1448
      %v2383 = vpop.permute.xlu0 %2382
      %2385 = vset.pattern.permute.xlu0 3
      %2386 = vperm.xlu0 %2385, %v1449
      %v2387 = vpop.permute.xlu0 %2386
      %2389 = vset.pattern.permute.xlu0 3
      %2390 = vperm.xlu0 %2389, %v1450
      %v2391 = vpop.permute.xlu0 %2390
      %2393 = vset.pattern.permute.xlu0 3
      %2394 = vperm.xlu0 %2393, %v1451
      %v2395 = vpop.permute.xlu0 %2394
      %v2397 = vmul.f32 %v1419, %v2271
      %v2398 = vmul.f32 %v1333, %v2275
      %v2399 = vmul.f32 %v1335, %v2279
      %v2400 = vmul.f32 %v1337, %v2283
      %v2401 = vmul.f32 %v1339, %v2287
      %v2402 = vmul.f32 %v1341, %v2291
      %v2403 = vmul.f32 %v1343, %v2295
      %v2404 = vmul.f32 %v1345, %v2299
      %v2405 = vmul.f32 %v1347, %v2303
      %v2406 = vmul.f32 %v1349, %v2307
      %v2407 = vmul.f32 %v1351, %v2311
      %v2408 = vmul.f32 %v1353, %v2315
      %v2409 = vmul.f32 %v1355, %v2319
      %v2410 = vmul.f32 %v1357, %v2323
      %v2411 = vmul.f32 %v1359, %v2327
      %v2412 = vmul.f32 %v1361, %v2331
      %v2413 = vmul.f32 %v1363, %v2335
      %v2414 = vmul.f32 %v1365, %v2339
      %v2415 = vmul.f32 %v1367, %v2343
      %v2416 = vmul.f32 %v1369, %v2347
      %v2417 = vmul.f32 %v1371, %v2351
      %v2418 = vmul.f32 %v1373, %v2355
      %v2419 = vmul.f32 %v1375, %v2359
      %v2420 = vmul.f32 %v1377, %v2363
      %v2421 = vmul.f32 %v1379, %v2367
      %v2422 = vmul.f32 %v1381, %v2371
      %v2423 = vmul.f32 %v1383, %v2375
      %v2424 = vmul.f32 %v1385, %v2379
      %v2425 = vmul.f32 %v1387, %v2383
      %v2426 = vmul.f32 %v1388, %v2387
      %v2427 = vmul.f32 %v1296, %v2391
      %v2428 = vmul.f32 %v1298, %v2395
      %v2429 = vld [vmem:[%s5 + $0x3] sm:$0x1]
      %v2430 = vlaneseq
      %v2431 = vshrl.u32 %v2430, 7
      %v2432 = vsub.s32 0, %v2431
      %v2433 = vrot.slane %v2429, %v2432
      %v2434 = vmul.f32 %v2397, %v2433
      %v2435 = vmul.f32 %v2398, %v2433
      %v2436 = vmul.f32 %v2399, %v2433
      %v2437 = vmul.f32 %v2400, %v2433
      %v2438 = vmul.f32 %v2401, %v2433
      %v2439 = vmul.f32 %v2402, %v2433
      %v2440 = vmul.f32 %v2403, %v2433
      %v2441 = vmul.f32 %v2404, %v2433
      %v2442 = vmul.f32 %v2405, %v2433
      %v2443 = vmul.f32 %v2406, %v2433
      %v2444 = vmul.f32 %v2407, %v2433
      %v2445 = vmul.f32 %v2408, %v2433
      %v2446 = vmul.f32 %v2409, %v2433
      %v2447 = vmul.f32 %v2410, %v2433
      %v2448 = vmul.f32 %v2411, %v2433
      %v2449 = vmul.f32 %v2412, %v2433
      %v2450 = vmul.f32 %v2413, %v2433
      %v2451 = vmul.f32 %v2414, %v2433
      %v2452 = vmul.f32 %v2415, %v2433
      %v2453 = vmul.f32 %v2416, %v2433
      %v2454 = vmul.f32 %v2417, %v2433
      %v2455 = vmul.f32 %v2418, %v2433
      %v2456 = vmul.f32 %v2419, %v2433
      %v2457 = vmul.f32 %v2420, %v2433
      %v2458 = vmul.f32 %v2421, %v2433
      %v2459 = vmul.f32 %v2422, %v2433
      %v2460 = vmul.f32 %v2423, %v2433
      %v2461 = vmul.f32 %v2424, %v2433
      %v2462 = vmul.f32 %v2425, %v2433
      %v2463 = vmul.f32 %v2426, %v2433
      %v2464 = vmul.f32 %v2427, %v2433
      %v2465 = vmul.f32 %v2428, %v2433
      %v2466 = vadd.f32 %v2237, %v2434
      %v2467 = vadd.f32 %v2238, %v2435
      %v2468 = vadd.f32 %v2239, %v2436
      %v2469 = vadd.f32 %v2240, %v2437
      %v2470 = vadd.f32 %v2241, %v2438
      %v2471 = vadd.f32 %v2242, %v2439
      %v2472 = vadd.f32 %v2243, %v2440
      %v2473 = vadd.f32 %v2244, %v2441
      %v2474 = vadd.f32 %v2245, %v2442
      %v2475 = vadd.f32 %v2246, %v2443
      %v2476 = vadd.f32 %v2247, %v2444
      %v2477 = vadd.f32 %v2248, %v2445
      %v2478 = vadd.f32 %v2249, %v2446
      %v2479 = vadd.f32 %v2250, %v2447
      %v2480 = vadd.f32 %v2251, %v2448
      %v2481 = vadd.f32 %v2252, %v2449
      %v2482 = vadd.f32 %v2253, %v2450
      %v2483 = vadd.f32 %v2254, %v2451
      %v2484 = vadd.f32 %v2255, %v2452
      %v2485 = vadd.f32 %v2256, %v2453
      %v2486 = vadd.f32 %v2257, %v2454
      %v2487 = vadd.f32 %v2258, %v2455
      %v2488 = vadd.f32 %v2259, %v2456
      %v2489 = vadd.f32 %v2260, %v2457
      %v2490 = vadd.f32 %v2261, %v2458
      %v2491 = vadd.f32 %v2262, %v2459
      %v2492 = vadd.f32 %v2263, %v2460
      %v2493 = vadd.f32 %v2264, %v2461
      %v2494 = vadd.f32 %v2265, %v2462
      %v2495 = vadd.f32 %v2266, %v2463
      %v2496 = vadd.f32 %v2267, %v2464
      %v2497 = vadd.f32 %v2268, %v2465
      %2498 = vset.pattern.permute.xlu0 4
      %2499 = vperm.xlu0 %2498, %v1420
      %v2500 = vpop.permute.xlu0 %2499
      %2502 = vset.pattern.permute.xlu0 4
      %2503 = vperm.xlu0 %2502, %v1421
      %v2504 = vpop.permute.xlu0 %2503
      %2506 = vset.pattern.permute.xlu0 4
      %2507 = vperm.xlu0 %2506, %v1422
      %v2508 = vpop.permute.xlu0 %2507
      %2510 = vset.pattern.permute.xlu0 4
      %2511 = vperm.xlu0 %2510, %v1423
      %v2512 = vpop.permute.xlu0 %2511
      %2514 = vset.pattern.permute.xlu0 4
      %2515 = vperm.xlu0 %2514, %v1424
      %v2516 = vpop.permute.xlu0 %2515
      %2518 = vset.pattern.permute.xlu0 4
      %2519 = vperm.xlu0 %2518, %v1425
      %v2520 = vpop.permute.xlu0 %2519
      %2522 = vset.pattern.permute.xlu0 4
      %2523 = vperm.xlu0 %2522, %v1426
      %v2524 = vpop.permute.xlu0 %2523
      %2526 = vset.pattern.permute.xlu0 4
      %2527 = vperm.xlu0 %2526, %v1427
      %v2528 = vpop.permute.xlu0 %2527
      %2530 = vset.pattern.permute.xlu0 4
      %2531 = vperm.xlu0 %2530, %v1428
      %v2532 = vpop.permute.xlu0 %2531
      %2534 = vset.pattern.permute.xlu0 4
      %2535 = vperm.xlu0 %2534, %v1429
      %v2536 = vpop.permute.xlu0 %2535
      %2538 = vset.pattern.permute.xlu0 4
      %2539 = vperm.xlu0 %2538, %v1430
      %v2540 = vpop.permute.xlu0 %2539
      %2542 = vset.pattern.permute.xlu0 4
      %2543 = vperm.xlu0 %2542, %v1431
      %v2544 = vpop.permute.xlu0 %2543
      %2546 = vset.pattern.permute.xlu0 4
      %2547 = vperm.xlu0 %2546, %v1432
      %v2548 = vpop.permute.xlu0 %2547
      %2550 = vset.pattern.permute.xlu0 4
      %2551 = vperm.xlu0 %2550, %v1433
      %v2552 = vpop.permute.xlu0 %2551
      %2554 = vset.pattern.permute.xlu0 4
      %2555 = vperm.xlu0 %2554, %v1434
      %v2556 = vpop.permute.xlu0 %2555
      %2558 = vset.pattern.permute.xlu0 4
      %2559 = vperm.xlu0 %2558, %v1435
      %v2560 = vpop.permute.xlu0 %2559
      %2562 = vset.pattern.permute.xlu0 4
      %2563 = vperm.xlu0 %2562, %v1436
      %v2564 = vpop.permute.xlu0 %2563
      %2566 = vset.pattern.permute.xlu0 4
      %2567 = vperm.xlu0 %2566, %v1437
      %v2568 = vpop.permute.xlu0 %2567
      %2570 = vset.pattern.permute.xlu0 4
      %2571 = vperm.xlu0 %2570, %v1438
      %v2572 = vpop.permute.xlu0 %2571
      %2574 = vset.pattern.permute.xlu0 4
      %2575 = vperm.xlu0 %2574, %v1439
      %v2576 = vpop.permute.xlu0 %2575
      %2578 = vset.pattern.permute.xlu0 4
      %2579 = vperm.xlu0 %2578, %v1440
      %v2580 = vpop.permute.xlu0 %2579
      %2582 = vset.pattern.permute.xlu0 4
      %2583 = vperm.xlu0 %2582, %v1441
      %v2584 = vpop.permute.xlu0 %2583
      %2586 = vset.pattern.permute.xlu0 4
      %2587 = vperm.xlu0 %2586, %v1442
      %v2588 = vpop.permute.xlu0 %2587
      %2590 = vset.pattern.permute.xlu0 4
      %2591 = vperm.xlu0 %2590, %v1443
      %v2592 = vpop.permute.xlu0 %2591
      %2594 = vset.pattern.permute.xlu0 4
      %2595 = vperm.xlu0 %2594, %v1444
      %v2596 = vpop.permute.xlu0 %2595
      %2598 = vset.pattern.permute.xlu0 4
      %2599 = vperm.xlu0 %2598, %v1445
      %v2600 = vpop.permute.xlu0 %2599
      %2602 = vset.pattern.permute.xlu0 4
      %2603 = vperm.xlu0 %2602, %v1446
      %v2604 = vpop.permute.xlu0 %2603
      %2606 = vset.pattern.permute.xlu0 4
      %2607 = vperm.xlu0 %2606, %v1447
      %v2608 = vpop.permute.xlu0 %2607
      %2610 = vset.pattern.permute.xlu0 4
      %2611 = vperm.xlu0 %2610, %v1448
      %v2612 = vpop.permute.xlu0 %2611
      %2614 = vset.pattern.permute.xlu0 4
      %2615 = vperm.xlu0 %2614, %v1449
      %v2616 = vpop.permute.xlu0 %2615
      %2618 = vset.pattern.permute.xlu0 4
      %2619 = vperm.xlu0 %2618, %v1450
      %v2620 = vpop.permute.xlu0 %2619
      %2622 = vset.pattern.permute.xlu0 4
      %2623 = vperm.xlu0 %2622, %v1451
      %v2624 = vpop.permute.xlu0 %2623
      %v2626 = vmul.f32 %v1132, %v2500
      %v2627 = vmul.f32 %v1137, %v2504
      %v2628 = vmul.f32 %v1142, %v2508
      %v2629 = vmul.f32 %v1147, %v2512
      %v2630 = vmul.f32 %v1152, %v2516
      %v2631 = vmul.f32 %v1157, %v2520
      %v2632 = vmul.f32 %v1162, %v2524
      %v2633 = vmul.f32 %v1167, %v2528
      %v2634 = vmul.f32 %v1172, %v2532
      %v2635 = vmul.f32 %v1177, %v2536
      %v2636 = vmul.f32 %v1182, %v2540
      %v2637 = vmul.f32 %v1187, %v2544
      %v2638 = vmul.f32 %v1192, %v2548
      %v2639 = vmul.f32 %v1197, %v2552
      %v2640 = vmul.f32 %v1202, %v2556
      %v2641 = vmul.f32 %v1207, %v2560
      %v2642 = vmul.f32 %v1212, %v2564
      %v2643 = vmul.f32 %v1217, %v2568
      %v2644 = vmul.f32 %v1222, %v2572
      %v2645 = vmul.f32 %v1227, %v2576
      %v2646 = vmul.f32 %v1232, %v2580
      %v2647 = vmul.f32 %v1237, %v2584
      %v2648 = vmul.f32 %v1242, %v2588
      %v2649 = vmul.f32 %v1247, %v2592
      %v2650 = vmul.f32 %v1252, %v2596
      %v2651 = vmul.f32 %v1257, %v2600
      %v2652 = vmul.f32 %v1262, %v2604
      %v2653 = vmul.f32 %v1267, %v2608
      %v2654 = vmul.f32 %v1272, %v2612
      %v2655 = vmul.f32 %v1277, %v2616
      %v2656 = vmul.f32 %v1282, %v2620
      %v2657 = vmul.f32 %v1287, %v2624
      %v2658 = vld [vmem:[%s5 + $0x4] sm:$0x1]
      %v2659 = vlaneseq
      %v2660 = vshrl.u32 %v2659, 7
      %v2661 = vsub.s32 0, %v2660
      %v2662 = vrot.slane %v2658, %v2661
      %v2663 = vmul.f32 %v2626, %v2662
      %v2664 = vmul.f32 %v2627, %v2662
      %v2665 = vmul.f32 %v2628, %v2662
      %v2666 = vmul.f32 %v2629, %v2662
      %v2667 = vmul.f32 %v2630, %v2662
      %v2668 = vmul.f32 %v2631, %v2662
      %v2669 = vmul.f32 %v2632, %v2662
      %v2670 = vmul.f32 %v2633, %v2662
      %v2671 = vmul.f32 %v2634, %v2662
      %v2672 = vmul.f32 %v2635, %v2662
      %v2673 = vmul.f32 %v2636, %v2662
      %v2674 = vmul.f32 %v2637, %v2662
      %v2675 = vmul.f32 %v2638, %v2662
      %v2676 = vmul.f32 %v2639, %v2662
      %v2677 = vmul.f32 %v2640, %v2662
      %v2678 = vmul.f32 %v2641, %v2662
      %v2679 = vmul.f32 %v2642, %v2662
      %v2680 = vmul.f32 %v2643, %v2662
      %v2681 = vmul.f32 %v2644, %v2662
      %v2682 = vmul.f32 %v2645, %v2662
      %v2683 = vmul.f32 %v2646, %v2662
      %v2684 = vmul.f32 %v2647, %v2662
      %v2685 = vmul.f32 %v2648, %v2662
      %v2686 = vmul.f32 %v2649, %v2662
      %v2687 = vmul.f32 %v2650, %v2662
      %v2688 = vmul.f32 %v2651, %v2662
      %v2689 = vmul.f32 %v2652, %v2662
      %v2690 = vmul.f32 %v2653, %v2662
      %v2691 = vmul.f32 %v2654, %v2662
      %v2692 = vmul.f32 %v2655, %v2662
      %v2693 = vmul.f32 %v2656, %v2662
      %v2694 = vmul.f32 %v2657, %v2662
      %v2695 = vadd.f32 %v2466, %v2663
      %v2696 = vadd.f32 %v2467, %v2664
      %v2697 = vadd.f32 %v2468, %v2665
      %v2698 = vadd.f32 %v2469, %v2666
      %v2699 = vadd.f32 %v2470, %v2667
      %v2700 = vadd.f32 %v2471, %v2668
      %v2701 = vadd.f32 %v2472, %v2669
      %v2702 = vadd.f32 %v2473, %v2670
      %v2703 = vadd.f32 %v2474, %v2671
      %v2704 = vadd.f32 %v2475, %v2672
      %v2705 = vadd.f32 %v2476, %v2673
      %v2706 = vadd.f32 %v2477, %v2674
      %v2707 = vadd.f32 %v2478, %v2675
      %v2708 = vadd.f32 %v2479, %v2676
      %v2709 = vadd.f32 %v2480, %v2677
      %v2710 = vadd.f32 %v2481, %v2678
      %v2711 = vadd.f32 %v2482, %v2679
      %v2712 = vadd.f32 %v2483, %v2680
      %v2713 = vadd.f32 %v2484, %v2681
      %v2714 = vadd.f32 %v2485, %v2682
      %v2715 = vadd.f32 %v2486, %v2683
      %v2716 = vadd.f32 %v2487, %v2684
      %v2717 = vadd.f32 %v2488, %v2685
      %v2718 = vadd.f32 %v2489, %v2686
      %v2719 = vadd.f32 %v2490, %v2687
      %v2720 = vadd.f32 %v2491, %v2688
      %v2721 = vadd.f32 %v2492, %v2689
      %v2722 = vadd.f32 %v2493, %v2690
      %v2723 = vadd.f32 %v2494, %v2691
      %v2724 = vadd.f32 %v2495, %v2692
      %v2725 = vadd.f32 %v2496, %v2693
      %v2726 = vadd.f32 %v2497, %v2694
      %2727 = vset.pattern.permute.xlu0 5
      %2728 = vperm.xlu0 %2727, %v1420
      %v2729 = vpop.permute.xlu0 %2728
      %2731 = vset.pattern.permute.xlu0 5
      %2732 = vperm.xlu0 %2731, %v1421
      %v2733 = vpop.permute.xlu0 %2732
      %2735 = vset.pattern.permute.xlu0 5
      %2736 = vperm.xlu0 %2735, %v1422
      %v2737 = vpop.permute.xlu0 %2736
      %2739 = vset.pattern.permute.xlu0 5
      %2740 = vperm.xlu0 %2739, %v1423
      %v2741 = vpop.permute.xlu0 %2740
      %2743 = vset.pattern.permute.xlu0 5
      %2744 = vperm.xlu0 %2743, %v1424
      %v2745 = vpop.permute.xlu0 %2744
      %2747 = vset.pattern.permute.xlu0 5
      %2748 = vperm.xlu0 %2747, %v1425
      %v2749 = vpop.permute.xlu0 %2748
      %2751 = vset.pattern.permute.xlu0 5
      %2752 = vperm.xlu0 %2751, %v1426
      %v2753 = vpop.permute.xlu0 %2752
      %2755 = vset.pattern.permute.xlu0 5
      %2756 = vperm.xlu0 %2755, %v1427
      %v2757 = vpop.permute.xlu0 %2756
      %2759 = vset.pattern.permute.xlu0 5
      %2760 = vperm.xlu0 %2759, %v1428
      %v2761 = vpop.permute.xlu0 %2760
      %2763 = vset.pattern.permute.xlu0 5
      %2764 = vperm.xlu0 %2763, %v1429
      %v2765 = vpop.permute.xlu0 %2764
      %2767 = vset.pattern.permute.xlu0 5
      %2768 = vperm.xlu0 %2767, %v1430
      %v2769 = vpop.permute.xlu0 %2768
      %2771 = vset.pattern.permute.xlu0 5
      %2772 = vperm.xlu0 %2771, %v1431
      %v2773 = vpop.permute.xlu0 %2772
      %2775 = vset.pattern.permute.xlu0 5
      %2776 = vperm.xlu0 %2775, %v1432
      %v2777 = vpop.permute.xlu0 %2776
      %2779 = vset.pattern.permute.xlu0 5
      %2780 = vperm.xlu0 %2779, %v1433
      %v2781 = vpop.permute.xlu0 %2780
      %2783 = vset.pattern.permute.xlu0 5
      %2784 = vperm.xlu0 %2783, %v1434
      %v2785 = vpop.permute.xlu0 %2784
      %2787 = vset.pattern.permute.xlu0 5
      %2788 = vperm.xlu0 %2787, %v1435
      %v2789 = vpop.permute.xlu0 %2788
      %2791 = vset.pattern.permute.xlu0 5
      %2792 = vperm.xlu0 %2791, %v1436
      %v2793 = vpop.permute.xlu0 %2792
      %2795 = vset.pattern.permute.xlu0 5
      %2796 = vperm.xlu0 %2795, %v1437
      %v2797 = vpop.permute.xlu0 %2796
      %2799 = vset.pattern.permute.xlu0 5
      %2800 = vperm.xlu0 %2799, %v1438
      %v2801 = vpop.permute.xlu0 %2800
      %2803 = vset.pattern.permute.xlu0 5
      %2804 = vperm.xlu0 %2803, %v1439
      %v2805 = vpop.permute.xlu0 %2804
      %2807 = vset.pattern.permute.xlu0 5
      %2808 = vperm.xlu0 %2807, %v1440
      %v2809 = vpop.permute.xlu0 %2808
      %2811 = vset.pattern.permute.xlu0 5
      %2812 = vperm.xlu0 %2811, %v1441
      %v2813 = vpop.permute.xlu0 %2812
      %2815 = vset.pattern.permute.xlu0 5
      %2816 = vperm.xlu0 %2815, %v1442
      %v2817 = vpop.permute.xlu0 %2816
      %2819 = vset.pattern.permute.xlu0 5
      %2820 = vperm.xlu0 %2819, %v1443
      %v2821 = vpop.permute.xlu0 %2820
      %2823 = vset.pattern.permute.xlu0 5
      %2824 = vperm.xlu0 %2823, %v1444
      %v2825 = vpop.permute.xlu0 %2824
      %2827 = vset.pattern.permute.xlu0 5
      %2828 = vperm.xlu0 %2827, %v1445
      %v2829 = vpop.permute.xlu0 %2828
      %2831 = vset.pattern.permute.xlu0 5
      %2832 = vperm.xlu0 %2831, %v1446
      %v2833 = vpop.permute.xlu0 %2832
      %2835 = vset.pattern.permute.xlu0 5
      %2836 = vperm.xlu0 %2835, %v1447
      %v2837 = vpop.permute.xlu0 %2836
      %2839 = vset.pattern.permute.xlu0 5
      %2840 = vperm.xlu0 %2839, %v1448
      %v2841 = vpop.permute.xlu0 %2840
      %2843 = vset.pattern.permute.xlu0 5
      %2844 = vperm.xlu0 %2843, %v1449
      %v2845 = vpop.permute.xlu0 %2844
      %2847 = vset.pattern.permute.xlu0 5
      %2848 = vperm.xlu0 %2847, %v1450
      %v2849 = vpop.permute.xlu0 %2848
      %2851 = vset.pattern.permute.xlu0 5
      %2852 = vperm.xlu0 %2851, %v1451
      %v2853 = vpop.permute.xlu0 %2852
      %v2855 = vmul.f32 %v1950, %v2729
      %v2856 = vmul.f32 %v1952, %v2733
      %v2857 = vmul.f32 %v1954, %v2737
      %v2858 = vmul.f32 %v1956, %v2741
      %v2859 = vmul.f32 %v1958, %v2745
      %v2860 = vmul.f32 %v1960, %v2749
      %v2861 = vmul.f32 %v1962, %v2753
      %v2862 = vmul.f32 %v1964, %v2757
      %v2863 = vmul.f32 %v1966, %v2761
      %v2864 = vmul.f32 %v1968, %v2765
      %v2865 = vmul.f32 %v1970, %v2769
      %v2866 = vmul.f32 %v1972, %v2773
      %v2867 = vmul.f32 %v1974, %v2777
      %v2868 = vmul.f32 %v1976, %v2781
      %v2869 = vmul.f32 %v1978, %v2785
      %v2870 = vmul.f32 %v1980, %v2789
      %v2871 = vmul.f32 %v1982, %v2793
      %v2872 = vmul.f32 %v1984, %v2797
      %v2873 = vmul.f32 %v1986, %v2801
      %v2874 = vmul.f32 %v1988, %v2805
      %v2875 = vmul.f32 %v1990, %v2809
      %v2876 = vmul.f32 %v1992, %v2813
      %v2877 = vmul.f32 %v1994, %v2817
      %v2878 = vmul.f32 %v1996, %v2821
      %v2879 = vmul.f32 %v1998, %v2825
      %v2880 = vmul.f32 %v2000, %v2829
      %v2881 = vmul.f32 %v2002, %v2833
      %v2882 = vmul.f32 %v2004, %v2837
      %v2883 = vmul.f32 %v2006, %v2841
      %v2884 = vmul.f32 %v2007, %v2845
      %v2885 = vmul.f32 %v1945, %v2849
      %v2886 = vmul.f32 %v2039, %v2853
      %v2887 = vld [vmem:[%s5 + $0x5] sm:$0x1]
      %v2888 = vlaneseq
      %v2889 = vshrl.u32 %v2888, 7
      %v2890 = vsub.s32 0, %v2889
      %v2891 = vrot.slane %v2887, %v2890
      %v2892 = vmul.f32 %v2855, %v2891
      %v2893 = vmul.f32 %v2856, %v2891
      %v2894 = vmul.f32 %v2857, %v2891
      %v2895 = vmul.f32 %v2858, %v2891
      %v2896 = vmul.f32 %v2859, %v2891
      %v2897 = vmul.f32 %v2860, %v2891
      %v2898 = vmul.f32 %v2861, %v2891
      %v2899 = vmul.f32 %v2862, %v2891
      %v2900 = vmul.f32 %v2863, %v2891
      %v2901 = vmul.f32 %v2864, %v2891
      %v2902 = vmul.f32 %v2865, %v2891
      %v2903 = vmul.f32 %v2866, %v2891
      %v2904 = vmul.f32 %v2867, %v2891
      %v2905 = vmul.f32 %v2868, %v2891
      %v2906 = vmul.f32 %v2869, %v2891
      %v2907 = vmul.f32 %v2870, %v2891
      %v2908 = vmul.f32 %v2871, %v2891
      %v2909 = vmul.f32 %v2872, %v2891
      %v2910 = vmul.f32 %v2873, %v2891
      %v2911 = vmul.f32 %v2874, %v2891
      %v2912 = vmul.f32 %v2875, %v2891
      %v2913 = vmul.f32 %v2876, %v2891
      %v2914 = vmul.f32 %v2877, %v2891
      %v2915 = vmul.f32 %v2878, %v2891
      %v2916 = vmul.f32 %v2879, %v2891
      %v2917 = vmul.f32 %v2880, %v2891
      %v2918 = vmul.f32 %v2881, %v2891
      %v2919 = vmul.f32 %v2882, %v2891
      %v2920 = vmul.f32 %v2883, %v2891
      %v2921 = vmul.f32 %v2884, %v2891
      %v2922 = vmul.f32 %v2885, %v2891
      %v2923 = vmul.f32 %v2886, %v2891
      %v2924 = vadd.f32 %v2695, %v2892
      %v2925 = vadd.f32 %v2696, %v2893
      %v2926 = vadd.f32 %v2697, %v2894
      %v2927 = vadd.f32 %v2698, %v2895
      %v2928 = vadd.f32 %v2699, %v2896
      %v2929 = vadd.f32 %v2700, %v2897
      %v2930 = vadd.f32 %v2701, %v2898
      %v2931 = vadd.f32 %v2702, %v2899
      %v2932 = vadd.f32 %v2703, %v2900
      %v2933 = vadd.f32 %v2704, %v2901
      %v2934 = vadd.f32 %v2705, %v2902
      %v2935 = vadd.f32 %v2706, %v2903
      %v2936 = vadd.f32 %v2707, %v2904
      %v2937 = vadd.f32 %v2708, %v2905
      %v2938 = vadd.f32 %v2709, %v2906
      %v2939 = vadd.f32 %v2710, %v2907
      %v2940 = vadd.f32 %v2711, %v2908
      %v2941 = vadd.f32 %v2712, %v2909
      %v2942 = vadd.f32 %v2713, %v2910
      %v2943 = vadd.f32 %v2714, %v2911
      %v2944 = vadd.f32 %v2715, %v2912
      %v2945 = vadd.f32 %v2716, %v2913
      %v2946 = vadd.f32 %v2717, %v2914
      %v2947 = vadd.f32 %v2718, %v2915
      %v2948 = vadd.f32 %v2719, %v2916
      %v2949 = vadd.f32 %v2720, %v2917
      %v2950 = vadd.f32 %v2721, %v2918
      %v2951 = vadd.f32 %v2722, %v2919
      %v2952 = vadd.f32 %v2723, %v2920
      %v2953 = vadd.f32 %v2724, %v2921
      %v2954 = vadd.f32 %v2725, %v2922
      %v2955 = vadd.f32 %v2726, %v2923
      %2956 = vset.pattern.permute.xlu0 6
      %2957 = vperm.xlu0 %2956, %v1420
      %v2958 = vpop.permute.xlu0 %2957
      %2960 = vset.pattern.permute.xlu0 6
      %2961 = vperm.xlu0 %2960, %v1421
      %v2962 = vpop.permute.xlu0 %2961
      %2964 = vset.pattern.permute.xlu0 6
      %2965 = vperm.xlu0 %2964, %v1422
      %v2966 = vpop.permute.xlu0 %2965
      %2968 = vset.pattern.permute.xlu0 6
      %2969 = vperm.xlu0 %2968, %v1423
      %v2970 = vpop.permute.xlu0 %2969
      %2972 = vset.pattern.permute.xlu0 6
      %2973 = vperm.xlu0 %2972, %v1424
      %v2974 = vpop.permute.xlu0 %2973
      %2976 = vset.pattern.permute.xlu0 6
      %2977 = vperm.xlu0 %2976, %v1425
      %v2978 = vpop.permute.xlu0 %2977
      %2980 = vset.pattern.permute.xlu0 6
      %2981 = vperm.xlu0 %2980, %v1426
      %v2982 = vpop.permute.xlu0 %2981
      %2984 = vset.pattern.permute.xlu0 6
      %2985 = vperm.xlu0 %2984, %v1427
      %v2986 = vpop.permute.xlu0 %2985
      %2988 = vset.pattern.permute.xlu0 6
      %2989 = vperm.xlu0 %2988, %v1428
      %v2990 = vpop.permute.xlu0 %2989
      %2992 = vset.pattern.permute.xlu0 6
      %2993 = vperm.xlu0 %2992, %v1429
      %v2994 = vpop.permute.xlu0 %2993
      %2996 = vset.pattern.permute.xlu0 6
      %2997 = vperm.xlu0 %2996, %v1430
      %v2998 = vpop.permute.xlu0 %2997
      %3000 = vset.pattern.permute.xlu0 6
      %3001 = vperm.xlu0 %3000, %v1431
      %v3002 = vpop.permute.xlu0 %3001
      %3004 = vset.pattern.permute.xlu0 6
      %3005 = vperm.xlu0 %3004, %v1432
      %v3006 = vpop.permute.xlu0 %3005
      %3008 = vset.pattern.permute.xlu0 6
      %3009 = vperm.xlu0 %3008, %v1433
      %v3010 = vpop.permute.xlu0 %3009
      %3012 = vset.pattern.permute.xlu0 6
      %3013 = vperm.xlu0 %3012, %v1434
      %v3014 = vpop.permute.xlu0 %3013
      %3016 = vset.pattern.permute.xlu0 6
      %3017 = vperm.xlu0 %3016, %v1435
      %v3018 = vpop.permute.xlu0 %3017
      %3020 = vset.pattern.permute.xlu0 6
      %3021 = vperm.xlu0 %3020, %v1436
      %v3022 = vpop.permute.xlu0 %3021
      %3024 = vset.pattern.permute.xlu0 6
      %3025 = vperm.xlu0 %3024, %v1437
      %v3026 = vpop.permute.xlu0 %3025
      %3028 = vset.pattern.permute.xlu0 6
      %3029 = vperm.xlu0 %3028, %v1438
      %v3030 = vpop.permute.xlu0 %3029
      %3032 = vset.pattern.permute.xlu0 6
      %3033 = vperm.xlu0 %3032, %v1439
      %v3034 = vpop.permute.xlu0 %3033
      %3036 = vset.pattern.permute.xlu0 6
      %3037 = vperm.xlu0 %3036, %v1440
      %v3038 = vpop.permute.xlu0 %3037
      %3040 = vset.pattern.permute.xlu0 6
      %3041 = vperm.xlu0 %3040, %v1441
      %v3042 = vpop.permute.xlu0 %3041
      %3044 = vset.pattern.permute.xlu0 6
      %3045 = vperm.xlu0 %3044, %v1442
      %v3046 = vpop.permute.xlu0 %3045
      %3048 = vset.pattern.permute.xlu0 6
      %3049 = vperm.xlu0 %3048, %v1443
      %v3050 = vpop.permute.xlu0 %3049
      %3052 = vset.pattern.permute.xlu0 6
      %3053 = vperm.xlu0 %3052, %v1444
      %v3054 = vpop.permute.xlu0 %3053
      %3056 = vset.pattern.permute.xlu0 6
      %3057 = vperm.xlu0 %3056, %v1445
      %v3058 = vpop.permute.xlu0 %3057
      %3060 = vset.pattern.permute.xlu0 6
      %3061 = vperm.xlu0 %3060, %v1446
      %v3062 = vpop.permute.xlu0 %3061
      %3064 = vset.pattern.permute.xlu0 6
      %3065 = vperm.xlu0 %3064, %v1447
      %v3066 = vpop.permute.xlu0 %3065
      %3068 = vset.pattern.permute.xlu0 6
      %3069 = vperm.xlu0 %3068, %v1448
      %v3070 = vpop.permute.xlu0 %3069
      %3072 = vset.pattern.permute.xlu0 6
      %3073 = vperm.xlu0 %3072, %v1449
      %v3074 = vpop.permute.xlu0 %3073
      %3076 = vset.pattern.permute.xlu0 6
      %3077 = vperm.xlu0 %3076, %v1450
      %v3078 = vpop.permute.xlu0 %3077
      %3080 = vset.pattern.permute.xlu0 6
      %3081 = vperm.xlu0 %3080, %v1451
      %v3082 = vpop.permute.xlu0 %3081
      %v3084 = vmul.f32 %v1335, %v2958
      %v3085 = vmul.f32 %v1337, %v2962
      %v3086 = vmul.f32 %v1339, %v2966
      %v3087 = vmul.f32 %v1341, %v2970
      %v3088 = vmul.f32 %v1343, %v2974
      %v3089 = vmul.f32 %v1345, %v2978
      %v3090 = vmul.f32 %v1347, %v2982
      %v3091 = vmul.f32 %v1349, %v2986
      %v3092 = vmul.f32 %v1351, %v2990
      %v3093 = vmul.f32 %v1353, %v2994
      %v3094 = vmul.f32 %v1355, %v2998
      %v3095 = vmul.f32 %v1357, %v3002
      %v3096 = vmul.f32 %v1359, %v3006
      %v3097 = vmul.f32 %v1361, %v3010
      %v3098 = vmul.f32 %v1363, %v3014
      %v3099 = vmul.f32 %v1365, %v3018
      %v3100 = vmul.f32 %v1367, %v3022
      %v3101 = vmul.f32 %v1369, %v3026
      %v3102 = vmul.f32 %v1371, %v3030
      %v3103 = vmul.f32 %v1373, %v3034
      %v3104 = vmul.f32 %v1375, %v3038
      %v3105 = vmul.f32 %v1377, %v3042
      %v3106 = vmul.f32 %v1379, %v3046
      %v3107 = vmul.f32 %v1381, %v3050
      %v3108 = vmul.f32 %v1383, %v3054
      %v3109 = vmul.f32 %v1385, %v3058
      %v3110 = vmul.f32 %v1387, %v3062
      %v3111 = vmul.f32 %v1388, %v3066
      %v3112 = vmul.f32 %v1296, %v3070
      %v3113 = vmul.f32 %v1298, %v3074
      %v3114 = vmul.f32 %v1419, %v3078
      %v3115 = vmul.f32 %v1333, %v3082
      %v3116 = vld [vmem:[%s5 + $0x6] sm:$0x1]
      %v3117 = vlaneseq
      %v3118 = vshrl.u32 %v3117, 7
      %v3119 = vsub.s32 0, %v3118
      %v3120 = vrot.slane %v3116, %v3119
      %v3121 = vmul.f32 %v3084, %v3120
      %v3122 = vmul.f32 %v3085, %v3120
      %v3123 = vmul.f32 %v3086, %v3120
      %v3124 = vmul.f32 %v3087, %v3120
      %v3125 = vmul.f32 %v3088, %v3120
      %v3126 = vmul.f32 %v3089, %v3120
      %v3127 = vmul.f32 %v3090, %v3120
      %v3128 = vmul.f32 %v3091, %v3120
      %v3129 = vmul.f32 %v3092, %v3120
      %v3130 = vmul.f32 %v3093, %v3120
      %v3131 = vmul.f32 %v3094, %v3120
      %v3132 = vmul.f32 %v3095, %v3120
      %v3133 = vmul.f32 %v3096, %v3120
      %v3134 = vmul.f32 %v3097, %v3120
      %v3135 = vmul.f32 %v3098, %v3120
      %v3136 = vmul.f32 %v3099, %v3120
      %v3137 = vmul.f32 %v3100, %v3120
      %v3138 = vmul.f32 %v3101, %v3120
      %v3139 = vmul.f32 %v3102, %v3120
      %v3140 = vmul.f32 %v3103, %v3120
      %v3141 = vmul.f32 %v3104, %v3120
      %v3142 = vmul.f32 %v3105, %v3120
      %v3143 = vmul.f32 %v3106, %v3120
      %v3144 = vmul.f32 %v3107, %v3120
      %v3145 = vmul.f32 %v3108, %v3120
      %v3146 = vmul.f32 %v3109, %v3120
      %v3147 = vmul.f32 %v3110, %v3120
      %v3148 = vmul.f32 %v3111, %v3120
      %v3149 = vmul.f32 %v3112, %v3120
      %v3150 = vmul.f32 %v3113, %v3120
      %v3151 = vmul.f32 %v3114, %v3120
      %v3152 = vmul.f32 %v3115, %v3120
      %v3153 = vadd.f32 %v2924, %v3121
      %v3154 = vadd.f32 %v2925, %v3122
      %v3155 = vadd.f32 %v2926, %v3123
      %v3156 = vadd.f32 %v2927, %v3124
      %v3157 = vadd.f32 %v2928, %v3125
      %v3158 = vadd.f32 %v2929, %v3126
      %v3159 = vadd.f32 %v2930, %v3127
      %v3160 = vadd.f32 %v2931, %v3128
      %v3161 = vadd.f32 %v2932, %v3129
      %v3162 = vadd.f32 %v2933, %v3130
      %v3163 = vadd.f32 %v2934, %v3131
      %v3164 = vadd.f32 %v2935, %v3132
      %v3165 = vadd.f32 %v2936, %v3133
      %v3166 = vadd.f32 %v2937, %v3134
      %v3167 = vadd.f32 %v2938, %v3135
      %v3168 = vadd.f32 %v2939, %v3136
      %v3169 = vadd.f32 %v2940, %v3137
      %v3170 = vadd.f32 %v2941, %v3138
      %v3171 = vadd.f32 %v2942, %v3139
      %v3172 = vadd.f32 %v2943, %v3140
      %v3173 = vadd.f32 %v2944, %v3141
      %v3174 = vadd.f32 %v2945, %v3142
      %v3175 = vadd.f32 %v2946, %v3143
      %v3176 = vadd.f32 %v2947, %v3144
      %v3177 = vadd.f32 %v2948, %v3145
      %v3178 = vadd.f32 %v2949, %v3146
      %v3179 = vadd.f32 %v2950, %v3147
      %v3180 = vadd.f32 %v2951, %v3148
      %v3181 = vadd.f32 %v2952, %v3149
      %v3182 = vadd.f32 %v2953, %v3150
      %v3183 = vadd.f32 %v2954, %v3151
      %v3184 = vadd.f32 %v2955, %v3152
      %3185 = vset.pattern.permute.xlu0 7
      %3186 = vperm.xlu0 %3185, %v1420
      %v3187 = vpop.permute.xlu0 %3186
      %3189 = vset.pattern.permute.xlu0 7
      %3190 = vperm.xlu0 %3189, %v1421
      %v3191 = vpop.permute.xlu0 %3190
      %3193 = vset.pattern.permute.xlu0 7
      %3194 = vperm.xlu0 %3193, %v1422
      %v3195 = vpop.permute.xlu0 %3194
      %3197 = vset.pattern.permute.xlu0 7
      %3198 = vperm.xlu0 %3197, %v1423
      %v3199 = vpop.permute.xlu0 %3198
      %3201 = vset.pattern.permute.xlu0 7
      %3202 = vperm.xlu0 %3201, %v1424
      %v3203 = vpop.permute.xlu0 %3202
      %3205 = vset.pattern.permute.xlu0 7
      %3206 = vperm.xlu0 %3205, %v1425
      %v3207 = vpop.permute.xlu0 %3206
      %3209 = vset.pattern.permute.xlu0 7
      %3210 = vperm.xlu0 %3209, %v1426
      %v3211 = vpop.permute.xlu0 %3210
      %3213 = vset.pattern.permute.xlu0 7
      %3214 = vperm.xlu0 %3213, %v1427
      %v3215 = vpop.permute.xlu0 %3214
      %3217 = vset.pattern.permute.xlu0 7
      %3218 = vperm.xlu0 %3217, %v1428
      %v3219 = vpop.permute.xlu0 %3218
      %3221 = vset.pattern.permute.xlu0 7
      %3222 = vperm.xlu0 %3221, %v1429
      %v3223 = vpop.permute.xlu0 %3222
      %3225 = vset.pattern.permute.xlu0 7
      %3226 = vperm.xlu0 %3225, %v1430
      %v3227 = vpop.permute.xlu0 %3226
      %3229 = vset.pattern.permute.xlu0 7
      %3230 = vperm.xlu0 %3229, %v1431
      %v3231 = vpop.permute.xlu0 %3230
      %3233 = vset.pattern.permute.xlu0 7
      %3234 = vperm.xlu0 %3233, %v1432
      %v3235 = vpop.permute.xlu0 %3234
      %3237 = vset.pattern.permute.xlu0 7
      %3238 = vperm.xlu0 %3237, %v1433
      %v3239 = vpop.permute.xlu0 %3238
      %3241 = vset.pattern.permute.xlu0 7
      %3242 = vperm.xlu0 %3241, %v1434
      %v3243 = vpop.permute.xlu0 %3242
      %3245 = vset.pattern.permute.xlu0 7
      %3246 = vperm.xlu0 %3245, %v1435
      %v3247 = vpop.permute.xlu0 %3246
      %3249 = vset.pattern.permute.xlu0 7
      %3250 = vperm.xlu0 %3249, %v1436
      %v3251 = vpop.permute.xlu0 %3250
      %3253 = vset.pattern.permute.xlu0 7
      %3254 = vperm.xlu0 %3253, %v1437
      %v3255 = vpop.permute.xlu0 %3254
      %3257 = vset.pattern.permute.xlu0 7
      %3258 = vperm.xlu0 %3257, %v1438
      %v3259 = vpop.permute.xlu0 %3258
      %3261 = vset.pattern.permute.xlu0 7
      %3262 = vperm.xlu0 %3261, %v1439
      %v3263 = vpop.permute.xlu0 %3262
      %3265 = vset.pattern.permute.xlu0 7
      %3266 = vperm.xlu0 %3265, %v1440
      %v3267 = vpop.permute.xlu0 %3266
      %3269 = vset.pattern.permute.xlu0 7
      %3270 = vperm.xlu0 %3269, %v1441
      %v3271 = vpop.permute.xlu0 %3270
      %3273 = vset.pattern.permute.xlu0 7
      %3274 = vperm.xlu0 %3273, %v1442
      %v3275 = vpop.permute.xlu0 %3274
      %3277 = vset.pattern.permute.xlu0 7
      %3278 = vperm.xlu0 %3277, %v1443
      %v3279 = vpop.permute.xlu0 %3278
      %3281 = vset.pattern.permute.xlu0 7
      %3282 = vperm.xlu0 %3281, %v1444
      %v3283 = vpop.permute.xlu0 %3282
      %3285 = vset.pattern.permute.xlu0 7
      %3286 = vperm.xlu0 %3285, %v1445
      %v3287 = vpop.permute.xlu0 %3286
      %3289 = vset.pattern.permute.xlu0 7
      %3290 = vperm.xlu0 %3289, %v1446
      %v3291 = vpop.permute.xlu0 %3290
      %3293 = vset.pattern.permute.xlu0 7
      %3294 = vperm.xlu0 %3293, %v1447
      %v3295 = vpop.permute.xlu0 %3294
      %3297 = vset.pattern.permute.xlu0 7
      %3298 = vperm.xlu0 %3297, %v1448
      %v3299 = vpop.permute.xlu0 %3298
      %3301 = vset.pattern.permute.xlu0 7
      %3302 = vperm.xlu0 %3301, %v1449
      %v3303 = vpop.permute.xlu0 %3302
      %3305 = vset.pattern.permute.xlu0 7
      %3306 = vperm.xlu0 %3305, %v1450
      %v3307 = vpop.permute.xlu0 %3306
      %3309 = vset.pattern.permute.xlu0 7
      %3310 = vperm.xlu0 %3309, %v1451
      %v3311 = vpop.permute.xlu0 %3310
      %v3313 = vmul.f32 %v1142, %v3187
      %v3314 = vmul.f32 %v1147, %v3191
      %v3315 = vmul.f32 %v1152, %v3195
      %v3316 = vmul.f32 %v1157, %v3199
      %v3317 = vmul.f32 %v1162, %v3203
      %v3318 = vmul.f32 %v1167, %v3207
      %v3319 = vmul.f32 %v1172, %v3211
      %v3320 = vmul.f32 %v1177, %v3215
      %v3321 = vmul.f32 %v1182, %v3219
      %v3322 = vmul.f32 %v1187, %v3223
      %v3323 = vmul.f32 %v1192, %v3227
      %v3324 = vmul.f32 %v1197, %v3231
      %v3325 = vmul.f32 %v1202, %v3235
      %v3326 = vmul.f32 %v1207, %v3239
      %v3327 = vmul.f32 %v1212, %v3243
      %v3328 = vmul.f32 %v1217, %v3247
      %v3329 = vmul.f32 %v1222, %v3251
      %v3330 = vmul.f32 %v1227, %v3255
      %v3331 = vmul.f32 %v1232, %v3259
      %v3332 = vmul.f32 %v1237, %v3263
      %v3333 = vmul.f32 %v1242, %v3267
      %v3334 = vmul.f32 %v1247, %v3271
      %v3335 = vmul.f32 %v1252, %v3275
      %v3336 = vmul.f32 %v1257, %v3279
      %v3337 = vmul.f32 %v1262, %v3283
      %v3338 = vmul.f32 %v1267, %v3287
      %v3339 = vmul.f32 %v1272, %v3291
      %v3340 = vmul.f32 %v1277, %v3295
      %v3341 = vmul.f32 %v1282, %v3299
      %v3342 = vmul.f32 %v1287, %v3303
      %v3343 = vmul.f32 %v1132, %v3307
      %v3344 = vmul.f32 %v1137, %v3311
      %v3345 = vld [vmem:[%s5 + $0x7] sm:$0x1]
      %v3346 = vlaneseq
      %v3347 = vshrl.u32 %v3346, 7
      %v3348 = vsub.s32 0, %v3347
      %v3349 = vrot.slane %v3345, %v3348
      %v3350 = vmul.f32 %v3313, %v3349
      %v3351 = vmul.f32 %v3314, %v3349
      %v3352 = vmul.f32 %v3315, %v3349
      %v3353 = vmul.f32 %v3316, %v3349
      %v3354 = vmul.f32 %v3317, %v3349
      %v3355 = vmul.f32 %v3318, %v3349
      %v3356 = vmul.f32 %v3319, %v3349
      %v3357 = vmul.f32 %v3320, %v3349
      %v3358 = vmul.f32 %v3321, %v3349
      %v3359 = vmul.f32 %v3322, %v3349
      %v3360 = vmul.f32 %v3323, %v3349
      %v3361 = vmul.f32 %v3324, %v3349
      %v3362 = vmul.f32 %v3325, %v3349
      %v3363 = vmul.f32 %v3326, %v3349
      %v3364 = vmul.f32 %v3327, %v3349
      %v3365 = vmul.f32 %v3328, %v3349
      %v3366 = vmul.f32 %v3329, %v3349
      %v3367 = vmul.f32 %v3330, %v3349
      %v3368 = vmul.f32 %v3331, %v3349
      %v3369 = vmul.f32 %v3332, %v3349
      %v3370 = vmul.f32 %v3333, %v3349
      %v3371 = vmul.f32 %v3334, %v3349
      %v3372 = vmul.f32 %v3335, %v3349
      %v3373 = vmul.f32 %v3336, %v3349
      %v3374 = vmul.f32 %v3337, %v3349
      %v3375 = vmul.f32 %v3338, %v3349
      %v3376 = vmul.f32 %v3339, %v3349
      %v3377 = vmul.f32 %v3340, %v3349
      %v3378 = vmul.f32 %v3341, %v3349
      %v3379 = vmul.f32 %v3342, %v3349
      %v3380 = vmul.f32 %v3343, %v3349
      %v3381 = vmul.f32 %v3344, %v3349
      %v3382 = vadd.f32 %v3153, %v3350
      %v3383 = vadd.f32 %v3154, %v3351
      %v3384 = vadd.f32 %v3155, %v3352
      %v3385 = vadd.f32 %v3156, %v3353
      %v3386 = vadd.f32 %v3157, %v3354
      %v3387 = vadd.f32 %v3158, %v3355
      %v3388 = vadd.f32 %v3159, %v3356
      %v3389 = vadd.f32 %v3160, %v3357
      %v3390 = vadd.f32 %v3161, %v3358
      %v3391 = vadd.f32 %v3162, %v3359
      %v3392 = vadd.f32 %v3163, %v3360
      %v3393 = vadd.f32 %v3164, %v3361
      %v3394 = vadd.f32 %v3165, %v3362
      %v3395 = vadd.f32 %v3166, %v3363
      %v3396 = vadd.f32 %v3167, %v3364
      %v3397 = vadd.f32 %v3168, %v3365
      %v3398 = vadd.f32 %v3169, %v3366
      %v3399 = vadd.f32 %v3170, %v3367
      %v3400 = vadd.f32 %v3171, %v3368
      %v3401 = vadd.f32 %v3172, %v3369
      %v3402 = vadd.f32 %v3173, %v3370
      %v3403 = vadd.f32 %v3174, %v3371
      %v3404 = vadd.f32 %v3175, %v3372
      %v3405 = vadd.f32 %v3176, %v3373
      %v3406 = vadd.f32 %v3177, %v3374
      %v3407 = vadd.f32 %v3178, %v3375
      %v3408 = vadd.f32 %v3179, %v3376
      %v3409 = vadd.f32 %v3180, %v3377
      %v3410 = vadd.f32 %v3181, %v3378
      %v3411 = vadd.f32 %v3182, %v3379
      %v3412 = vadd.f32 %v3183, %v3380
      %v3413 = vadd.f32 %v3184, %v3381
      %3414 = vset.pattern.permute.xlu0 8
      %3415 = vperm.xlu0 %3414, %v1420
      %v3416 = vpop.permute.xlu0 %3415
      %3418 = vset.pattern.permute.xlu0 8
      %3419 = vperm.xlu0 %3418, %v1421
      %v3420 = vpop.permute.xlu0 %3419
      %3422 = vset.pattern.permute.xlu0 8
      %3423 = vperm.xlu0 %3422, %v1422
      %v3424 = vpop.permute.xlu0 %3423
      %3426 = vset.pattern.permute.xlu0 8
      %3427 = vperm.xlu0 %3426, %v1423
      %v3428 = vpop.permute.xlu0 %3427
      %3430 = vset.pattern.permute.xlu0 8
      %3431 = vperm.xlu0 %3430, %v1424
      %v3432 = vpop.permute.xlu0 %3431
      %3434 = vset.pattern.permute.xlu0 8
      %3435 = vperm.xlu0 %3434, %v1425
      %v3436 = vpop.permute.xlu0 %3435
      %3438 = vset.pattern.permute.xlu0 8
      %3439 = vperm.xlu0 %3438, %v1426
      %v3440 = vpop.permute.xlu0 %3439
      %3442 = vset.pattern.permute.xlu0 8
      %3443 = vperm.xlu0 %3442, %v1427
      %v3444 = vpop.permute.xlu0 %3443
      %3446 = vset.pattern.permute.xlu0 8
      %3447 = vperm.xlu0 %3446, %v1428
      %v3448 = vpop.permute.xlu0 %3447
      %3450 = vset.pattern.permute.xlu0 8
      %3451 = vperm.xlu0 %3450, %v1429
      %v3452 = vpop.permute.xlu0 %3451
      %3454 = vset.pattern.permute.xlu0 8
      %3455 = vperm.xlu0 %3454, %v1430
      %v3456 = vpop.permute.xlu0 %3455
      %3458 = vset.pattern.permute.xlu0 8
      %3459 = vperm.xlu0 %3458, %v1431
      %v3460 = vpop.permute.xlu0 %3459
      %3462 = vset.pattern.permute.xlu0 8
      %3463 = vperm.xlu0 %3462, %v1432
      %v3464 = vpop.permute.xlu0 %3463
      %3466 = vset.pattern.permute.xlu0 8
      %3467 = vperm.xlu0 %3466, %v1433
      %v3468 = vpop.permute.xlu0 %3467
      %3470 = vset.pattern.permute.xlu0 8
      %3471 = vperm.xlu0 %3470, %v1434
      %v3472 = vpop.permute.xlu0 %3471
      %3474 = vset.pattern.permute.xlu0 8
      %3475 = vperm.xlu0 %3474, %v1435
      %v3476 = vpop.permute.xlu0 %3475
      %3478 = vset.pattern.permute.xlu0 8
      %3479 = vperm.xlu0 %3478, %v1436
      %v3480 = vpop.permute.xlu0 %3479
      %3482 = vset.pattern.permute.xlu0 8
      %3483 = vperm.xlu0 %3482, %v1437
      %v3484 = vpop.permute.xlu0 %3483
      %3486 = vset.pattern.permute.xlu0 8
      %3487 = vperm.xlu0 %3486, %v1438
      %v3488 = vpop.permute.xlu0 %3487
      %3490 = vset.pattern.permute.xlu0 8
      %3491 = vperm.xlu0 %3490, %v1439
      %v3492 = vpop.permute.xlu0 %3491
      %3494 = vset.pattern.permute.xlu0 8
      %3495 = vperm.xlu0 %3494, %v1440
      %v3496 = vpop.permute.xlu0 %3495
      %3498 = vset.pattern.permute.xlu0 8
      %3499 = vperm.xlu0 %3498, %v1441
      %v3500 = vpop.permute.xlu0 %3499
      %3502 = vset.pattern.permute.xlu0 8
      %3503 = vperm.xlu0 %3502, %v1442
      %v3504 = vpop.permute.xlu0 %3503
      %3506 = vset.pattern.permute.xlu0 8
      %3507 = vperm.xlu0 %3506, %v1443
      %v3508 = vpop.permute.xlu0 %3507
      %3510 = vset.pattern.permute.xlu0 8
      %3511 = vperm.xlu0 %3510, %v1444
      %v3512 = vpop.permute.xlu0 %3511
      %3514 = vset.pattern.permute.xlu0 8
      %3515 = vperm.xlu0 %3514, %v1445
      %v3516 = vpop.permute.xlu0 %3515
      %3518 = vset.pattern.permute.xlu0 8
      %3519 = vperm.xlu0 %3518, %v1446
      %v3520 = vpop.permute.xlu0 %3519
      %3522 = vset.pattern.permute.xlu0 8
      %3523 = vperm.xlu0 %3522, %v1447
      %v3524 = vpop.permute.xlu0 %3523
      %3526 = vset.pattern.permute.xlu0 8
      %3527 = vperm.xlu0 %3526, %v1448
      %v3528 = vpop.permute.xlu0 %3527
      %3530 = vset.pattern.permute.xlu0 8
      %3531 = vperm.xlu0 %3530, %v1449
      %v3532 = vpop.permute.xlu0 %3531
      %3534 = vset.pattern.permute.xlu0 8
      %3535 = vperm.xlu0 %3534, %v1450
      %v3536 = vpop.permute.xlu0 %3535
      %3538 = vset.pattern.permute.xlu0 8
      %3539 = vperm.xlu0 %3538, %v1451
      %v3540 = vpop.permute.xlu0 %3539
      %v3542 = vmul.f32 %v1954, %v3416
      %v3543 = vmul.f32 %v1956, %v3420
      %v3544 = vmul.f32 %v1958, %v3424
      %v3545 = vmul.f32 %v1960, %v3428
      %v3546 = vmul.f32 %v1962, %v3432
      %v3547 = vmul.f32 %v1964, %v3436
      %v3548 = vmul.f32 %v1966, %v3440
      %v3549 = vmul.f32 %v1968, %v3444
      %v3550 = vmul.f32 %v1970, %v3448
      %v3551 = vmul.f32 %v1972, %v3452
      %v3552 = vmul.f32 %v1974, %v3456
      %v3553 = vmul.f32 %v1976, %v3460
      %v3554 = vmul.f32 %v1978, %v3464
      %v3555 = vmul.f32 %v1980, %v3468
      %v3556 = vmul.f32 %v1982, %v3472
      %v3557 = vmul.f32 %v1984, %v3476
      %v3558 = vmul.f32 %v1986, %v3480
      %v3559 = vmul.f32 %v1988, %v3484
      %v3560 = vmul.f32 %v1990, %v3488
      %v3561 = vmul.f32 %v1992, %v3492
      %v3562 = vmul.f32 %v1994, %v3496
      %v3563 = vmul.f32 %v1996, %v3500
      %v3564 = vmul.f32 %v1998, %v3504
      %v3565 = vmul.f32 %v2000, %v3508
      %v3566 = vmul.f32 %v2002, %v3512
      %v3567 = vmul.f32 %v2004, %v3516
      %v3568 = vmul.f32 %v2006, %v3520
      %v3569 = vmul.f32 %v2007, %v3524
      %v3570 = vmul.f32 %v1945, %v3528
      %v3571 = vmul.f32 %v2039, %v3532
      %v3572 = vmul.f32 %v1950, %v3536
      %v3573 = vmul.f32 %v1952, %v3540
      %v3574 = vld [vmem:[%s5 + $0x8] sm:$0x1]
      %v3575 = vlaneseq
      %v3576 = vshrl.u32 %v3575, 7
      %v3577 = vsub.s32 0, %v3576
      %v3578 = vrot.slane %v3574, %v3577
      %v3579 = vmul.f32 %v3542, %v3578
      %v3580 = vmul.f32 %v3543, %v3578
      %v3581 = vmul.f32 %v3544, %v3578
      %v3582 = vmul.f32 %v3545, %v3578
      %v3583 = vmul.f32 %v3546, %v3578
      %v3584 = vmul.f32 %v3547, %v3578
      %v3585 = vmul.f32 %v3548, %v3578
      %v3586 = vmul.f32 %v3549, %v3578
      %v3587 = vmul.f32 %v3550, %v3578
      %v3588 = vmul.f32 %v3551, %v3578
      %v3589 = vmul.f32 %v3552, %v3578
      %v3590 = vmul.f32 %v3553, %v3578
      %v3591 = vmul.f32 %v3554, %v3578
      %v3592 = vmul.f32 %v3555, %v3578
      %v3593 = vmul.f32 %v3556, %v3578
      %v3594 = vmul.f32 %v3557, %v3578
      %v3595 = vmul.f32 %v3558, %v3578
      %v3596 = vmul.f32 %v3559, %v3578
      %v3597 = vmul.f32 %v3560, %v3578
      %v3598 = vmul.f32 %v3561, %v3578
      %v3599 = vmul.f32 %v3562, %v3578
      %v3600 = vmul.f32 %v3563, %v3578
      %v3601 = vmul.f32 %v3564, %v3578
      %v3602 = vmul.f32 %v3565, %v3578
      %v3603 = vmul.f32 %v3566, %v3578
      %v3604 = vmul.f32 %v3567, %v3578
      %v3605 = vmul.f32 %v3568, %v3578
      %v3606 = vmul.f32 %v3569, %v3578
      %v3607 = vmul.f32 %v3570, %v3578
      %v3608 = vmul.f32 %v3571, %v3578
      %v3609 = vmul.f32 %v3572, %v3578
      %v3610 = vmul.f32 %v3573, %v3578
      %v3611 = vadd.f32 %v3382, %v3579
      %v3612 = vadd.f32 %v3383, %v3580
      %v3613 = vadd.f32 %v3384, %v3581
      %v3614 = vadd.f32 %v3385, %v3582
      %v3615 = vadd.f32 %v3386, %v3583
      %v3616 = vadd.f32 %v3387, %v3584
      %v3617 = vadd.f32 %v3388, %v3585
      %v3618 = vadd.f32 %v3389, %v3586
      %v3619 = vadd.f32 %v3390, %v3587
      %v3620 = vadd.f32 %v3391, %v3588
      %v3621 = vadd.f32 %v3392, %v3589
      %v3622 = vadd.f32 %v3393, %v3590
      %v3623 = vadd.f32 %v3394, %v3591
      %v3624 = vadd.f32 %v3395, %v3592
      %v3625 = vadd.f32 %v3396, %v3593
      %v3626 = vadd.f32 %v3397, %v3594
      %v3627 = vadd.f32 %v3398, %v3595
      %v3628 = vadd.f32 %v3399, %v3596
      %v3629 = vadd.f32 %v3400, %v3597
      %v3630 = vadd.f32 %v3401, %v3598
      %v3631 = vadd.f32 %v3402, %v3599
      %v3632 = vadd.f32 %v3403, %v3600
      %v3633 = vadd.f32 %v3404, %v3601
      %v3634 = vadd.f32 %v3405, %v3602
      %v3635 = vadd.f32 %v3406, %v3603
      %v3636 = vadd.f32 %v3407, %v3604
      %v3637 = vadd.f32 %v3408, %v3605
      %v3638 = vadd.f32 %v3409, %v3606
      %v3639 = vadd.f32 %v3410, %v3607
      %v3640 = vadd.f32 %v3411, %v3608
      %v3641 = vadd.f32 %v3412, %v3609
      %v3642 = vadd.f32 %v3413, %v3610
      %v3643 = vmul.f32 %v3611, 0.5
      %v3644 = vmul.f32 %v3612, 0.5
      %v3645 = vmul.f32 %v3613, 0.5
      %v3646 = vmul.f32 %v3614, 0.5
      %v3647 = vmul.f32 %v3615, 0.5
      %v3648 = vmul.f32 %v3616, 0.5
      %v3649 = vmul.f32 %v3617, 0.5
      %v3650 = vmul.f32 %v3618, 0.5
      %v3651 = vmul.f32 %v3619, 0.5
      %v3652 = vmul.f32 %v3620, 0.5
      %v3653 = vmul.f32 %v3621, 0.5
      %v3654 = vmul.f32 %v3622, 0.5
      %v3655 = vmul.f32 %v3623, 0.5
      %v3656 = vmul.f32 %v3624, 0.5
      %v3657 = vmul.f32 %v3625, 0.5
      %v3658 = vmul.f32 %v3626, 0.5
      %v3659 = vmul.f32 %v3627, 0.5
      %v3660 = vmul.f32 %v3628, 0.5
      %v3661 = vmul.f32 %v3629, 0.5
      %v3662 = vmul.f32 %v3630, 0.5
      %v3663 = vmul.f32 %v3631, 0.5
      %v3664 = vmul.f32 %v3632, 0.5
      %v3665 = vmul.f32 %v3633, 0.5
      %v3666 = vmul.f32 %v3634, 0.5
      %v3667 = vmul.f32 %v3635, 0.5
      %v3668 = vmul.f32 %v3636, 0.5
      %v3669 = vmul.f32 %v3637, 0.5
      %v3670 = vmul.f32 %v3638, 0.5
      %v3671 = vmul.f32 %v3639, 0.5
      %v3672 = vmul.f32 %v3640, 0.5
      %v3673 = vmul.f32 %v3641, 0.5
      %v3674 = vmul.f32 %v3642, 0.5
      %v3675 = vmul.f32 %v3611, 0.70710677
      %v3676 = vmul.f32 %v3612, 0.70710677
      %v3677 = vmul.f32 %v3613, 0.70710677
      %v3678 = vmul.f32 %v3614, 0.70710677
      %v3679 = vmul.f32 %v3615, 0.70710677
      %v3680 = vmul.f32 %v3616, 0.70710677
      %v3681 = vmul.f32 %v3617, 0.70710677
      %v3682 = vmul.f32 %v3618, 0.70710677
      %v3683 = vmul.f32 %v3619, 0.70710677
      %v3684 = vmul.f32 %v3620, 0.70710677
      %v3685 = vmul.f32 %v3621, 0.70710677
      %v3686 = vmul.f32 %v3622, 0.70710677
      %v3687 = vmul.f32 %v3623, 0.70710677
      %v3688 = vmul.f32 %v3624, 0.70710677
      %v3689 = vmul.f32 %v3625, 0.70710677
      %v3690 = vmul.f32 %v3626, 0.70710677
      %v3691 = vmul.f32 %v3627, 0.70710677
      %v3692 = vmul.f32 %v3628, 0.70710677
      %v3693 = vmul.f32 %v3629, 0.70710677
      %v3694 = vmul.f32 %v3630, 0.70710677
      %v3695 = vmul.f32 %v3631, 0.70710677
      %v3696 = vmul.f32 %v3632, 0.70710677
      %v3697 = vmul.f32 %v3633, 0.70710677
      %v3698 = vmul.f32 %v3634, 0.70710677
      %v3699 = vmul.f32 %v3635, 0.70710677
      %v3700 = vmul.f32 %v3636, 0.70710677
      %v3701 = vmul.f32 %v3637, 0.70710677
      %v3702 = vmul.f32 %v3638, 0.70710677
      %v3703 = vmul.f32 %v3639, 0.70710677
      %v3704 = vmul.f32 %v3640, 0.70710677
      %v3705 = vmul.f32 %v3641, 0.70710677
      %v3706 = vmul.f32 %v3642, 0.70710677
      %v3707 = vand.u32 2147483647, %v3675
      %v3708 = vand.u32 2147483647, %v3676
      %v3709 = vand.u32 2147483647, %v3677
      %v3710 = vand.u32 2147483647, %v3678
      %v3711 = vand.u32 2147483647, %v3679
      %v3712 = vand.u32 2147483647, %v3680
      %v3713 = vand.u32 2147483647, %v3681
      %v3714 = vand.u32 2147483647, %v3682
      %v3715 = vand.u32 2147483647, %v3683
      %v3716 = vand.u32 2147483647, %v3684
      %v3717 = vand.u32 2147483647, %v3685
      %v3718 = vand.u32 2147483647, %v3686
      %v3719 = vand.u32 2147483647, %v3687
      %v3720 = vand.u32 2147483647, %v3688
      %v3721 = vand.u32 2147483647, %v3689
      %v3722 = vand.u32 2147483647, %v3690
      %v3723 = vand.u32 2147483647, %v3691
      %v3724 = vand.u32 2147483647, %v3692
      %v3725 = vand.u32 2147483647, %v3693
      %v3726 = vand.u32 2147483647, %v3694
      %v3727 = vand.u32 2147483647, %v3695
      %v3728 = vand.u32 2147483647, %v3696
      %v3729 = vand.u32 2147483647, %v3697
      %v3730 = vand.u32 2147483647, %v3698
      %v3731 = vand.u32 2147483647, %v3699
      %v3732 = vand.u32 2147483647, %v3700
      %v3733 = vand.u32 2147483647, %v3701
      %v3734 = vand.u32 2147483647, %v3702
      %v3735 = vand.u32 2147483647, %v3703
      %v3736 = vand.u32 2147483647, %v3704
      %v3737 = vand.u32 2147483647, %v3705
      %v3738 = vand.u32 2147483647, %v3706
      %v3739 = vmul.f32 %v3707, 0.3275911
      %v3740 = vmul.f32 %v3708, 0.3275911
      %v3741 = vmul.f32 %v3709, 0.3275911
      %v3742 = vmul.f32 %v3710, 0.3275911
      %v3743 = vmul.f32 %v3711, 0.3275911
      %v3744 = vmul.f32 %v3712, 0.3275911
      %v3745 = vmul.f32 %v3713, 0.3275911
      %v3746 = vmul.f32 %v3714, 0.3275911
      %v3747 = vmul.f32 %v3715, 0.3275911
      %v3748 = vmul.f32 %v3716, 0.3275911
      %v3749 = vmul.f32 %v3717, 0.3275911
      %v3750 = vmul.f32 %v3718, 0.3275911
      %v3751 = vmul.f32 %v3719, 0.3275911
      %v3752 = vmul.f32 %v3720, 0.3275911
      %v3753 = vmul.f32 %v3721, 0.3275911
      %v3754 = vmul.f32 %v3722, 0.3275911
      %v3755 = vmul.f32 %v3723, 0.3275911
      %v3756 = vmul.f32 %v3724, 0.3275911
      %v3757 = vmul.f32 %v3725, 0.3275911
      %v3758 = vmul.f32 %v3726, 0.3275911
      %v3759 = vmul.f32 %v3727, 0.3275911
      %v3760 = vmul.f32 %v3728, 0.3275911
      %v3761 = vmul.f32 %v3729, 0.3275911
      %v3762 = vmul.f32 %v3730, 0.3275911
      %v3763 = vmul.f32 %v3731, 0.3275911
      %v3764 = vmul.f32 %v3732, 0.3275911
      %v3765 = vmul.f32 %v3733, 0.3275911
      %v3766 = vmul.f32 %v3734, 0.3275911
      %v3767 = vmul.f32 %v3735, 0.3275911
      %v3768 = vmul.f32 %v3736, 0.3275911
      %v3769 = vmul.f32 %v3737, 0.3275911
      %v3770 = vmul.f32 %v3738, 0.3275911
      %v3771 = vadd.f32 %v3739, 1.0
      %v3772 = vadd.f32 %v3740, 1.0
      %v3773 = vadd.f32 %v3741, 1.0
      %v3774 = vadd.f32 %v3742, 1.0
      %v3775 = vadd.f32 %v3743, 1.0
      %v3776 = vadd.f32 %v3744, 1.0
      %v3777 = vadd.f32 %v3745, 1.0
      %v3778 = vadd.f32 %v3746, 1.0
      %v3779 = vadd.f32 %v3747, 1.0
      %v3780 = vadd.f32 %v3748, 1.0
      %v3781 = vadd.f32 %v3749, 1.0
      %v3782 = vadd.f32 %v3750, 1.0
      %v3783 = vadd.f32 %v3751, 1.0
      %v3784 = vadd.f32 %v3752, 1.0
      %v3785 = vadd.f32 %v3753, 1.0
      %v3786 = vadd.f32 %v3754, 1.0
      %v3787 = vadd.f32 %v3755, 1.0
      %v3788 = vadd.f32 %v3756, 1.0
      %v3789 = vadd.f32 %v3757, 1.0
      %v3790 = vadd.f32 %v3758, 1.0
      %v3791 = vadd.f32 %v3759, 1.0
      %v3792 = vadd.f32 %v3760, 1.0
      %v3793 = vadd.f32 %v3761, 1.0
      %v3794 = vadd.f32 %v3762, 1.0
      %v3795 = vadd.f32 %v3763, 1.0
      %v3796 = vadd.f32 %v3764, 1.0
      %v3797 = vadd.f32 %v3765, 1.0
      %v3798 = vadd.f32 %v3766, 1.0
      %v3799 = vadd.f32 %v3767, 1.0
      %v3800 = vadd.f32 %v3768, 1.0
      %v3801 = vadd.f32 %v3769, 1.0
      %v3802 = vadd.f32 %v3770, 1.0
      %v3803 = vrcp.pop %v3771
      %v3804 = vmul.f32 1.0, %v3803
      %v3805 = vrcp.pop %v3772
      %v3806 = vmul.f32 1.0, %v3805
      %v3807 = vrcp.pop %v3773
      %v3808 = vmul.f32 1.0, %v3807
      %v3809 = vrcp.pop %v3774
      %v3810 = vmul.f32 1.0, %v3809
      %v3811 = vrcp.pop %v3775
      %v3812 = vmul.f32 1.0, %v3811
      %v3813 = vrcp.pop %v3776
      %v3814 = vmul.f32 1.0, %v3813
      %v3815 = vrcp.pop %v3777
      %v3816 = vmul.f32 1.0, %v3815
      %v3817 = vrcp.pop %v3778
      %v3818 = vmul.f32 1.0, %v3817
      %v3819 = vrcp.pop %v3779
      %v3820 = vmul.f32 1.0, %v3819
      %v3821 = vrcp.pop %v3780
      %v3822 = vmul.f32 1.0, %v3821
      %v3823 = vrcp.pop %v3781
      %v3824 = vmul.f32 1.0, %v3823
      %v3825 = vrcp.pop %v3782
      %v3826 = vmul.f32 1.0, %v3825
      %v3827 = vrcp.pop %v3783
      %v3828 = vmul.f32 1.0, %v3827
      %v3829 = vrcp.pop %v3784
      %v3830 = vmul.f32 1.0, %v3829
      %v3831 = vrcp.pop %v3785
      %v3832 = vmul.f32 1.0, %v3831
      %v3833 = vrcp.pop %v3786
      %v3834 = vmul.f32 1.0, %v3833
      %v3835 = vrcp.pop %v3787
      %v3836 = vmul.f32 1.0, %v3835
      %v3837 = vrcp.pop %v3788
      %v3838 = vmul.f32 1.0, %v3837
      %v3839 = vrcp.pop %v3789
      %v3840 = vmul.f32 1.0, %v3839
      %v3841 = vrcp.pop %v3790
      %v3842 = vmul.f32 1.0, %v3841
      %v3843 = vrcp.pop %v3791
      %v3844 = vmul.f32 1.0, %v3843
      %v3845 = vrcp.pop %v3792
      %v3846 = vmul.f32 1.0, %v3845
      %v3847 = vrcp.pop %v3793
      %v3848 = vmul.f32 1.0, %v3847
      %v3849 = vrcp.pop %v3794
      %v3850 = vmul.f32 1.0, %v3849
      %v3851 = vrcp.pop %v3795
      %v3852 = vmul.f32 1.0, %v3851
      %v3853 = vrcp.pop %v3796
      %v3854 = vmul.f32 1.0, %v3853
      %v3855 = vrcp.pop %v3797
      %v3856 = vmul.f32 1.0, %v3855
      %v3857 = vrcp.pop %v3798
      %v3858 = vmul.f32 1.0, %v3857
      %v3859 = vrcp.pop %v3799
      %v3860 = vmul.f32 1.0, %v3859
      %v3861 = vrcp.pop %v3800
      %v3862 = vmul.f32 1.0, %v3861
      %v3863 = vrcp.pop %v3801
      %v3864 = vmul.f32 1.0, %v3863
      %v3865 = vrcp.pop %v3802
      %v3866 = vmul.f32 1.0, %v3865
      %v3867 = vmul.f32 %v3804, 1.0614054
      %v3868 = vmul.f32 %v3806, 1.0614054
      %v3869 = vmul.f32 %v3808, 1.0614054
      %v3870 = vmul.f32 %v3810, 1.0614054
      %v3871 = vmul.f32 %v3812, 1.0614054
      %v3872 = vmul.f32 %v3814, 1.0614054
      %v3873 = vmul.f32 %v3816, 1.0614054
      %v3874 = vmul.f32 %v3818, 1.0614054
      %v3875 = vmul.f32 %v3820, 1.0614054
      %v3876 = vmul.f32 %v3822, 1.0614054
      %v3877 = vmul.f32 %v3824, 1.0614054
      %v3878 = vmul.f32 %v3826, 1.0614054
      %v3879 = vmul.f32 %v3828, 1.0614054
      %v3880 = vmul.f32 %v3830, 1.0614054
      %v3881 = vmul.f32 %v3832, 1.0614054
      %v3882 = vmul.f32 %v3834, 1.0614054
      %v3883 = vmul.f32 %v3836, 1.0614054
      %v3884 = vmul.f32 %v3838, 1.0614054
      %v3885 = vmul.f32 %v3840, 1.0614054
      %v3886 = vmul.f32 %v3842, 1.0614054
      %v3887 = vmul.f32 %v3844, 1.0614054
      %v3888 = vmul.f32 %v3846, 1.0614054
      %v3889 = vmul.f32 %v3848, 1.0614054
      %v3890 = vmul.f32 %v3850, 1.0614054
      %v3891 = vmul.f32 %v3852, 1.0614054
      %v3892 = vmul.f32 %v3854, 1.0614054
      %v3893 = vmul.f32 %v3856, 1.0614054
      %v3894 = vmul.f32 %v3858, 1.0614054
      %v3895 = vmul.f32 %v3860, 1.0614054
      %v3896 = vmul.f32 %v3862, 1.0614054
      %v3897 = vmul.f32 %v3864, 1.0614054
      %v3898 = vmul.f32 %v3866, 1.0614054
      %v3899 = vadd.f32 %v3867, -1.4531521
      %v3900 = vadd.f32 %v3868, -1.4531521
      %v3901 = vadd.f32 %v3869, -1.4531521
      %v3902 = vadd.f32 %v3870, -1.4531521
      %v3903 = vadd.f32 %v3871, -1.4531521
      %v3904 = vadd.f32 %v3872, -1.4531521
      %v3905 = vadd.f32 %v3873, -1.4531521
      %v3906 = vadd.f32 %v3874, -1.4531521
      %v3907 = vadd.f32 %v3875, -1.4531521
      %v3908 = vadd.f32 %v3876, -1.4531521
      %v3909 = vadd.f32 %v3877, -1.4531521
      %v3910 = vadd.f32 %v3878, -1.4531521
      %v3911 = vadd.f32 %v3879, -1.4531521
      %v3912 = vadd.f32 %v3880, -1.4531521
      %v3913 = vadd.f32 %v3881, -1.4531521
      %v3914 = vadd.f32 %v3882, -1.4531521
      %v3915 = vadd.f32 %v3883, -1.4531521
      %v3916 = vadd.f32 %v3884, -1.4531521
      %v3917 = vadd.f32 %v3885, -1.4531521
      %v3918 = vadd.f32 %v3886, -1.4531521
      %v3919 = vadd.f32 %v3887, -1.4531521
      %v3920 = vadd.f32 %v3888, -1.4531521
      %v3921 = vadd.f32 %v3889, -1.4531521
      %v3922 = vadd.f32 %v3890, -1.4531521
      %v3923 = vadd.f32 %v3891, -1.4531521
      %v3924 = vadd.f32 %v3892, -1.4531521
      %v3925 = vadd.f32 %v3893, -1.4531521
      %v3926 = vadd.f32 %v3894, -1.4531521
      %v3927 = vadd.f32 %v3895, -1.4531521
      %v3928 = vadd.f32 %v3896, -1.4531521
      %v3929 = vadd.f32 %v3897, -1.4531521
      %v3930 = vadd.f32 %v3898, -1.4531521
      %v3931 = vmul.f32 %v3899, %v3804
      %v3932 = vmul.f32 %v3900, %v3806
      %v3933 = vmul.f32 %v3901, %v3808
      %v3934 = vmul.f32 %v3902, %v3810
      %v3935 = vmul.f32 %v3903, %v3812
      %v3936 = vmul.f32 %v3904, %v3814
      %v3937 = vmul.f32 %v3905, %v3816
      %v3938 = vmul.f32 %v3906, %v3818
      %v3939 = vmul.f32 %v3907, %v3820
      %v3940 = vmul.f32 %v3908, %v3822
      %v3941 = vmul.f32 %v3909, %v3824
      %v3942 = vmul.f32 %v3910, %v3826
      %v3943 = vmul.f32 %v3911, %v3828
      %v3944 = vmul.f32 %v3912, %v3830
      %v3945 = vmul.f32 %v3913, %v3832
      %v3946 = vmul.f32 %v3914, %v3834
      %v3947 = vmul.f32 %v3915, %v3836
      %v3948 = vmul.f32 %v3916, %v3838
      %v3949 = vmul.f32 %v3917, %v3840
      %v3950 = vmul.f32 %v3918, %v3842
      %v3951 = vmul.f32 %v3919, %v3844
      %v3952 = vmul.f32 %v3920, %v3846
      %v3953 = vmul.f32 %v3921, %v3848
      %v3954 = vmul.f32 %v3922, %v3850
      %v3955 = vmul.f32 %v3923, %v3852
      %v3956 = vmul.f32 %v3924, %v3854
      %v3957 = vmul.f32 %v3925, %v3856
      %v3958 = vmul.f32 %v3926, %v3858
      %v3959 = vmul.f32 %v3927, %v3860
      %v3960 = vmul.f32 %v3928, %v3862
      %v3961 = vmul.f32 %v3929, %v3864
      %v3962 = vmul.f32 %v3930, %v3866
      %v3963 = vadd.f32 %v3931, 1.4214138
      %v3964 = vadd.f32 %v3932, 1.4214138
      %v3965 = vadd.f32 %v3933, 1.4214138
      %v3966 = vadd.f32 %v3934, 1.4214138
      %v3967 = vadd.f32 %v3935, 1.4214138
      %v3968 = vadd.f32 %v3936, 1.4214138
      %v3969 = vadd.f32 %v3937, 1.4214138
      %v3970 = vadd.f32 %v3938, 1.4214138
      %v3971 = vadd.f32 %v3939, 1.4214138
      %v3972 = vadd.f32 %v3940, 1.4214138
      %v3973 = vadd.f32 %v3941, 1.4214138
      %v3974 = vadd.f32 %v3942, 1.4214138
      %v3975 = vadd.f32 %v3943, 1.4214138
      %v3976 = vadd.f32 %v3944, 1.4214138
      %v3977 = vadd.f32 %v3945, 1.4214138
      %v3978 = vadd.f32 %v3946, 1.4214138
      %v3979 = vadd.f32 %v3947, 1.4214138
      %v3980 = vadd.f32 %v3948, 1.4214138
      %v3981 = vadd.f32 %v3949, 1.4214138
      %v3982 = vadd.f32 %v3950, 1.4214138
      %v3983 = vadd.f32 %v3951, 1.4214138
      %v3984 = vadd.f32 %v3952, 1.4214138
      %v3985 = vadd.f32 %v3953, 1.4214138
      %v3986 = vadd.f32 %v3954, 1.4214138
      %v3987 = vadd.f32 %v3955, 1.4214138
      %v3988 = vadd.f32 %v3956, 1.4214138
      %v3989 = vadd.f32 %v3957, 1.4214138
      %v3990 = vadd.f32 %v3958, 1.4214138
      %v3991 = vadd.f32 %v3959, 1.4214138
      %v3992 = vadd.f32 %v3960, 1.4214138
      %v3993 = vadd.f32 %v3961, 1.4214138
      %v3994 = vadd.f32 %v3962, 1.4214138
      %v3995 = vmul.f32 %v3963, %v3804
      %v3996 = vmul.f32 %v3964, %v3806
      %v3997 = vmul.f32 %v3965, %v3808
      %v3998 = vmul.f32 %v3966, %v3810
      %v3999 = vmul.f32 %v3967, %v3812
      %v4000 = vmul.f32 %v3968, %v3814
      %v4001 = vmul.f32 %v3969, %v3816
      %v4002 = vmul.f32 %v3970, %v3818
      %v4003 = vmul.f32 %v3971, %v3820
      %v4004 = vmul.f32 %v3972, %v3822
      %v4005 = vmul.f32 %v3973, %v3824
      %v4006 = vmul.f32 %v3974, %v3826
      %v4007 = vmul.f32 %v3975, %v3828
      %v4008 = vmul.f32 %v3976, %v3830
      %v4009 = vmul.f32 %v3977, %v3832
      %v4010 = vmul.f32 %v3978, %v3834
      %v4011 = vmul.f32 %v3979, %v3836
      %v4012 = vmul.f32 %v3980, %v3838
      %v4013 = vmul.f32 %v3981, %v3840
      %v4014 = vmul.f32 %v3982, %v3842
      %v4015 = vmul.f32 %v3983, %v3844
      %v4016 = vmul.f32 %v3984, %v3846
      %v4017 = vmul.f32 %v3985, %v3848
      %v4018 = vmul.f32 %v3986, %v3850
      %v4019 = vmul.f32 %v3987, %v3852
      %v4020 = vmul.f32 %v3988, %v3854
      %v4021 = vmul.f32 %v3989, %v3856
      %v4022 = vmul.f32 %v3990, %v3858
      %v4023 = vmul.f32 %v3991, %v3860
      %v4024 = vmul.f32 %v3992, %v3862
      %v4025 = vmul.f32 %v3993, %v3864
      %v4026 = vmul.f32 %v3994, %v3866
      %v4027 = vadd.f32 %v3995, -0.28449672
      %v4028 = vadd.f32 %v3996, -0.28449672
      %v4029 = vadd.f32 %v3997, -0.28449672
      %v4030 = vadd.f32 %v3998, -0.28449672
      %v4031 = vadd.f32 %v3999, -0.28449672
      %v4032 = vadd.f32 %v4000, -0.28449672
      %v4033 = vadd.f32 %v4001, -0.28449672
      %v4034 = vadd.f32 %v4002, -0.28449672
      %v4035 = vadd.f32 %v4003, -0.28449672
      %v4036 = vadd.f32 %v4004, -0.28449672
      %v4037 = vadd.f32 %v4005, -0.28449672
      %v4038 = vadd.f32 %v4006, -0.28449672
      %v4039 = vadd.f32 %v4007, -0.28449672
      %v4040 = vadd.f32 %v4008, -0.28449672
      %v4041 = vadd.f32 %v4009, -0.28449672
      %v4042 = vadd.f32 %v4010, -0.28449672
      %v4043 = vadd.f32 %v4011, -0.28449672
      %v4044 = vadd.f32 %v4012, -0.28449672
      %v4045 = vadd.f32 %v4013, -0.28449672
      %v4046 = vadd.f32 %v4014, -0.28449672
      %v4047 = vadd.f32 %v4015, -0.28449672
      %v4048 = vadd.f32 %v4016, -0.28449672
      %v4049 = vadd.f32 %v4017, -0.28449672
      %v4050 = vadd.f32 %v4018, -0.28449672
      %v4051 = vadd.f32 %v4019, -0.28449672
      %v4052 = vadd.f32 %v4020, -0.28449672
      %v4053 = vadd.f32 %v4021, -0.28449672
      %v4054 = vadd.f32 %v4022, -0.28449672
      %v4055 = vadd.f32 %v4023, -0.28449672
      %v4056 = vadd.f32 %v4024, -0.28449672
      %v4057 = vadd.f32 %v4025, -0.28449672
      %v4058 = vadd.f32 %v4026, -0.28449672
      %v4059 = vmul.f32 %v4027, %v3804
      %v4060 = vmul.f32 %v4028, %v3806
      %v4061 = vmul.f32 %v4029, %v3808
      %v4062 = vmul.f32 %v4030, %v3810
      %v4063 = vmul.f32 %v4031, %v3812
      %v4064 = vmul.f32 %v4032, %v3814
      %v4065 = vmul.f32 %v4033, %v3816
      %v4066 = vmul.f32 %v4034, %v3818
      %v4067 = vmul.f32 %v4035, %v3820
      %v4068 = vmul.f32 %v4036, %v3822
      %v4069 = vmul.f32 %v4037, %v3824
      %v4070 = vmul.f32 %v4038, %v3826
      %v4071 = vmul.f32 %v4039, %v3828
      %v4072 = vmul.f32 %v4040, %v3830
      %v4073 = vmul.f32 %v4041, %v3832
      %v4074 = vmul.f32 %v4042, %v3834
      %v4075 = vmul.f32 %v4043, %v3836
      %v4076 = vmul.f32 %v4044, %v3838
      %v4077 = vmul.f32 %v4045, %v3840
      %v4078 = vmul.f32 %v4046, %v3842
      %v4079 = vmul.f32 %v4047, %v3844
      %v4080 = vmul.f32 %v4048, %v3846
      %v4081 = vmul.f32 %v4049, %v3848
      %v4082 = vmul.f32 %v4050, %v3850
      %v4083 = vmul.f32 %v4051, %v3852
      %v4084 = vmul.f32 %v4052, %v3854
      %v4085 = vmul.f32 %v4053, %v3856
      %v4086 = vmul.f32 %v4054, %v3858
      %v4087 = vmul.f32 %v4055, %v3860
      %v4088 = vmul.f32 %v4056, %v3862
      %v4089 = vmul.f32 %v4057, %v3864
      %v4090 = vmul.f32 %v4058, %v3866
      %v4091 = vadd.f32 %v4059, 0.2548296
      %v4092 = vadd.f32 %v4060, 0.2548296
      %v4093 = vadd.f32 %v4061, 0.2548296
      %v4094 = vadd.f32 %v4062, 0.2548296
      %v4095 = vadd.f32 %v4063, 0.2548296
      %v4096 = vadd.f32 %v4064, 0.2548296
      %v4097 = vadd.f32 %v4065, 0.2548296
      %v4098 = vadd.f32 %v4066, 0.2548296
      %v4099 = vadd.f32 %v4067, 0.2548296
      %v4100 = vadd.f32 %v4068, 0.2548296
      %v4101 = vadd.f32 %v4069, 0.2548296
      %v4102 = vadd.f32 %v4070, 0.2548296
      %v4103 = vadd.f32 %v4071, 0.2548296
      %v4104 = vadd.f32 %v4072, 0.2548296
      %v4105 = vadd.f32 %v4073, 0.2548296
      %v4106 = vadd.f32 %v4074, 0.2548296
      %v4107 = vadd.f32 %v4075, 0.2548296
      %v4108 = vadd.f32 %v4076, 0.2548296
      %v4109 = vadd.f32 %v4077, 0.2548296
      %v4110 = vadd.f32 %v4078, 0.2548296
      %v4111 = vadd.f32 %v4079, 0.2548296
      %v4112 = vadd.f32 %v4080, 0.2548296
      %v4113 = vadd.f32 %v4081, 0.2548296
      %v4114 = vadd.f32 %v4082, 0.2548296
      %v4115 = vadd.f32 %v4083, 0.2548296
      %v4116 = vadd.f32 %v4084, 0.2548296
      %v4117 = vadd.f32 %v4085, 0.2548296
      %v4118 = vadd.f32 %v4086, 0.2548296
      %v4119 = vadd.f32 %v4087, 0.2548296
      %v4120 = vadd.f32 %v4088, 0.2548296
      %v4121 = vadd.f32 %v4089, 0.2548296
      %v4122 = vadd.f32 %v4090, 0.2548296
      %v4123 = vmul.f32 %v4091, %v3804
      %v4124 = vmul.f32 %v4092, %v3806
      %v4125 = vmul.f32 %v4093, %v3808
      %v4126 = vmul.f32 %v4094, %v3810
      %v4127 = vmul.f32 %v4095, %v3812
      %v4128 = vmul.f32 %v4096, %v3814
      %v4129 = vmul.f32 %v4097, %v3816
      %v4130 = vmul.f32 %v4098, %v3818
      %v4131 = vmul.f32 %v4099, %v3820
      %v4132 = vmul.f32 %v4100, %v3822
      %v4133 = vmul.f32 %v4101, %v3824
      %v4134 = vmul.f32 %v4102, %v3826
      %v4135 = vmul.f32 %v4103, %v3828
      %v4136 = vmul.f32 %v4104, %v3830
      %v4137 = vmul.f32 %v4105, %v3832
      %v4138 = vmul.f32 %v4106, %v3834
      %v4139 = vmul.f32 %v4107, %v3836
      %v4140 = vmul.f32 %v4108, %v3838
      %v4141 = vmul.f32 %v4109, %v3840
      %v4142 = vmul.f32 %v4110, %v3842
      %v4143 = vmul.f32 %v4111, %v3844
      %v4144 = vmul.f32 %v4112, %v3846
      %v4145 = vmul.f32 %v4113, %v3848
      %v4146 = vmul.f32 %v4114, %v3850
      %v4147 = vmul.f32 %v4115, %v3852
      %v4148 = vmul.f32 %v4116, %v3854
      %v4149 = vmul.f32 %v4117, %v3856
      %v4150 = vmul.f32 %v4118, %v3858
      %v4151 = vmul.f32 %v4119, %v3860
      %v4152 = vmul.f32 %v4120, %v3862
      %v4153 = vmul.f32 %v4121, %v3864
      %v4154 = vmul.f32 %v4122, %v3866
      %v4155 = vsub.f32 0.0, %v3707
      %v4156 = vsub.f32 0.0, %v3708
      %v4157 = vsub.f32 0.0, %v3709
      %v4158 = vsub.f32 0.0, %v3710
      %v4159 = vsub.f32 0.0, %v3711
      %v4160 = vsub.f32 0.0, %v3712
      %v4161 = vsub.f32 0.0, %v3713
      %v4162 = vsub.f32 0.0, %v3714
      %v4163 = vsub.f32 0.0, %v3715
      %v4164 = vsub.f32 0.0, %v3716
      %v4165 = vsub.f32 0.0, %v3717
      %v4166 = vsub.f32 0.0, %v3718
      %v4167 = vsub.f32 0.0, %v3719
      %v4168 = vsub.f32 0.0, %v3720
      %v4169 = vsub.f32 0.0, %v3721
      %v4170 = vsub.f32 0.0, %v3722
      %v4171 = vsub.f32 0.0, %v3723
      %v4172 = vsub.f32 0.0, %v3724
      %v4173 = vsub.f32 0.0, %v3725
      %v4174 = vsub.f32 0.0, %v3726
      %v4175 = vsub.f32 0.0, %v3727
      %v4176 = vsub.f32 0.0, %v3728
      %v4177 = vsub.f32 0.0, %v3729
      %v4178 = vsub.f32 0.0, %v3730
      %v4179 = vsub.f32 0.0, %v3731
      %v4180 = vsub.f32 0.0, %v3732
      %v4181 = vsub.f32 0.0, %v3733
      %v4182 = vsub.f32 0.0, %v3734
      %v4183 = vsub.f32 0.0, %v3735
      %v4184 = vsub.f32 0.0, %v3736
      %v4185 = vsub.f32 0.0, %v3737
      %v4186 = vsub.f32 0.0, %v3738
      %v4187 = vmul.f32 %v4155, %v3707
      %v4188 = vmul.f32 %v4156, %v3708
      %v4189 = vmul.f32 %v4157, %v3709
      %v4190 = vmul.f32 %v4158, %v3710
      %v4191 = vmul.f32 %v4159, %v3711
      %v4192 = vmul.f32 %v4160, %v3712
      %v4193 = vmul.f32 %v4161, %v3713
      %v4194 = vmul.f32 %v4162, %v3714
      %v4195 = vmul.f32 %v4163, %v3715
      %v4196 = vmul.f32 %v4164, %v3716
      %v4197 = vmul.f32 %v4165, %v3717
      %v4198 = vmul.f32 %v4166, %v3718
      %v4199 = vmul.f32 %v4167, %v3719
      %v4200 = vmul.f32 %v4168, %v3720
      %v4201 = vmul.f32 %v4169, %v3721
      %v4202 = vmul.f32 %v4170, %v3722
      %v4203 = vmul.f32 %v4171, %v3723
      %v4204 = vmul.f32 %v4172, %v3724
      %v4205 = vmul.f32 %v4173, %v3725
      %v4206 = vmul.f32 %v4174, %v3726
      %v4207 = vmul.f32 %v4175, %v3727
      %v4208 = vmul.f32 %v4176, %v3728
      %v4209 = vmul.f32 %v4177, %v3729
      %v4210 = vmul.f32 %v4178, %v3730
      %v4211 = vmul.f32 %v4179, %v3731
      %v4212 = vmul.f32 %v4180, %v3732
      %v4213 = vmul.f32 %v4181, %v3733
      %v4214 = vmul.f32 %v4182, %v3734
      %v4215 = vmul.f32 %v4183, %v3735
      %v4216 = vmul.f32 %v4184, %v3736
      %v4217 = vmul.f32 %v4185, %v3737
      %v4218 = vmul.f32 %v4186, %v3738
      %v4219 = vmul.f32 %v4187, 1.442695
      %v4220 = vpow.pop %v4219
      %v4221 = vmul.f32 %v4188, 1.442695
      %v4222 = vpow.pop %v4221
      %v4223 = vmul.f32 %v4189, 1.442695
      %v4224 = vpow.pop %v4223
      %v4225 = vmul.f32 %v4190, 1.442695
      %v4226 = vpow.pop %v4225
      %v4227 = vmul.f32 %v4191, 1.442695
      %v4228 = vpow.pop %v4227
      %v4229 = vmul.f32 %v4192, 1.442695
      %v4230 = vpow.pop %v4229
      %v4231 = vmul.f32 %v4193, 1.442695
      %v4232 = vpow.pop %v4231
      %v4233 = vmul.f32 %v4194, 1.442695
      %v4234 = vpow.pop %v4233
      %v4235 = vmul.f32 %v4195, 1.442695
      %v4236 = vpow.pop %v4235
      %v4237 = vmul.f32 %v4196, 1.442695
      %v4238 = vpow.pop %v4237
      %v4239 = vmul.f32 %v4197, 1.442695
      %v4240 = vpow.pop %v4239
      %v4241 = vmul.f32 %v4198, 1.442695
      %v4242 = vpow.pop %v4241
      %v4243 = vmul.f32 %v4199, 1.442695
      %v4244 = vpow.pop %v4243
      %v4245 = vmul.f32 %v4200, 1.442695
      %v4246 = vpow.pop %v4245
      %v4247 = vmul.f32 %v4201, 1.442695
      %v4248 = vpow.pop %v4247
      %v4249 = vmul.f32 %v4202, 1.442695
      %v4250 = vpow.pop %v4249
      %v4251 = vmul.f32 %v4203, 1.442695
      %v4252 = vpow.pop %v4251
      %v4253 = vmul.f32 %v4204, 1.442695
      %v4254 = vpow.pop %v4253
      %v4255 = vmul.f32 %v4205, 1.442695
      %v4256 = vpow.pop %v4255
      %v4257 = vmul.f32 %v4206, 1.442695
      %v4258 = vpow.pop %v4257
      %v4259 = vmul.f32 %v4207, 1.442695
      %v4260 = vpow.pop %v4259
      %v4261 = vmul.f32 %v4208, 1.442695
      %v4262 = vpow.pop %v4261
      %v4263 = vmul.f32 %v4209, 1.442695
      %v4264 = vpow.pop %v4263
      %v4265 = vmul.f32 %v4210, 1.442695
      %v4266 = vpow.pop %v4265
      %v4267 = vmul.f32 %v4211, 1.442695
      %v4268 = vpow.pop %v4267
      %v4269 = vmul.f32 %v4212, 1.442695
      %v4270 = vpow.pop %v4269
      %v4271 = vmul.f32 %v4213, 1.442695
      %v4272 = vpow.pop %v4271
      %v4273 = vmul.f32 %v4214, 1.442695
      %v4274 = vpow.pop %v4273
      %v4275 = vmul.f32 %v4215, 1.442695
      %v4276 = vpow.pop %v4275
      %v4277 = vmul.f32 %v4216, 1.442695
      %v4278 = vpow.pop %v4277
      %v4279 = vmul.f32 %v4217, 1.442695
      %v4280 = vpow.pop %v4279
      %v4281 = vmul.f32 %v4218, 1.442695
      %v4282 = vpow.pop %v4281
      %v4283 = vmul.f32 %v4123, %v4220
      %v4284 = vmul.f32 %v4124, %v4222
      %v4285 = vmul.f32 %v4125, %v4224
      %v4286 = vmul.f32 %v4126, %v4226
      %v4287 = vmul.f32 %v4127, %v4228
      %v4288 = vmul.f32 %v4128, %v4230
      %v4289 = vmul.f32 %v4129, %v4232
      %v4290 = vmul.f32 %v4130, %v4234
      %v4291 = vmul.f32 %v4131, %v4236
      %v4292 = vmul.f32 %v4132, %v4238
      %v4293 = vmul.f32 %v4133, %v4240
      %v4294 = vmul.f32 %v4134, %v4242
      %v4295 = vmul.f32 %v4135, %v4244
      %v4296 = vmul.f32 %v4136, %v4246
      %v4297 = vmul.f32 %v4137, %v4248
      %v4298 = vmul.f32 %v4138, %v4250
      %v4299 = vmul.f32 %v4139, %v4252
      %v4300 = vmul.f32 %v4140, %v4254
      %v4301 = vmul.f32 %v4141, %v4256
      %v4302 = vmul.f32 %v4142, %v4258
      %v4303 = vmul.f32 %v4143, %v4260
      %v4304 = vmul.f32 %v4144, %v4262
      %v4305 = vmul.f32 %v4145, %v4264
      %v4306 = vmul.f32 %v4146, %v4266
      %v4307 = vmul.f32 %v4147, %v4268
      %v4308 = vmul.f32 %v4148, %v4270
      %v4309 = vmul.f32 %v4149, %v4272
      %v4310 = vmul.f32 %v4150, %v4274
      %v4311 = vmul.f32 %v4151, %v4276
      %v4312 = vmul.f32 %v4152, %v4278
      %v4313 = vmul.f32 %v4153, %v4280
      %v4314 = vmul.f32 %v4154, %v4282
      %v4315 = vsub.f32 1.0, %v4283
      %v4316 = vsub.f32 1.0, %v4284
      %v4317 = vsub.f32 1.0, %v4285
      %v4318 = vsub.f32 1.0, %v4286
      %v4319 = vsub.f32 1.0, %v4287
      %v4320 = vsub.f32 1.0, %v4288
      %v4321 = vsub.f32 1.0, %v4289
      %v4322 = vsub.f32 1.0, %v4290
      %v4323 = vsub.f32 1.0, %v4291
      %v4324 = vsub.f32 1.0, %v4292
      %v4325 = vsub.f32 1.0, %v4293
      %v4326 = vsub.f32 1.0, %v4294
      %v4327 = vsub.f32 1.0, %v4295
      %v4328 = vsub.f32 1.0, %v4296
      %v4329 = vsub.f32 1.0, %v4297
      %v4330 = vsub.f32 1.0, %v4298
      %v4331 = vsub.f32 1.0, %v4299
      %v4332 = vsub.f32 1.0, %v4300
      %v4333 = vsub.f32 1.0, %v4301
      %v4334 = vsub.f32 1.0, %v4302
      %v4335 = vsub.f32 1.0, %v4303
      %v4336 = vsub.f32 1.0, %v4304
      %v4337 = vsub.f32 1.0, %v4305
      %v4338 = vsub.f32 1.0, %v4306
      %v4339 = vsub.f32 1.0, %v4307
      %v4340 = vsub.f32 1.0, %v4308
      %v4341 = vsub.f32 1.0, %v4309
      %v4342 = vsub.f32 1.0, %v4310
      %v4343 = vsub.f32 1.0, %v4311
      %v4344 = vsub.f32 1.0, %v4312
      %v4345 = vsub.f32 1.0, %v4313
      %v4346 = vsub.f32 1.0, %v4314
      %vm4347 = vcmp.ge.f32.partialorder %v3675, 0.0
      %vm4348 = vcmp.ge.f32.partialorder %v3676, 0.0
      %vm4349 = vcmp.ge.f32.partialorder %v3677, 0.0
      %vm4350 = vcmp.ge.f32.partialorder %v3678, 0.0
      %vm4351 = vcmp.ge.f32.partialorder %v3679, 0.0
      %vm4352 = vcmp.ge.f32.partialorder %v3680, 0.0
      %vm4353 = vcmp.ge.f32.partialorder %v3681, 0.0
      %vm4354 = vcmp.ge.f32.partialorder %v3682, 0.0
      %vm4355 = vcmp.ge.f32.partialorder %v3683, 0.0
      %vm4356 = vcmp.ge.f32.partialorder %v3684, 0.0
      %vm4357 = vcmp.ge.f32.partialorder %v3685, 0.0
      %vm4358 = vcmp.ge.f32.partialorder %v3686, 0.0
      %vm4359 = vcmp.ge.f32.partialorder %v3687, 0.0
      %vm4360 = vcmp.ge.f32.partialorder %v3688, 0.0
      %vm4361 = vcmp.ge.f32.partialorder %v3689, 0.0
      %vm4362 = vcmp.ge.f32.partialorder %v3690, 0.0
      %vm4363 = vcmp.ge.f32.partialorder %v3691, 0.0
      %vm4364 = vcmp.ge.f32.partialorder %v3692, 0.0
      %vm4365 = vcmp.ge.f32.partialorder %v3693, 0.0
      %vm4366 = vcmp.ge.f32.partialorder %v3694, 0.0
      %vm4367 = vcmp.ge.f32.partialorder %v3695, 0.0
      %vm4368 = vcmp.ge.f32.partialorder %v3696, 0.0
      %vm4369 = vcmp.ge.f32.partialorder %v3697, 0.0
      %vm4370 = vcmp.ge.f32.partialorder %v3698, 0.0
      %vm4371 = vcmp.ge.f32.partialorder %v3699, 0.0
      %vm4372 = vcmp.ge.f32.partialorder %v3700, 0.0
      %vm4373 = vcmp.ge.f32.partialorder %v3701, 0.0
      %vm4374 = vcmp.ge.f32.partialorder %v3702, 0.0
      %vm4375 = vcmp.ge.f32.partialorder %v3703, 0.0
      %vm4376 = vcmp.ge.f32.partialorder %v3704, 0.0
      %vm4377 = vcmp.ge.f32.partialorder %v3705, 0.0
      %vm4378 = vcmp.ge.f32.partialorder %v3706, 0.0
      %v4379 = vsub.f32 0.0, %v4315
      %v4380 = vsub.f32 0.0, %v4316
      %v4381 = vsub.f32 0.0, %v4317
      %v4382 = vsub.f32 0.0, %v4318
      %v4383 = vsub.f32 0.0, %v4319
      %v4384 = vsub.f32 0.0, %v4320
      %v4385 = vsub.f32 0.0, %v4321
      %v4386 = vsub.f32 0.0, %v4322
      %v4387 = vsub.f32 0.0, %v4323
      %v4388 = vsub.f32 0.0, %v4324
      %v4389 = vsub.f32 0.0, %v4325
      %v4390 = vsub.f32 0.0, %v4326
      %v4391 = vsub.f32 0.0, %v4327
      %v4392 = vsub.f32 0.0, %v4328
      %v4393 = vsub.f32 0.0, %v4329
      %v4394 = vsub.f32 0.0, %v4330
      %v4395 = vsub.f32 0.0, %v4331
      %v4396 = vsub.f32 0.0, %v4332
      %v4397 = vsub.f32 0.0, %v4333
      %v4398 = vsub.f32 0.0, %v4334
      %v4399 = vsub.f32 0.0, %v4335
      %v4400 = vsub.f32 0.0, %v4336
      %v4401 = vsub.f32 0.0, %v4337
      %v4402 = vsub.f32 0.0, %v4338
      %v4403 = vsub.f32 0.0, %v4339
      %v4404 = vsub.f32 0.0, %v4340
      %v4405 = vsub.f32 0.0, %v4341
      %v4406 = vsub.f32 0.0, %v4342
      %v4407 = vsub.f32 0.0, %v4343
      %v4408 = vsub.f32 0.0, %v4344
      %v4409 = vsub.f32 0.0, %v4345
      %v4410 = vsub.f32 0.0, %v4346
      %v4411 = vsel %vm4347, %v4315, %v4379
      %v4412 = vsel %vm4348, %v4316, %v4380
      %v4413 = vsel %vm4349, %v4317, %v4381
      %v4414 = vsel %vm4350, %v4318, %v4382
      %v4415 = vsel %vm4351, %v4319, %v4383
      %v4416 = vsel %vm4352, %v4320, %v4384
      %v4417 = vsel %vm4353, %v4321, %v4385
      %v4418 = vsel %vm4354, %v4322, %v4386
      %v4419 = vsel %vm4355, %v4323, %v4387
      %v4420 = vsel %vm4356, %v4324, %v4388
      %v4421 = vsel %vm4357, %v4325, %v4389
      %v4422 = vsel %vm4358, %v4326, %v4390
      %v4423 = vsel %vm4359, %v4327, %v4391
      %v4424 = vsel %vm4360, %v4328, %v4392
      %v4425 = vsel %vm4361, %v4329, %v4393
      %v4426 = vsel %vm4362, %v4330, %v4394
      %v4427 = vsel %vm4363, %v4331, %v4395
      %v4428 = vsel %vm4364, %v4332, %v4396
      %v4429 = vsel %vm4365, %v4333, %v4397
      %v4430 = vsel %vm4366, %v4334, %v4398
      %v4431 = vsel %vm4367, %v4335, %v4399
      %v4432 = vsel %vm4368, %v4336, %v4400
      %v4433 = vsel %vm4369, %v4337, %v4401
      %v4434 = vsel %vm4370, %v4338, %v4402
      %v4435 = vsel %vm4371, %v4339, %v4403
      %v4436 = vsel %vm4372, %v4340, %v4404
      %v4437 = vsel %vm4373, %v4341, %v4405
      %v4438 = vsel %vm4374, %v4342, %v4406
      %v4439 = vsel %vm4375, %v4343, %v4407
      %v4440 = vsel %vm4376, %v4344, %v4408
      %v4441 = vsel %vm4377, %v4345, %v4409
      %v4442 = vsel %vm4378, %v4346, %v4410
      %v4443 = vadd.f32 %v4411, 1.0
      %v4444 = vadd.f32 %v4412, 1.0
      %v4445 = vadd.f32 %v4413, 1.0
      %v4446 = vadd.f32 %v4414, 1.0
      %v4447 = vadd.f32 %v4415, 1.0
      %v4448 = vadd.f32 %v4416, 1.0
      %v4449 = vadd.f32 %v4417, 1.0
      %v4450 = vadd.f32 %v4418, 1.0
      %v4451 = vadd.f32 %v4419, 1.0
      %v4452 = vadd.f32 %v4420, 1.0
      %v4453 = vadd.f32 %v4421, 1.0
      %v4454 = vadd.f32 %v4422, 1.0
      %v4455 = vadd.f32 %v4423, 1.0
      %v4456 = vadd.f32 %v4424, 1.0
      %v4457 = vadd.f32 %v4425, 1.0
      %v4458 = vadd.f32 %v4426, 1.0
      %v4459 = vadd.f32 %v4427, 1.0
      %v4460 = vadd.f32 %v4428, 1.0
      %v4461 = vadd.f32 %v4429, 1.0
      %v4462 = vadd.f32 %v4430, 1.0
      %v4463 = vadd.f32 %v4431, 1.0
      %v4464 = vadd.f32 %v4432, 1.0
      %v4465 = vadd.f32 %v4433, 1.0
      %v4466 = vadd.f32 %v4434, 1.0
      %v4467 = vadd.f32 %v4435, 1.0
      %v4468 = vadd.f32 %v4436, 1.0
      %v4469 = vadd.f32 %v4437, 1.0
      %v4470 = vadd.f32 %v4438, 1.0
      %v4471 = vadd.f32 %v4439, 1.0
      %v4472 = vadd.f32 %v4440, 1.0
      %v4473 = vadd.f32 %v4441, 1.0
      %v4474 = vadd.f32 %v4442, 1.0
      %v4475 = vmul.f32 %v3643, %v4443
      %v4476 = vmul.f32 %v3644, %v4444
      %v4477 = vmul.f32 %v3645, %v4445
      %v4478 = vmul.f32 %v3646, %v4446
      %v4479 = vmul.f32 %v3647, %v4447
      %v4480 = vmul.f32 %v3648, %v4448
      %v4481 = vmul.f32 %v3649, %v4449
      %v4482 = vmul.f32 %v3650, %v4450
      %v4483 = vmul.f32 %v3651, %v4451
      %v4484 = vmul.f32 %v3652, %v4452
      %v4485 = vmul.f32 %v3653, %v4453
      %v4486 = vmul.f32 %v3654, %v4454
      %v4487 = vmul.f32 %v3655, %v4455
      %v4488 = vmul.f32 %v3656, %v4456
      %v4489 = vmul.f32 %v3657, %v4457
      %v4490 = vmul.f32 %v3658, %v4458
      %v4491 = vmul.f32 %v3659, %v4459
      %v4492 = vmul.f32 %v3660, %v4460
      %v4493 = vmul.f32 %v3661, %v4461
      %v4494 = vmul.f32 %v3662, %v4462
      %v4495 = vmul.f32 %v3663, %v4463
      %v4496 = vmul.f32 %v3664, %v4464
      %v4497 = vmul.f32 %v3665, %v4465
      %v4498 = vmul.f32 %v3666, %v4466
      %v4499 = vmul.f32 %v3667, %v4467
      %v4500 = vmul.f32 %v3668, %v4468
      %v4501 = vmul.f32 %v3669, %v4469
      %v4502 = vmul.f32 %v3670, %v4470
      %v4503 = vmul.f32 %v3671, %v4471
      %v4504 = vmul.f32 %v3672, %v4472
      %v4505 = vmul.f32 %v3673, %v4473
      %v4506 = vmul.f32 %v3674, %v4474
      %4539 = vrot.lane.b32.xlu0 %v3611, 64
      %v4540 = vpop.permute.xlu0 %4539
      %4541 = vrot.lane.b32.xlu0 %v3612, 64
      %v4542 = vpop.permute.xlu0 %4541
      %4543 = vrot.lane.b32.xlu0 %v3613, 64
      %v4544 = vpop.permute.xlu0 %4543
      %4545 = vrot.lane.b32.xlu0 %v3614, 64
      %v4546 = vpop.permute.xlu0 %4545
      %4547 = vrot.lane.b32.xlu0 %v3615, 64
      %v4548 = vpop.permute.xlu0 %4547
      %4549 = vrot.lane.b32.xlu0 %v3616, 64
      %v4550 = vpop.permute.xlu0 %4549
      %4551 = vrot.lane.b32.xlu0 %v3617, 64
      %v4552 = vpop.permute.xlu0 %4551
      %4553 = vrot.lane.b32.xlu0 %v3618, 64
      %v4554 = vpop.permute.xlu0 %4553
      %4555 = vrot.lane.b32.xlu0 %v3619, 64
      %v4556 = vpop.permute.xlu0 %4555
      %4557 = vrot.lane.b32.xlu0 %v3620, 64
      %v4558 = vpop.permute.xlu0 %4557
      %4559 = vrot.lane.b32.xlu0 %v3621, 64
      %v4560 = vpop.permute.xlu0 %4559
      %4561 = vrot.lane.b32.xlu0 %v3622, 64
      %v4562 = vpop.permute.xlu0 %4561
      %4563 = vrot.lane.b32.xlu0 %v3623, 64
      %v4564 = vpop.permute.xlu0 %4563
      %4565 = vrot.lane.b32.xlu0 %v3624, 64
      %v4566 = vpop.permute.xlu0 %4565
      %4567 = vrot.lane.b32.xlu0 %v3625, 64
      %v4568 = vpop.permute.xlu0 %4567
      %4569 = vrot.lane.b32.xlu0 %v3626, 64
      %v4570 = vpop.permute.xlu0 %4569
      %4571 = vrot.lane.b32.xlu0 %v3627, 64
      %v4572 = vpop.permute.xlu0 %4571
      %4573 = vrot.lane.b32.xlu0 %v3628, 64
      %v4574 = vpop.permute.xlu0 %4573
      %4575 = vrot.lane.b32.xlu0 %v3629, 64
      %v4576 = vpop.permute.xlu0 %4575
      %4577 = vrot.lane.b32.xlu0 %v3630, 64
      %v4578 = vpop.permute.xlu0 %4577
      %4579 = vrot.lane.b32.xlu0 %v3631, 64
      %v4580 = vpop.permute.xlu0 %4579
      %4581 = vrot.lane.b32.xlu0 %v3632, 64
      %v4582 = vpop.permute.xlu0 %4581
      %4583 = vrot.lane.b32.xlu0 %v3633, 64
      %v4584 = vpop.permute.xlu0 %4583
      %4585 = vrot.lane.b32.xlu0 %v3634, 64
      %v4586 = vpop.permute.xlu0 %4585
      %4587 = vrot.lane.b32.xlu0 %v3635, 64
      %v4588 = vpop.permute.xlu0 %4587
      %4589 = vrot.lane.b32.xlu0 %v3636, 64
      %v4590 = vpop.permute.xlu0 %4589
      %4591 = vrot.lane.b32.xlu0 %v3637, 64
      %v4592 = vpop.permute.xlu0 %4591
      %4593 = vrot.lane.b32.xlu0 %v3638, 64
      %v4594 = vpop.permute.xlu0 %4593
      %4595 = vrot.lane.b32.xlu0 %v3639, 64
      %v4596 = vpop.permute.xlu0 %4595
      %4597 = vrot.lane.b32.xlu0 %v3640, 64
      %v4598 = vpop.permute.xlu0 %4597
      %4599 = vrot.lane.b32.xlu0 %v3641, 64
      %v4600 = vpop.permute.xlu0 %4599
      %4601 = vrot.lane.b32.xlu0 %v3642, 64
      %v4602 = vpop.permute.xlu0 %4601
      %v4635 = vmul.f32 %v4475, %v4540
      %v4636 = vmul.f32 %v4476, %v4542
      %v4637 = vmul.f32 %v4477, %v4544
      %v4638 = vmul.f32 %v4478, %v4546
      %v4639 = vmul.f32 %v4479, %v4548
      %v4640 = vmul.f32 %v4480, %v4550
      %v4641 = vmul.f32 %v4481, %v4552
      %v4642 = vmul.f32 %v4482, %v4554
      %v4643 = vmul.f32 %v4483, %v4556
      %v4644 = vmul.f32 %v4484, %v4558
      %v4645 = vmul.f32 %v4485, %v4560
      %v4646 = vmul.f32 %v4486, %v4562
      %v4647 = vmul.f32 %v4487, %v4564
      %v4648 = vmul.f32 %v4488, %v4566
      %v4649 = vmul.f32 %v4489, %v4568
      %v4650 = vmul.f32 %v4490, %v4570
      %v4651 = vmul.f32 %v4491, %v4572
      %v4652 = vmul.f32 %v4492, %v4574
      %v4653 = vmul.f32 %v4493, %v4576
      %v4654 = vmul.f32 %v4494, %v4578
      %v4655 = vmul.f32 %v4495, %v4580
      %v4656 = vmul.f32 %v4496, %v4582
      %v4657 = vmul.f32 %v4497, %v4584
      %v4658 = vmul.f32 %v4498, %v4586
      %v4659 = vmul.f32 %v4499, %v4588
      %v4660 = vmul.f32 %v4500, %v4590
      %v4661 = vmul.f32 %v4501, %v4592
      %v4662 = vmul.f32 %v4502, %v4594
      %v4663 = vmul.f32 %v4503, %v4596
      %v4664 = vmul.f32 %v4504, %v4598
      %v4665 = vmul.f32 %v4505, %v4600
      %v4666 = vmul.f32 %v4506, %v4602
      %v4667 = vld [vmem:[%s7] sm:$0xff]
      %v4668 = vld [vmem:[%s7 + $0x8] sm:$0xff]
      %v4669 = vld [vmem:[%s7 + $0x10] sm:$0xff]
      %v4670 = vld [vmem:[%s7 + $0x18] sm:$0xff]
      %v4671 = vld [vmem:[%s7 + $0x20] sm:$0xff]
      %v4672 = vld [vmem:[%s7 + $0x28] sm:$0xff]
      %v4673 = vld [vmem:[%s7 + $0x30] sm:$0xff]
      %v4674 = vld [vmem:[%s7 + $0x38] sm:$0xff]
      %vm4675 = vcmask 523264
      %v4677 = vsel %vm4675, %v4635, 0
      %v4680 = vsel %vm4675, %v4636, 0
      %v4683 = vsel %vm4675, %v4637, 0
      %v4686 = vsel %vm4675, %v4638, 0
      %v4689 = vsel %vm4675, %v4639, 0
      %v4692 = vsel %vm4675, %v4640, 0
      %v4695 = vsel %vm4675, %v4641, 0
      %v4698 = vsel %vm4675, %v4642, 0
      %v4701 = vsel %vm4675, %v4643, 0
      %v4704 = vsel %vm4675, %v4644, 0
      %v4707 = vsel %vm4675, %v4645, 0
      %v4710 = vsel %vm4675, %v4646, 0
      %v4713 = vsel %vm4675, %v4647, 0
      %v4716 = vsel %vm4675, %v4648, 0
      %v4719 = vsel %vm4675, %v4649, 0
      %v4722 = vsel %vm4675, %v4650, 0
      %v4725 = vsel %vm4675, %v4651, 0
      %v4728 = vsel %vm4675, %v4652, 0
      %v4731 = vsel %vm4675, %v4653, 0
      %v4734 = vsel %vm4675, %v4654, 0
      %v4737 = vsel %vm4675, %v4655, 0
      %v4740 = vsel %vm4675, %v4656, 0
      %v4743 = vsel %vm4675, %v4657, 0
      %v4746 = vsel %vm4675, %v4658, 0
      %v4749 = vsel %vm4675, %v4659, 0
      %v4752 = vsel %vm4675, %v4660, 0
      %v4755 = vsel %vm4675, %v4661, 0
      %v4758 = vsel %vm4675, %v4662, 0
      %v4761 = vsel %vm4675, %v4663, 0
      %v4764 = vsel %vm4675, %v4664, 0
      %v4767 = vsel %vm4675, %v4665, 0
      %v4770 = vsel %vm4675, %v4666, 0
      %4772 = vmatprep.subr.mxu0 0.0
      %4773 = vmatpush1.msra.mxu0 %v4667
      %4774 = vmatprep.subr.mxu0 0.0
      %4775 = vmatpush1.msra.mxu0 %v4668
      %4776 = vmatprep.subr.mxu0 0.0
      %4777 = vmatpush1.msra.mxu0 %v4669
      %4778 = vmatprep.subr.mxu0 0.0
      %4779 = vmatpush1.msra.mxu0 %v4670
      %4780 = vmatprep.subr.mxu0 0.0
      %4781 = vmatpush1.msra.mxu0 %v4671
      %4782 = vmatprep.subr.mxu0 0.0
      %4783 = vmatpush1.msra.mxu0 %v4672
      %4784 = vmatprep.subr.mxu0 0.0
      %4785 = vmatpush1.msra.mxu0 %v4673
      %4786 = vmatprep.subr.mxu0 0.0
      %4787 = vmatpush1.msra.mxu0 %v4674
      %4788 = vmatprep.subr.mxu0 0.0
      %4789 = vmatpush1.msra.mxu0 0.0
      %4790 = vmatprep.subr.mxu0 0.0
      %4791 = vmatpush1.msra.mxu0 0.0
      %4792 = vmatprep.subr.mxu0 0.0
      %4793 = vmatpush1.msra.mxu0 0.0
      %4794 = vmatprep.subr.mxu0 0.0
      %4795 = vmatpush1.msra.mxu0 0.0
      %4796 = vmatprep.subr.mxu0 0.0
      %4797 = vmatpush1.msra.mxu0 0.0
      %4798 = vmatprep.subr.mxu0 0.0
      %4799 = vmatpush1.msra.mxu0 0.0
      %4800 = vmatprep.subr.mxu0 0.0
      %4801 = vmatpush1.msra.mxu0 0.0
      %4802 = vmatprep.subr.mxu0 0.0
      %4803 = vmatpush1.msra.mxu0 0.0
      %4804 = vmatprep.subr.mxu0 0.0
      %4805 = vmatpush1.msra.mxu0 0.0
      %4806 = vmatprep.subr.mxu0 0.0
      %4807 = vmatpush1.msra.mxu0 0.0
      %4808 = vmatprep.subr.mxu0 0.0
      %4809 = vmatpush1.msra.mxu0 0.0
      %4810 = vmatprep.subr.mxu0 0.0
      %4811 = vmatpush1.msra.mxu0 0.0
      %4812 = vmatprep.subr.mxu0 0.0
      %4813 = vmatpush1.msra.mxu0 0.0
      %4814 = vmatprep.subr.mxu0 0.0
      %4815 = vmatpush1.msra.mxu0 0.0
      %4816 = vmatprep.subr.mxu0 0.0
      %4817 = vmatpush1.msra.mxu0 0.0
      %4818 = vmatprep.subr.mxu0 0.0
      %4819 = vmatpush1.msra.mxu0 0.0
      %4820 = vmatprep.subr.mxu0 0.0
      %4821 = vmatpush1.msra.mxu0 0.0
      %4822 = vmatprep.subr.mxu0 0.0
      %4823 = vmatpush1.msra.mxu0 0.0
      %4824 = vmatprep.subr.mxu0 0.0
      %4825 = vmatpush1.msra.mxu0 0.0
      %4826 = vmatprep.subr.mxu0 0.0
      %4827 = vmatpush1.msra.mxu0 0.0
      %4828 = vmatprep.subr.mxu0 0.0
      %4829 = vmatpush1.msra.mxu0 0.0
      %4830 = vmatprep.subr.mxu0 0.0
      %4831 = vmatpush1.msra.mxu0 0.0
      %4832 = vmatprep.subr.mxu0 0.0
      %4833 = vmatpush1.msra.mxu0 0.0
      %4834 = vmatprep.subr.mxu0 0.0
      %4835 = vmatpush1.msra.mxu0 0.0
      %4836 = vmatprep.mubr.f32.mxu0 0.0
      %4837 = vmatmul.mubr.f32.gmra.mrb[0].mxu0 %v4677
      %v4838 = vpop.f32.mrb[0].mxu0
      %v4839 = vadd.f32 0.0, %v4838
      %v4840 = vpop.f32.mrb[0].mxu0
      %4841 = vmatprep.mubr.f32.mxu0 0.0
      %4842 = vmatmul.mubr.f32.gmra.mrb[0].mxu0 %v4680
      %v4843 = vpop.f32.mrb[0].mxu0
      %v4844 = vadd.f32 0.0, %v4843
      %v4845 = vpop.f32.mrb[0].mxu0
      %4846 = vmatprep.mubr.f32.mxu0 0.0
      %4847 = vmatmul.mubr.f32.gmra.mrb[0].mxu0 %v4683
      %v4848 = vpop.f32.mrb[0].mxu0
      %v4849 = vadd.f32 0.0, %v4848
      %v4850 = vpop.f32.mrb[0].mxu0
      %4851 = vmatprep.mubr.f32.mxu0 0.0
      %4852 = vmatmul.mubr.f32.gmra.mrb[0].mxu0 %v4686
      %v4853 = vpop.f32.mrb[0].mxu0
      %v4854 = vadd.f32 0.0, %v4853
      %v4855 = vpop.f32.mrb[0].mxu0
      %4856 = vmatprep.mubr.f32.mxu0 0.0
      %4857 = vmatmul.mubr.f32.gmra.mrb[0].mxu0 %v4689
      %v4858 = vpop.f32.mrb[0].mxu0
      %v4859 = vadd.f32 0.0, %v4858
      %v4860 = vpop.f32.mrb[0].mxu0
      %4861 = vmatprep.mubr.f32.mxu0 0.0
      %4862 = vmatmul.mubr.f32.gmra.mrb[0].mxu0 %v4692
      %v4863 = vpop.f32.mrb[0].mxu0
      %v4864 = vadd.f32 0.0, %v4863
      %v4865 = vpop.f32.mrb[0].mxu0
      %4866 = vmatprep.mubr.f32.mxu0 0.0
      %4867 = vmatmul.mubr.f32.gmra.mrb[0].mxu0 %v4695
      %v4868 = vpop.f32.mrb[0].mxu0
      %v4869 = vadd.f32 0.0, %v4868
      %v4870 = vpop.f32.mrb[0].mxu0
      %4871 = vmatprep.mubr.f32.mxu0 0.0
      %4872 = vmatmul.mubr.f32.gmra.mrb[0].mxu0 %v4698
      %v4873 = vpop.f32.mrb[0].mxu0
      %v4874 = vadd.f32 0.0, %v4873
      %v4875 = vpop.f32.mrb[0].mxu0
      %4876 = vmatprep.mubr.f32.mxu0 0.0
      %4877 = vmatmul.mubr.f32.gmra.mrb[0].mxu0 %v4701
      %v4878 = vpop.f32.mrb[0].mxu0
      %v4879 = vadd.f32 0.0, %v4878
      %v4880 = vpop.f32.mrb[0].mxu0
      %4881 = vmatprep.mubr.f32.mxu0 0.0
      %4882 = vmatmul.mubr.f32.gmra.mrb[0].mxu0 %v4704
      %v4883 = vpop.f32.mrb[0].mxu0
      %v4884 = vadd.f32 0.0, %v4883
      %v4885 = vpop.f32.mrb[0].mxu0
      %4886 = vmatprep.mubr.f32.mxu0 0.0
      %4887 = vmatmul.mubr.f32.gmra.mrb[0].mxu0 %v4707
      %v4888 = vpop.f32.mrb[0].mxu0
      %v4889 = vadd.f32 0.0, %v4888
      %v4890 = vpop.f32.mrb[0].mxu0
      %4891 = vmatprep.mubr.f32.mxu0 0.0
      %4892 = vmatmul.mubr.f32.gmra.mrb[0].mxu0 %v4710
      %v4893 = vpop.f32.mrb[0].mxu0
      %v4894 = vadd.f32 0.0, %v4893
      %v4895 = vpop.f32.mrb[0].mxu0
      %4896 = vmatprep.mubr.f32.mxu0 0.0
      %4897 = vmatmul.mubr.f32.gmra.mrb[0].mxu0 %v4713
      %v4898 = vpop.f32.mrb[0].mxu0
      %v4899 = vadd.f32 0.0, %v4898
      %v4900 = vpop.f32.mrb[0].mxu0
      %4901 = vmatprep.mubr.f32.mxu0 0.0
      %4902 = vmatmul.mubr.f32.gmra.mrb[0].mxu0 %v4716
      %v4903 = vpop.f32.mrb[0].mxu0
      %v4904 = vadd.f32 0.0, %v4903
      %v4905 = vpop.f32.mrb[0].mxu0
      %4906 = vmatprep.mubr.f32.mxu0 0.0
      %4907 = vmatmul.mubr.f32.gmra.mrb[0].mxu0 %v4719
      %v4908 = vpop.f32.mrb[0].mxu0
      %v4909 = vadd.f32 0.0, %v4908
      %v4910 = vpop.f32.mrb[0].mxu0
      %4911 = vmatprep.mubr.f32.mxu0 0.0
      %4912 = vmatmul.mubr.f32.gmra.mrb[0].mxu0 %v4722
      %v4913 = vpop.f32.mrb[0].mxu0
      %v4914 = vadd.f32 0.0, %v4913
      %v4915 = vpop.f32.mrb[0].mxu0
      %4916 = vmatprep.mubr.f32.mxu0 0.0
      %4917 = vmatmul.mubr.f32.gmra.mrb[0].mxu0 %v4725
      %v4918 = vpop.f32.mrb[0].mxu0
      %v4919 = vadd.f32 0.0, %v4918
      %v4920 = vpop.f32.mrb[0].mxu0
      %4921 = vmatprep.mubr.f32.mxu0 0.0
      %4922 = vmatmul.mubr.f32.gmra.mrb[0].mxu0 %v4728
      %v4923 = vpop.f32.mrb[0].mxu0
      %v4924 = vadd.f32 0.0, %v4923
      %v4925 = vpop.f32.mrb[0].mxu0
      %4926 = vmatprep.mubr.f32.mxu0 0.0
      %4927 = vmatmul.mubr.f32.gmra.mrb[0].mxu0 %v4731
      %v4928 = vpop.f32.mrb[0].mxu0
      %v4929 = vadd.f32 0.0, %v4928
      %v4930 = vpop.f32.mrb[0].mxu0
      %4931 = vmatprep.mubr.f32.mxu0 0.0
      %4932 = vmatmul.mubr.f32.gmra.mrb[0].mxu0 %v4734
      %v4933 = vpop.f32.mrb[0].mxu0
      %v4934 = vadd.f32 0.0, %v4933
      %v4935 = vpop.f32.mrb[0].mxu0
      %4936 = vmatprep.mubr.f32.mxu0 0.0
      %4937 = vmatmul.mubr.f32.gmra.mrb[0].mxu0 %v4737
      %v4938 = vpop.f32.mrb[0].mxu0
      %v4939 = vadd.f32 0.0, %v4938
      %v4940 = vpop.f32.mrb[0].mxu0
      %4941 = vmatprep.mubr.f32.mxu0 0.0
      %4942 = vmatmul.mubr.f32.gmra.mrb[0].mxu0 %v4740
      %v4943 = vpop.f32.mrb[0].mxu0
      %v4944 = vadd.f32 0.0, %v4943
      %v4945 = vpop.f32.mrb[0].mxu0
      %4946 = vmatprep.mubr.f32.mxu0 0.0
      %4947 = vmatmul.mubr.f32.gmra.mrb[0].mxu0 %v4743
      %v4948 = vpop.f32.mrb[0].mxu0
      %v4949 = vadd.f32 0.0, %v4948
      %v4950 = vpop.f32.mrb[0].mxu0
      %4951 = vmatprep.mubr.f32.mxu0 0.0
      %4952 = vmatmul.mubr.f32.gmra.mrb[0].mxu0 %v4746
      %v4953 = vpop.f32.mrb[0].mxu0
      %v4954 = vadd.f32 0.0, %v4953
      %v4955 = vpop.f32.mrb[0].mxu0
      %4956 = vmatprep.mubr.f32.mxu0 0.0
      %4957 = vmatmul.mubr.f32.gmra.mrb[0].mxu0 %v4749
      %v4958 = vpop.f32.mrb[0].mxu0
      %v4959 = vadd.f32 0.0, %v4958
      %v4960 = vpop.f32.mrb[0].mxu0
      %4961 = vmatprep.mubr.f32.mxu0 0.0
      %4962 = vmatmul.mubr.f32.gmra.mrb[0].mxu0 %v4752
      %v4963 = vpop.f32.mrb[0].mxu0
      %v4964 = vadd.f32 0.0, %v4963
      %v4965 = vpop.f32.mrb[0].mxu0
      %4966 = vmatprep.mubr.f32.mxu0 0.0
      %4967 = vmatmul.mubr.f32.gmra.mrb[0].mxu0 %v4755
      %v4968 = vpop.f32.mrb[0].mxu0
      %v4969 = vadd.f32 0.0, %v4968
      %v4970 = vpop.f32.mrb[0].mxu0
      %4971 = vmatprep.mubr.f32.mxu0 0.0
      %4972 = vmatmul.mubr.f32.gmra.mrb[0].mxu0 %v4758
      %v4973 = vpop.f32.mrb[0].mxu0
      %v4974 = vadd.f32 0.0, %v4973
      %v4975 = vpop.f32.mrb[0].mxu0
      %4976 = vmatprep.mubr.f32.mxu0 0.0
      %4977 = vmatmul.mubr.f32.gmra.mrb[0].mxu0 %v4761
      %v4978 = vpop.f32.mrb[0].mxu0
      %v4979 = vadd.f32 0.0, %v4978
      %v4980 = vpop.f32.mrb[0].mxu0
      %4981 = vmatprep.mubr.f32.mxu0 0.0
      %4982 = vmatmul.mubr.f32.gmra.mrb[0].mxu0 %v4764
      %v4983 = vpop.f32.mrb[0].mxu0
      %v4984 = vadd.f32 0.0, %v4983
      %v4985 = vpop.f32.mrb[0].mxu0
      %4986 = vmatprep.mubr.f32.mxu0 0.0
      %4987 = vmatmul.mubr.f32.gmra.mrb[0].mxu0 %v4767
      %v4988 = vpop.f32.mrb[0].mxu0
      %v4989 = vadd.f32 0.0, %v4988
      %v4990 = vpop.f32.mrb[0].mxu0
      %4991 = vmatprep.mubr.f32.mxu0 0.0
      %4992 = vmatmul.mubr.f32.gmra.mrb[0].mxu0 %v4770
      %v4993 = vpop.f32.mrb[0].mxu0
      %v4994 = vadd.f32 0.0, %v4993
      %v4995 = vpop.f32.mrb[0].mxu0
      %4996 = vdwg.mxu0
      %4997 = vxpose.xlu0.b32.start [1/16] %v4839, 128
      %4998 = vxpose.xlu0.b32.cont [2/16] %v4844, 128
      %4999 = vxpose.xlu0.b32.cont [3/16] %v4849, 128
      %5000 = vxpose.xlu0.b32.cont [4/16] %v4854, 128
      %5001 = vxpose.xlu0.b32.cont [5/16] %v4859, 128
      %5002 = vxpose.xlu0.b32.cont [6/16] %v4864, 128
      %5003 = vxpose.xlu0.b32.cont [7/16] %v4869, 128
      %5004 = vxpose.xlu0.b32.cont [8/16] %v4874, 128
      %5005 = vxpose.xlu0.b32.cont [9/16] %v4879, 128
      %5006 = vxpose.xlu0.b32.cont [10/16] %v4884, 128
      %5007 = vxpose.xlu0.b32.cont [11/16] %v4889, 128
      %5008 = vxpose.xlu0.b32.cont [12/16] %v4894, 128
      %5009 = vxpose.xlu0.b32.cont [13/16] %v4899, 128
      %5010 = vxpose.xlu0.b32.cont [14/16] %v4904, 128
      %5011 = vxpose.xlu0.b32.cont [15/16] %v4909, 128
      %5012 = vxpose.xlu0.b32.end [16/16] %v4914, 128
      %v5013 = vpop.trf.xlu0
      %v5014 = vpop.trf.xlu0
      %v5015 = vpop.trf.xlu0
      %v5016 = vpop.trf.xlu0
      %v5017 = vpop.trf.xlu0
      %v5018 = vpop.trf.xlu0
      %v5019 = vpop.trf.xlu0
      %v5020 = vpop.trf.xlu0
      %v5021 = vpop.trf.xlu0
      %v5022 = vpop.trf.xlu0
      %v5023 = vpop.trf.xlu0
      %v5024 = vpop.trf.xlu0
      %v5025 = vpop.trf.xlu0
      %v5026 = vpop.trf.xlu0
      %v5027 = vpop.trf.xlu0
      %v5028 = vpop.trf.xlu0
      %5029 = vxpose.xlu0.b32.start [1/16] %v4919, 128
      %5030 = vxpose.xlu0.b32.cont [2/16] %v4924, 128
      %5031 = vxpose.xlu0.b32.cont [3/16] %v4929, 128
      %5032 = vxpose.xlu0.b32.cont [4/16] %v4934, 128
      %5033 = vxpose.xlu0.b32.cont [5/16] %v4939, 128
      %5034 = vxpose.xlu0.b32.cont [6/16] %v4944, 128
      %5035 = vxpose.xlu0.b32.cont [7/16] %v4949, 128
      %5036 = vxpose.xlu0.b32.cont [8/16] %v4954, 128
      %5037 = vxpose.xlu0.b32.cont [9/16] %v4959, 128
      %5038 = vxpose.xlu0.b32.cont [10/16] %v4964, 128
      %5039 = vxpose.xlu0.b32.cont [11/16] %v4969, 128
      %5040 = vxpose.xlu0.b32.cont [12/16] %v4974, 128
      %5041 = vxpose.xlu0.b32.cont [13/16] %v4979, 128
      %5042 = vxpose.xlu0.b32.cont [14/16] %v4984, 128
      %5043 = vxpose.xlu0.b32.cont [15/16] %v4989, 128
      %5044 = vxpose.xlu0.b32.end [16/16] %v4994, 128
      %v5045 = vpop.trf.xlu0
      %v5046 = vpop.trf.xlu0
      %v5047 = vpop.trf.xlu0
      %v5048 = vpop.trf.xlu0
      %v5049 = vpop.trf.xlu0
      %v5050 = vpop.trf.xlu0
      %v5051 = vpop.trf.xlu0
      %v5052 = vpop.trf.xlu0
      %v5053 = vpop.trf.xlu0
      %v5054 = vpop.trf.xlu0
      %v5055 = vpop.trf.xlu0
      %v5056 = vpop.trf.xlu0
      %v5057 = vpop.trf.xlu0
      %v5058 = vpop.trf.xlu0
      %v5059 = vpop.trf.xlu0
      %v5060 = vpop.trf.xlu0
      %v5061 = vadd.f32 %v323, %v5013
      %v5062 = vadd.f32 %v324, %v5045
      %v5063 = vadd.f32 %v325, %v5014
      %v5064 = vadd.f32 %v326, %v5046
      %v5065 = vadd.f32 %v327, %v5015
      %v5066 = vadd.f32 %v328, %v5047
      %v5067 = vadd.f32 %v329, %v5016
      %v5068 = vadd.f32 %v330, %v5048
      %5069 = vst [vmem:[%s322] sm:$0xff] %v5061
      %5070 = vst [vmem:[%s322 + $0x8] sm:$0xff] %v5062
      %5071 = vst [vmem:[%s322 + $0x10] sm:$0xff] %v5063
      %5072 = vst [vmem:[%s322 + $0x18] sm:$0xff] %v5064
      %5073 = vst [vmem:[%s322 + $0x20] sm:$0xff] %v5065
      %5074 = vst [vmem:[%s322 + $0x28] sm:$0xff] %v5066
      %5075 = vst [vmem:[%s322 + $0x30] sm:$0xff] %v5067
      %5076 = vst [vmem:[%s322 + $0x38] sm:$0xff] %v5068
      %p5077 = scmp.lt.s32.totalorder %s19, 1
      %s5078 = scalar_select %p5077, %s19, 1
      %s5079 = smul.addr %s5078, 8
      %s5080 = smul.addr %s5079, 8
      %s5081 = scalar_lea.vmem %s8, %s5080
      // Predicated region
      $region53: #{transformer_block_forward.3} parent=51 // pred_check
        %p5082 = pneg %p215
      $region54: #{transformer_block_forward.3} parent=51 // pred_check_branch
        %5084 = sbr.rel (%p5082) target = $region56
      $region55: #{transformer_block_forward.3} parent=51 // pred_region
        _
      $region56: #{transformer_block_forward.3} parent=51 // pred_fallthru
        _
    $region52: #{transformer_block_forward.3} parent=5 // pred_fallthru
      _
    %p5085 = scmp.le.s32.totalorder 2, %s14
    // Predicated region
    $region57: #{transformer_block_forward.3} parent=5 // pred_check
      %p5086 = pneg %p5085
    $region58: #{transformer_block_forward.3} parent=5 // pred_check_branch
      %5088 = sbr.rel (%p5086) target = $region60
    $region59: #{transformer_block_forward.3} parent=5 // pred_region
      %s5089 = ssub.s32 %s14, 2
      // Predicated region
      $region61: #{transformer_block_forward.3} parent=59 // pred_check
        %p5090 = pneg %p221
      $region62: #{transformer_block_forward.3} parent=59 // pred_check_branch
        %5092 = sbr.rel (%p5090) target = $region64
      $region63: #{transformer_block_forward.3} parent=59 // pred_region
        %p5093 = scmp.lt.s32.totalorder %s20, 1
        %s5094 = scalar_select %p5093, %s20, 1
        %s5095 = smul.addr %s5094, 8
        %s5096 = smul.addr %s5095, 8
        %s5097 = scalar_lea.vmem %s8, %s5096
      $region64: #{transformer_block_forward.3} parent=59 // pred_fallthru
        _
    $region60: #{transformer_block_forward.3} parent=5 // pred_fallthru
      _
  $region6: #{transformer_block_forward.3} parent=0 // loop_footer
    %s18 = sadd.s32 1, %s14
  $region7: #{transformer_block_forward.3} parent=0 // loop_footer_branch
    %13 = sbr.rel target = $region3
  $region8: #{transformer_block_forward.3} parent=0 // loop_exit
    _

// kernel: transformer_block_forward.2
$region0: #{transformer_block_forward.2}
  #allocation0 [shape = 'u32[]', space=smem, size = 0x4, offset = 0x4, fixed_abs, tag = 'smem constant byte address 0x4 - core index']
  #allocation1 [shape = 'u32[144,128]{1,0:T(1,128)}', space=vmem, size = 0x12000, scoped, tag = 'internal scratch']
  %s0 = inlined_call_operand.vmem [shape: f32[2,256,32], index: 0, kind: input, shape index: {}]
  %s1 = inlined_call_operand.vmem [shape: f32[2,2,32], index: 1, kind: input, shape index: {}]
  %s2 = inlined_call_operand.vmem [shape: f32[256,256], index: 2, kind: input, shape index: {}]
  %s3 = inlined_call_operand.vmem [shape: f32[256,1], index: 3, kind: input, shape index: {}]
  %s4 = inlined_call_operand.vmem [shape: f32[256,1], index: 4, kind: input, shape index: {}]
  %s5 = inlined_call_operand.vmem [shape: f32[32,32], index: 5, kind: input, shape index: {}]
  %s6 = inlined_call_operand.vmem [shape: f32[1,32], index: 6, kind: input, shape index: {}]
  %s7 = inlined_call_operand.vmem [shape: f32[32,32], index: 7, kind: input, shape index: {}]
  %s8 = inlined_call_operand.vmem [shape: f32[1,32], index: 8, kind: input, shape index: {}]
  %s9 = inlined_call_operand.vmem [shape: f32[32,32], index: 9, kind: input, shape index: {}]
  %s10 = inlined_call_operand.vmem [shape: f32[1,32], index: 10, kind: input, shape index: {}]
  %s11 = inlined_call_operand.vmem [shape: f32[256,256], index: 11, kind: input, shape index: {}]
  %s12 = inlined_call_operand.vmem [shape: f32[256,32], index: 12, kind: input, shape index: {}]
  %s13 = inlined_call_operand.vmem [shape: f32[256,256], index: 13, kind: input, shape index: {}]
  %s14 = inlined_call_operand.vmem [shape: f32[32,32], index: 14, kind: input, shape index: {}]
  %s15 = inlined_call_operand.vmem [shape: f32[1,32], index: 15, kind: input, shape index: {}]
  %s16 = inlined_call_operand.vmem [shape: f32[2,256,32], index: 16, kind: output, shape index: {}]
  %s17 = sld [smem:[#allocation0]]
  $region97: #{transformer_block_forward.2} parent=0
    _
  %s19 = ssub.s32 1, %s17
  %s20 = scalar_select 0, %s19, %s17
  loop: start=0, step=1, limit=4
  $region2: #{transformer_block_forward.2} parent=0 // loop_pre_header
    _
  $region3: #{transformer_block_forward.2} parent=0 // loop_header
    %s22 = sphi 0, %s26
    %p23 = scmp.ge.s32.totalorder %s22, 4
    %s32 = sphi 0, %s34
    %s35 = sphi 0, %s32
    %s36 = sphi 0, %s35
    %s52 = sphi 0, %s36
    %s58 = sphi 0, %s60
    %s61 = sphi 0, %s58
    %s62 = sphi 0, %s61
    %s78 = sphi 0, %s62
    %s82 = sphi 0, %s82
    %s84 = sphi 0, %s82
    %s85 = sphi 0, %s84
    %s99 = sphi 0, %s85
    %s103 = sphi 0, %s103
    %s105 = sphi 0, %s103
    %s106 = sphi 0, %s105
    %s120 = sphi 0, %s106
    %s124 = sphi 0, %s124
    %s126 = sphi 0, %s124
    %s127 = sphi 0, %s126
    %s141 = sphi 0, %s127
    %s145 = sphi 0, %s145
    %s147 = sphi 0, %s145
    %s148 = sphi 0, %s147
    %s162 = sphi 0, %s148
    %s166 = sphi 0, %s166
    %s168 = sphi 0, %s166
    %s169 = sphi 0, %s168
    %s183 = sphi 0, %s169
    %s187 = sphi 0, %s187
    %s189 = sphi 0, %s187
    %s190 = sphi 0, %s189
    %s204 = sphi 0, %s190
    %s208 = sphi 0, %s208
    %s210 = sphi 0, %s208
    %s211 = sphi 0, %s210
    %s225 = sphi 0, %s211
    %s229 = sphi 0, %s229
    %s231 = sphi 0, %s229
    %s232 = sphi 0, %s231
    %s246 = sphi 0, %s232
    %s250 = sphi 0, %s250
    %s252 = sphi 0, %s250
    %s253 = sphi 0, %s252
    %s267 = sphi 0, %s253
    %s271 = sphi 0, %s271
    %s273 = sphi 0, %s271
    %s274 = sphi 0, %s273
    %s288 = sphi 0, %s274
    %s292 = sphi 0, %s292
    %s294 = sphi 0, %s292
    %s295 = sphi 0, %s294
    %s309 = sphi 0, %s295
    %s313 = sphi 0, %s313
    %s315 = sphi 0, %s313
    %s316 = sphi 0, %s315
    %s330 = sphi 0, %s316
    %s334 = sphi 0, %s334
    %s336 = sphi 0, %s334
    %s337 = sphi 0, %s336
    %s351 = sphi 0, %s337
    %s355 = sphi 0, %s355
    %s357 = sphi 0, %s355
    %s358 = sphi 0, %s357
    %s372 = sphi 0, %s358
    %s378 = sphi 0, %s380
    %s381 = sphi 0, %s378
    %s382 = sphi 0, %s381
    %s398 = sphi 0, %s382
  $region4: #{transformer_block_forward.2} parent=0 // loop_header_branch
    %25 = sbr.rel (%p23) target = $region8
  $region5: #{transformer_block_forward.2} parent=0 // loop_body
    %s27 = ssub.s32 %s22, 1
    %s28 = ssub.s32 %s22, 2
    %s29 = sadd.s32 %s22, 1
    %s30 = ssub.s32 %s22, %s29
    %p31 = scmp.eq.s32.totalorder %s30, 0
    %s33 = sadd.s32 %s32, 1
    %s34 = scalar_select %p31, %s32, %s33
    %p37 = pneg %p31
    %p38 = scmp.eq.s32.totalorder %s22, 1
    %p39 = por %p37, %p38
    %p40 = scmp.ne.s32.totalorder %s32, %s35
    %p41 = scmp.eq.s32.totalorder %s22, 0
    %p42 = por %p40, %p41
    %p43 = scmp.ne.s32.totalorder %s32, %s35
    %p44 = scmp.eq.s32.totalorder %s27, 1
    %p45 = por %p43, %p44
    %p46 = scmp.ne.s32.totalorder %s35, %s36
    %p47 = scmp.eq.s32.totalorder %s27, 0
    %p48 = por %p46, %p47
    %p49 = scmp.ne.s32.totalorder %s35, %s36
    %p50 = scmp.eq.s32.totalorder %s28, 1
    %p51 = por %p49, %p50
    %p53 = scmp.ne.s32.totalorder %s36, %s52
    %p54 = scmp.eq.s32.totalorder %s28, 0
    %p55 = por %p53, %p54
    %s56 = ssub.s32 %s22, %s29
    %p57 = scmp.eq.s32.totalorder %s56, 0
    %s59 = sadd.s32 %s58, 1
    %s60 = scalar_select %p57, %s58, %s59
    %p63 = pneg %p57
    %p64 = scmp.eq.s32.totalorder %s22, 1
    %p65 = por %p63, %p64
    %p66 = scmp.ne.s32.totalorder %s58, %s61
    %p67 = scmp.eq.s32.totalorder %s22, 0
    %p68 = por %p66, %p67
    %p69 = scmp.ne.s32.totalorder %s58, %s61
    %p70 = scmp.eq.s32.totalorder %s27, 1
    %p71 = por %p69, %p70
    %p72 = scmp.ne.s32.totalorder %s61, %s62
    %p73 = scmp.eq.s32.totalorder %s27, 0
    %p74 = por %p72, %p73
    %p75 = scmp.ne.s32.totalorder %s61, %s62
    %p76 = scmp.eq.s32.totalorder %s28, 1
    %p77 = por %p75, %p76
    %p79 = scmp.ne.s32.totalorder %s62, %s78
    %p80 = scmp.eq.s32.totalorder %s28, 0
    %p81 = por %p79, %p80
    %s83 = sadd.s32 %s82, 1
    %p86 = scmp.eq.s32.totalorder %s22, 1
    %p87 = scmp.ne.s32.totalorder %s82, %s84
    %p88 = scmp.eq.s32.totalorder %s22, 0
    %p89 = por %p87, %p88
    %p90 = scmp.ne.s32.totalorder %s82, %s84
    %p91 = scmp.eq.s32.totalorder %s27, 1
    %p92 = por %p90, %p91
    %p93 = scmp.ne.s32.totalorder %s84, %s85
    %p94 = scmp.eq.s32.totalorder %s27, 0
    %p95 = por %p93, %p94
    %p96 = scmp.ne.s32.totalorder %s84, %s85
    %p97 = scmp.eq.s32.totalorder %s28, 1
    %p98 = por %p96, %p97
    %p100 = scmp.ne.s32.totalorder %s85, %s99
    %p101 = scmp.eq.s32.totalorder %s28, 0
    %p102 = por %p100, %p101
    %s104 = sadd.s32 %s103, 1
    %p107 = scmp.eq.s32.totalorder %s22, 1
    %p108 = scmp.ne.s32.totalorder %s103, %s105
    %p109 = scmp.eq.s32.totalorder %s22, 0
    %p110 = por %p108, %p109
    %p111 = scmp.ne.s32.totalorder %s103, %s105
    %p112 = scmp.eq.s32.totalorder %s27, 1
    %p113 = por %p111, %p112
    %p114 = scmp.ne.s32.totalorder %s105, %s106
    %p115 = scmp.eq.s32.totalorder %s27, 0
    %p116 = por %p114, %p115
    %p117 = scmp.ne.s32.totalorder %s105, %s106
    %p118 = scmp.eq.s32.totalorder %s28, 1
    %p119 = por %p117, %p118
    %p121 = scmp.ne.s32.totalorder %s106, %s120
    %p122 = scmp.eq.s32.totalorder %s28, 0
    %p123 = por %p121, %p122
    %s125 = sadd.s32 %s124, 1
    %p128 = scmp.eq.s32.totalorder %s22, 1
    %p129 = scmp.ne.s32.totalorder %s124, %s126
    %p130 = scmp.eq.s32.totalorder %s22, 0
    %p131 = por %p129, %p130
    %p132 = scmp.ne.s32.totalorder %s124, %s126
    %p133 = scmp.eq.s32.totalorder %s27, 1
    %p134 = por %p132, %p133
    %p135 = scmp.ne.s32.totalorder %s126, %s127
    %p136 = scmp.eq.s32.totalorder %s27, 0
    %p137 = por %p135, %p136
    %p138 = scmp.ne.s32.totalorder %s126, %s127
    %p139 = scmp.eq.s32.totalorder %s28, 1
    %p140 = por %p138, %p139
    %p142 = scmp.ne.s32.totalorder %s127, %s141
    %p143 = scmp.eq.s32.totalorder %s28, 0
    %p144 = por %p142, %p143
    %s146 = sadd.s32 %s145, 1
    %p149 = scmp.eq.s32.totalorder %s22, 1
    %p150 = scmp.ne.s32.totalorder %s145, %s147
    %p151 = scmp.eq.s32.totalorder %s22, 0
    %p152 = por %p150, %p151
    %p153 = scmp.ne.s32.totalorder %s145, %s147
    %p154 = scmp.eq.s32.totalorder %s27, 1
    %p155 = por %p153, %p154
    %p156 = scmp.ne.s32.totalorder %s147, %s148
    %p157 = scmp.eq.s32.totalorder %s27, 0
    %p158 = por %p156, %p157
    %p159 = scmp.ne.s32.totalorder %s147, %s148
    %p160 = scmp.eq.s32.totalorder %s28, 1
    %p161 = por %p159, %p160
    %p163 = scmp.ne.s32.totalorder %s148, %s162
    %p164 = scmp.eq.s32.totalorder %s28, 0
    %p165 = por %p163, %p164
    %s167 = sadd.s32 %s166, 1
    %p170 = scmp.eq.s32.totalorder %s22, 1
    %p171 = scmp.ne.s32.totalorder %s166, %s168
    %p172 = scmp.eq.s32.totalorder %s22, 0
    %p173 = por %p171, %p172
    %p174 = scmp.ne.s32.totalorder %s166, %s168
    %p175 = scmp.eq.s32.totalorder %s27, 1
    %p176 = por %p174, %p175
    %p177 = scmp.ne.s32.totalorder %s168, %s169
    %p178 = scmp.eq.s32.totalorder %s27, 0
    %p179 = por %p177, %p178
    %p180 = scmp.ne.s32.totalorder %s168, %s169
    %p181 = scmp.eq.s32.totalorder %s28, 1
    %p182 = por %p180, %p181
    %p184 = scmp.ne.s32.totalorder %s169, %s183
    %p185 = scmp.eq.s32.totalorder %s28, 0
    %p186 = por %p184, %p185
    %s188 = sadd.s32 %s187, 1
    %p191 = scmp.eq.s32.totalorder %s22, 1
    %p192 = scmp.ne.s32.totalorder %s187, %s189
    %p193 = scmp.eq.s32.totalorder %s22, 0
    %p194 = por %p192, %p193
    %p195 = scmp.ne.s32.totalorder %s187, %s189
    %p196 = scmp.eq.s32.totalorder %s27, 1
    %p197 = por %p195, %p196
    %p198 = scmp.ne.s32.totalorder %s189, %s190
    %p199 = scmp.eq.s32.totalorder %s27, 0
    %p200 = por %p198, %p199
    %p201 = scmp.ne.s32.totalorder %s189, %s190
    %p202 = scmp.eq.s32.totalorder %s28, 1
    %p203 = por %p201, %p202
    %p205 = scmp.ne.s32.totalorder %s190, %s204
    %p206 = scmp.eq.s32.totalorder %s28, 0
    %p207 = por %p205, %p206
    %s209 = sadd.s32 %s208, 1
    %p212 = scmp.eq.s32.totalorder %s22, 1
    %p213 = scmp.ne.s32.totalorder %s208, %s210
    %p214 = scmp.eq.s32.totalorder %s22, 0
    %p215 = por %p213, %p214
    %p216 = scmp.ne.s32.totalorder %s208, %s210
    %p217 = scmp.eq.s32.totalorder %s27, 1
    %p218 = por %p216, %p217
    %p219 = scmp.ne.s32.totalorder %s210, %s211
    %p220 = scmp.eq.s32.totalorder %s27, 0
    %p221 = por %p219, %p220
    %p222 = scmp.ne.s32.totalorder %s210, %s211
    %p223 = scmp.eq.s32.totalorder %s28, 1
    %p224 = por %p222, %p223
    %p226 = scmp.ne.s32.totalorder %s211, %s225
    %p227 = scmp.eq.s32.totalorder %s28, 0
    %p228 = por %p226, %p227
    %s230 = sadd.s32 %s229, 1
    %p233 = scmp.eq.s32.totalorder %s22, 1
    %p234 = scmp.ne.s32.totalorder %s229, %s231
    %p235 = scmp.eq.s32.totalorder %s22, 0
    %p236 = por %p234, %p235
    %p237 = scmp.ne.s32.totalorder %s229, %s231
    %p238 = scmp.eq.s32.totalorder %s27, 1
    %p239 = por %p237, %p238
    %p240 = scmp.ne.s32.totalorder %s231, %s232
    %p241 = scmp.eq.s32.totalorder %s27, 0
    %p242 = por %p240, %p241
    %p243 = scmp.ne.s32.totalorder %s231, %s232
    %p244 = scmp.eq.s32.totalorder %s28, 1
    %p245 = por %p243, %p244
    %p247 = scmp.ne.s32.totalorder %s232, %s246
    %p248 = scmp.eq.s32.totalorder %s28, 0
    %p249 = por %p247, %p248
    %s251 = sadd.s32 %s250, 1
    %p254 = scmp.eq.s32.totalorder %s22, 1
    %p255 = scmp.ne.s32.totalorder %s250, %s252
    %p256 = scmp.eq.s32.totalorder %s22, 0
    %p257 = por %p255, %p256
    %p258 = scmp.ne.s32.totalorder %s250, %s252
    %p259 = scmp.eq.s32.totalorder %s27, 1
    %p260 = por %p258, %p259
    %p261 = scmp.ne.s32.totalorder %s252, %s253
    %p262 = scmp.eq.s32.totalorder %s27, 0
    %p263 = por %p261, %p262
    %p264 = scmp.ne.s32.totalorder %s252, %s253
    %p265 = scmp.eq.s32.totalorder %s28, 1
    %p266 = por %p264, %p265
    %p268 = scmp.ne.s32.totalorder %s253, %s267
    %p269 = scmp.eq.s32.totalorder %s28, 0
    %p270 = por %p268, %p269
    %s272 = sadd.s32 %s271, 1
    %p275 = scmp.eq.s32.totalorder %s22, 1
    %p276 = scmp.ne.s32.totalorder %s271, %s273
    %p277 = scmp.eq.s32.totalorder %s22, 0
    %p278 = por %p276, %p277
    %p279 = scmp.ne.s32.totalorder %s271, %s273
    %p280 = scmp.eq.s32.totalorder %s27, 1
    %p281 = por %p279, %p280
    %p282 = scmp.ne.s32.totalorder %s273, %s274
    %p283 = scmp.eq.s32.totalorder %s27, 0
    %p284 = por %p282, %p283
    %p285 = scmp.ne.s32.totalorder %s273, %s274
    %p286 = scmp.eq.s32.totalorder %s28, 1
    %p287 = por %p285, %p286
    %p289 = scmp.ne.s32.totalorder %s274, %s288
    %p290 = scmp.eq.s32.totalorder %s28, 0
    %p291 = por %p289, %p290
    %s293 = sadd.s32 %s292, 1
    %p296 = scmp.eq.s32.totalorder %s22, 1
    %p297 = scmp.ne.s32.totalorder %s292, %s294
    %p298 = scmp.eq.s32.totalorder %s22, 0
    %p299 = por %p297, %p298
    %p300 = scmp.ne.s32.totalorder %s292, %s294
    %p301 = scmp.eq.s32.totalorder %s27, 1
    %p302 = por %p300, %p301
    %p303 = scmp.ne.s32.totalorder %s294, %s295
    %p304 = scmp.eq.s32.totalorder %s27, 0
    %p305 = por %p303, %p304
    %p306 = scmp.ne.s32.totalorder %s294, %s295
    %p307 = scmp.eq.s32.totalorder %s28, 1
    %p308 = por %p306, %p307
    %p310 = scmp.ne.s32.totalorder %s295, %s309
    %p311 = scmp.eq.s32.totalorder %s28, 0
    %p312 = por %p310, %p311
    %s314 = sadd.s32 %s313, 1
    %p317 = scmp.eq.s32.totalorder %s22, 1
    %p318 = scmp.ne.s32.totalorder %s313, %s315
    %p319 = scmp.eq.s32.totalorder %s22, 0
    %p320 = por %p318, %p319
    %p321 = scmp.ne.s32.totalorder %s313, %s315
    %p322 = scmp.eq.s32.totalorder %s27, 1
    %p323 = por %p321, %p322
    %p324 = scmp.ne.s32.totalorder %s315, %s316
    %p325 = scmp.eq.s32.totalorder %s27, 0
    %p326 = por %p324, %p325
    %p327 = scmp.ne.s32.totalorder %s315, %s316
    %p328 = scmp.eq.s32.totalorder %s28, 1
    %p329 = por %p327, %p328
    %p331 = scmp.ne.s32.totalorder %s316, %s330
    %p332 = scmp.eq.s32.totalorder %s28, 0
    %p333 = por %p331, %p332
    %s335 = sadd.s32 %s334, 1
    %p338 = scmp.eq.s32.totalorder %s22, 1
    %p339 = scmp.ne.s32.totalorder %s334, %s336
    %p340 = scmp.eq.s32.totalorder %s22, 0
    %p341 = por %p339, %p340
    %p342 = scmp.ne.s32.totalorder %s334, %s336
    %p343 = scmp.eq.s32.totalorder %s27, 1
    %p344 = por %p342, %p343
    %p345 = scmp.ne.s32.totalorder %s336, %s337
    %p346 = scmp.eq.s32.totalorder %s27, 0
    %p347 = por %p345, %p346
    %p348 = scmp.ne.s32.totalorder %s336, %s337
    %p349 = scmp.eq.s32.totalorder %s28, 1
    %p350 = por %p348, %p349
    %p352 = scmp.ne.s32.totalorder %s337, %s351
    %p353 = scmp.eq.s32.totalorder %s28, 0
    %p354 = por %p352, %p353
    %s356 = sadd.s32 %s355, 1
    %p359 = scmp.eq.s32.totalorder %s22, 1
    %p360 = scmp.ne.s32.totalorder %s355, %s357
    %p361 = scmp.eq.s32.totalorder %s22, 0
    %p362 = por %p360, %p361
    %p363 = scmp.ne.s32.totalorder %s355, %s357
    %p364 = scmp.eq.s32.totalorder %s27, 1
    %p365 = por %p363, %p364
    %p366 = scmp.ne.s32.totalorder %s357, %s358
    %p367 = scmp.eq.s32.totalorder %s27, 0
    %p368 = por %p366, %p367
    %p369 = scmp.ne.s32.totalorder %s357, %s358
    %p370 = scmp.eq.s32.totalorder %s28, 1
    %p371 = por %p369, %p370
    %p373 = scmp.ne.s32.totalorder %s358, %s372
    %p374 = scmp.eq.s32.totalorder %s28, 0
    %p375 = por %p373, %p374
    %s376 = ssub.s32 %s22, %s29
    %p377 = scmp.eq.s32.totalorder %s376, 0
    %s379 = sadd.s32 %s378, 1
    %s380 = scalar_select %p377, %s378, %s379
    %p383 = pneg %p377
    %p384 = scmp.eq.s32.totalorder %s22, 1
    %p385 = por %p383, %p384
    %p386 = scmp.ne.s32.totalorder %s378, %s381
    %p387 = scmp.eq.s32.totalorder %s22, 0
    %p388 = por %p386, %p387
    %p389 = scmp.ne.s32.totalorder %s378, %s381
    %p390 = scmp.eq.s32.totalorder %s27, 1
    %p391 = por %p389, %p390
    %p392 = scmp.ne.s32.totalorder %s381, %s382
    %p393 = scmp.eq.s32.totalorder %s27, 0
    %p394 = por %p392, %p393
    %p395 = scmp.ne.s32.totalorder %s381, %s382
    %p396 = scmp.eq.s32.totalorder %s28, 1
    %p397 = por %p395, %p396
    %p399 = scmp.ne.s32.totalorder %s382, %s398
    %p400 = scmp.eq.s32.totalorder %s28, 0
    %p401 = por %p399, %p400
    %p402 = scmp.le.s32.totalorder 1, %s22
    %p403 = scmp.lt.s32.totalorder %s22, 3
    %p404 = pnand %p402, %p403
    %p405 = pneg %p404
    // Predicated region
    $region9: #{transformer_block_forward.2} parent=5 // pred_check
      _
    $region10: #{transformer_block_forward.2} parent=5 // pred_check_branch
      %407 = sbr.rel (%p404) target = $region12
    $region11: #{transformer_block_forward.2} parent=5 // pred_region
      %s408 = ssub.s32 %s22, 1
      // Predicated region
      $region13: #{transformer_block_forward.2} parent=11 // pred_check
        %p409 = pneg %p95
      $region14: #{transformer_block_forward.2} parent=11 // pred_check_branch
        %411 = sbr.rel (%p409) target = $region16
      $region15: #{transformer_block_forward.2} parent=11 // pred_region
        _
      $region16: #{transformer_block_forward.2} parent=11 // pred_fallthru
        _
      // Predicated region
      $region17: #{transformer_block_forward.2} parent=11 // pred_check
        %p412 = pneg %p116
      $region18: #{transformer_block_forward.2} parent=11 // pred_check_branch
        %414 = sbr.rel (%p412) target = $region20
      $region19: #{transformer_block_forward.2} parent=11 // pred_region
        _
      $region20: #{transformer_block_forward.2} parent=11 // pred_fallthru
        _
      // Predicated region
      $region21: #{transformer_block_forward.2} parent=11 // pred_check
        %p415 = pneg %p137
      $region22: #{transformer_block_forward.2} parent=11 // pred_check_branch
        %417 = sbr.rel (%p415) target = $region24
      $region23: #{transformer_block_forward.2} parent=11 // pred_region
        _
      $region24: #{transformer_block_forward.2} parent=11 // pred_fallthru
        _
      // Predicated region
      $region25: #{transformer_block_forward.2} parent=11 // pred_check
        %p418 = pneg %p158
      $region26: #{transformer_block_forward.2} parent=11 // pred_check_branch
        %420 = sbr.rel (%p418) target = $region28
      $region27: #{transformer_block_forward.2} parent=11 // pred_region
        _
      $region28: #{transformer_block_forward.2} parent=11 // pred_fallthru
        _
      // Predicated region
      $region29: #{transformer_block_forward.2} parent=11 // pred_check
        %p421 = pneg %p179
      $region30: #{transformer_block_forward.2} parent=11 // pred_check_branch
        %423 = sbr.rel (%p421) target = $region32
      $region31: #{transformer_block_forward.2} parent=11 // pred_region
        _
      $region32: #{transformer_block_forward.2} parent=11 // pred_fallthru
        _
      // Predicated region
      $region33: #{transformer_block_forward.2} parent=11 // pred_check
        %p424 = pneg %p200
      $region34: #{transformer_block_forward.2} parent=11 // pred_check_branch
        %426 = sbr.rel (%p424) target = $region36
      $region35: #{transformer_block_forward.2} parent=11 // pred_region
        _
      $region36: #{transformer_block_forward.2} parent=11 // pred_fallthru
        _
      // Predicated region
      $region37: #{transformer_block_forward.2} parent=11 // pred_check
        %p427 = pneg %p221
      $region38: #{transformer_block_forward.2} parent=11 // pred_check_branch
        %429 = sbr.rel (%p427) target = $region40
      $region39: #{transformer_block_forward.2} parent=11 // pred_region
        _
      $region40: #{transformer_block_forward.2} parent=11 // pred_fallthru
        _
      // Predicated region
      $region41: #{transformer_block_forward.2} parent=11 // pred_check
        %p430 = pneg %p242
      $region42: #{transformer_block_forward.2} parent=11 // pred_check_branch
        %432 = sbr.rel (%p430) target = $region44
      $region43: #{transformer_block_forward.2} parent=11 // pred_region
        _
      $region44: #{transformer_block_forward.2} parent=11 // pred_fallthru
        _
      // Predicated region
      $region45: #{transformer_block_forward.2} parent=11 // pred_check
        %p433 = pneg %p263
      $region46: #{transformer_block_forward.2} parent=11 // pred_check_branch
        %435 = sbr.rel (%p433) target = $region48
      $region47: #{transformer_block_forward.2} parent=11 // pred_region
        _
      $region48: #{transformer_block_forward.2} parent=11 // pred_fallthru
        _
      // Predicated region
      $region49: #{transformer_block_forward.2} parent=11 // pred_check
        %p436 = pneg %p284
      $region50: #{transformer_block_forward.2} parent=11 // pred_check_branch
        %438 = sbr.rel (%p436) target = $region52
      $region51: #{transformer_block_forward.2} parent=11 // pred_region
        _
      $region52: #{transformer_block_forward.2} parent=11 // pred_fallthru
        _
      // Predicated region
      $region53: #{transformer_block_forward.2} parent=11 // pred_check
        %p439 = pneg %p305
      $region54: #{transformer_block_forward.2} parent=11 // pred_check_branch
        %441 = sbr.rel (%p439) target = $region56
      $region55: #{transformer_block_forward.2} parent=11 // pred_region
        _
      $region56: #{transformer_block_forward.2} parent=11 // pred_fallthru
        _
      // Predicated region
      $region57: #{transformer_block_forward.2} parent=11 // pred_check
        %p442 = pneg %p326
      $region58: #{transformer_block_forward.2} parent=11 // pred_check_branch
        %444 = sbr.rel (%p442) target = $region60
      $region59: #{transformer_block_forward.2} parent=11 // pred_region
        _
      $region60: #{transformer_block_forward.2} parent=11 // pred_fallthru
        _
      // Predicated region
      $region61: #{transformer_block_forward.2} parent=11 // pred_check
        %p445 = pneg %p347
      $region62: #{transformer_block_forward.2} parent=11 // pred_check_branch
        %447 = sbr.rel (%p445) target = $region64
      $region63: #{transformer_block_forward.2} parent=11 // pred_region
        _
      $region64: #{transformer_block_forward.2} parent=11 // pred_fallthru
        _
      // Predicated region
      $region65: #{transformer_block_forward.2} parent=11 // pred_check
        %p448 = pneg %p368
      $region66: #{transformer_block_forward.2} parent=11 // pred_check_branch
        %450 = sbr.rel (%p448) target = $region68
      $region67: #{transformer_block_forward.2} parent=11 // pred_region
        _
      $region68: #{transformer_block_forward.2} parent=11 // pred_fallthru
        _
    $region12: #{transformer_block_forward.2} parent=5 // pred_fallthru
      _
    %p451 = scmp.lt.s32.totalorder %s22, 2
    // Predicated region
    $region69: #{transformer_block_forward.2} parent=5 // pred_check
      %p452 = pneg %p451
    $region70: #{transformer_block_forward.2} parent=5 // pred_check_branch
      %454 = sbr.rel (%p452) target = $region72
    $region71: #{transformer_block_forward.2} parent=5 // pred_region
      // Predicated region
      $region73: #{transformer_block_forward.2} parent=71 // pred_check
        %p455 = pneg %p42
      $region74: #{transformer_block_forward.2} parent=71 // pred_check_branch
        %457 = sbr.rel (%p455) target = $region76
      $region75: #{transformer_block_forward.2} parent=71 // pred_region
        %p458 = scmp.lt.s32.totalorder %s22, 1
        %s459 = scalar_select %p458, %s22, 1
        %s460 = smul.addr %s459, 32
        %s461 = smul.addr %s460, 8
        %s462 = scalar_lea.vmem %s0, %s461
      $region76: #{transformer_block_forward.2} parent=71 // pred_fallthru
        _
      // Predicated region
      $region77: #{transformer_block_forward.2} parent=71 // pred_check
        %p463 = pneg %p68
      $region78: #{transformer_block_forward.2} parent=71 // pred_check_branch
        %465 = sbr.rel (%p463) target = $region80
      $region79: #{transformer_block_forward.2} parent=71 // pred_region
        %p466 = scmp.lt.s32.totalorder %s22, 1
        %s467 = scalar_select %p466, %s22, 1
        %s468 = smul.addr %s467, 2
        %s469 = scalar_lea.vmem %s1, %s468
      $region80: #{transformer_block_forward.2} parent=71 // pred_fallthru
        _
    $region72: #{transformer_block_forward.2} parent=5 // pred_fallthru
      _
    %p470 = scmp.le.s32.totalorder 1, %s22
    %p471 = scmp.lt.s32.totalorder %s22, 3
    %p472 = pnand %p470, %p471
    %p473 = pneg %p472
    // Predicated region
    $region81: #{transformer_block_forward.2} parent=5 // pred_check
      _
    $region82: #{transformer_block_forward.2} parent=5 // pred_check_branch
      %475 = sbr.rel (%p472) target = $region84
    $region83: #{transformer_block_forward.2} parent=5 // pred_region
      %s476 = ssub.s32 %s22, 1
      %p477 = scmp.lt.s32.totalorder %s27, 1
      %s478 = scalar_select %p477, %s27, 1
      %s479 = smul.addr %s478, 32
      %s480 = smul.addr %s479, 8
      %s481 = scalar_lea.vmem %s0, %s480
      %p482 = pneg %p48
      %p483 = pneg %p45
      %p484 = scmp.lt.s32.totalorder %s27, 1
      %s485 = scalar_select %p484, %s27, 1
      %s486 = smul.addr %s485, 2
      %s487 = scalar_lea.vmem %s1, %s486
      %p488 = pneg %p74
      %p489 = pneg %p71
      %p490 = pneg %p95
      %p491 = pneg %p92
      %p492 = pneg %p116
      %p493 = pneg %p113
      %p494 = pneg %p137
      %p495 = pneg %p134
      %p496 = pneg %p158
      %p497 = pneg %p155
      %p498 = pneg %p179
      %p499 = pneg %p176
      %p500 = pneg %p200
      %p501 = pneg %p197
      %p502 = pneg %p221
      %p503 = pneg %p218
      %p504 = pneg %p242
      %p505 = pneg %p239
      %p506 = pneg %p263
      %p507 = pneg %p260
      %p508 = pneg %p284
      %p509 = pneg %p281
      %p510 = pneg %p305
      %p511 = pneg %p302
      %p512 = pneg %p326
      %p513 = pneg %p323
      %p514 = pneg %p347
      %p515 = pneg %p344
      %p516 = pneg %p368
      %p517 = pneg %p365
      %p518 = pneg %p394
      %p519 = pneg %p391
      %p520 = scmp.lt.s32.totalorder %s27, 1
      %s521 = scalar_select %p520, %s27, 1
      %s522 = smul.addr %s521, 32
      %s523 = smul.addr %s522, 8
      %s524 = scalar_lea.vmem %s16, %s523
      %p525 = scmp.lt.s32.totalorder %s27, 1
      %s526 = scalar_select %p525, %s27, 1
      %s527 = smul.addr %s526, 32
      %s528 = smul.addr %s527, 8
      %s529 = scalar_lea.vmem %s0, %s528
      %p530 = scmp.lt.s32.totalorder %s27, 1
      %s531 = scalar_select %p530, %s27, 1
      %s532 = smul.addr %s531, 2
      %s533 = scalar_lea.vmem %s1, %s532
      %p534 = scmp.lt.s32.totalorder %s27, 1
      %s535 = scalar_select %p534, %s27, 1
      %s536 = smul.addr %s535, 32
      %s537 = smul.addr %s536, 8
      %s538 = scalar_lea.vmem %s16, %s537
      %v539 = vld [vmem:[%s529] sm:$0xff]
      %v540 = vld [vmem:[%s529 + $0x8] sm:$0xff]
      %v541 = vld [vmem:[%s529 + $0x10] sm:$0xff]
      %v542 = vld [vmem:[%s529 + $0x18] sm:$0xff]
      %v543 = vld [vmem:[%s529 + $0x20] sm:$0xff]
      %v544 = vld [vmem:[%s529 + $0x28] sm:$0xff]
      %v545 = vld [vmem:[%s529 + $0x30] sm:$0xff]
      %v546 = vld [vmem:[%s529 + $0x38] sm:$0xff]
      %v547 = vld [vmem:[%s529 + $0x40] sm:$0xff]
      %v548 = vld [vmem:[%s529 + $0x48] sm:$0xff]
      %v549 = vld [vmem:[%s529 + $0x50] sm:$0xff]
      %v550 = vld [vmem:[%s529 + $0x58] sm:$0xff]
      %v551 = vld [vmem:[%s529 + $0x60] sm:$0xff]
      %v552 = vld [vmem:[%s529 + $0x68] sm:$0xff]
      %v553 = vld [vmem:[%s529 + $0x70] sm:$0xff]
      %v554 = vld [vmem:[%s529 + $0x78] sm:$0xff]
      %v555 = vld [vmem:[%s529 + $0x80] sm:$0xff]
      %v556 = vld [vmem:[%s529 + $0x88] sm:$0xff]
      %v557 = vld [vmem:[%s529 + $0x90] sm:$0xff]
      %v558 = vld [vmem:[%s529 + $0x98] sm:$0xff]
      %v559 = vld [vmem:[%s529 + $0xa0] sm:$0xff]
      %v560 = vld [vmem:[%s529 + $0xa8] sm:$0xff]
      %v561 = vld [vmem:[%s529 + $0xb0] sm:$0xff]
      %v562 = vld [vmem:[%s529 + $0xb8] sm:$0xff]
      %v563 = vld [vmem:[%s529 + $0xc0] sm:$0xff]
      %v564 = vld [vmem:[%s529 + $0xc8] sm:$0xff]
      %v565 = vld [vmem:[%s529 + $0xd0] sm:$0xff]
      %v566 = vld [vmem:[%s529 + $0xd8] sm:$0xff]
      %v567 = vld [vmem:[%s529 + $0xe0] sm:$0xff]
      %v568 = vld [vmem:[%s529 + $0xe8] sm:$0xff]
      %v569 = vld [vmem:[%s529 + $0xf0] sm:$0xff]
      %v570 = vld [vmem:[%s529 + $0xf8] sm:$0xff]
      %v571 = vld [vmem:[%s2] sm:$0xff]
      %v572 = vld [vmem:[%s2 + $0x8] sm:$0xff]
      %v573 = vld [vmem:[%s2 + $0x10] sm:$0xff]
      %v574 = vld [vmem:[%s2 + $0x18] sm:$0xff]
      %v575 = vld [vmem:[%s2 + $0x20] sm:$0xff]
      %v576 = vld [vmem:[%s2 + $0x28] sm:$0xff]
      %v577 = vld [vmem:[%s2 + $0x30] sm:$0xff]
      %v578 = vld [vmem:[%s2 + $0x38] sm:$0xff]
      %v579 = vld [vmem:[%s2 + $0x40] sm:$0xff]
      %v580 = vld [vmem:[%s2 + $0x48] sm:$0xff]
      %v581 = vld [vmem:[%s2 + $0x50] sm:$0xff]
      %v582 = vld [vmem:[%s2 + $0x58] sm:$0xff]
      %v583 = vld [vmem:[%s2 + $0x60] sm:$0xff]
      %v584 = vld [vmem:[%s2 + $0x68] sm:$0xff]
      %v585 = vld [vmem:[%s2 + $0x70] sm:$0xff]
      %v586 = vld [vmem:[%s2 + $0x78] sm:$0xff]
      %v587 = vld [vmem:[%s2 + $0x80] sm:$0xff]
      %v588 = vld [vmem:[%s2 + $0x88] sm:$0xff]
      %v589 = vld [vmem:[%s2 + $0x90] sm:$0xff]
      %v590 = vld [vmem:[%s2 + $0x98] sm:$0xff]
      %v591 = vld [vmem:[%s2 + $0xa0] sm:$0xff]
      %v592 = vld [vmem:[%s2 + $0xa8] sm:$0xff]
      %v593 = vld [vmem:[%s2 + $0xb0] sm:$0xff]
      %v594 = vld [vmem:[%s2 + $0xb8] sm:$0xff]
      %v595 = vld [vmem:[%s2 + $0xc0] sm:$0xff]
      %v596 = vld [vmem:[%s2 + $0xc8] sm:$0xff]
      %v597 = vld [vmem:[%s2 + $0xd0] sm:$0xff]
      %v598 = vld [vmem:[%s2 + $0xd8] sm:$0xff]
      %v599 = vld [vmem:[%s2 + $0xe0] sm:$0xff]
      %v600 = vld [vmem:[%s2 + $0xe8] sm:$0xff]
      %v601 = vld [vmem:[%s2 + $0xf0] sm:$0xff]
      %v602 = vld [vmem:[%s2 + $0xf8] sm:$0xff]
      %v603 = vld [vmem:[%s2 + $0x100] sm:$0xff]
      %v604 = vld [vmem:[%s2 + $0x108] sm:$0xff]
      %v605 = vld [vmem:[%s2 + $0x110] sm:$0xff]
      %v606 = vld [vmem:[%s2 + $0x118] sm:$0xff]
      %v607 = vld [vmem:[%s2 + $0x120] sm:$0xff]
      %v608 = vld [vmem:[%s2 + $0x128] sm:$0xff]
      %v609 = vld [vmem:[%s2 + $0x130] sm:$0xff]
      %v610 = vld [vmem:[%s2 + $0x138] sm:$0xff]
      %v611 = vld [vmem:[%s2 + $0x140] sm:$0xff]
      %v612 = vld [vmem:[%s2 + $0x148] sm:$0xff]
      %v613 = vld [vmem:[%s2 + $0x150] sm:$0xff]
      %v614 = vld [vmem:[%s2 + $0x158] sm:$0xff]
      %v615 = vld [vmem:[%s2 + $0x160] sm:$0xff]
      %v616 = vld [vmem:[%s2 + $0x168] sm:$0xff]
      %v617 = vld [vmem:[%s2 + $0x170] sm:$0xff]
      %v618 = vld [vmem:[%s2 + $0x178] sm:$0xff]
      %v619 = vld [vmem:[%s2 + $0x180] sm:$0xff]
      %v620 = vld [vmem:[%s2 + $0x188] sm:$0xff]
      %v621 = vld [vmem:[%s2 + $0x190] sm:$0xff]
      %v622 = vld [vmem:[%s2 + $0x198] sm:$0xff]
      %v623 = vld [vmem:[%s2 + $0x1a0] sm:$0xff]
      %v624 = vld [vmem:[%s2 + $0x1a8] sm:$0xff]
      %v625 = vld [vmem:[%s2 + $0x1b0] sm:$0xff]
      %v626 = vld [vmem:[%s2 + $0x1b8] sm:$0xff]
      %v627 = vld [vmem:[%s2 + $0x1c0] sm:$0xff]
      %v628 = vld [vmem:[%s2 + $0x1c8] sm:$0xff]
      %v629 = vld [vmem:[%s2 + $0x1d0] sm:$0xff]
      %v630 = vld [vmem:[%s2 + $0x1d8] sm:$0xff]
      %v631 = vld [vmem:[%s2 + $0x1e0] sm:$0xff]
      %v632 = vld [vmem:[%s2 + $0x1e8] sm:$0xff]
      %v633 = vld [vmem:[%s2 + $0x1f0] sm:$0xff]
      %v634 = vld [vmem:[%s2 + $0x1f8] sm:$0xff]
      %635 = vmatprep.subr.mxu0 0.0
      %636 = vmatpush1.msra.mxu0 %v539
      %637 = vmatprep.subr.mxu0 0.0
      %638 = vmatpush1.msra.mxu0 %v540
      %639 = vmatprep.subr.mxu0 0.0
      %640 = vmatpush1.msra.mxu0 %v541
      %641 = vmatprep.subr.mxu0 0.0
      %642 = vmatpush1.msra.mxu0 %v542
      %643 = vmatprep.subr.mxu0 0.0
      %644 = vmatpush1.msra.mxu0 %v543
      %645 = vmatprep.subr.mxu0 0.0
      %646 = vmatpush1.msra.mxu0 %v544
      %647 = vmatprep.subr.mxu0 0.0
      %648 = vmatpush1.msra.mxu0 %v545
      %649 = vmatprep.subr.mxu0 0.0
      %650 = vmatpush1.msra.mxu0 %v546
      %651 = vmatprep.subr.mxu0 0.0
      %652 = vmatpush1.msra.mxu0 %v547
      %653 = vmatprep.subr.mxu0 0.0
      %654 = vmatpush1.msra.mxu0 %v548
      %655 = vmatprep.subr.mxu0 0.0
      %656 = vmatpush1.msra.mxu0 %v549
      %657 = vmatprep.subr.mxu0 0.0
      %658 = vmatpush1.msra.mxu0 %v550
      %659 = vmatprep.subr.mxu0 0.0
      %660 = vmatpush1.msra.mxu0 %v551
      %661 = vmatprep.subr.mxu0 0.0
      %662 = vmatpush1.msra.mxu0 %v552
      %663 = vmatprep.subr.mxu0 0.0
      %664 = vmatpush1.msra.mxu0 %v553
      %665 = vmatprep.subr.mxu0 0.0
      %666 = vmatpush1.msra.mxu0 %v554
      %667 = vmatprep.subr.mxu0 0.0
      %668 = vmatpush1.msra.mxu0 %v555
      %669 = vmatprep.subr.mxu0 0.0
      %670 = vmatpush1.msra.mxu0 %v556
      %671 = vmatprep.subr.mxu0 0.0
      %672 = vmatpush1.msra.mxu0 %v557
      %673 = vmatprep.subr.mxu0 0.0
      %674 = vmatpush1.msra.mxu0 %v558
      %675 = vmatprep.subr.mxu0 0.0
      %676 = vmatpush1.msra.mxu0 %v559
      %677 = vmatprep.subr.mxu0 0.0
      %678 = vmatpush1.msra.mxu0 %v560
      %679 = vmatprep.subr.mxu0 0.0
      %680 = vmatpush1.msra.mxu0 %v561
      %681 = vmatprep.subr.mxu0 0.0
      %682 = vmatpush1.msra.mxu0 %v562
      %683 = vmatprep.subr.mxu0 0.0
      %684 = vmatpush1.msra.mxu0 %v563
      %685 = vmatprep.subr.mxu0 0.0
      %686 = vmatpush1.msra.mxu0 %v564
      %687 = vmatprep.subr.mxu0 0.0
      %688 = vmatpush1.msra.mxu0 %v565
      %689 = vmatprep.subr.mxu0 0.0
      %690 = vmatpush1.msra.mxu0 %v566
      %691 = vmatprep.subr.mxu0 0.0
      %692 = vmatpush1.msra.mxu0 %v567
      %693 = vmatprep.subr.mxu0 0.0
      %694 = vmatpush1.msra.mxu0 %v568
      %695 = vmatprep.subr.mxu0 0.0
      %696 = vmatpush1.msra.mxu0 %v569
      %697 = vmatprep.subr.mxu0 0.0
      %698 = vmatpush1.msra.mxu0 %v570
      %699 = vmatprep.mubr.f32.mxu0 %v572
      %700 = vmatmul.mubr.f32.gmra.mrb[0].mxu0 %v571
      %v701 = vpop.f32.mrb[0].mxu0
      %v702 = vadd.f32 0.0, %v701
      %v703 = vpop.f32.mrb[0].mxu0
      %704 = vmatprep.mubr.f32.mxu0 %v574
      %705 = vmatmul.mubr.f32.gmra.mrb[0].mxu0 %v573
      %v706 = vpop.f32.mrb[0].mxu0
      %v707 = vadd.f32 0.0, %v706
      %v708 = vpop.f32.mrb[0].mxu0
      %709 = vmatprep.mubr.f32.mxu0 %v576
      %710 = vmatmul.mubr.f32.gmra.mrb[0].mxu0 %v575
      %v711 = vpop.f32.mrb[0].mxu0
      %v712 = vadd.f32 0.0, %v711
      %v713 = vpop.f32.mrb[0].mxu0
      %714 = vmatprep.mubr.f32.mxu0 %v578
      %715 = vmatmul.mubr.f32.gmra.mrb[0].mxu0 %v577
      %v716 = vpop.f32.mrb[0].mxu0
      %v717 = vadd.f32 0.0, %v716
      %v718 = vpop.f32.mrb[0].mxu0
      %719 = vmatprep.mubr.f32.mxu0 %v580
      %720 = vmatmul.mubr.f32.gmra.mrb[0].mxu0 %v579
      %v721 = vpop.f32.mrb[0].mxu0
      %v722 = vadd.f32 0.0, %v721
      %v723 = vpop.f32.mrb[0].mxu0
      %724 = vmatprep.mubr.f32.mxu0 %v582
      %725 = vmatmul.mubr.f32.gmra.mrb[0].mxu0 %v581
      %v726 = vpop.f32.mrb[0].mxu0
      %v727 = vadd.f32 0.0, %v726
      %v728 = vpop.f32.mrb[0].mxu0
      %729 = vmatprep.mubr.f32.mxu0 %v584
      %730 = vmatmul.mubr.f32.gmra.mrb[0].mxu0 %v583
      %v731 = vpop.f32.mrb[0].mxu0
      %v732 = vadd.f32 0.0, %v731
      %v733 = vpop.f32.mrb[0].mxu0
      %734 = vmatprep.mubr.f32.mxu0 %v586
      %735 = vmatmul.mubr.f32.gmra.mrb[0].mxu0 %v585
      %v736 = vpop.f32.mrb[0].mxu0
      %v737 = vadd.f32 0.0, %v736
      %v738 = vpop.f32.mrb[0].mxu0
      %739 = vmatprep.mubr.f32.mxu0 %v588
      %740 = vmatmul.mubr.f32.gmra.mrb[0].mxu0 %v587
      %v741 = vpop.f32.mrb[0].mxu0
      %v742 = vadd.f32 0.0, %v741
      %v743 = vpop.f32.mrb[0].mxu0
      %744 = vmatprep.mubr.f32.mxu0 %v590
      %745 = vmatmul.mubr.f32.gmra.mrb[0].mxu0 %v589
      %v746 = vpop.f32.mrb[0].mxu0
      %v747 = vadd.f32 0.0, %v746
      %v748 = vpop.f32.mrb[0].mxu0
      %749 = vmatprep.mubr.f32.mxu0 %v592
      %750 = vmatmul.mubr.f32.gmra.mrb[0].mxu0 %v591
      %v751 = vpop.f32.mrb[0].mxu0
      %v752 = vadd.f32 0.0, %v751
      %v753 = vpop.f32.mrb[0].mxu0
      %754 = vmatprep.mubr.f32.mxu0 %v594
      %755 = vmatmul.mubr.f32.gmra.mrb[0].mxu0 %v593
      %v756 = vpop.f32.mrb[0].mxu0
      %v757 = vadd.f32 0.0, %v756
      %v758 = vpop.f32.mrb[0].mxu0
      %759 = vmatprep.mubr.f32.mxu0 %v596
      %760 = vmatmul.mubr.f32.gmra.mrb[0].mxu0 %v595
      %v761 = vpop.f32.mrb[0].mxu0
      %v762 = vadd.f32 0.0, %v761
      %v763 = vpop.f32.mrb[0].mxu0
      %764 = vmatprep.mubr.f32.mxu0 %v598
      %765 = vmatmul.mubr.f32.gmra.mrb[0].mxu0 %v597
      %v766 = vpop.f32.mrb[0].mxu0
      %v767 = vadd.f32 0.0, %v766
      %v768 = vpop.f32.mrb[0].mxu0
      %769 = vmatprep.mubr.f32.mxu0 %v600
      %770 = vmatmul.mubr.f32.gmra.mrb[0].mxu0 %v599
      %v771 = vpop.f32.mrb[0].mxu0
      %v772 = vadd.f32 0.0, %v771
      %v773 = vpop.f32.mrb[0].mxu0
      %774 = vmatprep.mubr.f32.mxu0 %v602
      %775 = vmatmul.mubr.f32.gmra.mrb[0].mxu0 %v601
      %v776 = vpop.f32.mrb[0].mxu0
      %v777 = vadd.f32 0.0, %v776
      %v778 = vpop.f32.mrb[0].mxu0
      %779 = vmatprep.mubr.f32.mxu0 %v604
      %780 = vmatmul.mubr.f32.gmra.mrb[0].mxu0 %v603
      %v781 = vpop.f32.mrb[0].mxu0
      %v782 = vadd.f32 0.0, %v781
      %v783 = vpop.f32.mrb[0].mxu0
      %784 = vmatprep.mubr.f32.mxu0 %v606
      %785 = vmatmul.mubr.f32.gmra.mrb[0].mxu0 %v605
      %v786 = vpop.f32.mrb[0].mxu0
      %v787 = vadd.f32 0.0, %v786
      %v788 = vpop.f32.mrb[0].mxu0
      %789 = vmatprep.mubr.f32.mxu0 %v608
      %790 = vmatmul.mubr.f32.gmra.mrb[0].mxu0 %v607
      %v791 = vpop.f32.mrb[0].mxu0
      %v792 = vadd.f32 0.0, %v791
      %v793 = vpop.f32.mrb[0].mxu0
      %794 = vmatprep.mubr.f32.mxu0 %v610
      %795 = vmatmul.mubr.f32.gmra.mrb[0].mxu0 %v609
      %v796 = vpop.f32.mrb[0].mxu0
      %v797 = vadd.f32 0.0, %v796
      %v798 = vpop.f32.mrb[0].mxu0
      %799 = vmatprep.mubr.f32.mxu0 %v612
      %800 = vmatmul.mubr.f32.gmra.mrb[0].mxu0 %v611
      %v801 = vpop.f32.mrb[0].mxu0
      %v802 = vadd.f32 0.0, %v801
      %v803 = vpop.f32.mrb[0].mxu0
      %804 = vmatprep.mubr.f32.mxu0 %v614
      %805 = vmatmul.mubr.f32.gmra.mrb[0].mxu0 %v613
      %v806 = vpop.f32.mrb[0].mxu0
      %v807 = vadd.f32 0.0, %v806
      %v808 = vpop.f32.mrb[0].mxu0
      %809 = vmatprep.mubr.f32.mxu0 %v616
      %810 = vmatmul.mubr.f32.gmra.mrb[0].mxu0 %v615
      %v811 = vpop.f32.mrb[0].mxu0
      %v812 = vadd.f32 0.0, %v811
      %v813 = vpop.f32.mrb[0].mxu0
      %814 = vmatprep.mubr.f32.mxu0 %v618
      %815 = vmatmul.mubr.f32.gmra.mrb[0].mxu0 %v617
      %v816 = vpop.f32.mrb[0].mxu0
      %v817 = vadd.f32 0.0, %v816
      %v818 = vpop.f32.mrb[0].mxu0
      %819 = vmatprep.mubr.f32.mxu0 %v620
      %820 = vmatmul.mubr.f32.gmra.mrb[0].mxu0 %v619
      %v821 = vpop.f32.mrb[0].mxu0
      %v822 = vadd.f32 0.0, %v821
      %v823 = vpop.f32.mrb[0].mxu0
      %824 = vmatprep.mubr.f32.mxu0 %v622
      %825 = vmatmul.mubr.f32.gmra.mrb[0].mxu0 %v621
      %v826 = vpop.f32.mrb[0].mxu0
      %v827 = vadd.f32 0.0, %v826
      %v828 = vpop.f32.mrb[0].mxu0
      %829 = vmatprep.mubr.f32.mxu0 %v624
      %830 = vmatmul.mubr.f32.gmra.mrb[0].mxu0 %v623
      %v831 = vpop.f32.mrb[0].mxu0
      %v832 = vadd.f32 0.0, %v831
      %v833 = vpop.f32.mrb[0].mxu0
      %834 = vmatprep.mubr.f32.mxu0 %v626
      %835 = vmatmul.mubr.f32.gmra.mrb[0].mxu0 %v625
      %v836 = vpop.f32.mrb[0].mxu0
      %v837 = vadd.f32 0.0, %v836
      %v838 = vpop.f32.mrb[0].mxu0
      %839 = vmatprep.mubr.f32.mxu0 %v628
      %840 = vmatmul.mubr.f32.gmra.mrb[0].mxu0 %v627
      %v841 = vpop.f32.mrb[0].mxu0
      %v842 = vadd.f32 0.0, %v841
      %v843 = vpop.f32.mrb[0].mxu0
      %844 = vmatprep.mubr.f32.mxu0 %v630
      %845 = vmatmul.mubr.f32.gmra.mrb[0].mxu0 %v629
      %v846 = vpop.f32.mrb[0].mxu0
      %v847 = vadd.f32 0.0, %v846
      %v848 = vpop.f32.mrb[0].mxu0
      %849 = vmatprep.mubr.f32.mxu0 %v632
      %850 = vmatmul.mubr.f32.gmra.mrb[0].mxu0 %v631
      %v851 = vpop.f32.mrb[0].mxu0
      %v852 = vadd.f32 0.0, %v851
      %v853 = vpop.f32.mrb[0].mxu0
      %854 = vmatprep.mubr.f32.mxu0 %v634
      %855 = vmatmul.mubr.f32.gmra.mrb[0].mxu0 %v633
      %v856 = vpop.f32.mrb[0].mxu0
      %v857 = vadd.f32 0.0, %v856
      %v858 = vpop.f32.mrb[0].mxu0
      %859 = vdwg.mxu0
      %v860 = vsub.f32 %v539, %v702
      %v861 = vsub.f32 %v540, %v707
      %v862 = vsub.f32 %v541, %v712
      %v863 = vsub.f32 %v542, %v717
      %v864 = vsub.f32 %v543, %v722
      %v865 = vsub.f32 %v544, %v727
      %v866 = vsub.f32 %v545, %v732
      %v867 = vsub.f32 %v546, %v737
      %v868 = vsub.f32 %v547, %v742
      %v869 = vsub.f32 %v548, %v747
      %v870 = vsub.f32 %v549, %v752
      %v871 = vsub.f32 %v550, %v757
      %v872 = vsub.f32 %v551, %v762
      %v873 = vsub.f32 %v552, %v767
      %v874 = vsub.f32 %v553, %v772
      %v875 = vsub.f32 %v554, %v777
      %v876 = vsub.f32 %v555, %v782
      %v877 = vsub.f32 %v556, %v787
      %v878 = vsub.f32 %v557, %v792
      %v879 = vsub.f32 %v558, %v797
      %v880 = vsub.f32 %v559, %v802
      %v881 = vsub.f32 %v560, %v807
      %v882 = vsub.f32 %v561, %v812
      %v883 = vsub.f32 %v562, %v817
      %v884 = vsub.f32 %v563, %v822
      %v885 = vsub.f32 %v564, %v827
      %v886 = vsub.f32 %v565, %v832
      %v887 = vsub.f32 %v566, %v837
      %v888 = vsub.f32 %v567, %v842
      %v889 = vsub.f32 %v568, %v847
      %v890 = vsub.f32 %v569, %v852
      %v891 = vsub.f32 %v570, %v857
      %v892 = vmul.f32 %v860, %v860
      %v893 = vmul.f32 %v861, %v861
      %v894 = vmul.f32 %v862, %v862
      %v895 = vmul.f32 %v863, %v863
      %v896 = vmul.f32 %v864, %v864
      %v897 = vmul.f32 %v865, %v865
      %v898 = vmul.f32 %v866, %v866
      %v899 = vmul.f32 %v867, %v867
      %v900 = vmul.f32 %v868, %v868
      %v901 = vmul.f32 %v869, %v869
      %v902 = vmul.f32 %v870, %v870
      %v903 = vmul.f32 %v871, %v871
      %v904 = vmul.f32 %v872, %v872
      %v905 = vmul.f32 %v873, %v873
      %v906 = vmul.f32 %v874, %v874
      %v907 = vmul.f32 %v875, %v875
      %v908 = vmul.f32 %v876, %v876
      %v909 = vmul.f32 %v877, %v877
      %v910 = vmul.f32 %v878, %v878
      %v911 = vmul.f32 %v879, %v879
      %v912 = vmul.f32 %v880, %v880
      %v913 = vmul.f32 %v881, %v881
      %v914 = vmul.f32 %v882, %v882
      %v915 = vmul.f32 %v883, %v883
      %v916 = vmul.f32 %v884, %v884
      %v917 = vmul.f32 %v885, %v885
      %v918 = vmul.f32 %v886, %v886
      %v919 = vmul.f32 %v887, %v887
      %v920 = vmul.f32 %v888, %v888
      %v921 = vmul.f32 %v889, %v889
      %v922 = vmul.f32 %v890, %v890
      %v923 = vmul.f32 %v891, %v891
      %924 = vmatprep.subr.mxu0 0.0
      %925 = vmatpush1.msra.mxu0 %v892
      %926 = vmatprep.subr.mxu0 0.0
      %927 = vmatpush1.msra.mxu0 %v893
      %928 = vmatprep.subr.mxu0 0.0
      %929 = vmatpush1.msra.mxu0 %v894
      %930 = vmatprep.subr.mxu0 0.0
      %931 = vmatpush1.msra.mxu0 %v895
      %932 = vmatprep.subr.mxu0 0.0
      %933 = vmatpush1.msra.mxu0 %v896
      %934 = vmatprep.subr.mxu0 0.0
      %935 = vmatpush1.msra.mxu0 %v897
      %936 = vmatprep.subr.mxu0 0.0
      %937 = vmatpush1.msra.mxu0 %v898
      %938 = vmatprep.subr.mxu0 0.0
      %939 = vmatpush1.msra.mxu0 %v899
      %940 = vmatprep.subr.mxu0 0.0
      %941 = vmatpush1.msra.mxu0 %v900
      %942 = vmatprep.subr.mxu0 0.0
      %943 = vmatpush1.msra.mxu0 %v901
      %944 = vmatprep.subr.mxu0 0.0
      %945 = vmatpush1.msra.mxu0 %v902
      %946 = vmatprep.subr.mxu0 0.0
      %947 = vmatpush1.msra.mxu0 %v903
      %948 = vmatprep.subr.mxu0 0.0
      %949 = vmatpush1.msra.mxu0 %v904
      %950 = vmatprep.subr.mxu0 0.0
      %951 = vmatpush1.msra.mxu0 %v905
      %952 = vmatprep.subr.mxu0 0.0
      %953 = vmatpush1.msra.mxu0 %v906
      %954 = vmatprep.subr.mxu0 0.0
      %955 = vmatpush1.msra.mxu0 %v907
      %956 = vmatprep.subr.mxu0 0.0
      %957 = vmatpush1.msra.mxu0 %v908
      %958 = vmatprep.subr.mxu0 0.0
      %959 = vmatpush1.msra.mxu0 %v909
      %960 = vmatprep.subr.mxu0 0.0
      %961 = vmatpush1.msra.mxu0 %v910
      %962 = vmatprep.subr.mxu0 0.0
      %963 = vmatpush1.msra.mxu0 %v911
      %964 = vmatprep.subr.mxu0 0.0
      %965 = vmatpush1.msra.mxu0 %v912
      %966 = vmatprep.subr.mxu0 0.0
      %967 = vmatpush1.msra.mxu0 %v913
      %968 = vmatprep.subr.mxu0 0.0
      %969 = vmatpush1.msra.mxu0 %v914
      %970 = vmatprep.subr.mxu0 0.0
      %971 = vmatpush1.msra.mxu0 %v915
      %972 = vmatprep.subr.mxu0 0.0
      %973 = vmatpush1.msra.mxu0 %v916
      %974 = vmatprep.subr.mxu0 0.0
      %975 = vmatpush1.msra.mxu0 %v917
      %976 = vmatprep.subr.mxu0 0.0
      %977 = vmatpush1.msra.mxu0 %v918
      %978 = vmatprep.subr.mxu0 0.0
      %979 = vmatpush1.msra.mxu0 %v919
      %980 = vmatprep.subr.mxu0 0.0
      %981 = vmatpush1.msra.mxu0 %v920
      %982 = vmatprep.subr.mxu0 0.0
      %983 = vmatpush1.msra.mxu0 %v921
      %984 = vmatprep.subr.mxu0 0.0
      %985 = vmatpush1.msra.mxu0 %v922
      %986 = vmatprep.subr.mxu0 0.0
      %987 = vmatpush1.msra.mxu0 %v923
      %988 = vmatprep.mubr.f32.mxu0 %v572
      %989 = vmatmul.mubr.f32.gmra.mrb[0].mxu0 %v571
      %v990 = vpop.f32.mrb[0].mxu0
      %v991 = vadd.f32 1e-05, %v990
      %v992 = vpop.f32.mrb[0].mxu0
      %993 = vmatprep.mubr.f32.mxu0 %v574
      %994 = vmatmul.mubr.f32.gmra.mrb[0].mxu0 %v573
      %v995 = vpop.f32.mrb[0].mxu0
      %v996 = vadd.f32 1e-05, %v995
      %v997 = vpop.f32.mrb[0].mxu0
      %998 = vmatprep.mubr.f32.mxu0 %v576
      %999 = vmatmul.mubr.f32.gmra.mrb[0].mxu0 %v575
      %v1000 = vpop.f32.mrb[0].mxu0
      %v1001 = vadd.f32 1e-05, %v1000
      %v1002 = vpop.f32.mrb[0].mxu0
      %1003 = vmatprep.mubr.f32.mxu0 %v578
      %1004 = vmatmul.mubr.f32.gmra.mrb[0].mxu0 %v577
      %v1005 = vpop.f32.mrb[0].mxu0
      %v1006 = vadd.f32 1e-05, %v1005
      %v1007 = vpop.f32.mrb[0].mxu0
      %1008 = vmatprep.mubr.f32.mxu0 %v580
      %1009 = vmatmul.mubr.f32.gmra.mrb[0].mxu0 %v579
      %v1010 = vpop.f32.mrb[0].mxu0
      %v1011 = vadd.f32 1e-05, %v1010
      %v1012 = vpop.f32.mrb[0].mxu0
      %1013 = vmatprep.mubr.f32.mxu0 %v582
      %1014 = vmatmul.mubr.f32.gmra.mrb[0].mxu0 %v581
      %v1015 = vpop.f32.mrb[0].mxu0
      %v1016 = vadd.f32 1e-05, %v1015
      %v1017 = vpop.f32.mrb[0].mxu0
      %1018 = vmatprep.mubr.f32.mxu0 %v584
      %1019 = vmatmul.mubr.f32.gmra.mrb[0].mxu0 %v583
      %v1020 = vpop.f32.mrb[0].mxu0
      %v1021 = vadd.f32 1e-05, %v1020
      %v1022 = vpop.f32.mrb[0].mxu0
      %1023 = vmatprep.mubr.f32.mxu0 %v586
      %1024 = vmatmul.mubr.f32.gmra.mrb[0].mxu0 %v585
      %v1025 = vpop.f32.mrb[0].mxu0
      %v1026 = vadd.f32 1e-05, %v1025
      %v1027 = vpop.f32.mrb[0].mxu0
      %1028 = vmatprep.mubr.f32.mxu0 %v588
      %1029 = vmatmul.mubr.f32.gmra.mrb[0].mxu0 %v587
      %v1030 = vpop.f32.mrb[0].mxu0
      %v1031 = vadd.f32 1e-05, %v1030
      %v1032 = vpop.f32.mrb[0].mxu0
      %1033 = vmatprep.mubr.f32.mxu0 %v590
      %1034 = vmatmul.mubr.f32.gmra.mrb[0].mxu0 %v589
      %v1035 = vpop.f32.mrb[0].mxu0
      %v1036 = vadd.f32 1e-05, %v1035
      %v1037 = vpop.f32.mrb[0].mxu0
      %1038 = vmatprep.mubr.f32.mxu0 %v592
      %1039 = vmatmul.mubr.f32.gmra.mrb[0].mxu0 %v591
      %v1040 = vpop.f32.mrb[0].mxu0
      %v1041 = vadd.f32 1e-05, %v1040
      %v1042 = vpop.f32.mrb[0].mxu0
      %1043 = vmatprep.mubr.f32.mxu0 %v594
      %1044 = vmatmul.mubr.f32.gmra.mrb[0].mxu0 %v593
      %v1045 = vpop.f32.mrb[0].mxu0
      %v1046 = vadd.f32 1e-05, %v1045
      %v1047 = vpop.f32.mrb[0].mxu0
      %1048 = vmatprep.mubr.f32.mxu0 %v596
      %1049 = vmatmul.mubr.f32.gmra.mrb[0].mxu0 %v595
      %v1050 = vpop.f32.mrb[0].mxu0
      %v1051 = vadd.f32 1e-05, %v1050
      %v1052 = vpop.f32.mrb[0].mxu0
      %1053 = vmatprep.mubr.f32.mxu0 %v598
      %1054 = vmatmul.mubr.f32.gmra.mrb[0].mxu0 %v597
      %v1055 = vpop.f32.mrb[0].mxu0
      %v1056 = vadd.f32 1e-05, %v1055
      %v1057 = vpop.f32.mrb[0].mxu0
      %1058 = vmatprep.mubr.f32.mxu0 %v600
      %1059 = vmatmul.mubr.f32.gmra.mrb[0].mxu0 %v599
      %v1060 = vpop.f32.mrb[0].mxu0
      %v1061 = vadd.f32 1e-05, %v1060
      %v1062 = vpop.f32.mrb[0].mxu0
      %1063 = vmatprep.mubr.f32.mxu0 %v602
      %1064 = vmatmul.mubr.f32.gmra.mrb[0].mxu0 %v601
      %v1065 = vpop.f32.mrb[0].mxu0
      %v1066 = vadd.f32 1e-05, %v1065
      %v1067 = vpop.f32.mrb[0].mxu0
      %1068 = vmatprep.mubr.f32.mxu0 %v604
      %1069 = vmatmul.mubr.f32.gmra.mrb[0].mxu0 %v603
      %v1070 = vpop.f32.mrb[0].mxu0
      %v1071 = vadd.f32 1e-05, %v1070
      %v1072 = vpop.f32.mrb[0].mxu0
      %1073 = vmatprep.mubr.f32.mxu0 %v606
      %1074 = vmatmul.mubr.f32.gmra.mrb[0].mxu0 %v605
      %v1075 = vpop.f32.mrb[0].mxu0
      %v1076 = vadd.f32 1e-05, %v1075
      %v1077 = vpop.f32.mrb[0].mxu0
      %1078 = vmatprep.mubr.f32.mxu0 %v608
      %1079 = vmatmul.mubr.f32.gmra.mrb[0].mxu0 %v607
      %v1080 = vpop.f32.mrb[0].mxu0
      %v1081 = vadd.f32 1e-05, %v1080
      %v1082 = vpop.f32.mrb[0].mxu0
      %1083 = vmatprep.mubr.f32.mxu0 %v610
      %1084 = vmatmul.mubr.f32.gmra.mrb[0].mxu0 %v609
      %v1085 = vpop.f32.mrb[0].mxu0
      %v1086 = vadd.f32 1e-05, %v1085
      %v1087 = vpop.f32.mrb[0].mxu0
      %1088 = vmatprep.mubr.f32.mxu0 %v612
      %1089 = vmatmul.mubr.f32.gmra.mrb[0].mxu0 %v611
      %v1090 = vpop.f32.mrb[0].mxu0
      %v1091 = vadd.f32 1e-05, %v1090
      %v1092 = vpop.f32.mrb[0].mxu0
      %1093 = vmatprep.mubr.f32.mxu0 %v614
      %1094 = vmatmul.mubr.f32.gmra.mrb[0].mxu0 %v613
      %v1095 = vpop.f32.mrb[0].mxu0
      %v1096 = vadd.f32 1e-05, %v1095
      %v1097 = vpop.f32.mrb[0].mxu0
      %1098 = vmatprep.mubr.f32.mxu0 %v616
      %1099 = vmatmul.mubr.f32.gmra.mrb[0].mxu0 %v615
      %v1100 = vpop.f32.mrb[0].mxu0
      %v1101 = vadd.f32 1e-05, %v1100
      %v1102 = vpop.f32.mrb[0].mxu0
      %1103 = vmatprep.mubr.f32.mxu0 %v618
      %1104 = vmatmul.mubr.f32.gmra.mrb[0].mxu0 %v617
      %v1105 = vpop.f32.mrb[0].mxu0
      %v1106 = vadd.f32 1e-05, %v1105
      %v1107 = vpop.f32.mrb[0].mxu0
      %1108 = vmatprep.mubr.f32.mxu0 %v620
      %1109 = vmatmul.mubr.f32.gmra.mrb[0].mxu0 %v619
      %v1110 = vpop.f32.mrb[0].mxu0
      %v1111 = vadd.f32 1e-05, %v1110
      %v1112 = vpop.f32.mrb[0].mxu0
      %1113 = vmatprep.mubr.f32.mxu0 %v622
      %1114 = vmatmul.mubr.f32.gmra.mrb[0].mxu0 %v621
      %v1115 = vpop.f32.mrb[0].mxu0
      %v1116 = vadd.f32 1e-05, %v1115
      %v1117 = vpop.f32.mrb[0].mxu0
      %1118 = vmatprep.mubr.f32.mxu0 %v624
      %1119 = vmatmul.mubr.f32.gmra.mrb[0].mxu0 %v623
      %v1120 = vpop.f32.mrb[0].mxu0
      %v1121 = vadd.f32 1e-05, %v1120
      %v1122 = vpop.f32.mrb[0].mxu0
      %1123 = vmatprep.mubr.f32.mxu0 %v626
      %1124 = vmatmul.mubr.f32.gmra.mrb[0].mxu0 %v625
      %v1125 = vpop.f32.mrb[0].mxu0
      %v1126 = vadd.f32 1e-05, %v1125
      %v1127 = vpop.f32.mrb[0].mxu0
      %1128 = vmatprep.mubr.f32.mxu0 %v628
      %1129 = vmatmul.mubr.f32.gmra.mrb[0].mxu0 %v627
      %v1130 = vpop.f32.mrb[0].mxu0
      %v1131 = vadd.f32 1e-05, %v1130
      %v1132 = vpop.f32.mrb[0].mxu0
      %1133 = vmatprep.mubr.f32.mxu0 %v630
      %1134 = vmatmul.mubr.f32.gmra.mrb[0].mxu0 %v629
      %v1135 = vpop.f32.mrb[0].mxu0
      %v1136 = vadd.f32 1e-05, %v1135
      %v1137 = vpop.f32.mrb[0].mxu0
      %1138 = vmatprep.mubr.f32.mxu0 %v632
      %1139 = vmatmul.mubr.f32.gmra.mrb[0].mxu0 %v631
      %v1140 = vpop.f32.mrb[0].mxu0
      %v1141 = vadd.f32 1e-05, %v1140
      %v1142 = vpop.f32.mrb[0].mxu0
      %1143 = vmatprep.mubr.f32.mxu0 %v634
      %1144 = vmatmul.mubr.f32.gmra.mrb[0].mxu0 %v633
      %v1145 = vpop.f32.mrb[0].mxu0
      %v1146 = vadd.f32 1e-05, %v1145
      %v1147 = vpop.f32.mrb[0].mxu0
      %1148 = vdwg.mxu0
      %v1149 = vrsqrt.pop %v991
      %v1150 = vrsqrt.pop %v996
      %v1151 = vrsqrt.pop %v1001
      %v1152 = vrsqrt.pop %v1006
      %v1153 = vrsqrt.pop %v1011
      %v1154 = vrsqrt.pop %v1016
      %v1155 = vrsqrt.pop %v1021
      %v1156 = vrsqrt.pop %v1026
      %v1157 = vrsqrt.pop %v1031
      %v1158 = vrsqrt.pop %v1036
      %v1159 = vrsqrt.pop %v1041
      %v1160 = vrsqrt.pop %v1046
      %v1161 = vrsqrt.pop %v1051
      %v1162 = vrsqrt.pop %v1056
      %v1163 = vrsqrt.pop %v1061
      %v1164 = vrsqrt.pop %v1066
      %v1165 = vrsqrt.pop %v1071
      %v1166 = vrsqrt.pop %v1076
      %v1167 = vrsqrt.pop %v1081
      %v1168 = vrsqrt.pop %v1086
      %v1169 = vrsqrt.pop %v1091
      %v1170 = vrsqrt.pop %v1096
      %v1171 = vrsqrt.pop %v1101
      %v1172 = vrsqrt.pop %v1106
      %v1173 = vrsqrt.pop %v1111
      %v1174 = vrsqrt.pop %v1116
      %v1175 = vrsqrt.pop %v1121
      %v1176 = vrsqrt.pop %v1126
      %v1177 = vrsqrt.pop %v1131
      %v1178 = vrsqrt.pop %v1136
      %v1179 = vrsqrt.pop %v1141
      %v1180 = vrsqrt.pop %v1146
      %v1181 = vmul.f32 %v860, %v1149
      %v1182 = vmul.f32 %v861, %v1150
      %v1183 = vmul.f32 %v862, %v1151
      %v1184 = vmul.f32 %v863, %v1152
      %v1185 = vmul.f32 %v864, %v1153
      %v1186 = vmul.f32 %v865, %v1154
      %v1187 = vmul.f32 %v866, %v1155
      %v1188 = vmul.f32 %v867, %v1156
      %v1189 = vmul.f32 %v868, %v1157
      %v1190 = vmul.f32 %v869, %v1158
      %v1191 = vmul.f32 %v870, %v1159
      %v1192 = vmul.f32 %v871, %v1160
      %v1193 = vmul.f32 %v872, %v1161
      %v1194 = vmul.f32 %v873, %v1162
      %v1195 = vmul.f32 %v874, %v1163
      %v1196 = vmul.f32 %v875, %v1164
      %v1197 = vmul.f32 %v876, %v1165
      %v1198 = vmul.f32 %v877, %v1166
      %v1199 = vmul.f32 %v878, %v1167
      %v1200 = vmul.f32 %v879, %v1168
      %v1201 = vmul.f32 %v880, %v1169
      %v1202 = vmul.f32 %v881, %v1170
      %v1203 = vmul.f32 %v882, %v1171
      %v1204 = vmul.f32 %v883, %v1172
      %v1205 = vmul.f32 %v884, %v1173
      %v1206 = vmul.f32 %v885, %v1174
      %v1207 = vmul.f32 %v886, %v1175
      %v1208 = vmul.f32 %v887, %v1176
      %v1209 = vmul.f32 %v888, %v1177
      %v1210 = vmul.f32 %v889, %v1178
      %v1211 = vmul.f32 %v890, %v1179
      %v1212 = vmul.f32 %v891, %v1180
      %v1213 = vld [vmem:[%s3] sm:$0xff]
      %v1214 = vld [vmem:[%s3 + $0x8] sm:$0xff]
      %v1215 = vld [vmem:[%s3 + $0x10] sm:$0xff]
      %v1216 = vld [vmem:[%s3 + $0x18] sm:$0xff]
      %v1217 = vld [vmem:[%s3 + $0x20] sm:$0xff]
      %v1218 = vld [vmem:[%s3 + $0x28] sm:$0xff]
      %v1219 = vld [vmem:[%s3 + $0x30] sm:$0xff]
      %v1220 = vld [vmem:[%s3 + $0x38] sm:$0xff]
      %v1221 = vld [vmem:[%s3 + $0x40] sm:$0xff]
      %v1222 = vld [vmem:[%s3 + $0x48] sm:$0xff]
      %v1223 = vld [vmem:[%s3 + $0x50] sm:$0xff]
      %v1224 = vld [vmem:[%s3 + $0x58] sm:$0xff]
      %v1225 = vld [vmem:[%s3 + $0x60] sm:$0xff]
      %v1226 = vld [vmem:[%s3 + $0x68] sm:$0xff]
      %v1227 = vld [vmem:[%s3 + $0x70] sm:$0xff]
      %v1228 = vld [vmem:[%s3 + $0x78] sm:$0xff]
      %v1229 = vld [vmem:[%s3 + $0x80] sm:$0xff]
      %v1230 = vld [vmem:[%s3 + $0x88] sm:$0xff]
      %v1231 = vld [vmem:[%s3 + $0x90] sm:$0xff]
      %v1232 = vld [vmem:[%s3 + $0x98] sm:$0xff]
      %v1233 = vld [vmem:[%s3 + $0xa0] sm:$0xff]
      %v1234 = vld [vmem:[%s3 + $0xa8] sm:$0xff]
      %v1235 = vld [vmem:[%s3 + $0xb0] sm:$0xff]
      %v1236 = vld [vmem:[%s3 + $0xb8] sm:$0xff]
      %v1237 = vld [vmem:[%s3 + $0xc0] sm:$0xff]
      %v1238 = vld [vmem:[%s3 + $0xc8] sm:$0xff]
      %v1239 = vld [vmem:[%s3 + $0xd0] sm:$0xff]
      %v1240 = vld [vmem:[%s3 + $0xd8] sm:$0xff]
      %v1241 = vld [vmem:[%s3 + $0xe0] sm:$0xff]
      %v1242 = vld [vmem:[%s3 + $0xe8] sm:$0xff]
      %v1243 = vld [vmem:[%s3 + $0xf0] sm:$0xff]
      %v1244 = vld [vmem:[%s3 + $0xf8] sm:$0xff]
      %1246 = vset.pattern.permute.xlu0 0
      %1247 = vperm.xlu0 %1246, %v1213
      %v1248 = vpop.permute.xlu0 %1247
      %1251 = vset.pattern.permute.xlu0 0
      %1252 = vperm.xlu0 %1251, %v1214
      %v1253 = vpop.permute.xlu0 %1252
      %1256 = vset.pattern.permute.xlu0 0
      %1257 = vperm.xlu0 %1256, %v1215
      %v1258 = vpop.permute.xlu0 %1257
      %1261 = vset.pattern.permute.xlu0 0
      %1262 = vperm.xlu0 %1261, %v1216
      %v1263 = vpop.permute.xlu0 %1262
      %1266 = vset.pattern.permute.xlu0 0
      %1267 = vperm.xlu0 %1266, %v1217
      %v1268 = vpop.permute.xlu0 %1267
      %1271 = vset.pattern.permute.xlu0 0
      %1272 = vperm.xlu0 %1271, %v1218
      %v1273 = vpop.permute.xlu0 %1272
      %1276 = vset.pattern.permute.xlu0 0
      %1277 = vperm.xlu0 %1276, %v1219
      %v1278 = vpop.permute.xlu0 %1277
      %1281 = vset.pattern.permute.xlu0 0
      %1282 = vperm.xlu0 %1281, %v1220
      %v1283 = vpop.permute.xlu0 %1282
      %1286 = vset.pattern.permute.xlu0 0
      %1287 = vperm.xlu0 %1286, %v1221
      %v1288 = vpop.permute.xlu0 %1287
      %1291 = vset.pattern.permute.xlu0 0
      %1292 = vperm.xlu0 %1291, %v1222
      %v1293 = vpop.permute.xlu0 %1292
      %1296 = vset.pattern.permute.xlu0 0
      %1297 = vperm.xlu0 %1296, %v1223
      %v1298 = vpop.permute.xlu0 %1297
      %1301 = vset.pattern.permute.xlu0 0
      %1302 = vperm.xlu0 %1301, %v1224
      %v1303 = vpop.permute.xlu0 %1302
      %1306 = vset.pattern.permute.xlu0 0
      %1307 = vperm.xlu0 %1306, %v1225
      %v1308 = vpop.permute.xlu0 %1307
      %1311 = vset.pattern.permute.xlu0 0
      %1312 = vperm.xlu0 %1311, %v1226
      %v1313 = vpop.permute.xlu0 %1312
      %1316 = vset.pattern.permute.xlu0 0
      %1317 = vperm.xlu0 %1316, %v1227
      %v1318 = vpop.permute.xlu0 %1317
      %1321 = vset.pattern.permute.xlu0 0
      %1322 = vperm.xlu0 %1321, %v1228
      %v1323 = vpop.permute.xlu0 %1322
      %1326 = vset.pattern.permute.xlu0 0
      %1327 = vperm.xlu0 %1326, %v1229
      %v1328 = vpop.permute.xlu0 %1327
      %1331 = vset.pattern.permute.xlu0 0
      %1332 = vperm.xlu0 %1331, %v1230
      %v1333 = vpop.permute.xlu0 %1332
      %1336 = vset.pattern.permute.xlu0 0
      %1337 = vperm.xlu0 %1336, %v1231
      %v1338 = vpop.permute.xlu0 %1337
      %1341 = vset.pattern.permute.xlu0 0
      %1342 = vperm.xlu0 %1341, %v1232
      %v1343 = vpop.permute.xlu0 %1342
      %1346 = vset.pattern.permute.xlu0 0
      %1347 = vperm.xlu0 %1346, %v1233
      %v1348 = vpop.permute.xlu0 %1347
      %1351 = vset.pattern.permute.xlu0 0
      %1352 = vperm.xlu0 %1351, %v1234
      %v1353 = vpop.permute.xlu0 %1352
      %1356 = vset.pattern.permute.xlu0 0
      %1357 = vperm.xlu0 %1356, %v1235
      %v1358 = vpop.permute.xlu0 %1357
      %1361 = vset.pattern.permute.xlu0 0
      %1362 = vperm.xlu0 %1361, %v1236
      %v1363 = vpop.permute.xlu0 %1362
      %1366 = vset.pattern.permute.xlu0 0
      %1367 = vperm.xlu0 %1366, %v1237
      %v1368 = vpop.permute.xlu0 %1367
      %1371 = vset.pattern.permute.xlu0 0
      %1372 = vperm.xlu0 %1371, %v1238
      %v1373 = vpop.permute.xlu0 %1372
      %1376 = vset.pattern.permute.xlu0 0
      %1377 = vperm.xlu0 %1376, %v1239
      %v1378 = vpop.permute.xlu0 %1377
      %1381 = vset.pattern.permute.xlu0 0
      %1382 = vperm.xlu0 %1381, %v1240
      %v1383 = vpop.permute.xlu0 %1382
      %1386 = vset.pattern.permute.xlu0 0
      %1387 = vperm.xlu0 %1386, %v1241
      %v1388 = vpop.permute.xlu0 %1387
      %1391 = vset.pattern.permute.xlu0 0
      %1392 = vperm.xlu0 %1391, %v1242
      %v1393 = vpop.permute.xlu0 %1392
      %1396 = vset.pattern.permute.xlu0 0
      %1397 = vperm.xlu0 %1396, %v1243
      %v1398 = vpop.permute.xlu0 %1397
      %1401 = vset.pattern.permute.xlu0 0
      %1402 = vperm.xlu0 %1401, %v1244
      %v1403 = vpop.permute.xlu0 %1402
      %v1405 = vmul.f32 %v1181, %v1248
      %v1406 = vmul.f32 %v1182, %v1253
      %v1407 = vmul.f32 %v1183, %v1258
      %v1408 = vmul.f32 %v1184, %v1263
      %v1409 = vmul.f32 %v1185, %v1268
      %v1410 = vmul.f32 %v1186, %v1273
      %v1411 = vmul.f32 %v1187, %v1278
      %v1412 = vmul.f32 %v1188, %v1283
      %v1413 = vmul.f32 %v1189, %v1288
      %v1414 = vmul.f32 %v1190, %v1293
      %v1415 = vmul.f32 %v1191, %v1298
      %v1416 = vmul.f32 %v1192, %v1303
      %v1417 = vmul.f32 %v1193, %v1308
      %v1418 = vmul.f32 %v1194, %v1313
      %v1419 = vmul.f32 %v1195, %v1318
      %v1420 = vmul.f32 %v1196, %v1323
      %v1421 = vmul.f32 %v1197, %v1328
      %v1422 = vmul.f32 %v1198, %v1333
      %v1423 = vmul.f32 %v1199, %v1338
      %v1424 = vmul.f32 %v1200, %v1343
      %v1425 = vmul.f32 %v1201, %v1348
      %v1426 = vmul.f32 %v1202, %v1353
      %v1427 = vmul.f32 %v1203, %v1358
      %v1428 = vmul.f32 %v1204, %v1363
      %v1429 = vmul.f32 %v1205, %v1368
      %v1430 = vmul.f32 %v1206, %v1373
      %v1431 = vmul.f32 %v1207, %v1378
      %v1432 = vmul.f32 %v1208, %v1383
      %v1433 = vmul.f32 %v1209, %v1388
      %v1434 = vmul.f32 %v1210, %v1393
      %v1435 = vmul.f32 %v1211, %v1398
      %v1436 = vmul.f32 %v1212, %v1403
      %v1437 = vld [vmem:[%s4] sm:$0xff]
      %v1438 = vld [vmem:[%s4 + $0x8] sm:$0xff]
      %v1439 = vld [vmem:[%s4 + $0x10] sm:$0xff]
      %v1440 = vld [vmem:[%s4 + $0x18] sm:$0xff]
      %v1441 = vld [vmem:[%s4 + $0x20] sm:$0xff]
      %v1442 = vld [vmem:[%s4 + $0x28] sm:$0xff]
      %v1443 = vld [vmem:[%s4 + $0x30] sm:$0xff]
      %v1444 = vld [vmem:[%s4 + $0x38] sm:$0xff]
      %v1445 = vld [vmem:[%s4 + $0x40] sm:$0xff]
      %v1446 = vld [vmem:[%s4 + $0x48] sm:$0xff]
      %v1447 = vld [vmem:[%s4 + $0x50] sm:$0xff]
      %v1448 = vld [vmem:[%s4 + $0x58] sm:$0xff]
      %v1449 = vld [vmem:[%s4 + $0x60] sm:$0xff]
      %v1450 = vld [vmem:[%s4 + $0x68] sm:$0xff]
      %v1451 = vld [vmem:[%s4 + $0x70] sm:$0xff]
      %v1452 = vld [vmem:[%s4 + $0x78] sm:$0xff]
      %v1453 = vld [vmem:[%s4 + $0x80] sm:$0xff]
      %v1454 = vld [vmem:[%s4 + $0x88] sm:$0xff]
      %v1455 = vld [vmem:[%s4 + $0x90] sm:$0xff]
      %v1456 = vld [vmem:[%s4 + $0x98] sm:$0xff]
      %v1457 = vld [vmem:[%s4 + $0xa0] sm:$0xff]
      %v1458 = vld [vmem:[%s4 + $0xa8] sm:$0xff]
      %v1459 = vld [vmem:[%s4 + $0xb0] sm:$0xff]
      %v1460 = vld [vmem:[%s4 + $0xb8] sm:$0xff]
      %v1461 = vld [vmem:[%s4 + $0xc0] sm:$0xff]
      %v1462 = vld [vmem:[%s4 + $0xc8] sm:$0xff]
      %v1463 = vld [vmem:[%s4 + $0xd0] sm:$0xff]
      %v1464 = vld [vmem:[%s4 + $0xd8] sm:$0xff]
      %v1465 = vld [vmem:[%s4 + $0xe0] sm:$0xff]
      %v1466 = vld [vmem:[%s4 + $0xe8] sm:$0xff]
      %v1467 = vld [vmem:[%s4 + $0xf0] sm:$0xff]
      %v1468 = vld [vmem:[%s4 + $0xf8] sm:$0xff]
      %1470 = vset.pattern.permute.xlu0 0
      %1471 = vperm.xlu0 %1470, %v1437
      %v1472 = vpop.permute.xlu0 %1471
      %1475 = vset.pattern.permute.xlu0 0
      %1476 = vperm.xlu0 %1475, %v1438
      %v1477 = vpop.permute.xlu0 %1476
      %1480 = vset.pattern.permute.xlu0 0
      %1481 = vperm.xlu0 %1480, %v1439
      %v1482 = vpop.permute.xlu0 %1481
      %1485 = vset.pattern.permute.xlu0 0
      %1486 = vperm.xlu0 %1485, %v1440
      %v1487 = vpop.permute.xlu0 %1486
      %1490 = vset.pattern.permute.xlu0 0
      %1491 = vperm.xlu0 %1490, %v1441
      %v1492 = vpop.permute.xlu0 %1491
      %1495 = vset.pattern.permute.xlu0 0
      %1496 = vperm.xlu0 %1495, %v1442
      %v1497 = vpop.permute.xlu0 %1496
      %1500 = vset.pattern.permute.xlu0 0
      %1501 = vperm.xlu0 %1500, %v1443
      %v1502 = vpop.permute.xlu0 %1501
      %1505 = vset.pattern.permute.xlu0 0
      %1506 = vperm.xlu0 %1505, %v1444
      %v1507 = vpop.permute.xlu0 %1506
      %1510 = vset.pattern.permute.xlu0 0
      %1511 = vperm.xlu0 %1510, %v1445
      %v1512 = vpop.permute.xlu0 %1511
      %1515 = vset.pattern.permute.xlu0 0
      %1516 = vperm.xlu0 %1515, %v1446
      %v1517 = vpop.permute.xlu0 %1516
      %1520 = vset.pattern.permute.xlu0 0
      %1521 = vperm.xlu0 %1520, %v1447
      %v1522 = vpop.permute.xlu0 %1521
      %1525 = vset.pattern.permute.xlu0 0
      %1526 = vperm.xlu0 %1525, %v1448
      %v1527 = vpop.permute.xlu0 %1526
      %1530 = vset.pattern.permute.xlu0 0
      %1531 = vperm.xlu0 %1530, %v1449
      %v1532 = vpop.permute.xlu0 %1531
      %1535 = vset.pattern.permute.xlu0 0
      %1536 = vperm.xlu0 %1535, %v1450
      %v1537 = vpop.permute.xlu0 %1536
      %1540 = vset.pattern.permute.xlu0 0
      %1541 = vperm.xlu0 %1540, %v1451
      %v1542 = vpop.permute.xlu0 %1541
      %1545 = vset.pattern.permute.xlu0 0
      %1546 = vperm.xlu0 %1545, %v1452
      %v1547 = vpop.permute.xlu0 %1546
      %1550 = vset.pattern.permute.xlu0 0
      %1551 = vperm.xlu0 %1550, %v1453
      %v1552 = vpop.permute.xlu0 %1551
      %1555 = vset.pattern.permute.xlu0 0
      %1556 = vperm.xlu0 %1555, %v1454
      %v1557 = vpop.permute.xlu0 %1556
      %1560 = vset.pattern.permute.xlu0 0
      %1561 = vperm.xlu0 %1560, %v1455
      %v1562 = vpop.permute.xlu0 %1561
      %1565 = vset.pattern.permute.xlu0 0
      %1566 = vperm.xlu0 %1565, %v1456
      %v1567 = vpop.permute.xlu0 %1566
      %1570 = vset.pattern.permute.xlu0 0
      %1571 = vperm.xlu0 %1570, %v1457
      %v1572 = vpop.permute.xlu0 %1571
      %1575 = vset.pattern.permute.xlu0 0
      %1576 = vperm.xlu0 %1575, %v1458
      %v1577 = vpop.permute.xlu0 %1576
      %1580 = vset.pattern.permute.xlu0 0
      %1581 = vperm.xlu0 %1580, %v1459
      %v1582 = vpop.permute.xlu0 %1581
      %1585 = vset.pattern.permute.xlu0 0
      %1586 = vperm.xlu0 %1585, %v1460
      %v1587 = vpop.permute.xlu0 %1586
      %1590 = vset.pattern.permute.xlu0 0
      %1591 = vperm.xlu0 %1590, %v1461
      %v1592 = vpop.permute.xlu0 %1591
      %1595 = vset.pattern.permute.xlu0 0
      %1596 = vperm.xlu0 %1595, %v1462
      %v1597 = vpop.permute.xlu0 %1596
      %1600 = vset.pattern.permute.xlu0 0
      %1601 = vperm.xlu0 %1600, %v1463
      %v1602 = vpop.permute.xlu0 %1601
      %1605 = vset.pattern.permute.xlu0 0
      %1606 = vperm.xlu0 %1605, %v1464
      %v1607 = vpop.permute.xlu0 %1606
      %1610 = vset.pattern.permute.xlu0 0
      %1611 = vperm.xlu0 %1610, %v1465
      %v1612 = vpop.permute.xlu0 %1611
      %1615 = vset.pattern.permute.xlu0 0
      %1616 = vperm.xlu0 %1615, %v1466
      %v1617 = vpop.permute.xlu0 %1616
      %1620 = vset.pattern.permute.xlu0 0
      %1621 = vperm.xlu0 %1620, %v1467
      %v1622 = vpop.permute.xlu0 %1621
      %1625 = vset.pattern.permute.xlu0 0
      %1626 = vperm.xlu0 %1625, %v1468
      %v1627 = vpop.permute.xlu0 %1626
      %v1629 = vadd.f32 %v1405, %v1472
      %v1630 = vadd.f32 %v1406, %v1477
      %v1631 = vadd.f32 %v1407, %v1482
      %v1632 = vadd.f32 %v1408, %v1487
      %v1633 = vadd.f32 %v1409, %v1492
      %v1634 = vadd.f32 %v1410, %v1497
      %v1635 = vadd.f32 %v1411, %v1502
      %v1636 = vadd.f32 %v1412, %v1507
      %v1637 = vadd.f32 %v1413, %v1512
      %v1638 = vadd.f32 %v1414, %v1517
      %v1639 = vadd.f32 %v1415, %v1522
      %v1640 = vadd.f32 %v1416, %v1527
      %v1641 = vadd.f32 %v1417, %v1532
      %v1642 = vadd.f32 %v1418, %v1537
      %v1643 = vadd.f32 %v1419, %v1542
      %v1644 = vadd.f32 %v1420, %v1547
      %v1645 = vadd.f32 %v1421, %v1552
      %v1646 = vadd.f32 %v1422, %v1557
      %v1647 = vadd.f32 %v1423, %v1562
      %v1648 = vadd.f32 %v1424, %v1567
      %v1649 = vadd.f32 %v1425, %v1572
      %v1650 = vadd.f32 %v1426, %v1577
      %v1651 = vadd.f32 %v1427, %v1582
      %v1652 = vadd.f32 %v1428, %v1587
      %v1653 = vadd.f32 %v1429, %v1592
      %v1654 = vadd.f32 %v1430, %v1597
      %v1655 = vadd.f32 %v1431, %v1602
      %v1656 = vadd.f32 %v1432, %v1607
      %v1657 = vadd.f32 %v1433, %v1612
      %v1658 = vadd.f32 %v1434, %v1617
      %v1659 = vadd.f32 %v1435, %v1622
      %v1660 = vadd.f32 %v1436, %v1627
      %v1661 = vld [vmem:[%s533] sm:$0x1]
      %v1662 = vlaneseq
      %v1663 = vshrl.u32 %v1662, 7
      %v1664 = vsub.s32 0, %v1663
      %v1665 = vrot.slane %v1661, %v1664
      %v1666 = vmul.f32 %v1629, %v1665
      %v1667 = vmul.f32 %v1630, %v1665
      %v1668 = vmul.f32 %v1631, %v1665
      %v1669 = vmul.f32 %v1632, %v1665
      %v1670 = vmul.f32 %v1633, %v1665
      %v1671 = vmul.f32 %v1634, %v1665
      %v1672 = vmul.f32 %v1635, %v1665
      %v1673 = vmul.f32 %v1636, %v1665
      %v1674 = vmul.f32 %v1637, %v1665
      %v1675 = vmul.f32 %v1638, %v1665
      %v1676 = vmul.f32 %v1639, %v1665
      %v1677 = vmul.f32 %v1640, %v1665
      %v1678 = vmul.f32 %v1641, %v1665
      %v1679 = vmul.f32 %v1642, %v1665
      %v1680 = vmul.f32 %v1643, %v1665
      %v1681 = vmul.f32 %v1644, %v1665
      %v1682 = vmul.f32 %v1645, %v1665
      %v1683 = vmul.f32 %v1646, %v1665
      %v1684 = vmul.f32 %v1647, %v1665
      %v1685 = vmul.f32 %v1648, %v1665
      %v1686 = vmul.f32 %v1649, %v1665
      %v1687 = vmul.f32 %v1650, %v1665
      %v1688 = vmul.f32 %v1651, %v1665
      %v1689 = vmul.f32 %v1652, %v1665
      %v1690 = vmul.f32 %v1653, %v1665
      %v1691 = vmul.f32 %v1654, %v1665
      %v1692 = vmul.f32 %v1655, %v1665
      %v1693 = vmul.f32 %v1656, %v1665
      %v1694 = vmul.f32 %v1657, %v1665
      %v1695 = vmul.f32 %v1658, %v1665
      %v1696 = vmul.f32 %v1659, %v1665
      %v1697 = vmul.f32 %v1660, %v1665
      %v1698 = vld [vmem:[%s533 + $0x1] sm:$0x1]
      %v1699 = vlaneseq
      %v1700 = vshrl.u32 %v1699, 7
      %v1701 = vsub.s32 0, %v1700
      %v1702 = vrot.slane %v1698, %v1701
      %v1703 = vadd.f32 %v1666, %v1702
      %v1704 = vadd.f32 %v1667, %v1702
      %v1705 = vadd.f32 %v1668, %v1702
      %v1706 = vadd.f32 %v1669, %v1702
      %v1707 = vadd.f32 %v1670, %v1702
      %v1708 = vadd.f32 %v1671, %v1702
      %v1709 = vadd.f32 %v1672, %v1702
      %v1710 = vadd.f32 %v1673, %v1702
      %v1711 = vadd.f32 %v1674, %v1702
      %v1712 = vadd.f32 %v1675, %v1702
      %v1713 = vadd.f32 %v1676, %v1702
      %v1714 = vadd.f32 %v1677, %v1702
      %v1715 = vadd.f32 %v1678, %v1702
      %v1716 = vadd.f32 %v1679, %v1702
      %v1717 = vadd.f32 %v1680, %v1702
      %v1718 = vadd.f32 %v1681, %v1702
      %v1719 = vadd.f32 %v1682, %v1702
      %v1720 = vadd.f32 %v1683, %v1702
      %v1721 = vadd.f32 %v1684, %v1702
      %v1722 = vadd.f32 %v1685, %v1702
      %v1723 = vadd.f32 %v1686, %v1702
      %v1724 = vadd.f32 %v1687, %v1702
      %v1725 = vadd.f32 %v1688, %v1702
      %v1726 = vadd.f32 %v1689, %v1702
      %v1727 = vadd.f32 %v1690, %v1702
      %v1728 = vadd.f32 %v1691, %v1702
      %v1729 = vadd.f32 %v1692, %v1702
      %v1730 = vadd.f32 %v1693, %v1702
      %v1731 = vadd.f32 %v1694, %v1702
      %v1732 = vadd.f32 %v1695, %v1702
      %v1733 = vadd.f32 %v1696, %v1702
      %v1734 = vadd.f32 %v1697, %v1702
      %v1735 = vld [vmem:[%s5] sm:$0xff]
      %v1736 = vld [vmem:[%s5 + $0x8] sm:$0xff]
      %v1737 = vld [vmem:[%s5 + $0x10] sm:$0xff]
      %v1738 = vld [vmem:[%s5 + $0x18] sm:$0xff]
      %v1739 = vld [vmem:[%s6] sm:$0x1]
      %v1741 = vlaneseq
      %v1742 = vshrl.u32 %v1741, 7
      %v1743 = vsub.s32 0, %v1742
      %v1744 = vrot.slane %v1739, %v1743
      %vm1746 = vcmask 261120
      %v1748 = vsel %vm1746, %v1703, 0
      %v1751 = vsel %vm1746, %v1704, 0
      %v1754 = vsel %vm1746, %v1705, 0
      %v1757 = vsel %vm1746, %v1706, 0
      %v1760 = vsel %vm1746, %v1707, 0
      %v1763 = vsel %vm1746, %v1708, 0
      %v1766 = vsel %vm1746, %v1709, 0
      %v1769 = vsel %vm1746, %v1710, 0
      %v1772 = vsel %vm1746, %v1711, 0
      %v1775 = vsel %vm1746, %v1712, 0
      %v1778 = vsel %vm1746, %v1713, 0
      %v1781 = vsel %vm1746, %v1714, 0
      %v1784 = vsel %vm1746, %v1715, 0
      %v1787 = vsel %vm1746, %v1716, 0
      %v1790 = vsel %vm1746, %v1717, 0
      %v1793 = vsel %vm1746, %v1718, 0
      %v1796 = vsel %vm1746, %v1719, 0
      %v1799 = vsel %vm1746, %v1720, 0
      %v1802 = vsel %vm1746, %v1721, 0
      %v1805 = vsel %vm1746, %v1722, 0
      %v1808 = vsel %vm1746, %v1723, 0
      %v1811 = vsel %vm1746, %v1724, 0
      %v1814 = vsel %vm1746, %v1725, 0
      %v1817 = vsel %vm1746, %v1726, 0
      %v1820 = vsel %vm1746, %v1727, 0
      %v1823 = vsel %vm1746, %v1728, 0
      %v1826 = vsel %vm1746, %v1729, 0
      %v1829 = vsel %vm1746, %v1730, 0
      %v1832 = vsel %vm1746, %v1731, 0
      %v1835 = vsel %vm1746, %v1732, 0
      %v1838 = vsel %vm1746, %v1733, 0
      %v1841 = vsel %vm1746, %v1734, 0
      %1843 = vmatprep.subr.mxu0 0.0
      %1844 = vmatpush1.msra.mxu0 %v1735
      %1845 = vmatprep.subr.mxu0 0.0
      %1846 = vmatpush1.msra.mxu0 %v1736
      %1847 = vmatprep.subr.mxu0 0.0
      %1848 = vmatpush1.msra.mxu0 %v1737
      %1849 = vmatprep.subr.mxu0 0.0
      %1850 = vmatpush1.msra.mxu0 %v1738
      %1851 = vmatprep.subr.mxu0 0.0
      %1852 = vmatpush1.msra.mxu0 0.0
      %1853 = vmatprep.subr.mxu0 0.0
      %1854 = vmatpush1.msra.mxu0 0.0
      %1855 = vmatprep.subr.mxu0 0.0
      %1856 = vmatpush1.msra.mxu0 0.0
      %1857 = vmatprep.subr.mxu0 0.0
      %1858 = vmatpush1.msra.mxu0 0.0
      %1859 = vmatprep.subr.mxu0 0.0
      %1860 = vmatpush1.msra.mxu0 0.0
      %1861 = vmatprep.subr.mxu0 0.0
      %1862 = vmatpush1.msra.mxu0 0.0
      %1863 = vmatprep.subr.mxu0 0.0
      %1864 = vmatpush1.msra.mxu0 0.0
      %1865 = vmatprep.subr.mxu0 0.0
      %1866 = vmatpush1.msra.mxu0 0.0
      %1867 = vmatprep.subr.mxu0 0.0
      %1868 = vmatpush1.msra.mxu0 0.0
      %1869 = vmatprep.subr.mxu0 0.0
      %1870 = vmatpush1.msra.mxu0 0.0
      %1871 = vmatprep.subr.mxu0 0.0
      %1872 = vmatpush1.msra.mxu0 0.0
      %1873 = vmatprep.subr.mxu0 0.0
      %1874 = vmatpush1.msra.mxu0 0.0
      %1875 = vmatprep.subr.mxu0 0.0
      %1876 = vmatpush1.msra.mxu0 0.0
      %1877 = vmatprep.subr.mxu0 0.0
      %1878 = vmatpush1.msra.mxu0 0.0
      %1879 = vmatprep.subr.mxu0 0.0
      %1880 = vmatpush1.msra.mxu0 0.0
      %1881 = vmatprep.subr.mxu0 0.0
      %1882 = vmatpush1.msra.mxu0 0.0
      %1883 = vmatprep.subr.mxu0 0.0
      %1884 = vmatpush1.msra.mxu0 0.0
      %1885 = vmatprep.subr.mxu0 0.0
      %1886 = vmatpush1.msra.mxu0 0.0
      %1887 = vmatprep.subr.mxu0 0.0
      %1888 = vmatpush1.msra.mxu0 0.0
      %1889 = vmatprep.subr.mxu0 0.0
      %1890 = vmatpush1.msra.mxu0 0.0
      %1891 = vmatprep.subr.mxu0 0.0
      %1892 = vmatpush1.msra.mxu0 0.0
      %1893 = vmatprep.subr.mxu0 0.0
      %1894 = vmatpush1.msra.mxu0 0.0
      %1895 = vmatprep.subr.mxu0 0.0
      %1896 = vmatpush1.msra.mxu0 0.0
      %1897 = vmatprep.subr.mxu0 0.0
      %1898 = vmatpush1.msra.mxu0 0.0
      %1899 = vmatprep.subr.mxu0 0.0
      %1900 = vmatpush1.msra.mxu0 0.0
      %1901 = vmatprep.subr.mxu0 0.0
      %1902 = vmatpush1.msra.mxu0 0.0
      %1903 = vmatprep.subr.mxu0 0.0
      %1904 = vmatpush1.msra.mxu0 0.0
      %1905 = vmatprep.subr.mxu0 0.0
      %1906 = vmatpush1.msra.mxu0 0.0
      %1907 = vmatprep.mubr.f32.mxu0 0.0
      %1908 = vmatmul.mubr.f32.gmra.mrb[0].mxu0 %v1748
      %v1909 = vpop.f32.mrb[0].mxu0
      %v1910 = vadd.f32 %v1744, %v1909
      %v1911 = vpop.f32.mrb[0].mxu0
      %1912 = vmatprep.mubr.f32.mxu0 0.0
      %1913 = vmatmul.mubr.f32.gmra.mrb[0].mxu0 %v1751
      %v1914 = vpop.f32.mrb[0].mxu0
      %v1915 = vadd.f32 %v1744, %v1914
      %v1916 = vpop.f32.mrb[0].mxu0
      %1917 = vmatprep.mubr.f32.mxu0 0.0
      %1918 = vmatmul.mubr.f32.gmra.mrb[0].mxu0 %v1754
      %v1919 = vpop.f32.mrb[0].mxu0
      %v1920 = vadd.f32 %v1744, %v1919
      %v1921 = vpop.f32.mrb[0].mxu0
      %1922 = vmatprep.mubr.f32.mxu0 0.0
      %1923 = vmatmul.mubr.f32.gmra.mrb[0].mxu0 %v1757
      %v1924 = vpop.f32.mrb[0].mxu0
      %v1925 = vadd.f32 %v1744, %v1924
      %v1926 = vpop.f32.mrb[0].mxu0
      %1927 = vmatprep.mubr.f32.mxu0 0.0
      %1928 = vmatmul.mubr.f32.gmra.mrb[0].mxu0 %v1760
      %v1929 = vpop.f32.mrb[0].mxu0
      %v1930 = vadd.f32 %v1744, %v1929
      %v1931 = vpop.f32.mrb[0].mxu0
      %1932 = vmatprep.mubr.f32.mxu0 0.0
      %1933 = vmatmul.mubr.f32.gmra.mrb[0].mxu0 %v1763
      %v1934 = vpop.f32.mrb[0].mxu0
      %v1935 = vadd.f32 %v1744, %v1934
      %v1936 = vpop.f32.mrb[0].mxu0
      %1937 = vmatprep.mubr.f32.mxu0 0.0
      %1938 = vmatmul.mubr.f32.gmra.mrb[0].mxu0 %v1766
      %v1939 = vpop.f32.mrb[0].mxu0
      %v1940 = vadd.f32 %v1744, %v1939
      %v1941 = vpop.f32.mrb[0].mxu0
      %1942 = vmatprep.mubr.f32.mxu0 0.0
      %1943 = vmatmul.mubr.f32.gmra.mrb[0].mxu0 %v1769
      %v1944 = vpop.f32.mrb[0].mxu0
      %v1945 = vadd.f32 %v1744, %v1944
      %v1946 = vpop.f32.mrb[0].mxu0
      %1947 = vmatprep.mubr.f32.mxu0 0.0
      %1948 = vmatmul.mubr.f32.gmra.mrb[0].mxu0 %v1772
      %v1949 = vpop.f32.mrb[0].mxu0
      %v1950 = vadd.f32 %v1744, %v1949
      %v1951 = vpop.f32.mrb[0].mxu0
      %1952 = vmatprep.mubr.f32.mxu0 0.0
      %1953 = vmatmul.mubr.f32.gmra.mrb[0].mxu0 %v1775
      %v1954 = vpop.f32.mrb[0].mxu0
      %v1955 = vadd.f32 %v1744, %v1954
      %v1956 = vpop.f32.mrb[0].mxu0
      %1957 = vmatprep.mubr.f32.mxu0 0.0
      %1958 = vmatmul.mubr.f32.gmra.mrb[0].mxu0 %v1778
      %v1959 = vpop.f32.mrb[0].mxu0
      %v1960 = vadd.f32 %v1744, %v1959
      %v1961 = vpop.f32.mrb[0].mxu0
      %1962 = vmatprep.mubr.f32.mxu0 0.0
      %1963 = vmatmul.mubr.f32.gmra.mrb[0].mxu0 %v1781
      %v1964 = vpop.f32.mrb[0].mxu0
      %v1965 = vadd.f32 %v1744, %v1964
      %v1966 = vpop.f32.mrb[0].mxu0
      %1967 = vmatprep.mubr.f32.mxu0 0.0
      %1968 = vmatmul.mubr.f32.gmra.mrb[0].mxu0 %v1784
      %v1969 = vpop.f32.mrb[0].mxu0
      %v1970 = vadd.f32 %v1744, %v1969
      %v1971 = vpop.f32.mrb[0].mxu0
      %1972 = vmatprep.mubr.f32.mxu0 0.0
      %1973 = vmatmul.mubr.f32.gmra.mrb[0].mxu0 %v1787
      %v1974 = vpop.f32.mrb[0].mxu0
      %v1975 = vadd.f32 %v1744, %v1974
      %v1976 = vpop.f32.mrb[0].mxu0
      %1977 = vmatprep.mubr.f32.mxu0 0.0
      %1978 = vmatmul.mubr.f32.gmra.mrb[0].mxu0 %v1790
      %v1979 = vpop.f32.mrb[0].mxu0
      %v1980 = vadd.f32 %v1744, %v1979
      %v1981 = vpop.f32.mrb[0].mxu0
      %1982 = vmatprep.mubr.f32.mxu0 0.0
      %1983 = vmatmul.mubr.f32.gmra.mrb[0].mxu0 %v1793
      %v1984 = vpop.f32.mrb[0].mxu0
      %v1985 = vadd.f32 %v1744, %v1984
      %v1986 = vpop.f32.mrb[0].mxu0
      %1987 = vmatprep.mubr.f32.mxu0 0.0
      %1988 = vmatmul.mubr.f32.gmra.mrb[0].mxu0 %v1796
      %v1989 = vpop.f32.mrb[0].mxu0
      %v1990 = vadd.f32 %v1744, %v1989
      %v1991 = vpop.f32.mrb[0].mxu0
      %1992 = vmatprep.mubr.f32.mxu0 0.0
      %1993 = vmatmul.mubr.f32.gmra.mrb[0].mxu0 %v1799
      %v1994 = vpop.f32.mrb[0].mxu0
      %v1995 = vadd.f32 %v1744, %v1994
      %v1996 = vpop.f32.mrb[0].mxu0
      %1997 = vmatprep.mubr.f32.mxu0 0.0
      %1998 = vmatmul.mubr.f32.gmra.mrb[0].mxu0 %v1802
      %v1999 = vpop.f32.mrb[0].mxu0
      %v2000 = vadd.f32 %v1744, %v1999
      %v2001 = vpop.f32.mrb[0].mxu0
      %2002 = vmatprep.mubr.f32.mxu0 0.0
      %2003 = vmatmul.mubr.f32.gmra.mrb[0].mxu0 %v1805
      %v2004 = vpop.f32.mrb[0].mxu0
      %v2005 = vadd.f32 %v1744, %v2004
      %v2006 = vpop.f32.mrb[0].mxu0
      %2007 = vmatprep.mubr.f32.mxu0 0.0
      %2008 = vmatmul.mubr.f32.gmra.mrb[0].mxu0 %v1808
      %v2009 = vpop.f32.mrb[0].mxu0
      %v2010 = vadd.f32 %v1744, %v2009
      %v2011 = vpop.f32.mrb[0].mxu0
      %2012 = vmatprep.mubr.f32.mxu0 0.0
      %2013 = vmatmul.mubr.f32.gmra.mrb[0].mxu0 %v1811
      %v2014 = vpop.f32.mrb[0].mxu0
      %v2015 = vadd.f32 %v1744, %v2014
      %v2016 = vpop.f32.mrb[0].mxu0
      %2017 = vmatprep.mubr.f32.mxu0 0.0
      %2018 = vmatmul.mubr.f32.gmra.mrb[0].mxu0 %v1814
      %v2019 = vpop.f32.mrb[0].mxu0
      %v2020 = vadd.f32 %v1744, %v2019
      %v2021 = vpop.f32.mrb[0].mxu0
      %2022 = vmatprep.mubr.f32.mxu0 0.0
      %2023 = vmatmul.mubr.f32.gmra.mrb[0].mxu0 %v1817
      %v2024 = vpop.f32.mrb[0].mxu0
      %v2025 = vadd.f32 %v1744, %v2024
      %v2026 = vpop.f32.mrb[0].mxu0
      %2027 = vmatprep.mubr.f32.mxu0 0.0
      %2028 = vmatmul.mubr.f32.gmra.mrb[0].mxu0 %v1820
      %v2029 = vpop.f32.mrb[0].mxu0
      %v2030 = vadd.f32 %v1744, %v2029
      %v2031 = vpop.f32.mrb[0].mxu0
      %2032 = vmatprep.mubr.f32.mxu0 0.0
      %2033 = vmatmul.mubr.f32.gmra.mrb[0].mxu0 %v1823
      %v2034 = vpop.f32.mrb[0].mxu0
      %v2035 = vadd.f32 %v1744, %v2034
      %v2036 = vpop.f32.mrb[0].mxu0
      %2037 = vmatprep.mubr.f32.mxu0 0.0
      %2038 = vmatmul.mubr.f32.gmra.mrb[0].mxu0 %v1826
      %v2039 = vpop.f32.mrb[0].mxu0
      %v2040 = vadd.f32 %v1744, %v2039
      %v2041 = vpop.f32.mrb[0].mxu0
      %2042 = vmatprep.mubr.f32.mxu0 0.0
      %2043 = vmatmul.mubr.f32.gmra.mrb[0].mxu0 %v1829
      %v2044 = vpop.f32.mrb[0].mxu0
      %v2045 = vadd.f32 %v1744, %v2044
      %v2046 = vpop.f32.mrb[0].mxu0
      %2047 = vmatprep.mubr.f32.mxu0 0.0
      %2048 = vmatmul.mubr.f32.gmra.mrb[0].mxu0 %v1832
      %v2049 = vpop.f32.mrb[0].mxu0
      %v2050 = vadd.f32 %v1744, %v2049
      %v2051 = vpop.f32.mrb[0].mxu0
      %2052 = vmatprep.mubr.f32.mxu0 0.0
      %2053 = vmatmul.mubr.f32.gmra.mrb[0].mxu0 %v1835
      %v2054 = vpop.f32.mrb[0].mxu0
      %v2055 = vadd.f32 %v1744, %v2054
      %v2056 = vpop.f32.mrb[0].mxu0
      %2057 = vmatprep.mubr.f32.mxu0 0.0
      %2058 = vmatmul.mubr.f32.gmra.mrb[0].mxu0 %v1838
      %v2059 = vpop.f32.mrb[0].mxu0
      %v2060 = vadd.f32 %v1744, %v2059
      %v2061 = vpop.f32.mrb[0].mxu0
      %2062 = vmatprep.mubr.f32.mxu0 0.0
      %2063 = vmatmul.mubr.f32.gmra.mrb[0].mxu0 %v1841
      %v2064 = vpop.f32.mrb[0].mxu0
      %v2065 = vadd.f32 %v1744, %v2064
      %v2066 = vpop.f32.mrb[0].mxu0
      %2067 = vdwg.mxu0
      %v2068 = vld [vmem:[%s7] sm:$0xff]
      %v2069 = vld [vmem:[%s7 + $0x8] sm:$0xff]
      %v2070 = vld [vmem:[%s7 + $0x10] sm:$0xff]
      %v2071 = vld [vmem:[%s7 + $0x18] sm:$0xff]
      %v2072 = vld [vmem:[%s8] sm:$0x1]
      %v2074 = vlaneseq
      %v2075 = vshrl.u32 %v2074, 7
      %v2076 = vsub.s32 0, %v2075
      %v2077 = vrot.slane %v2072, %v2076
      %2079 = vmatprep.subr.mxu0 0.0
      %2080 = vmatpush1.msra.mxu0 %v2068
      %2081 = vmatprep.subr.mxu0 0.0
      %2082 = vmatpush1.msra.mxu0 %v2069
      %2083 = vmatprep.subr.mxu0 0.0
      %2084 = vmatpush1.msra.mxu0 %v2070
      %2085 = vmatprep.subr.mxu0 0.0
      %2086 = vmatpush1.msra.mxu0 %v2071
      %2087 = vmatprep.subr.mxu0 0.0
      %2088 = vmatpush1.msra.mxu0 0.0
      %2089 = vmatprep.subr.mxu0 0.0
      %2090 = vmatpush1.msra.mxu0 0.0
      %2091 = vmatprep.subr.mxu0 0.0
      %2092 = vmatpush1.msra.mxu0 0.0
      %2093 = vmatprep.subr.mxu0 0.0
      %2094 = vmatpush1.msra.mxu0 0.0
      %2095 = vmatprep.subr.mxu0 0.0
      %2096 = vmatpush1.msra.mxu0 0.0
      %2097 = vmatprep.subr.mxu0 0.0
      %2098 = vmatpush1.msra.mxu0 0.0
      %2099 = vmatprep.subr.mxu0 0.0
      %2100 = vmatpush1.msra.mxu0 0.0
      %2101 = vmatprep.subr.mxu0 0.0
      %2102 = vmatpush1.msra.mxu0 0.0
      %2103 = vmatprep.subr.mxu0 0.0
      %2104 = vmatpush1.msra.mxu0 0.0
      %2105 = vmatprep.subr.mxu0 0.0
      %2106 = vmatpush1.msra.mxu0 0.0
      %2107 = vmatprep.subr.mxu0 0.0
      %2108 = vmatpush1.msra.mxu0 0.0
      %2109 = vmatprep.subr.mxu0 0.0
      %2110 = vmatpush1.msra.mxu0 0.0
      %2111 = vmatprep.subr.mxu0 0.0
      %2112 = vmatpush1.msra.mxu0 0.0
      %2113 = vmatprep.subr.mxu0 0.0
      %2114 = vmatpush1.msra.mxu0 0.0
      %2115 = vmatprep.subr.mxu0 0.0
      %2116 = vmatpush1.msra.mxu0 0.0
      %2117 = vmatprep.subr.mxu0 0.0
      %2118 = vmatpush1.msra.mxu0 0.0
      %2119 = vmatprep.subr.mxu0 0.0
      %2120 = vmatpush1.msra.mxu0 0.0
      %2121 = vmatprep.subr.mxu0 0.0
      %2122 = vmatpush1.msra.mxu0 0.0
      %2123 = vmatprep.subr.mxu0 0.0
      %2124 = vmatpush1.msra.mxu0 0.0
      %2125 = vmatprep.subr.mxu0 0.0
      %2126 = vmatpush1.msra.mxu0 0.0
      %2127 = vmatprep.subr.mxu0 0.0
      %2128 = vmatpush1.msra.mxu0 0.0
      %2129 = vmatprep.subr.mxu0 0.0
      %2130 = vmatpush1.msra.mxu0 0.0
      %2131 = vmatprep.subr.mxu0 0.0
      %2132 = vmatpush1.msra.mxu0 0.0
      %2133 = vmatprep.subr.mxu0 0.0
      %2134 = vmatpush1.msra.mxu0 0.0
      %2135 = vmatprep.subr.mxu0 0.0
      %2136 = vmatpush1.msra.mxu0 0.0
      %2137 = vmatprep.subr.mxu0 0.0
      %2138 = vmatpush1.msra.mxu0 0.0
      %2139 = vmatprep.subr.mxu0 0.0
      %2140 = vmatpush1.msra.mxu0 0.0
      %2141 = vmatprep.subr.mxu0 0.0
      %2142 = vmatpush1.msra.mxu0 0.0
      %2143 = vmatprep.mubr.f32.mxu0 0.0
      %2144 = vmatmul.mubr.f32.gmra.mrb[0].mxu0 %v1748
      %v2145 = vpop.f32.mrb[0].mxu0
      %v2146 = vadd.f32 %v2077, %v2145
      %v2147 = vpop.f32.mrb[0].mxu0
      %2148 = vmatprep.mubr.f32.mxu0 0.0
      %2149 = vmatmul.mubr.f32.gmra.mrb[0].mxu0 %v1751
      %v2150 = vpop.f32.mrb[0].mxu0
      %v2151 = vadd.f32 %v2077, %v2150
      %v2152 = vpop.f32.mrb[0].mxu0
      %2153 = vmatprep.mubr.f32.mxu0 0.0
      %2154 = vmatmul.mubr.f32.gmra.mrb[0].mxu0 %v1754
      %v2155 = vpop.f32.mrb[0].mxu0
      %v2156 = vadd.f32 %v2077, %v2155
      %v2157 = vpop.f32.mrb[0].mxu0
      %2158 = vmatprep.mubr.f32.mxu0 0.0
      %2159 = vmatmul.mubr.f32.gmra.mrb[0].mxu0 %v1757
      %v2160 = vpop.f32.mrb[0].mxu0
      %v2161 = vadd.f32 %v2077, %v2160
      %v2162 = vpop.f32.mrb[0].mxu0
      %2163 = vmatprep.mubr.f32.mxu0 0.0
      %2164 = vmatmul.mubr.f32.gmra.mrb[0].mxu0 %v1760
      %v2165 = vpop.f32.mrb[0].mxu0
      %v2166 = vadd.f32 %v2077, %v2165
      %v2167 = vpop.f32.mrb[0].mxu0
      %2168 = vmatprep.mubr.f32.mxu0 0.0
      %2169 = vmatmul.mubr.f32.gmra.mrb[0].mxu0 %v1763
      %v2170 = vpop.f32.mrb[0].mxu0
      %v2171 = vadd.f32 %v2077, %v2170
      %v2172 = vpop.f32.mrb[0].mxu0
      %2173 = vmatprep.mubr.f32.mxu0 0.0
      %2174 = vmatmul.mubr.f32.gmra.mrb[0].mxu0 %v1766
      %v2175 = vpop.f32.mrb[0].mxu0
      %v2176 = vadd.f32 %v2077, %v2175
      %v2177 = vpop.f32.mrb[0].mxu0
      %2178 = vmatprep.mubr.f32.mxu0 0.0
      %2179 = vmatmul.mubr.f32.gmra.mrb[0].mxu0 %v1769
      %v2180 = vpop.f32.mrb[0].mxu0
      %v2181 = vadd.f32 %v2077, %v2180
      %v2182 = vpop.f32.mrb[0].mxu0
      %2183 = vmatprep.mubr.f32.mxu0 0.0
      %2184 = vmatmul.mubr.f32.gmra.mrb[0].mxu0 %v1772
      %v2185 = vpop.f32.mrb[0].mxu0
      %v2186 = vadd.f32 %v2077, %v2185
      %v2187 = vpop.f32.mrb[0].mxu0
      %2188 = vmatprep.mubr.f32.mxu0 0.0
      %2189 = vmatmul.mubr.f32.gmra.mrb[0].mxu0 %v1775
      %v2190 = vpop.f32.mrb[0].mxu0
      %v2191 = vadd.f32 %v2077, %v2190
      %v2192 = vpop.f32.mrb[0].mxu0
      %2193 = vmatprep.mubr.f32.mxu0 0.0
      %2194 = vmatmul.mubr.f32.gmra.mrb[0].mxu0 %v1778
      %v2195 = vpop.f32.mrb[0].mxu0
      %v2196 = vadd.f32 %v2077, %v2195
      %v2197 = vpop.f32.mrb[0].mxu0
      %2198 = vmatprep.mubr.f32.mxu0 0.0
      %2199 = vmatmul.mubr.f32.gmra.mrb[0].mxu0 %v1781
      %v2200 = vpop.f32.mrb[0].mxu0
      %v2201 = vadd.f32 %v2077, %v2200
      %v2202 = vpop.f32.mrb[0].mxu0
      %2203 = vmatprep.mubr.f32.mxu0 0.0
      %2204 = vmatmul.mubr.f32.gmra.mrb[0].mxu0 %v1784
      %v2205 = vpop.f32.mrb[0].mxu0
      %v2206 = vadd.f32 %v2077, %v2205
      %v2207 = vpop.f32.mrb[0].mxu0
      %2208 = vmatprep.mubr.f32.mxu0 0.0
      %2209 = vmatmul.mubr.f32.gmra.mrb[0].mxu0 %v1787
      %v2210 = vpop.f32.mrb[0].mxu0
      %v2211 = vadd.f32 %v2077, %v2210
      %v2212 = vpop.f32.mrb[0].mxu0
      %2213 = vmatprep.mubr.f32.mxu0 0.0
      %2214 = vmatmul.mubr.f32.gmra.mrb[0].mxu0 %v1790
      %v2215 = vpop.f32.mrb[0].mxu0
      %v2216 = vadd.f32 %v2077, %v2215
      %v2217 = vpop.f32.mrb[0].mxu0
      %2218 = vmatprep.mubr.f32.mxu0 0.0
      %2219 = vmatmul.mubr.f32.gmra.mrb[0].mxu0 %v1793
      %v2220 = vpop.f32.mrb[0].mxu0
      %v2221 = vadd.f32 %v2077, %v2220
      %v2222 = vpop.f32.mrb[0].mxu0
      %2223 = vmatprep.mubr.f32.mxu0 0.0
      %2224 = vmatmul.mubr.f32.gmra.mrb[0].mxu0 %v1796
      %v2225 = vpop.f32.mrb[0].mxu0
      %v2226 = vadd.f32 %v2077, %v2225
      %v2227 = vpop.f32.mrb[0].mxu0
      %2228 = vmatprep.mubr.f32.mxu0 0.0
      %2229 = vmatmul.mubr.f32.gmra.mrb[0].mxu0 %v1799
      %v2230 = vpop.f32.mrb[0].mxu0
      %v2231 = vadd.f32 %v2077, %v2230
      %v2232 = vpop.f32.mrb[0].mxu0
      %2233 = vmatprep.mubr.f32.mxu0 0.0
      %2234 = vmatmul.mubr.f32.gmra.mrb[0].mxu0 %v1802
      %v2235 = vpop.f32.mrb[0].mxu0
      %v2236 = vadd.f32 %v2077, %v2235
      %v2237 = vpop.f32.mrb[0].mxu0
      %2238 = vmatprep.mubr.f32.mxu0 0.0
      %2239 = vmatmul.mubr.f32.gmra.mrb[0].mxu0 %v1805
      %v2240 = vpop.f32.mrb[0].mxu0
      %v2241 = vadd.f32 %v2077, %v2240
      %v2242 = vpop.f32.mrb[0].mxu0
      %2243 = vmatprep.mubr.f32.mxu0 0.0
      %2244 = vmatmul.mubr.f32.gmra.mrb[0].mxu0 %v1808
      %v2245 = vpop.f32.mrb[0].mxu0
      %v2246 = vadd.f32 %v2077, %v2245
      %v2247 = vpop.f32.mrb[0].mxu0
      %2248 = vmatprep.mubr.f32.mxu0 0.0
      %2249 = vmatmul.mubr.f32.gmra.mrb[0].mxu0 %v1811
      %v2250 = vpop.f32.mrb[0].mxu0
      %v2251 = vadd.f32 %v2077, %v2250
      %v2252 = vpop.f32.mrb[0].mxu0
      %2253 = vmatprep.mubr.f32.mxu0 0.0
      %2254 = vmatmul.mubr.f32.gmra.mrb[0].mxu0 %v1814
      %v2255 = vpop.f32.mrb[0].mxu0
      %v2256 = vadd.f32 %v2077, %v2255
      %v2257 = vpop.f32.mrb[0].mxu0
      %2258 = vmatprep.mubr.f32.mxu0 0.0
      %2259 = vmatmul.mubr.f32.gmra.mrb[0].mxu0 %v1817
      %v2260 = vpop.f32.mrb[0].mxu0
      %v2261 = vadd.f32 %v2077, %v2260
      %v2262 = vpop.f32.mrb[0].mxu0
      %2263 = vmatprep.mubr.f32.mxu0 0.0
      %2264 = vmatmul.mubr.f32.gmra.mrb[0].mxu0 %v1820
      %v2265 = vpop.f32.mrb[0].mxu0
      %v2266 = vadd.f32 %v2077, %v2265
      %v2267 = vpop.f32.mrb[0].mxu0
      %2268 = vmatprep.mubr.f32.mxu0 0.0
      %2269 = vmatmul.mubr.f32.gmra.mrb[0].mxu0 %v1823
      %v2270 = vpop.f32.mrb[0].mxu0
      %v2271 = vadd.f32 %v2077, %v2270
      %v2272 = vpop.f32.mrb[0].mxu0
      %2273 = vmatprep.mubr.f32.mxu0 0.0
      %2274 = vmatmul.mubr.f32.gmra.mrb[0].mxu0 %v1826
      %v2275 = vpop.f32.mrb[0].mxu0
      %v2276 = vadd.f32 %v2077, %v2275
      %v2277 = vpop.f32.mrb[0].mxu0
      %2278 = vmatprep.mubr.f32.mxu0 0.0
      %2279 = vmatmul.mubr.f32.gmra.mrb[0].mxu0 %v1829
      %v2280 = vpop.f32.mrb[0].mxu0
      %v2281 = vadd.f32 %v2077, %v2280
      %v2282 = vpop.f32.mrb[0].mxu0
      %2283 = vmatprep.mubr.f32.mxu0 0.0
      %2284 = vmatmul.mubr.f32.gmra.mrb[0].mxu0 %v1832
      %v2285 = vpop.f32.mrb[0].mxu0
      %v2286 = vadd.f32 %v2077, %v2285
      %v2287 = vpop.f32.mrb[0].mxu0
      %2288 = vmatprep.mubr.f32.mxu0 0.0
      %2289 = vmatmul.mubr.f32.gmra.mrb[0].mxu0 %v1835
      %v2290 = vpop.f32.mrb[0].mxu0
      %v2291 = vadd.f32 %v2077, %v2290
      %v2292 = vpop.f32.mrb[0].mxu0
      %2293 = vmatprep.mubr.f32.mxu0 0.0
      %2294 = vmatmul.mubr.f32.gmra.mrb[0].mxu0 %v1838
      %v2295 = vpop.f32.mrb[0].mxu0
      %v2296 = vadd.f32 %v2077, %v2295
      %v2297 = vpop.f32.mrb[0].mxu0
      %2298 = vmatprep.mubr.f32.mxu0 0.0
      %2299 = vmatmul.mubr.f32.gmra.mrb[0].mxu0 %v1841
      %v2300 = vpop.f32.mrb[0].mxu0
      %v2301 = vadd.f32 %v2077, %v2300
      %v2302 = vpop.f32.mrb[0].mxu0
      %2303 = vdwg.mxu0
      %v2304 = vld [vmem:[%s9] sm:$0xff]
      %v2305 = vld [vmem:[%s9 + $0x8] sm:$0xff]
      %v2306 = vld [vmem:[%s9 + $0x10] sm:$0xff]
      %v2307 = vld [vmem:[%s9 + $0x18] sm:$0xff]
      %v2308 = vld [vmem:[%s10] sm:$0x1]
      %v2310 = vlaneseq
      %v2311 = vshrl.u32 %v2310, 7
      %v2312 = vsub.s32 0, %v2311
      %v2313 = vrot.slane %v2308, %v2312
      %2315 = vmatprep.subr.mxu0 0.0
      %2316 = vmatpush1.msra.mxu0 %v2304
      %2317 = vmatprep.subr.mxu0 0.0
      %2318 = vmatpush1.msra.mxu0 %v2305
      %2319 = vmatprep.subr.mxu0 0.0
      %2320 = vmatpush1.msra.mxu0 %v2306
      %2321 = vmatprep.subr.mxu0 0.0
      %2322 = vmatpush1.msra.mxu0 %v2307
      %2323 = vmatprep.subr.mxu0 0.0
      %2324 = vmatpush1.msra.mxu0 0.0
      %2325 = vmatprep.subr.mxu0 0.0
      %2326 = vmatpush1.msra.mxu0 0.0
      %2327 = vmatprep.subr.mxu0 0.0
      %2328 = vmatpush1.msra.mxu0 0.0
      %2329 = vmatprep.subr.mxu0 0.0
      %2330 = vmatpush1.msra.mxu0 0.0
      %2331 = vmatprep.subr.mxu0 0.0
      %2332 = vmatpush1.msra.mxu0 0.0
      %2333 = vmatprep.subr.mxu0 0.0
      %2334 = vmatpush1.msra.mxu0 0.0
      %2335 = vmatprep.subr.mxu0 0.0
      %2336 = vmatpush1.msra.mxu0 0.0
      %2337 = vmatprep.subr.mxu0 0.0
      %2338 = vmatpush1.msra.mxu0 0.0
      %2339 = vmatprep.subr.mxu0 0.0
      %2340 = vmatpush1.msra.mxu0 0.0
      %2341 = vmatprep.subr.mxu0 0.0
      %2342 = vmatpush1.msra.mxu0 0.0
      %2343 = vmatprep.subr.mxu0 0.0
      %2344 = vmatpush1.msra.mxu0 0.0
      %2345 = vmatprep.subr.mxu0 0.0
      %2346 = vmatpush1.msra.mxu0 0.0
      %2347 = vmatprep.subr.mxu0 0.0
      %2348 = vmatpush1.msra.mxu0 0.0
      %2349 = vmatprep.subr.mxu0 0.0
      %2350 = vmatpush1.msra.mxu0 0.0
      %2351 = vmatprep.subr.mxu0 0.0
      %2352 = vmatpush1.msra.mxu0 0.0
      %2353 = vmatprep.subr.mxu0 0.0
      %2354 = vmatpush1.msra.mxu0 0.0
      %2355 = vmatprep.subr.mxu0 0.0
      %2356 = vmatpush1.msra.mxu0 0.0
      %2357 = vmatprep.subr.mxu0 0.0
      %2358 = vmatpush1.msra.mxu0 0.0
      %2359 = vmatprep.subr.mxu0 0.0
      %2360 = vmatpush1.msra.mxu0 0.0
      %2361 = vmatprep.subr.mxu0 0.0
      %2362 = vmatpush1.msra.mxu0 0.0
      %2363 = vmatprep.subr.mxu0 0.0
      %2364 = vmatpush1.msra.mxu0 0.0
      %2365 = vmatprep.subr.mxu0 0.0
      %2366 = vmatpush1.msra.mxu0 0.0
      %2367 = vmatprep.subr.mxu0 0.0
      %2368 = vmatpush1.msra.mxu0 0.0
      %2369 = vmatprep.subr.mxu0 0.0
      %2370 = vmatpush1.msra.mxu0 0.0
      %2371 = vmatprep.subr.mxu0 0.0
      %2372 = vmatpush1.msra.mxu0 0.0
      %2373 = vmatprep.subr.mxu0 0.0
      %2374 = vmatpush1.msra.mxu0 0.0
      %2375 = vmatprep.subr.mxu0 0.0
      %2376 = vmatpush1.msra.mxu0 0.0
      %2377 = vmatprep.subr.mxu0 0.0
      %2378 = vmatpush1.msra.mxu0 0.0
      %2379 = vmatprep.mubr.f32.mxu0 0.0
      %2380 = vmatmul.mubr.f32.gmra.mrb[0].mxu0 %v1748
      %v2381 = vpop.f32.mrb[0].mxu0
      %v2382 = vadd.f32 %v2313, %v2381
      %v2383 = vpop.f32.mrb[0].mxu0
      %2384 = vmatprep.mubr.f32.mxu0 0.0
      %2385 = vmatmul.mubr.f32.gmra.mrb[0].mxu0 %v1751
      %v2386 = vpop.f32.mrb[0].mxu0
      %v2387 = vadd.f32 %v2313, %v2386
      %v2388 = vpop.f32.mrb[0].mxu0
      %2389 = vmatprep.mubr.f32.mxu0 0.0
      %2390 = vmatmul.mubr.f32.gmra.mrb[0].mxu0 %v1754
      %v2391 = vpop.f32.mrb[0].mxu0
      %v2392 = vadd.f32 %v2313, %v2391
      %v2393 = vpop.f32.mrb[0].mxu0
      %2394 = vmatprep.mubr.f32.mxu0 0.0
      %2395 = vmatmul.mubr.f32.gmra.mrb[0].mxu0 %v1757
      %v2396 = vpop.f32.mrb[0].mxu0
      %v2397 = vadd.f32 %v2313, %v2396
      %v2398 = vpop.f32.mrb[0].mxu0
      %2399 = vmatprep.mubr.f32.mxu0 0.0
      %2400 = vmatmul.mubr.f32.gmra.mrb[0].mxu0 %v1760
      %v2401 = vpop.f32.mrb[0].mxu0
      %v2402 = vadd.f32 %v2313, %v2401
      %v2403 = vpop.f32.mrb[0].mxu0
      %2404 = vmatprep.mubr.f32.mxu0 0.0
      %2405 = vmatmul.mubr.f32.gmra.mrb[0].mxu0 %v1763
      %v2406 = vpop.f32.mrb[0].mxu0
      %v2407 = vadd.f32 %v2313, %v2406
      %v2408 = vpop.f32.mrb[0].mxu0
      %2409 = vmatprep.mubr.f32.mxu0 0.0
      %2410 = vmatmul.mubr.f32.gmra.mrb[0].mxu0 %v1766
      %v2411 = vpop.f32.mrb[0].mxu0
      %v2412 = vadd.f32 %v2313, %v2411
      %v2413 = vpop.f32.mrb[0].mxu0
      %2414 = vmatprep.mubr.f32.mxu0 0.0
      %2415 = vmatmul.mubr.f32.gmra.mrb[0].mxu0 %v1769
      %v2416 = vpop.f32.mrb[0].mxu0
      %v2417 = vadd.f32 %v2313, %v2416
      %v2418 = vpop.f32.mrb[0].mxu0
      %2419 = vmatprep.mubr.f32.mxu0 0.0
      %2420 = vmatmul.mubr.f32.gmra.mrb[0].mxu0 %v1772
      %v2421 = vpop.f32.mrb[0].mxu0
      %v2422 = vadd.f32 %v2313, %v2421
      %v2423 = vpop.f32.mrb[0].mxu0
      %2424 = vmatprep.mubr.f32.mxu0 0.0
      %2425 = vmatmul.mubr.f32.gmra.mrb[0].mxu0 %v1775
      %v2426 = vpop.f32.mrb[0].mxu0
      %v2427 = vadd.f32 %v2313, %v2426
      %v2428 = vpop.f32.mrb[0].mxu0
      %2429 = vmatprep.mubr.f32.mxu0 0.0
      %2430 = vmatmul.mubr.f32.gmra.mrb[0].mxu0 %v1778
      %v2431 = vpop.f32.mrb[0].mxu0
      %v2432 = vadd.f32 %v2313, %v2431
      %v2433 = vpop.f32.mrb[0].mxu0
      %2434 = vmatprep.mubr.f32.mxu0 0.0
      %2435 = vmatmul.mubr.f32.gmra.mrb[0].mxu0 %v1781
      %v2436 = vpop.f32.mrb[0].mxu0
      %v2437 = vadd.f32 %v2313, %v2436
      %v2438 = vpop.f32.mrb[0].mxu0
      %2439 = vmatprep.mubr.f32.mxu0 0.0
      %2440 = vmatmul.mubr.f32.gmra.mrb[0].mxu0 %v1784
      %v2441 = vpop.f32.mrb[0].mxu0
      %v2442 = vadd.f32 %v2313, %v2441
      %v2443 = vpop.f32.mrb[0].mxu0
      %2444 = vmatprep.mubr.f32.mxu0 0.0
      %2445 = vmatmul.mubr.f32.gmra.mrb[0].mxu0 %v1787
      %v2446 = vpop.f32.mrb[0].mxu0
      %v2447 = vadd.f32 %v2313, %v2446
      %v2448 = vpop.f32.mrb[0].mxu0
      %2449 = vmatprep.mubr.f32.mxu0 0.0
      %2450 = vmatmul.mubr.f32.gmra.mrb[0].mxu0 %v1790
      %v2451 = vpop.f32.mrb[0].mxu0
      %v2452 = vadd.f32 %v2313, %v2451
      %v2453 = vpop.f32.mrb[0].mxu0
      %2454 = vmatprep.mubr.f32.mxu0 0.0
      %2455 = vmatmul.mubr.f32.gmra.mrb[0].mxu0 %v1793
      %v2456 = vpop.f32.mrb[0].mxu0
      %v2457 = vadd.f32 %v2313, %v2456
      %v2458 = vpop.f32.mrb[0].mxu0
      %2459 = vmatprep.mubr.f32.mxu0 0.0
      %2460 = vmatmul.mubr.f32.gmra.mrb[0].mxu0 %v1796
      %v2461 = vpop.f32.mrb[0].mxu0
      %v2462 = vadd.f32 %v2313, %v2461
      %v2463 = vpop.f32.mrb[0].mxu0
      %2464 = vmatprep.mubr.f32.mxu0 0.0
      %2465 = vmatmul.mubr.f32.gmra.mrb[0].mxu0 %v1799
      %v2466 = vpop.f32.mrb[0].mxu0
      %v2467 = vadd.f32 %v2313, %v2466
      %v2468 = vpop.f32.mrb[0].mxu0
      %2469 = vmatprep.mubr.f32.mxu0 0.0
      %2470 = vmatmul.mubr.f32.gmra.mrb[0].mxu0 %v1802
      %v2471 = vpop.f32.mrb[0].mxu0
      %v2472 = vadd.f32 %v2313, %v2471
      %v2473 = vpop.f32.mrb[0].mxu0
      %2474 = vmatprep.mubr.f32.mxu0 0.0
      %2475 = vmatmul.mubr.f32.gmra.mrb[0].mxu0 %v1805
      %v2476 = vpop.f32.mrb[0].mxu0
      %v2477 = vadd.f32 %v2313, %v2476
      %v2478 = vpop.f32.mrb[0].mxu0
      %2479 = vmatprep.mubr.f32.mxu0 0.0
      %2480 = vmatmul.mubr.f32.gmra.mrb[0].mxu0 %v1808
      %v2481 = vpop.f32.mrb[0].mxu0
      %v2482 = vadd.f32 %v2313, %v2481
      %v2483 = vpop.f32.mrb[0].mxu0
      %2484 = vmatprep.mubr.f32.mxu0 0.0
      %2485 = vmatmul.mubr.f32.gmra.mrb[0].mxu0 %v1811
      %v2486 = vpop.f32.mrb[0].mxu0
      %v2487 = vadd.f32 %v2313, %v2486
      %v2488 = vpop.f32.mrb[0].mxu0
      %2489 = vmatprep.mubr.f32.mxu0 0.0
      %2490 = vmatmul.mubr.f32.gmra.mrb[0].mxu0 %v1814
      %v2491 = vpop.f32.mrb[0].mxu0
      %v2492 = vadd.f32 %v2313, %v2491
      %v2493 = vpop.f32.mrb[0].mxu0
      %2494 = vmatprep.mubr.f32.mxu0 0.0
      %2495 = vmatmul.mubr.f32.gmra.mrb[0].mxu0 %v1817
      %v2496 = vpop.f32.mrb[0].mxu0
      %v2497 = vadd.f32 %v2313, %v2496
      %v2498 = vpop.f32.mrb[0].mxu0
      %2499 = vmatprep.mubr.f32.mxu0 0.0
      %2500 = vmatmul.mubr.f32.gmra.mrb[0].mxu0 %v1820
      %v2501 = vpop.f32.mrb[0].mxu0
      %v2502 = vadd.f32 %v2313, %v2501
      %v2503 = vpop.f32.mrb[0].mxu0
      %2504 = vmatprep.mubr.f32.mxu0 0.0
      %2505 = vmatmul.mubr.f32.gmra.mrb[0].mxu0 %v1823
      %v2506 = vpop.f32.mrb[0].mxu0
      %v2507 = vadd.f32 %v2313, %v2506
      %v2508 = vpop.f32.mrb[0].mxu0
      %2509 = vmatprep.mubr.f32.mxu0 0.0
      %2510 = vmatmul.mubr.f32.gmra.mrb[0].mxu0 %v1826
      %v2511 = vpop.f32.mrb[0].mxu0
      %v2512 = vadd.f32 %v2313, %v2511
      %v2513 = vpop.f32.mrb[0].mxu0
      %2514 = vmatprep.mubr.f32.mxu0 0.0
      %2515 = vmatmul.mubr.f32.gmra.mrb[0].mxu0 %v1829
      %v2516 = vpop.f32.mrb[0].mxu0
      %v2517 = vadd.f32 %v2313, %v2516
      %v2518 = vpop.f32.mrb[0].mxu0
      %2519 = vmatprep.mubr.f32.mxu0 0.0
      %2520 = vmatmul.mubr.f32.gmra.mrb[0].mxu0 %v1832
      %v2521 = vpop.f32.mrb[0].mxu0
      %v2522 = vadd.f32 %v2313, %v2521
      %v2523 = vpop.f32.mrb[0].mxu0
      %2524 = vmatprep.mubr.f32.mxu0 0.0
      %2525 = vmatmul.mubr.f32.gmra.mrb[0].mxu0 %v1835
      %v2526 = vpop.f32.mrb[0].mxu0
      %v2527 = vadd.f32 %v2313, %v2526
      %v2528 = vpop.f32.mrb[0].mxu0
      %2529 = vmatprep.mubr.f32.mxu0 0.0
      %2530 = vmatmul.mubr.f32.gmra.mrb[0].mxu0 %v1838
      %v2531 = vpop.f32.mrb[0].mxu0
      %v2532 = vadd.f32 %v2313, %v2531
      %v2533 = vpop.f32.mrb[0].mxu0
      %2534 = vmatprep.mubr.f32.mxu0 0.0
      %2535 = vmatmul.mubr.f32.gmra.mrb[0].mxu0 %v1841
      %v2536 = vpop.f32.mrb[0].mxu0
      %v2537 = vadd.f32 %v2313, %v2536
      %v2538 = vpop.f32.mrb[0].mxu0
      %2539 = vdwg.mxu0
      %v2540 = vld [vmem:[%s11] sm:$0xff]
      %v2541 = vld [vmem:[%s11 + $0x8] sm:$0xff]
      %v2542 = vld [vmem:[%s11 + $0x10] sm:$0xff]
      %v2543 = vld [vmem:[%s11 + $0x18] sm:$0xff]
      %v2544 = vld [vmem:[%s11 + $0x20] sm:$0xff]
      %v2545 = vld [vmem:[%s11 + $0x28] sm:$0xff]
      %v2546 = vld [vmem:[%s11 + $0x30] sm:$0xff]
      %v2547 = vld [vmem:[%s11 + $0x38] sm:$0xff]
      %v2548 = vld [vmem:[%s11 + $0x40] sm:$0xff]
      %v2549 = vld [vmem:[%s11 + $0x48] sm:$0xff]
      %v2550 = vld [vmem:[%s11 + $0x50] sm:$0xff]
      %v2551 = vld [vmem:[%s11 + $0x58] sm:$0xff]
      %v2552 = vld [vmem:[%s11 + $0x60] sm:$0xff]
      %v2553 = vld [vmem:[%s11 + $0x68] sm:$0xff]
      %v2554 = vld [vmem:[%s11 + $0x70] sm:$0xff]
      %v2555 = vld [vmem:[%s11 + $0x78] sm:$0xff]
      %v2556 = vld [vmem:[%s11 + $0x80] sm:$0xff]
      %v2557 = vld [vmem:[%s11 + $0x88] sm:$0xff]
      %v2558 = vld [vmem:[%s11 + $0x90] sm:$0xff]
      %v2559 = vld [vmem:[%s11 + $0x98] sm:$0xff]
      %v2560 = vld [vmem:[%s11 + $0xa0] sm:$0xff]
      %v2561 = vld [vmem:[%s11 + $0xa8] sm:$0xff]
      %v2562 = vld [vmem:[%s11 + $0xb0] sm:$0xff]
      %v2563 = vld [vmem:[%s11 + $0xb8] sm:$0xff]
      %v2564 = vld [vmem:[%s11 + $0xc0] sm:$0xff]
      %v2565 = vld [vmem:[%s11 + $0xc8] sm:$0xff]
      %v2566 = vld [vmem:[%s11 + $0xd0] sm:$0xff]
      %v2567 = vld [vmem:[%s11 + $0xd8] sm:$0xff]
      %v2568 = vld [vmem:[%s11 + $0xe0] sm:$0xff]
      %v2569 = vld [vmem:[%s11 + $0xe8] sm:$0xff]
      %v2570 = vld [vmem:[%s11 + $0xf0] sm:$0xff]
      %v2571 = vld [vmem:[%s11 + $0xf8] sm:$0xff]
      %v2572 = vld [vmem:[%s11 + $0x100] sm:$0xff]
      %v2573 = vld [vmem:[%s11 + $0x108] sm:$0xff]
      %v2574 = vld [vmem:[%s11 + $0x110] sm:$0xff]
      %v2575 = vld [vmem:[%s11 + $0x118] sm:$0xff]
      %v2576 = vld [vmem:[%s11 + $0x120] sm:$0xff]
      %v2577 = vld [vmem:[%s11 + $0x128] sm:$0xff]
      %v2578 = vld [vmem:[%s11 + $0x130] sm:$0xff]
      %v2579 = vld [vmem:[%s11 + $0x138] sm:$0xff]
      %v2580 = vld [vmem:[%s11 + $0x140] sm:$0xff]
      %v2581 = vld [vmem:[%s11 + $0x148] sm:$0xff]
      %v2582 = vld [vmem:[%s11 + $0x150] sm:$0xff]
      %v2583 = vld [vmem:[%s11 + $0x158] sm:$0xff]
      %v2584 = vld [vmem:[%s11 + $0x160] sm:$0xff]
      %v2585 = vld [vmem:[%s11 + $0x168] sm:$0xff]
      %v2586 = vld [vmem:[%s11 + $0x170] sm:$0xff]
      %v2587 = vld [vmem:[%s11 + $0x178] sm:$0xff]
      %v2588 = vld [vmem:[%s11 + $0x180] sm:$0xff]
      %v2589 = vld [vmem:[%s11 + $0x188] sm:$0xff]
      %v2590 = vld [vmem:[%s11 + $0x190] sm:$0xff]
      %v2591 = vld [vmem:[%s11 + $0x198] sm:$0xff]
      %v2592 = vld [vmem:[%s11 + $0x1a0] sm:$0xff]
      %v2593 = vld [vmem:[%s11 + $0x1a8] sm:$0xff]
      %v2594 = vld [vmem:[%s11 + $0x1b0] sm:$0xff]
      %v2595 = vld [vmem:[%s11 + $0x1b8] sm:$0xff]
      %v2596 = vld [vmem:[%s11 + $0x1c0] sm:$0xff]
      %v2597 = vld [vmem:[%s11 + $0x1c8] sm:$0xff]
      %v2598 = vld [vmem:[%s11 + $0x1d0] sm:$0xff]
      %v2599 = vld [vmem:[%s11 + $0x1d8] sm:$0xff]
      %v2600 = vld [vmem:[%s11 + $0x1e0] sm:$0xff]
      %v2601 = vld [vmem:[%s11 + $0x1e8] sm:$0xff]
      %v2602 = vld [vmem:[%s11 + $0x1f0] sm:$0xff]
      %v2603 = vld [vmem:[%s11 + $0x1f8] sm:$0xff]
      %v2604 = vld [vmem:[%s12] sm:$0xff]
      %v2605 = vld [vmem:[%s12 + $0x8] sm:$0xff]
      %v2606 = vld [vmem:[%s12 + $0x10] sm:$0xff]
      %v2607 = vld [vmem:[%s12 + $0x18] sm:$0xff]
      %v2608 = vld [vmem:[%s12 + $0x20] sm:$0xff]
      %v2609 = vld [vmem:[%s12 + $0x28] sm:$0xff]
      %v2610 = vld [vmem:[%s12 + $0x30] sm:$0xff]
      %v2611 = vld [vmem:[%s12 + $0x38] sm:$0xff]
      %v2612 = vld [vmem:[%s12 + $0x40] sm:$0xff]
      %v2613 = vld [vmem:[%s12 + $0x48] sm:$0xff]
      %v2614 = vld [vmem:[%s12 + $0x50] sm:$0xff]
      %v2615 = vld [vmem:[%s12 + $0x58] sm:$0xff]
      %v2616 = vld [vmem:[%s12 + $0x60] sm:$0xff]
      %v2617 = vld [vmem:[%s12 + $0x68] sm:$0xff]
      %v2618 = vld [vmem:[%s12 + $0x70] sm:$0xff]
      %v2619 = vld [vmem:[%s12 + $0x78] sm:$0xff]
      %v2620 = vld [vmem:[%s12 + $0x80] sm:$0xff]
      %v2621 = vld [vmem:[%s12 + $0x88] sm:$0xff]
      %v2622 = vld [vmem:[%s12 + $0x90] sm:$0xff]
      %v2623 = vld [vmem:[%s12 + $0x98] sm:$0xff]
      %v2624 = vld [vmem:[%s12 + $0xa0] sm:$0xff]
      %v2625 = vld [vmem:[%s12 + $0xa8] sm:$0xff]
      %v2626 = vld [vmem:[%s12 + $0xb0] sm:$0xff]
      %v2627 = vld [vmem:[%s12 + $0xb8] sm:$0xff]
      %v2628 = vld [vmem:[%s12 + $0xc0] sm:$0xff]
      %v2629 = vld [vmem:[%s12 + $0xc8] sm:$0xff]
      %v2630 = vld [vmem:[%s12 + $0xd0] sm:$0xff]
      %v2631 = vld [vmem:[%s12 + $0xd8] sm:$0xff]
      %v2632 = vld [vmem:[%s12 + $0xe0] sm:$0xff]
      %v2633 = vld [vmem:[%s12 + $0xe8] sm:$0xff]
      %v2634 = vld [vmem:[%s12 + $0xf0] sm:$0xff]
      %v2635 = vld [vmem:[%s12 + $0xf8] sm:$0xff]
      %2636 = vmatprep.subr.mxu0 0.0
      %2637 = vmatpush1.msra.mxu0 %v2146
      %2638 = vmatprep.subr.mxu0 0.0
      %2639 = vmatpush1.msra.mxu0 %v2151
      %2640 = vmatprep.subr.mxu0 0.0
      %2641 = vmatpush1.msra.mxu0 %v2156
      %2642 = vmatprep.subr.mxu0 0.0
      %2643 = vmatpush1.msra.mxu0 %v2161
      %2644 = vmatprep.subr.mxu0 0.0
      %2645 = vmatpush1.msra.mxu0 %v2166
      %2646 = vmatprep.subr.mxu0 0.0
      %2647 = vmatpush1.msra.mxu0 %v2171
      %2648 = vmatprep.subr.mxu0 0.0
      %2649 = vmatpush1.msra.mxu0 %v2176
      %2650 = vmatprep.subr.mxu0 0.0
      %2651 = vmatpush1.msra.mxu0 %v2181
      %2652 = vmatprep.subr.mxu0 0.0
      %2653 = vmatpush1.msra.mxu0 %v2186
      %2654 = vmatprep.subr.mxu0 0.0
      %2655 = vmatpush1.msra.mxu0 %v2191
      %2656 = vmatprep.subr.mxu0 0.0
      %2657 = vmatpush1.msra.mxu0 %v2196
      %2658 = vmatprep.subr.mxu0 0.0
      %2659 = vmatpush1.msra.mxu0 %v2201
      %2660 = vmatprep.subr.mxu0 0.0
      %2661 = vmatpush1.msra.mxu0 %v2206
      %2662 = vmatprep.subr.mxu0 0.0
      %2663 = vmatpush1.msra.mxu0 %v2211
      %2664 = vmatprep.subr.mxu0 0.0
      %2665 = vmatpush1.msra.mxu0 %v2216
      %2666 = vmatprep.subr.mxu0 0.0
      %2667 = vmatpush1.msra.mxu0 %v2221
      %2668 = vmatprep.subr.mxu0 0.0
      %2669 = vmatpush1.msra.mxu0 %v2226
      %2670 = vmatprep.subr.mxu0 0.0
      %2671 = vmatpush1.msra.mxu0 %v2231
      %2672 = vmatprep.subr.mxu0 0.0
      %2673 = vmatpush1.msra.mxu0 %v2236
      %2674 = vmatprep.subr.mxu0 0.0
      %2675 = vmatpush1.msra.mxu0 %v2241
      %2676 = vmatprep.subr.mxu0 0.0
      %2677 = vmatpush1.msra.mxu0 %v2246
      %2678 = vmatprep.subr.mxu0 0.0
      %2679 = vmatpush1.msra.mxu0 %v2251
      %2680 = vmatprep.subr.mxu0 0.0
      %2681 = vmatpush1.msra.mxu0 %v2256
      %2682 = vmatprep.subr.mxu0 0.0
      %2683 = vmatpush1.msra.mxu0 %v2261
      %2684 = vmatprep.subr.mxu0 0.0
      %2685 = vmatpush1.msra.mxu0 %v2266
      %2686 = vmatprep.subr.mxu0 0.0
      %2687 = vmatpush1.msra.mxu0 %v2271
      %2688 = vmatprep.subr.mxu0 0.0
      %2689 = vmatpush1.msra.mxu0 %v2276
      %2690 = vmatprep.subr.mxu0 0.0
      %2691 = vmatpush1.msra.mxu0 %v2281
      %2692 = vmatprep.subr.mxu0 0.0
      %2693 = vmatpush1.msra.mxu0 %v2286
      %2694 = vmatprep.subr.mxu0 0.0
      %2695 = vmatpush1.msra.mxu0 %v2291
      %2696 = vmatprep.subr.mxu0 0.0
      %2697 = vmatpush1.msra.mxu0 %v2296
      %2698 = vmatprep.subr.mxu0 0.0
      %2699 = vmatpush1.msra.mxu0 %v2301
      %2700 = vmatprep.mubr.f32.mxu0 %v2541
      %2701 = vmatmul.mubr.f32.gmra.mrb[0].mxu0 %v2540
      %v2702 = vpop.f32.mrb[0].mxu0
      %v2703 = vadd.f32 0.0, %v2702
      %v2704 = vpop.f32.mrb[0].mxu0
      %2705 = vmatprep.mubr.f32.mxu0 %v2543
      %2706 = vmatmul.mubr.f32.gmra.mrb[0].mxu0 %v2542
      %v2707 = vpop.f32.mrb[0].mxu0
      %v2708 = vadd.f32 0.0, %v2707
      %v2709 = vpop.f32.mrb[0].mxu0
      %2710 = vmatprep.mubr.f32.mxu0 %v2545
      %2711 = vmatmul.mubr.f32.gmra.mrb[0].mxu0 %v2544
      %v2712 = vpop.f32.mrb[0].mxu0
      %v2713 = vadd.f32 0.0, %v2712
      %v2714 = vpop.f32.mrb[0].mxu0
      %2715 = vmatprep.mubr.f32.mxu0 %v2547
      %2716 = vmatmul.mubr.f32.gmra.mrb[0].mxu0 %v2546
      %v2717 = vpop.f32.mrb[0].mxu0
      %v2718 = vadd.f32 0.0, %v2717
      %v2719 = vpop.f32.mrb[0].mxu0
      %2720 = vmatprep.mubr.f32.mxu0 %v2549
      %2721 = vmatmul.mubr.f32.gmra.mrb[0].mxu0 %v2548
      %v2722 = vpop.f32.mrb[0].mxu0
      %v2723 = vadd.f32 0.0, %v2722
      %v2724 = vpop.f32.mrb[0].mxu0
      %2725 = vmatprep.mubr.f32.mxu0 %v2551
      %2726 = vmatmul.mubr.f32.gmra.mrb[0].mxu0 %v2550
      %v2727 = vpop.f32.mrb[0].mxu0
      %v2728 = vadd.f32 0.0, %v2727
      %v2729 = vpop.f32.mrb[0].mxu0
      %2730 = vmatprep.mubr.f32.mxu0 %v2553
      %2731 = vmatmul.mubr.f32.gmra.mrb[0].mxu0 %v2552
      %v2732 = vpop.f32.mrb[0].mxu0
      %v2733 = vadd.f32 0.0, %v2732
      %v2734 = vpop.f32.mrb[0].mxu0
      %2735 = vmatprep.mubr.f32.mxu0 %v2555
      %2736 = vmatmul.mubr.f32.gmra.mrb[0].mxu0 %v2554
      %v2737 = vpop.f32.mrb[0].mxu0
      %v2738 = vadd.f32 0.0, %v2737
      %v2739 = vpop.f32.mrb[0].mxu0
      %2740 = vmatprep.mubr.f32.mxu0 %v2557
      %2741 = vmatmul.mubr.f32.gmra.mrb[0].mxu0 %v2556
      %v2742 = vpop.f32.mrb[0].mxu0
      %v2743 = vadd.f32 0.0, %v2742
      %v2744 = vpop.f32.mrb[0].mxu0
      %2745 = vmatprep.mubr.f32.mxu0 %v2559
      %2746 = vmatmul.mubr.f32.gmra.mrb[0].mxu0 %v2558
      %v2747 = vpop.f32.mrb[0].mxu0
      %v2748 = vadd.f32 0.0, %v2747
      %v2749 = vpop.f32.mrb[0].mxu0
      %2750 = vmatprep.mubr.f32.mxu0 %v2561
      %2751 = vmatmul.mubr.f32.gmra.mrb[0].mxu0 %v2560
      %v2752 = vpop.f32.mrb[0].mxu0
      %v2753 = vadd.f32 0.0, %v2752
      %v2754 = vpop.f32.mrb[0].mxu0
      %2755 = vmatprep.mubr.f32.mxu0 %v2563
      %2756 = vmatmul.mubr.f32.gmra.mrb[0].mxu0 %v2562
      %v2757 = vpop.f32.mrb[0].mxu0
      %v2758 = vadd.f32 0.0, %v2757
      %v2759 = vpop.f32.mrb[0].mxu0
      %2760 = vmatprep.mubr.f32.mxu0 %v2565
      %2761 = vmatmul.mubr.f32.gmra.mrb[0].mxu0 %v2564
      %v2762 = vpop.f32.mrb[0].mxu0
      %v2763 = vadd.f32 0.0, %v2762
      %v2764 = vpop.f32.mrb[0].mxu0
      %2765 = vmatprep.mubr.f32.mxu0 %v2567
      %2766 = vmatmul.mubr.f32.gmra.mrb[0].mxu0 %v2566
      %v2767 = vpop.f32.mrb[0].mxu0
      %v2768 = vadd.f32 0.0, %v2767
      %v2769 = vpop.f32.mrb[0].mxu0
      %2770 = vmatprep.mubr.f32.mxu0 %v2569
      %2771 = vmatmul.mubr.f32.gmra.mrb[0].mxu0 %v2568
      %v2772 = vpop.f32.mrb[0].mxu0
      %v2773 = vadd.f32 0.0, %v2772
      %v2774 = vpop.f32.mrb[0].mxu0
      %2775 = vmatprep.mubr.f32.mxu0 %v2571
      %2776 = vmatmul.mubr.f32.gmra.mrb[0].mxu0 %v2570
      %v2777 = vpop.f32.mrb[0].mxu0
      %v2778 = vadd.f32 0.0, %v2777
      %v2779 = vpop.f32.mrb[0].mxu0
      %2780 = vmatprep.mubr.f32.mxu0 %v2573
      %2781 = vmatmul.mubr.f32.gmra.mrb[0].mxu0 %v2572
      %v2782 = vpop.f32.mrb[0].mxu0
      %v2783 = vadd.f32 0.0, %v2782
      %v2784 = vpop.f32.mrb[0].mxu0
      %2785 = vmatprep.mubr.f32.mxu0 %v2575
      %2786 = vmatmul.mubr.f32.gmra.mrb[0].mxu0 %v2574
      %v2787 = vpop.f32.mrb[0].mxu0
      %v2788 = vadd.f32 0.0, %v2787
      %v2789 = vpop.f32.mrb[0].mxu0
      %2790 = vmatprep.mubr.f32.mxu0 %v2577
      %2791 = vmatmul.mubr.f32.gmra.mrb[0].mxu0 %v2576
      %v2792 = vpop.f32.mrb[0].mxu0
      %v2793 = vadd.f32 0.0, %v2792
      %v2794 = vpop.f32.mrb[0].mxu0
      %2795 = vmatprep.mubr.f32.mxu0 %v2579
      %2796 = vmatmul.mubr.f32.gmra.mrb[0].mxu0 %v2578
      %v2797 = vpop.f32.mrb[0].mxu0
      %v2798 = vadd.f32 0.0, %v2797
      %v2799 = vpop.f32.mrb[0].mxu0
      %2800 = vmatprep.mubr.f32.mxu0 %v2581
      %2801 = vmatmul.mubr.f32.gmra.mrb[0].mxu0 %v2580
      %v2802 = vpop.f32.mrb[0].mxu0
      %v2803 = vadd.f32 0.0, %v2802
      %v2804 = vpop.f32.mrb[0].mxu0
      %2805 = vmatprep.mubr.f32.mxu0 %v2583
      %2806 = vmatmul.mubr.f32.gmra.mrb[0].mxu0 %v2582
      %v2807 = vpop.f32.mrb[0].mxu0
      %v2808 = vadd.f32 0.0, %v2807
      %v2809 = vpop.f32.mrb[0].mxu0
      %2810 = vmatprep.mubr.f32.mxu0 %v2585
      %2811 = vmatmul.mubr.f32.gmra.mrb[0].mxu0 %v2584
      %v2812 = vpop.f32.mrb[0].mxu0
      %v2813 = vadd.f32 0.0, %v2812
      %v2814 = vpop.f32.mrb[0].mxu0
      %2815 = vmatprep.mubr.f32.mxu0 %v2587
      %2816 = vmatmul.mubr.f32.gmra.mrb[0].mxu0 %v2586
      %v2817 = vpop.f32.mrb[0].mxu0
      %v2818 = vadd.f32 0.0, %v2817
      %v2819 = vpop.f32.mrb[0].mxu0
      %2820 = vmatprep.mubr.f32.mxu0 %v2589
      %2821 = vmatmul.mubr.f32.gmra.mrb[0].mxu0 %v2588
      %v2822 = vpop.f32.mrb[0].mxu0
      %v2823 = vadd.f32 0.0, %v2822
      %v2824 = vpop.f32.mrb[0].mxu0
      %2825 = vmatprep.mubr.f32.mxu0 %v2591
      %2826 = vmatmul.mubr.f32.gmra.mrb[0].mxu0 %v2590
      %v2827 = vpop.f32.mrb[0].mxu0
      %v2828 = vadd.f32 0.0, %v2827
      %v2829 = vpop.f32.mrb[0].mxu0
      %2830 = vmatprep.mubr.f32.mxu0 %v2593
      %2831 = vmatmul.mubr.f32.gmra.mrb[0].mxu0 %v2592
      %v2832 = vpop.f32.mrb[0].mxu0
      %v2833 = vadd.f32 0.0, %v2832
      %v2834 = vpop.f32.mrb[0].mxu0
      %2835 = vmatprep.mubr.f32.mxu0 %v2595
      %2836 = vmatmul.mubr.f32.gmra.mrb[0].mxu0 %v2594
      %v2837 = vpop.f32.mrb[0].mxu0
      %v2838 = vadd.f32 0.0, %v2837
      %v2839 = vpop.f32.mrb[0].mxu0
      %2840 = vmatprep.mubr.f32.mxu0 %v2597
      %2841 = vmatmul.mubr.f32.gmra.mrb[0].mxu0 %v2596
      %v2842 = vpop.f32.mrb[0].mxu0
      %v2843 = vadd.f32 0.0, %v2842
      %v2844 = vpop.f32.mrb[0].mxu0
      %2845 = vmatprep.mubr.f32.mxu0 %v2599
      %2846 = vmatmul.mubr.f32.gmra.mrb[0].mxu0 %v2598
      %v2847 = vpop.f32.mrb[0].mxu0
      %v2848 = vadd.f32 0.0, %v2847
      %v2849 = vpop.f32.mrb[0].mxu0
      %2850 = vmatprep.mubr.f32.mxu0 %v2601
      %2851 = vmatmul.mubr.f32.gmra.mrb[0].mxu0 %v2600
      %v2852 = vpop.f32.mrb[0].mxu0
      %v2853 = vadd.f32 0.0, %v2852
      %v2854 = vpop.f32.mrb[0].mxu0
      %2855 = vmatprep.mubr.f32.mxu0 %v2603
      %2856 = vmatmul.mubr.f32.gmra.mrb[0].mxu0 %v2602
      %v2857 = vpop.f32.mrb[0].mxu0
      %v2858 = vadd.f32 0.0, %v2857
      %v2859 = vpop.f32.mrb[0].mxu0
      %2860 = vdwg.mxu0
      %v2861 = vmul.f32 %v2703, %v2604
      %v2862 = vmul.f32 %v2708, %v2605
      %v2863 = vmul.f32 %v2713, %v2606
      %v2864 = vmul.f32 %v2718, %v2607
      %v2865 = vmul.f32 %v2723, %v2608
      %v2866 = vmul.f32 %v2728, %v2609
      %v2867 = vmul.f32 %v2733, %v2610
      %v2868 = vmul.f32 %v2738, %v2611
      %v2869 = vmul.f32 %v2743, %v2612
      %v2870 = vmul.f32 %v2748, %v2613
      %v2871 = vmul.f32 %v2753, %v2614
      %v2872 = vmul.f32 %v2758, %v2615
      %v2873 = vmul.f32 %v2763, %v2616
      %v2874 = vmul.f32 %v2768, %v2617
      %v2875 = vmul.f32 %v2773, %v2618
      %v2876 = vmul.f32 %v2778, %v2619
      %v2877 = vmul.f32 %v2783, %v2620
      %v2878 = vmul.f32 %v2788, %v2621
      %v2879 = vmul.f32 %v2793, %v2622
      %v2880 = vmul.f32 %v2798, %v2623
      %v2881 = vmul.f32 %v2803, %v2624
      %v2882 = vmul.f32 %v2808, %v2625
      %v2883 = vmul.f32 %v2813, %v2626
      %v2884 = vmul.f32 %v2818, %v2627
      %v2885 = vmul.f32 %v2823, %v2628
      %v2886 = vmul.f32 %v2828, %v2629
      %v2887 = vmul.f32 %v2833, %v2630
      %v2888 = vmul.f32 %v2838, %v2631
      %v2889 = vmul.f32 %v2843, %v2632
      %v2890 = vmul.f32 %v2848, %v2633
      %v2891 = vmul.f32 %v2853, %v2634
      %v2892 = vmul.f32 %v2858, %v2635
      %2893 = vmatprep.subr.mxu0 0.0
      %2894 = vmatpush1.msra.mxu0 %v2382
      %2895 = vmatprep.subr.mxu0 0.0
      %2896 = vmatpush1.msra.mxu0 %v2387
      %2897 = vmatprep.subr.mxu0 0.0
      %2898 = vmatpush1.msra.mxu0 %v2392
      %2899 = vmatprep.subr.mxu0 0.0
      %2900 = vmatpush1.msra.mxu0 %v2397
      %2901 = vmatprep.subr.mxu0 0.0
      %2902 = vmatpush1.msra.mxu0 %v2402
      %2903 = vmatprep.subr.mxu0 0.0
      %2904 = vmatpush1.msra.mxu0 %v2407
      %2905 = vmatprep.subr.mxu0 0.0
      %2906 = vmatpush1.msra.mxu0 %v2412
      %2907 = vmatprep.subr.mxu0 0.0
      %2908 = vmatpush1.msra.mxu0 %v2417
      %2909 = vmatprep.subr.mxu0 0.0
      %2910 = vmatpush1.msra.mxu0 %v2422
      %2911 = vmatprep.subr.mxu0 0.0
      %2912 = vmatpush1.msra.mxu0 %v2427
      %2913 = vmatprep.subr.mxu0 0.0
      %2914 = vmatpush1.msra.mxu0 %v2432
      %2915 = vmatprep.subr.mxu0 0.0
      %2916 = vmatpush1.msra.mxu0 %v2437
      %2917 = vmatprep.subr.mxu0 0.0
      %2918 = vmatpush1.msra.mxu0 %v2442
      %2919 = vmatprep.subr.mxu0 0.0
      %2920 = vmatpush1.msra.mxu0 %v2447
      %2921 = vmatprep.subr.mxu0 0.0
      %2922 = vmatpush1.msra.mxu0 %v2452
      %2923 = vmatprep.subr.mxu0 0.0
      %2924 = vmatpush1.msra.mxu0 %v2457
      %2925 = vmatprep.subr.mxu0 0.0
      %2926 = vmatpush1.msra.mxu0 %v2462
      %2927 = vmatprep.subr.mxu0 0.0
      %2928 = vmatpush1.msra.mxu0 %v2467
      %2929 = vmatprep.subr.mxu0 0.0
      %2930 = vmatpush1.msra.mxu0 %v2472
      %2931 = vmatprep.subr.mxu0 0.0
      %2932 = vmatpush1.msra.mxu0 %v2477
      %2933 = vmatprep.subr.mxu0 0.0
      %2934 = vmatpush1.msra.mxu0 %v2482
      %2935 = vmatprep.subr.mxu0 0.0
      %2936 = vmatpush1.msra.mxu0 %v2487
      %2937 = vmatprep.subr.mxu0 0.0
      %2938 = vmatpush1.msra.mxu0 %v2492
      %2939 = vmatprep.subr.mxu0 0.0
      %2940 = vmatpush1.msra.mxu0 %v2497
      %2941 = vmatprep.subr.mxu0 0.0
      %2942 = vmatpush1.msra.mxu0 %v2502
      %2943 = vmatprep.subr.mxu0 0.0
      %2944 = vmatpush1.msra.mxu0 %v2507
      %2945 = vmatprep.subr.mxu0 0.0
      %2946 = vmatpush1.msra.mxu0 %v2512
      %2947 = vmatprep.subr.mxu0 0.0
      %2948 = vmatpush1.msra.mxu0 %v2517
      %2949 = vmatprep.subr.mxu0 0.0
      %2950 = vmatpush1.msra.mxu0 %v2522
      %2951 = vmatprep.subr.mxu0 0.0
      %2952 = vmatpush1.msra.mxu0 %v2527
      %2953 = vmatprep.subr.mxu0 0.0
      %2954 = vmatpush1.msra.mxu0 %v2532
      %2955 = vmatprep.subr.mxu0 0.0
      %2956 = vmatpush1.msra.mxu0 %v2537
      %2957 = vmatprep.mubr.f32.mxu0 %v2541
      %2958 = vmatmul.mubr.f32.gmra.mrb[0].mxu0 %v2540
      %v2959 = vpop.f32.mrb[0].mxu0
      %v2960 = vadd.f32 0.0, %v2959
      %v2961 = vpop.f32.mrb[0].mxu0
      %2962 = vmatprep.mubr.f32.mxu0 %v2543
      %2963 = vmatmul.mubr.f32.gmra.mrb[0].mxu0 %v2542
      %v2964 = vpop.f32.mrb[0].mxu0
      %v2965 = vadd.f32 0.0, %v2964
      %v2966 = vpop.f32.mrb[0].mxu0
      %2967 = vmatprep.mubr.f32.mxu0 %v2545
      %2968 = vmatmul.mubr.f32.gmra.mrb[0].mxu0 %v2544
      %v2969 = vpop.f32.mrb[0].mxu0
      %v2970 = vadd.f32 0.0, %v2969
      %v2971 = vpop.f32.mrb[0].mxu0
      %2972 = vmatprep.mubr.f32.mxu0 %v2547
      %2973 = vmatmul.mubr.f32.gmra.mrb[0].mxu0 %v2546
      %v2974 = vpop.f32.mrb[0].mxu0
      %v2975 = vadd.f32 0.0, %v2974
      %v2976 = vpop.f32.mrb[0].mxu0
      %2977 = vmatprep.mubr.f32.mxu0 %v2549
      %2978 = vmatmul.mubr.f32.gmra.mrb[0].mxu0 %v2548
      %v2979 = vpop.f32.mrb[0].mxu0
      %v2980 = vadd.f32 0.0, %v2979
      %v2981 = vpop.f32.mrb[0].mxu0
      %2982 = vmatprep.mubr.f32.mxu0 %v2551
      %2983 = vmatmul.mubr.f32.gmra.mrb[0].mxu0 %v2550
      %v2984 = vpop.f32.mrb[0].mxu0
      %v2985 = vadd.f32 0.0, %v2984
      %v2986 = vpop.f32.mrb[0].mxu0
      %2987 = vmatprep.mubr.f32.mxu0 %v2553
      %2988 = vmatmul.mubr.f32.gmra.mrb[0].mxu0 %v2552
      %v2989 = vpop.f32.mrb[0].mxu0
      %v2990 = vadd.f32 0.0, %v2989
      %v2991 = vpop.f32.mrb[0].mxu0
      %2992 = vmatprep.mubr.f32.mxu0 %v2555
      %2993 = vmatmul.mubr.f32.gmra.mrb[0].mxu0 %v2554
      %v2994 = vpop.f32.mrb[0].mxu0
      %v2995 = vadd.f32 0.0, %v2994
      %v2996 = vpop.f32.mrb[0].mxu0
      %2997 = vmatprep.mubr.f32.mxu0 %v2557
      %2998 = vmatmul.mubr.f32.gmra.mrb[0].mxu0 %v2556
      %v2999 = vpop.f32.mrb[0].mxu0
      %v3000 = vadd.f32 0.0, %v2999
      %v3001 = vpop.f32.mrb[0].mxu0
      %3002 = vmatprep.mubr.f32.mxu0 %v2559
      %3003 = vmatmul.mubr.f32.gmra.mrb[0].mxu0 %v2558
      %v3004 = vpop.f32.mrb[0].mxu0
      %v3005 = vadd.f32 0.0, %v3004
      %v3006 = vpop.f32.mrb[0].mxu0
      %3007 = vmatprep.mubr.f32.mxu0 %v2561
      %3008 = vmatmul.mubr.f32.gmra.mrb[0].mxu0 %v2560
      %v3009 = vpop.f32.mrb[0].mxu0
      %v3010 = vadd.f32 0.0, %v3009
      %v3011 = vpop.f32.mrb[0].mxu0
      %3012 = vmatprep.mubr.f32.mxu0 %v2563
      %3013 = vmatmul.mubr.f32.gmra.mrb[0].mxu0 %v2562
      %v3014 = vpop.f32.mrb[0].mxu0
      %v3015 = vadd.f32 0.0, %v3014
      %v3016 = vpop.f32.mrb[0].mxu0
      %3017 = vmatprep.mubr.f32.mxu0 %v2565
      %3018 = vmatmul.mubr.f32.gmra.mrb[0].mxu0 %v2564
      %v3019 = vpop.f32.mrb[0].mxu0
      %v3020 = vadd.f32 0.0, %v3019
      %v3021 = vpop.f32.mrb[0].mxu0
      %3022 = vmatprep.mubr.f32.mxu0 %v2567
      %3023 = vmatmul.mubr.f32.gmra.mrb[0].mxu0 %v2566
      %v3024 = vpop.f32.mrb[0].mxu0
      %v3025 = vadd.f32 0.0, %v3024
      %v3026 = vpop.f32.mrb[0].mxu0
      %3027 = vmatprep.mubr.f32.mxu0 %v2569
      %3028 = vmatmul.mubr.f32.gmra.mrb[0].mxu0 %v2568
      %v3029 = vpop.f32.mrb[0].mxu0
      %v3030 = vadd.f32 0.0, %v3029
      %v3031 = vpop.f32.mrb[0].mxu0
      %3032 = vmatprep.mubr.f32.mxu0 %v2571
      %3033 = vmatmul.mubr.f32.gmra.mrb[0].mxu0 %v2570
      %v3034 = vpop.f32.mrb[0].mxu0
      %v3035 = vadd.f32 0.0, %v3034
      %v3036 = vpop.f32.mrb[0].mxu0
      %3037 = vmatprep.mubr.f32.mxu0 %v2573
      %3038 = vmatmul.mubr.f32.gmra.mrb[0].mxu0 %v2572
      %v3039 = vpop.f32.mrb[0].mxu0
      %v3040 = vadd.f32 0.0, %v3039
      %v3041 = vpop.f32.mrb[0].mxu0
      %3042 = vmatprep.mubr.f32.mxu0 %v2575
      %3043 = vmatmul.mubr.f32.gmra.mrb[0].mxu0 %v2574
      %v3044 = vpop.f32.mrb[0].mxu0
      %v3045 = vadd.f32 0.0, %v3044
      %v3046 = vpop.f32.mrb[0].mxu0
      %3047 = vmatprep.mubr.f32.mxu0 %v2577
      %3048 = vmatmul.mubr.f32.gmra.mrb[0].mxu0 %v2576
      %v3049 = vpop.f32.mrb[0].mxu0
      %v3050 = vadd.f32 0.0, %v3049
      %v3051 = vpop.f32.mrb[0].mxu0
      %3052 = vmatprep.mubr.f32.mxu0 %v2579
      %3053 = vmatmul.mubr.f32.gmra.mrb[0].mxu0 %v2578
      %v3054 = vpop.f32.mrb[0].mxu0
      %v3055 = vadd.f32 0.0, %v3054
      %v3056 = vpop.f32.mrb[0].mxu0
      %3057 = vmatprep.mubr.f32.mxu0 %v2581
      %3058 = vmatmul.mubr.f32.gmra.mrb[0].mxu0 %v2580
      %v3059 = vpop.f32.mrb[0].mxu0
      %v3060 = vadd.f32 0.0, %v3059
      %v3061 = vpop.f32.mrb[0].mxu0
      %3062 = vmatprep.mubr.f32.mxu0 %v2583
      %3063 = vmatmul.mubr.f32.gmra.mrb[0].mxu0 %v2582
      %v3064 = vpop.f32.mrb[0].mxu0
      %v3065 = vadd.f32 0.0, %v3064
      %v3066 = vpop.f32.mrb[0].mxu0
      %3067 = vmatprep.mubr.f32.mxu0 %v2585
      %3068 = vmatmul.mubr.f32.gmra.mrb[0].mxu0 %v2584
      %v3069 = vpop.f32.mrb[0].mxu0
      %v3070 = vadd.f32 0.0, %v3069
      %v3071 = vpop.f32.mrb[0].mxu0
      %3072 = vmatprep.mubr.f32.mxu0 %v2587
      %3073 = vmatmul.mubr.f32.gmra.mrb[0].mxu0 %v2586
      %v3074 = vpop.f32.mrb[0].mxu0
      %v3075 = vadd.f32 0.0, %v3074
      %v3076 = vpop.f32.mrb[0].mxu0
      %3077 = vmatprep.mubr.f32.mxu0 %v2589
      %3078 = vmatmul.mubr.f32.gmra.mrb[0].mxu0 %v2588
      %v3079 = vpop.f32.mrb[0].mxu0
      %v3080 = vadd.f32 0.0, %v3079
      %v3081 = vpop.f32.mrb[0].mxu0
      %3082 = vmatprep.mubr.f32.mxu0 %v2591
      %3083 = vmatmul.mubr.f32.gmra.mrb[0].mxu0 %v2590
      %v3084 = vpop.f32.mrb[0].mxu0
      %v3085 = vadd.f32 0.0, %v3084
      %v3086 = vpop.f32.mrb[0].mxu0
      %3087 = vmatprep.mubr.f32.mxu0 %v2593
      %3088 = vmatmul.mubr.f32.gmra.mrb[0].mxu0 %v2592
      %v3089 = vpop.f32.mrb[0].mxu0
      %v3090 = vadd.f32 0.0, %v3089
      %v3091 = vpop.f32.mrb[0].mxu0
      %3092 = vmatprep.mubr.f32.mxu0 %v2595
      %3093 = vmatmul.mubr.f32.gmra.mrb[0].mxu0 %v2594
      %v3094 = vpop.f32.mrb[0].mxu0
      %v3095 = vadd.f32 0.0, %v3094
      %v3096 = vpop.f32.mrb[0].mxu0
      %3097 = vmatprep.mubr.f32.mxu0 %v2597
      %3098 = vmatmul.mubr.f32.gmra.mrb[0].mxu0 %v2596
      %v3099 = vpop.f32.mrb[0].mxu0
      %v3100 = vadd.f32 0.0, %v3099
      %v3101 = vpop.f32.mrb[0].mxu0
      %3102 = vmatprep.mubr.f32.mxu0 %v2599
      %3103 = vmatmul.mubr.f32.gmra.mrb[0].mxu0 %v2598
      %v3104 = vpop.f32.mrb[0].mxu0
      %v3105 = vadd.f32 0.0, %v3104
      %v3106 = vpop.f32.mrb[0].mxu0
      %3107 = vmatprep.mubr.f32.mxu0 %v2601
      %3108 = vmatmul.mubr.f32.gmra.mrb[0].mxu0 %v2600
      %v3109 = vpop.f32.mrb[0].mxu0
      %v3110 = vadd.f32 0.0, %v3109
      %v3111 = vpop.f32.mrb[0].mxu0
      %3112 = vmatprep.mubr.f32.mxu0 %v2603
      %3113 = vmatmul.mubr.f32.gmra.mrb[0].mxu0 %v2602
      %v3114 = vpop.f32.mrb[0].mxu0
      %v3115 = vadd.f32 0.0, %v3114
      %v3116 = vpop.f32.mrb[0].mxu0
      %3117 = vdwg.mxu0
      %v3118 = vmul.f32 %v2960, %v2604
      %v3119 = vmul.f32 %v2965, %v2605
      %v3120 = vmul.f32 %v2970, %v2606
      %v3121 = vmul.f32 %v2975, %v2607
      %v3122 = vmul.f32 %v2980, %v2608
      %v3123 = vmul.f32 %v2985, %v2609
      %v3124 = vmul.f32 %v2990, %v2610
      %v3125 = vmul.f32 %v2995, %v2611
      %v3126 = vmul.f32 %v3000, %v2612
      %v3127 = vmul.f32 %v3005, %v2613
      %v3128 = vmul.f32 %v3010, %v2614
      %v3129 = vmul.f32 %v3015, %v2615
      %v3130 = vmul.f32 %v3020, %v2616
      %v3131 = vmul.f32 %v3025, %v2617
      %v3132 = vmul.f32 %v3030, %v2618
      %v3133 = vmul.f32 %v3035, %v2619
      %v3134 = vmul.f32 %v3040, %v2620
      %v3135 = vmul.f32 %v3045, %v2621
      %v3136 = vmul.f32 %v3050, %v2622
      %v3137 = vmul.f32 %v3055, %v2623
      %v3138 = vmul.f32 %v3060, %v2624
      %v3139 = vmul.f32 %v3065, %v2625
      %v3140 = vmul.f32 %v3070, %v2626
      %v3141 = vmul.f32 %v3075, %v2627
      %v3142 = vmul.f32 %v3080, %v2628
      %v3143 = vmul.f32 %v3085, %v2629
      %v3144 = vmul.f32 %v3090, %v2630
      %v3145 = vmul.f32 %v3095, %v2631
      %v3146 = vmul.f32 %v3100, %v2632
      %v3147 = vmul.f32 %v3105, %v2633
      %v3148 = vmul.f32 %v3110, %v2634
      %v3149 = vmul.f32 %v3115, %v2635
      %v3150 = vld [vmem:[%s13] sm:$0xff]
      %v3151 = vld [vmem:[%s13 + $0x8] sm:$0xff]
      %v3152 = vld [vmem:[%s13 + $0x10] sm:$0xff]
      %v3153 = vld [vmem:[%s13 + $0x18] sm:$0xff]
      %v3154 = vld [vmem:[%s13 + $0x20] sm:$0xff]
      %v3155 = vld [vmem:[%s13 + $0x28] sm:$0xff]
      %v3156 = vld [vmem:[%s13 + $0x30] sm:$0xff]
      %v3157 = vld [vmem:[%s13 + $0x38] sm:$0xff]
      %v3158 = vld [vmem:[%s13 + $0x40] sm:$0xff]
      %v3159 = vld [vmem:[%s13 + $0x48] sm:$0xff]
      %v3160 = vld [vmem:[%s13 + $0x50] sm:$0xff]
      %v3161 = vld [vmem:[%s13 + $0x58] sm:$0xff]
      %v3162 = vld [vmem:[%s13 + $0x60] sm:$0xff]
      %v3163 = vld [vmem:[%s13 + $0x68] sm:$0xff]
      %v3164 = vld [vmem:[%s13 + $0x70] sm:$0xff]
      %v3165 = vld [vmem:[%s13 + $0x78] sm:$0xff]
      %v3166 = vld [vmem:[%s13 + $0x80] sm:$0xff]
      %v3167 = vld [vmem:[%s13 + $0x88] sm:$0xff]
      %v3168 = vld [vmem:[%s13 + $0x90] sm:$0xff]
      %v3169 = vld [vmem:[%s13 + $0x98] sm:$0xff]
      %v3170 = vld [vmem:[%s13 + $0xa0] sm:$0xff]
      %v3171 = vld [vmem:[%s13 + $0xa8] sm:$0xff]
      %v3172 = vld [vmem:[%s13 + $0xb0] sm:$0xff]
      %v3173 = vld [vmem:[%s13 + $0xb8] sm:$0xff]
      %v3174 = vld [vmem:[%s13 + $0xc0] sm:$0xff]
      %v3175 = vld [vmem:[%s13 + $0xc8] sm:$0xff]
      %v3176 = vld [vmem:[%s13 + $0xd0] sm:$0xff]
      %v3177 = vld [vmem:[%s13 + $0xd8] sm:$0xff]
      %v3178 = vld [vmem:[%s13 + $0xe0] sm:$0xff]
      %v3179 = vld [vmem:[%s13 + $0xe8] sm:$0xff]
      %v3180 = vld [vmem:[%s13 + $0xf0] sm:$0xff]
      %v3181 = vld [vmem:[%s13 + $0xf8] sm:$0xff]
      %v3182 = vld [vmem:[%s13 + $0x100] sm:$0xff]
      %v3183 = vld [vmem:[%s13 + $0x108] sm:$0xff]
      %v3184 = vld [vmem:[%s13 + $0x110] sm:$0xff]
      %v3185 = vld [vmem:[%s13 + $0x118] sm:$0xff]
      %v3186 = vld [vmem:[%s13 + $0x120] sm:$0xff]
      %v3187 = vld [vmem:[%s13 + $0x128] sm:$0xff]
      %v3188 = vld [vmem:[%s13 + $0x130] sm:$0xff]
      %v3189 = vld [vmem:[%s13 + $0x138] sm:$0xff]
      %v3190 = vld [vmem:[%s13 + $0x140] sm:$0xff]
      %v3191 = vld [vmem:[%s13 + $0x148] sm:$0xff]
      %v3192 = vld [vmem:[%s13 + $0x150] sm:$0xff]
      %v3193 = vld [vmem:[%s13 + $0x158] sm:$0xff]
      %v3194 = vld [vmem:[%s13 + $0x160] sm:$0xff]
      %v3195 = vld [vmem:[%s13 + $0x168] sm:$0xff]
      %v3196 = vld [vmem:[%s13 + $0x170] sm:$0xff]
      %v3197 = vld [vmem:[%s13 + $0x178] sm:$0xff]
      %v3198 = vld [vmem:[%s13 + $0x180] sm:$0xff]
      %v3199 = vld [vmem:[%s13 + $0x188] sm:$0xff]
      %v3200 = vld [vmem:[%s13 + $0x190] sm:$0xff]
      %v3201 = vld [vmem:[%s13 + $0x198] sm:$0xff]
      %v3202 = vld [vmem:[%s13 + $0x1a0] sm:$0xff]
      %v3203 = vld [vmem:[%s13 + $0x1a8] sm:$0xff]
      %v3204 = vld [vmem:[%s13 + $0x1b0] sm:$0xff]
      %v3205 = vld [vmem:[%s13 + $0x1b8] sm:$0xff]
      %v3206 = vld [vmem:[%s13 + $0x1c0] sm:$0xff]
      %v3207 = vld [vmem:[%s13 + $0x1c8] sm:$0xff]
      %v3208 = vld [vmem:[%s13 + $0x1d0] sm:$0xff]
      %v3209 = vld [vmem:[%s13 + $0x1d8] sm:$0xff]
      %v3210 = vld [vmem:[%s13 + $0x1e0] sm:$0xff]
      %v3211 = vld [vmem:[%s13 + $0x1e8] sm:$0xff]
      %v3212 = vld [vmem:[%s13 + $0x1f0] sm:$0xff]
      %v3213 = vld [vmem:[%s13 + $0x1f8] sm:$0xff]
      %v3215 = vsel %vm1746, %v1910, 0
      %v3218 = vsel %vm1746, %v1915, 0
      %v3221 = vsel %vm1746, %v1920, 0
      %v3224 = vsel %vm1746, %v1925, 0
      %v3227 = vsel %vm1746, %v1930, 0
      %v3230 = vsel %vm1746, %v1935, 0
      %v3233 = vsel %vm1746, %v1940, 0
      %v3236 = vsel %vm1746, %v1945, 0
      %v3239 = vsel %vm1746, %v1950, 0
      %v3242 = vsel %vm1746, %v1955, 0
      %v3245 = vsel %vm1746, %v1960, 0
      %v3248 = vsel %vm1746, %v1965, 0
      %v3251 = vsel %vm1746, %v1970, 0
      %v3254 = vsel %vm1746, %v1975, 0
      %v3257 = vsel %vm1746, %v1980, 0
      %v3260 = vsel %vm1746, %v1985, 0
      %v3263 = vsel %vm1746, %v1990, 0
      %v3266 = vsel %vm1746, %v1995, 0
      %v3269 = vsel %vm1746, %v2000, 0
      %v3272 = vsel %vm1746, %v2005, 0
      %v3275 = vsel %vm1746, %v2010, 0
      %v3278 = vsel %vm1746, %v2015, 0
      %v3281 = vsel %vm1746, %v2020, 0
      %v3284 = vsel %vm1746, %v2025, 0
      %v3287 = vsel %vm1746, %v2030, 0
      %v3290 = vsel %vm1746, %v2035, 0
      %v3293 = vsel %vm1746, %v2040, 0
      %v3296 = vsel %vm1746, %v2045, 0
      %v3299 = vsel %vm1746, %v2050, 0
      %v3302 = vsel %vm1746, %v2055, 0
      %v3305 = vsel %vm1746, %v2060, 0
      %v3308 = vsel %vm1746, %v2065, 0
      %v3311 = vsel %vm1746, %v2861, 0
      %v3314 = vsel %vm1746, %v2862, 0
      %v3317 = vsel %vm1746, %v2863, 0
      %v3320 = vsel %vm1746, %v2864, 0
      %v3323 = vsel %vm1746, %v2865, 0
      %v3326 = vsel %vm1746, %v2866, 0
      %v3329 = vsel %vm1746, %v2867, 0
      %v3332 = vsel %vm1746, %v2868, 0
      %v3335 = vsel %vm1746, %v2869, 0
      %v3338 = vsel %vm1746, %v2870, 0
      %v3341 = vsel %vm1746, %v2871, 0
      %v3344 = vsel %vm1746, %v2872, 0
      %v3347 = vsel %vm1746, %v2873, 0
      %v3350 = vsel %vm1746, %v2874, 0
      %v3353 = vsel %vm1746, %v2875, 0
      %v3356 = vsel %vm1746, %v2876, 0
      %v3359 = vsel %vm1746, %v2877, 0
      %v3362 = vsel %vm1746, %v2878, 0
      %v3365 = vsel %vm1746, %v2879, 0
      %v3368 = vsel %vm1746, %v2880, 0
      %v3371 = vsel %vm1746, %v2881, 0
      %v3374 = vsel %vm1746, %v2882, 0
      %v3377 = vsel %vm1746, %v2883, 0
      %v3380 = vsel %vm1746, %v2884, 0
      %v3383 = vsel %vm1746, %v2885, 0
      %v3386 = vsel %vm1746, %v2886, 0
      %v3389 = vsel %vm1746, %v2887, 0
      %v3392 = vsel %vm1746, %v2888, 0
      %v3395 = vsel %vm1746, %v2889, 0
      %v3398 = vsel %vm1746, %v2890, 0
      %v3401 = vsel %vm1746, %v2891, 0
      %v3404 = vsel %vm1746, %v2892, 0
      %3406 = vmatprep.subr.mxu0 0.0
      %3407 = vmatpush1.xpose.msra.mxu0 %v3311
      %3408 = vmatprep.subr.mxu0 0.0
      %3409 = vmatpush1.xpose.msra.mxu0 %v3314
      %3410 = vmatprep.subr.mxu0 0.0
      %3411 = vmatpush1.xpose.msra.mxu0 %v3317
      %3412 = vmatprep.subr.mxu0 0.0
      %3413 = vmatpush1.xpose.msra.mxu0 %v3320
      %3414 = vmatprep.subr.mxu0 0.0
      %3415 = vmatpush1.xpose.msra.mxu0 %v3323
      %3416 = vmatprep.subr.mxu0 0.0
      %3417 = vmatpush1.xpose.msra.mxu0 %v3326
      %3418 = vmatprep.subr.mxu0 0.0
      %3419 = vmatpush1.xpose.msra.mxu0 %v3329
      %3420 = vmatprep.subr.mxu0 0.0
      %3421 = vmatpush1.xpose.msra.mxu0 %v3332
      %3422 = vmatprep.subr.mxu0 0.0
      %3423 = vmatpush1.xpose.msra.mxu0 %v3335
      %3424 = vmatprep.subr.mxu0 0.0
      %3425 = vmatpush1.xpose.msra.mxu0 %v3338
      %3426 = vmatprep.subr.mxu0 0.0
      %3427 = vmatpush1.xpose.msra.mxu0 %v3341
      %3428 = vmatprep.subr.mxu0 0.0
      %3429 = vmatpush1.xpose.msra.mxu0 %v3344
      %3430 = vmatprep.subr.mxu0 0.0
      %3431 = vmatpush1.xpose.msra.mxu0 %v3347
      %3432 = vmatprep.subr.mxu0 0.0
      %3433 = vmatpush1.xpose.msra.mxu0 %v3350
      %3434 = vmatprep.subr.mxu0 0.0
      %3435 = vmatpush1.xpose.msra.mxu0 %v3353
      %3436 = vmatprep.subr.mxu0 0.0
      %3437 = vmatpush1.xpose.msra.mxu0 %v3356
      %3438 = vmatprep.subr.mxu0 0.0
      %3439 = vmatpush1.xpose.msra.mxu0 %v3359
      %3440 = vmatprep.subr.mxu0 0.0
      %3441 = vmatpush1.xpose.msra.mxu0 %v3362
      %3442 = vmatprep.subr.mxu0 0.0
      %3443 = vmatpush1.xpose.msra.mxu0 %v3365
      %3444 = vmatprep.subr.mxu0 0.0
      %3445 = vmatpush1.xpose.msra.mxu0 %v3368
      %3446 = vmatprep.subr.mxu0 0.0
      %3447 = vmatpush1.xpose.msra.mxu0 %v3371
      %3448 = vmatprep.subr.mxu0 0.0
      %3449 = vmatpush1.xpose.msra.mxu0 %v3374
      %3450 = vmatprep.subr.mxu0 0.0
      %3451 = vmatpush1.xpose.msra.mxu0 %v3377
      %3452 = vmatprep.subr.mxu0 0.0
      %3453 = vmatpush1.xpose.msra.mxu0 %v3380
      %3454 = vmatprep.subr.mxu0 0.0
      %3455 = vmatpush1.xpose.msra.mxu0 %v3383
      %3456 = vmatprep.subr.mxu0 0.0
      %3457 = vmatpush1.xpose.msra.mxu0 %v3386
      %3458 = vmatprep.subr.mxu0 0.0
      %3459 = vmatpush1.xpose.msra.mxu0 %v3389
      %3460 = vmatprep.subr.mxu0 0.0
      %3461 = vmatpush1.xpose.msra.mxu0 %v3392
      %3462 = vmatprep.subr.mxu0 0.0
      %3463 = vmatpush1.xpose.msra.mxu0 %v3395
      %3464 = vmatprep.subr.mxu0 0.0
      %3465 = vmatpush1.xpose.msra.mxu0 %v3398
      %3466 = vmatprep.subr.mxu0 0.0
      %3467 = vmatpush1.xpose.msra.mxu0 %v3401
      %3468 = vmatprep.subr.mxu0 0.0
      %3469 = vmatpush1.xpose.msra.mxu0 %v3404
      %3470 = vmatprep.mubr.f32.mxu0 0.0
      %3471 = vmatmul.mubr.f32.gmra.mrb[0].mxu0 %v3215
      %v3472 = vpop.f32.mrb[0].mxu0
      %v3473 = vadd.f32 %v3150, %v3472
      %v3474 = vpop.f32.mrb[0].mxu0
      %v3475 = vadd.f32 %v3151, %v3474
      %3476 = vmatprep.mubr.f32.mxu0 0.0
      %3477 = vmatmul.mubr.f32.gmra.mrb[0].mxu0 %v3218
      %v3478 = vpop.f32.mrb[0].mxu0
      %v3479 = vadd.f32 %v3152, %v3478
      %v3480 = vpop.f32.mrb[0].mxu0
      %v3481 = vadd.f32 %v3153, %v3480
      %3482 = vmatprep.mubr.f32.mxu0 0.0
      %3483 = vmatmul.mubr.f32.gmra.mrb[0].mxu0 %v3221
      %v3484 = vpop.f32.mrb[0].mxu0
      %v3485 = vadd.f32 %v3154, %v3484
      %v3486 = vpop.f32.mrb[0].mxu0
      %v3487 = vadd.f32 %v3155, %v3486
      %3488 = vmatprep.mubr.f32.mxu0 0.0
      %3489 = vmatmul.mubr.f32.gmra.mrb[0].mxu0 %v3224
      %v3490 = vpop.f32.mrb[0].mxu0
      %v3491 = vadd.f32 %v3156, %v3490
      %v3492 = vpop.f32.mrb[0].mxu0
      %v3493 = vadd.f32 %v3157, %v3492
      %3494 = vmatprep.mubr.f32.mxu0 0.0
      %3495 = vmatmul.mubr.f32.gmra.mrb[0].mxu0 %v3227
      %v3496 = vpop.f32.mrb[0].mxu0
      %v3497 = vadd.f32 %v3158, %v3496
      %v3498 = vpop.f32.mrb[0].mxu0
      %v3499 = vadd.f32 %v3159, %v3498
      %3500 = vmatprep.mubr.f32.mxu0 0.0
      %3501 = vmatmul.mubr.f32.gmra.mrb[0].mxu0 %v3230
      %v3502 = vpop.f32.mrb[0].mxu0
      %v3503 = vadd.f32 %v3160, %v3502
      %v3504 = vpop.f32.mrb[0].mxu0
      %v3505 = vadd.f32 %v3161, %v3504
      %3506 = vmatprep.mubr.f32.mxu0 0.0
      %3507 = vmatmul.mubr.f32.gmra.mrb[0].mxu0 %v3233
      %v3508 = vpop.f32.mrb[0].mxu0
      %v3509 = vadd.f32 %v3162, %v3508
      %v3510 = vpop.f32.mrb[0].mxu0
      %v3511 = vadd.f32 %v3163, %v3510
      %3512 = vmatprep.mubr.f32.mxu0 0.0
      %3513 = vmatmul.mubr.f32.gmra.mrb[0].mxu0 %v3236
      %v3514 = vpop.f32.mrb[0].mxu0
      %v3515 = vadd.f32 %v3164, %v3514
      %v3516 = vpop.f32.mrb[0].mxu0
      %v3517 = vadd.f32 %v3165, %v3516
      %3518 = vmatprep.mubr.f32.mxu0 0.0
      %3519 = vmatmul.mubr.f32.gmra.mrb[0].mxu0 %v3239
      %v3520 = vpop.f32.mrb[0].mxu0
      %v3521 = vadd.f32 %v3166, %v3520
      %v3522 = vpop.f32.mrb[0].mxu0
      %v3523 = vadd.f32 %v3167, %v3522
      %3524 = vmatprep.mubr.f32.mxu0 0.0
      %3525 = vmatmul.mubr.f32.gmra.mrb[0].mxu0 %v3242
      %v3526 = vpop.f32.mrb[0].mxu0
      %v3527 = vadd.f32 %v3168, %v3526
      %v3528 = vpop.f32.mrb[0].mxu0
      %v3529 = vadd.f32 %v3169, %v3528
      %3530 = vmatprep.mubr.f32.mxu0 0.0
      %3531 = vmatmul.mubr.f32.gmra.mrb[0].mxu0 %v3245
      %v3532 = vpop.f32.mrb[0].mxu0
      %v3533 = vadd.f32 %v3170, %v3532
      %v3534 = vpop.f32.mrb[0].mxu0
      %v3535 = vadd.f32 %v3171, %v3534
      %3536 = vmatprep.mubr.f32.mxu0 0.0
      %3537 = vmatmul.mubr.f32.gmra.mrb[0].mxu0 %v3248
      %v3538 = vpop.f32.mrb[0].mxu0
      %v3539 = vadd.f32 %v3172, %v3538
      %v3540 = vpop.f32.mrb[0].mxu0
      %v3541 = vadd.f32 %v3173, %v3540
      %3542 = vmatprep.mubr.f32.mxu0 0.0
      %3543 = vmatmul.mubr.f32.gmra.mrb[0].mxu0 %v3251
      %v3544 = vpop.f32.mrb[0].mxu0
      %v3545 = vadd.f32 %v3174, %v3544
      %v3546 = vpop.f32.mrb[0].mxu0
      %v3547 = vadd.f32 %v3175, %v3546
      %3548 = vmatprep.mubr.f32.mxu0 0.0
      %3549 = vmatmul.mubr.f32.gmra.mrb[0].mxu0 %v3254
      %v3550 = vpop.f32.mrb[0].mxu0
      %v3551 = vadd.f32 %v3176, %v3550
      %v3552 = vpop.f32.mrb[0].mxu0
      %v3553 = vadd.f32 %v3177, %v3552
      %3554 = vmatprep.mubr.f32.mxu0 0.0
      %3555 = vmatmul.mubr.f32.gmra.mrb[0].mxu0 %v3257
      %v3556 = vpop.f32.mrb[0].mxu0
      %v3557 = vadd.f32 %v3178, %v3556
      %v3558 = vpop.f32.mrb[0].mxu0
      %v3559 = vadd.f32 %v3179, %v3558
      %3560 = vmatprep.mubr.f32.mxu0 0.0
      %3561 = vmatmul.mubr.f32.gmra.mrb[0].mxu0 %v3260
      %v3562 = vpop.f32.mrb[0].mxu0
      %v3563 = vadd.f32 %v3180, %v3562
      %v3564 = vpop.f32.mrb[0].mxu0
      %v3565 = vadd.f32 %v3181, %v3564
      %3566 = vmatprep.mubr.f32.mxu0 0.0
      %3567 = vmatmul.mubr.f32.gmra.mrb[0].mxu0 %v3263
      %v3568 = vpop.f32.mrb[0].mxu0
      %v3569 = vadd.f32 %v3182, %v3568
      %v3570 = vpop.f32.mrb[0].mxu0
      %v3571 = vadd.f32 %v3183, %v3570
      %3572 = vmatprep.mubr.f32.mxu0 0.0
      %3573 = vmatmul.mubr.f32.gmra.mrb[0].mxu0 %v3266
      %v3574 = vpop.f32.mrb[0].mxu0
      %v3575 = vadd.f32 %v3184, %v3574
      %v3576 = vpop.f32.mrb[0].mxu0
      %v3577 = vadd.f32 %v3185, %v3576
      %3578 = vmatprep.mubr.f32.mxu0 0.0
      %3579 = vmatmul.mubr.f32.gmra.mrb[0].mxu0 %v3269
      %v3580 = vpop.f32.mrb[0].mxu0
      %v3581 = vadd.f32 %v3186, %v3580
      %v3582 = vpop.f32.mrb[0].mxu0
      %v3583 = vadd.f32 %v3187, %v3582
      %3584 = vmatprep.mubr.f32.mxu0 0.0
      %3585 = vmatmul.mubr.f32.gmra.mrb[0].mxu0 %v3272
      %v3586 = vpop.f32.mrb[0].mxu0
      %v3587 = vadd.f32 %v3188, %v3586
      %v3588 = vpop.f32.mrb[0].mxu0
      %v3589 = vadd.f32 %v3189, %v3588
      %3590 = vmatprep.mubr.f32.mxu0 0.0
      %3591 = vmatmul.mubr.f32.gmra.mrb[0].mxu0 %v3275
      %v3592 = vpop.f32.mrb[0].mxu0
      %v3593 = vadd.f32 %v3190, %v3592
      %v3594 = vpop.f32.mrb[0].mxu0
      %v3595 = vadd.f32 %v3191, %v3594
      %3596 = vmatprep.mubr.f32.mxu0 0.0
      %3597 = vmatmul.mubr.f32.gmra.mrb[0].mxu0 %v3278
      %v3598 = vpop.f32.mrb[0].mxu0
      %v3599 = vadd.f32 %v3192, %v3598
      %v3600 = vpop.f32.mrb[0].mxu0
      %v3601 = vadd.f32 %v3193, %v3600
      %3602 = vmatprep.mubr.f32.mxu0 0.0
      %3603 = vmatmul.mubr.f32.gmra.mrb[0].mxu0 %v3281
      %v3604 = vpop.f32.mrb[0].mxu0
      %v3605 = vadd.f32 %v3194, %v3604
      %v3606 = vpop.f32.mrb[0].mxu0
      %v3607 = vadd.f32 %v3195, %v3606
      %3608 = vmatprep.mubr.f32.mxu0 0.0
      %3609 = vmatmul.mubr.f32.gmra.mrb[0].mxu0 %v3284
      %v3610 = vpop.f32.mrb[0].mxu0
      %v3611 = vadd.f32 %v3196, %v3610
      %v3612 = vpop.f32.mrb[0].mxu0
      %v3613 = vadd.f32 %v3197, %v3612
      %3614 = vmatprep.mubr.f32.mxu0 0.0
      %3615 = vmatmul.mubr.f32.gmra.mrb[0].mxu0 %v3287
      %v3616 = vpop.f32.mrb[0].mxu0
      %v3617 = vadd.f32 %v3198, %v3616
      %v3618 = vpop.f32.mrb[0].mxu0
      %v3619 = vadd.f32 %v3199, %v3618
      %3620 = vmatprep.mubr.f32.mxu0 0.0
      %3621 = vmatmul.mubr.f32.gmra.mrb[0].mxu0 %v3290
      %v3622 = vpop.f32.mrb[0].mxu0
      %v3623 = vadd.f32 %v3200, %v3622
      %v3624 = vpop.f32.mrb[0].mxu0
      %v3625 = vadd.f32 %v3201, %v3624
      %3626 = vmatprep.mubr.f32.mxu0 0.0
      %3627 = vmatmul.mubr.f32.gmra.mrb[0].mxu0 %v3293
      %v3628 = vpop.f32.mrb[0].mxu0
      %v3629 = vadd.f32 %v3202, %v3628
      %v3630 = vpop.f32.mrb[0].mxu0
      %v3631 = vadd.f32 %v3203, %v3630
      %3632 = vmatprep.mubr.f32.mxu0 0.0
      %3633 = vmatmul.mubr.f32.gmra.mrb[0].mxu0 %v3296
      %v3634 = vpop.f32.mrb[0].mxu0
      %v3635 = vadd.f32 %v3204, %v3634
      %v3636 = vpop.f32.mrb[0].mxu0
      %v3637 = vadd.f32 %v3205, %v3636
      %3638 = vmatprep.mubr.f32.mxu0 0.0
      %3639 = vmatmul.mubr.f32.gmra.mrb[0].mxu0 %v3299
      %v3640 = vpop.f32.mrb[0].mxu0
      %v3641 = vadd.f32 %v3206, %v3640
      %v3642 = vpop.f32.mrb[0].mxu0
      %v3643 = vadd.f32 %v3207, %v3642
      %3644 = vmatprep.mubr.f32.mxu0 0.0
      %3645 = vmatmul.mubr.f32.gmra.mrb[0].mxu0 %v3302
      %v3646 = vpop.f32.mrb[0].mxu0
      %v3647 = vadd.f32 %v3208, %v3646
      %v3648 = vpop.f32.mrb[0].mxu0
      %v3649 = vadd.f32 %v3209, %v3648
      %3650 = vmatprep.mubr.f32.mxu0 0.0
      %3651 = vmatmul.mubr.f32.gmra.mrb[0].mxu0 %v3305
      %v3652 = vpop.f32.mrb[0].mxu0
      %v3653 = vadd.f32 %v3210, %v3652
      %v3654 = vpop.f32.mrb[0].mxu0
      %v3655 = vadd.f32 %v3211, %v3654
      %3656 = vmatprep.mubr.f32.mxu0 0.0
      %3657 = vmatmul.mubr.f32.gmra.mrb[0].mxu0 %v3308
      %v3658 = vpop.f32.mrb[0].mxu0
      %v3659 = vadd.f32 %v3212, %v3658
      %v3660 = vpop.f32.mrb[0].mxu0
      %v3661 = vadd.f32 %v3213, %v3660
      %3662 = vdwg.mxu0
      %vm3663 = vcmask 523264
      %v3664 = vsel %vm3663, %v3473, -inf
      %3665 = vmax.xlane.f32.xlu0 %v3664
      %v3666 = vpop.xlane.xlu0 %3665
      %v3667 = vsel %vm3663, %v3479, -inf
      %3668 = vmax.xlane.f32.xlu0 %v3667
      %v3669 = vpop.xlane.xlu0 %3668
      %v3670 = vsel %vm3663, %v3485, -inf
      %3671 = vmax.xlane.f32.xlu0 %v3670
      %v3672 = vpop.xlane.xlu0 %3671
      %v3673 = vsel %vm3663, %v3491, -inf
      %3674 = vmax.xlane.f32.xlu0 %v3673
      %v3675 = vpop.xlane.xlu0 %3674
      %v3676 = vsel %vm3663, %v3497, -inf
      %3677 = vmax.xlane.f32.xlu0 %v3676
      %v3678 = vpop.xlane.xlu0 %3677
      %v3679 = vsel %vm3663, %v3503, -inf
      %3680 = vmax.xlane.f32.xlu0 %v3679
      %v3681 = vpop.xlane.xlu0 %3680
      %v3682 = vsel %vm3663, %v3509, -inf
      %3683 = vmax.xlane.f32.xlu0 %v3682
      %v3684 = vpop.xlane.xlu0 %3683
      %v3685 = vsel %vm3663, %v3515, -inf
      %3686 = vmax.xlane.f32.xlu0 %v3685
      %v3687 = vpop.xlane.xlu0 %3686
      %v3688 = vsel %vm3663, %v3521, -inf
      %3689 = vmax.xlane.f32.xlu0 %v3688
      %v3690 = vpop.xlane.xlu0 %3689
      %v3691 = vsel %vm3663, %v3527, -inf
      %3692 = vmax.xlane.f32.xlu0 %v3691
      %v3693 = vpop.xlane.xlu0 %3692
      %v3694 = vsel %vm3663, %v3533, -inf
      %3695 = vmax.xlane.f32.xlu0 %v3694
      %v3696 = vpop.xlane.xlu0 %3695
      %v3697 = vsel %vm3663, %v3539, -inf
      %3698 = vmax.xlane.f32.xlu0 %v3697
      %v3699 = vpop.xlane.xlu0 %3698
      %v3700 = vsel %vm3663, %v3545, -inf
      %3701 = vmax.xlane.f32.xlu0 %v3700
      %v3702 = vpop.xlane.xlu0 %3701
      %v3703 = vsel %vm3663, %v3551, -inf
      %3704 = vmax.xlane.f32.xlu0 %v3703
      %v3705 = vpop.xlane.xlu0 %3704
      %v3706 = vsel %vm3663, %v3557, -inf
      %3707 = vmax.xlane.f32.xlu0 %v3706
      %v3708 = vpop.xlane.xlu0 %3707
      %v3709 = vsel %vm3663, %v3563, -inf
      %3710 = vmax.xlane.f32.xlu0 %v3709
      %v3711 = vpop.xlane.xlu0 %3710
      %v3712 = vsel %vm3663, %v3569, -inf
      %3713 = vmax.xlane.f32.xlu0 %v3712
      %v3714 = vpop.xlane.xlu0 %3713
      %v3715 = vsel %vm3663, %v3575, -inf
      %3716 = vmax.xlane.f32.xlu0 %v3715
      %v3717 = vpop.xlane.xlu0 %3716
      %v3718 = vsel %vm3663, %v3581, -inf
      %3719 = vmax.xlane.f32.xlu0 %v3718
      %v3720 = vpop.xlane.xlu0 %3719
      %v3721 = vsel %vm3663, %v3587, -inf
      %3722 = vmax.xlane.f32.xlu0 %v3721
      %v3723 = vpop.xlane.xlu0 %3722
      %v3724 = vsel %vm3663, %v3593, -inf
      %3725 = vmax.xlane.f32.xlu0 %v3724
      %v3726 = vpop.xlane.xlu0 %3725
      %v3727 = vsel %vm3663, %v3599, -inf
      %3728 = vmax.xlane.f32.xlu0 %v3727
      %v3729 = vpop.xlane.xlu0 %3728
      %v3730 = vsel %vm3663, %v3605, -inf
      %3731 = vmax.xlane.f32.xlu0 %v3730
      %v3732 = vpop.xlane.xlu0 %3731
      %v3733 = vsel %vm3663, %v3611, -inf
      %3734 = vmax.xlane.f32.xlu0 %v3733
      %v3735 = vpop.xlane.xlu0 %3734
      %v3736 = vsel %vm3663, %v3617, -inf
      %3737 = vmax.xlane.f32.xlu0 %v3736
      %v3738 = vpop.xlane.xlu0 %3737
      %v3739 = vsel %vm3663, %v3623, -inf
      %3740 = vmax.xlane.f32.xlu0 %v3739
      %v3741 = vpop.xlane.xlu0 %3740
      %v3742 = vsel %vm3663, %v3629, -inf
      %3743 = vmax.xlane.f32.xlu0 %v3742
      %v3744 = vpop.xlane.xlu0 %3743
      %v3745 = vsel %vm3663, %v3635, -inf
      %3746 = vmax.xlane.f32.xlu0 %v3745
      %v3747 = vpop.xlane.xlu0 %3746
      %v3748 = vsel %vm3663, %v3641, -inf
      %3749 = vmax.xlane.f32.xlu0 %v3748
      %v3750 = vpop.xlane.xlu0 %3749
      %v3751 = vsel %vm3663, %v3647, -inf
      %3752 = vmax.xlane.f32.xlu0 %v3751
      %v3753 = vpop.xlane.xlu0 %3752
      %v3754 = vsel %vm3663, %v3653, -inf
      %3755 = vmax.xlane.f32.xlu0 %v3754
      %v3756 = vpop.xlane.xlu0 %3755
      %v3757 = vsel %vm3663, %v3659, -inf
      %3758 = vmax.xlane.f32.xlu0 %v3757
      %v3759 = vpop.xlane.xlu0 %3758
      %v3760 = vsub.f32 %v3473, %v3666
      %v3761 = vsub.f32 %v3479, %v3669
      %v3762 = vsub.f32 %v3485, %v3672
      %v3763 = vsub.f32 %v3491, %v3675
      %v3764 = vsub.f32 %v3497, %v3678
      %v3765 = vsub.f32 %v3503, %v3681
      %v3766 = vsub.f32 %v3509, %v3684
      %v3767 = vsub.f32 %v3515, %v3687
      %v3768 = vsub.f32 %v3521, %v3690
      %v3769 = vsub.f32 %v3527, %v3693
      %v3770 = vsub.f32 %v3533, %v3696
      %v3771 = vsub.f32 %v3539, %v3699
      %v3772 = vsub.f32 %v3545, %v3702
      %v3773 = vsub.f32 %v3551, %v3705
      %v3774 = vsub.f32 %v3557, %v3708
      %v3775 = vsub.f32 %v3563, %v3711
      %v3776 = vsub.f32 %v3569, %v3714
      %v3777 = vsub.f32 %v3575, %v3717
      %v3778 = vsub.f32 %v3581, %v3720
      %v3779 = vsub.f32 %v3587, %v3723
      %v3780 = vsub.f32 %v3593, %v3726
      %v3781 = vsub.f32 %v3599, %v3729
      %v3782 = vsub.f32 %v3605, %v3732
      %v3783 = vsub.f32 %v3611, %v3735
      %v3784 = vsub.f32 %v3617, %v3738
      %v3785 = vsub.f32 %v3623, %v3741
      %v3786 = vsub.f32 %v3629, %v3744
      %v3787 = vsub.f32 %v3635, %v3747
      %v3788 = vsub.f32 %v3641, %v3750
      %v3789 = vsub.f32 %v3647, %v3753
      %v3790 = vsub.f32 %v3653, %v3756
      %v3791 = vsub.f32 %v3659, %v3759
      %v3792 = vmul.f32 %v3760, 1.442695
      %v3793 = vpow.pop %v3792
      %v3794 = vmul.f32 %v3761, 1.442695
      %v3795 = vpow.pop %v3794
      %v3796 = vmul.f32 %v3762, 1.442695
      %v3797 = vpow.pop %v3796
      %v3798 = vmul.f32 %v3763, 1.442695
      %v3799 = vpow.pop %v3798
      %v3800 = vmul.f32 %v3764, 1.442695
      %v3801 = vpow.pop %v3800
      %v3802 = vmul.f32 %v3765, 1.442695
      %v3803 = vpow.pop %v3802
      %v3804 = vmul.f32 %v3766, 1.442695
      %v3805 = vpow.pop %v3804
      %v3806 = vmul.f32 %v3767, 1.442695
      %v3807 = vpow.pop %v3806
      %v3808 = vmul.f32 %v3768, 1.442695
      %v3809 = vpow.pop %v3808
      %v3810 = vmul.f32 %v3769, 1.442695
      %v3811 = vpow.pop %v3810
      %v3812 = vmul.f32 %v3770, 1.442695
      %v3813 = vpow.pop %v3812
      %v3814 = vmul.f32 %v3771, 1.442695
      %v3815 = vpow.pop %v3814
      %v3816 = vmul.f32 %v3772, 1.442695
      %v3817 = vpow.pop %v3816
      %v3818 = vmul.f32 %v3773, 1.442695
      %v3819 = vpow.pop %v3818
      %v3820 = vmul.f32 %v3774, 1.442695
      %v3821 = vpow.pop %v3820
      %v3822 = vmul.f32 %v3775, 1.442695
      %v3823 = vpow.pop %v3822
      %v3824 = vmul.f32 %v3776, 1.442695
      %v3825 = vpow.pop %v3824
      %v3826 = vmul.f32 %v3777, 1.442695
      %v3827 = vpow.pop %v3826
      %v3828 = vmul.f32 %v3778, 1.442695
      %v3829 = vpow.pop %v3828
      %v3830 = vmul.f32 %v3779, 1.442695
      %v3831 = vpow.pop %v3830
      %v3832 = vmul.f32 %v3780, 1.442695
      %v3833 = vpow.pop %v3832
      %v3834 = vmul.f32 %v3781, 1.442695
      %v3835 = vpow.pop %v3834
      %v3836 = vmul.f32 %v3782, 1.442695
      %v3837 = vpow.pop %v3836
      %v3838 = vmul.f32 %v3783, 1.442695
      %v3839 = vpow.pop %v3838
      %v3840 = vmul.f32 %v3784, 1.442695
      %v3841 = vpow.pop %v3840
      %v3842 = vmul.f32 %v3785, 1.442695
      %v3843 = vpow.pop %v3842
      %v3844 = vmul.f32 %v3786, 1.442695
      %v3845 = vpow.pop %v3844
      %v3846 = vmul.f32 %v3787, 1.442695
      %v3847 = vpow.pop %v3846
      %v3848 = vmul.f32 %v3788, 1.442695
      %v3849 = vpow.pop %v3848
      %v3850 = vmul.f32 %v3789, 1.442695
      %v3851 = vpow.pop %v3850
      %v3852 = vmul.f32 %v3790, 1.442695
      %v3853 = vpow.pop %v3852
      %v3854 = vmul.f32 %v3791, 1.442695
      %v3855 = vpow.pop %v3854
      %v3856 = vsel %vm3663, %v3793, 0.0
      %3857 = vadd.xlane.f32.xlu0 %v3856
      %v3858 = vpop.xlane.xlu0 %3857
      %v3859 = vsel %vm3663, %v3795, 0.0
      %3860 = vadd.xlane.f32.xlu0 %v3859
      %v3861 = vpop.xlane.xlu0 %3860
      %v3862 = vsel %vm3663, %v3797, 0.0
      %3863 = vadd.xlane.f32.xlu0 %v3862
      %v3864 = vpop.xlane.xlu0 %3863
      %v3865 = vsel %vm3663, %v3799, 0.0
      %3866 = vadd.xlane.f32.xlu0 %v3865
      %v3867 = vpop.xlane.xlu0 %3866
      %v3868 = vsel %vm3663, %v3801, 0.0
      %3869 = vadd.xlane.f32.xlu0 %v3868
      %v3870 = vpop.xlane.xlu0 %3869
      %v3871 = vsel %vm3663, %v3803, 0.0
      %3872 = vadd.xlane.f32.xlu0 %v3871
      %v3873 = vpop.xlane.xlu0 %3872
      %v3874 = vsel %vm3663, %v3805, 0.0
      %3875 = vadd.xlane.f32.xlu0 %v3874
      %v3876 = vpop.xlane.xlu0 %3875
      %v3877 = vsel %vm3663, %v3807, 0.0
      %3878 = vadd.xlane.f32.xlu0 %v3877
      %v3879 = vpop.xlane.xlu0 %3878
      %v3880 = vsel %vm3663, %v3809, 0.0
      %3881 = vadd.xlane.f32.xlu0 %v3880
      %v3882 = vpop.xlane.xlu0 %3881
      %v3883 = vsel %vm3663, %v3811, 0.0
      %3884 = vadd.xlane.f32.xlu0 %v3883
      %v3885 = vpop.xlane.xlu0 %3884
      %v3886 = vsel %vm3663, %v3813, 0.0
      %3887 = vadd.xlane.f32.xlu0 %v3886
      %v3888 = vpop.xlane.xlu0 %3887
      %v3889 = vsel %vm3663, %v3815, 0.0
      %3890 = vadd.xlane.f32.xlu0 %v3889
      %v3891 = vpop.xlane.xlu0 %3890
      %v3892 = vsel %vm3663, %v3817, 0.0
      %3893 = vadd.xlane.f32.xlu0 %v3892
      %v3894 = vpop.xlane.xlu0 %3893
      %v3895 = vsel %vm3663, %v3819, 0.0
      %3896 = vadd.xlane.f32.xlu0 %v3895
      %v3897 = vpop.xlane.xlu0 %3896
      %v3898 = vsel %vm3663, %v3821, 0.0
      %3899 = vadd.xlane.f32.xlu0 %v3898
      %v3900 = vpop.xlane.xlu0 %3899
      %v3901 = vsel %vm3663, %v3823, 0.0
      %3902 = vadd.xlane.f32.xlu0 %v3901
      %v3903 = vpop.xlane.xlu0 %3902
      %v3904 = vsel %vm3663, %v3825, 0.0
      %3905 = vadd.xlane.f32.xlu0 %v3904
      %v3906 = vpop.xlane.xlu0 %3905
      %v3907 = vsel %vm3663, %v3827, 0.0
      %3908 = vadd.xlane.f32.xlu0 %v3907
      %v3909 = vpop.xlane.xlu0 %3908
      %v3910 = vsel %vm3663, %v3829, 0.0
      %3911 = vadd.xlane.f32.xlu0 %v3910
      %v3912 = vpop.xlane.xlu0 %3911
      %v3913 = vsel %vm3663, %v3831, 0.0
      %3914 = vadd.xlane.f32.xlu0 %v3913
      %v3915 = vpop.xlane.xlu0 %3914
      %v3916 = vsel %vm3663, %v3833, 0.0
      %3917 = vadd.xlane.f32.xlu0 %v3916
      %v3918 = vpop.xlane.xlu0 %3917
      %v3919 = vsel %vm3663, %v3835, 0.0
      %3920 = vadd.xlane.f32.xlu0 %v3919
      %v3921 = vpop.xlane.xlu0 %3920
      %v3922 = vsel %vm3663, %v3837, 0.0
      %3923 = vadd.xlane.f32.xlu0 %v3922
      %v3924 = vpop.xlane.xlu0 %3923
      %v3925 = vsel %vm3663, %v3839, 0.0
      %3926 = vadd.xlane.f32.xlu0 %v3925
      %v3927 = vpop.xlane.xlu0 %3926
      %v3928 = vsel %vm3663, %v3841, 0.0
      %3929 = vadd.xlane.f32.xlu0 %v3928
      %v3930 = vpop.xlane.xlu0 %3929
      %v3931 = vsel %vm3663, %v3843, 0.0
      %3932 = vadd.xlane.f32.xlu0 %v3931
      %v3933 = vpop.xlane.xlu0 %3932
      %v3934 = vsel %vm3663, %v3845, 0.0
      %3935 = vadd.xlane.f32.xlu0 %v3934
      %v3936 = vpop.xlane.xlu0 %3935
      %v3937 = vsel %vm3663, %v3847, 0.0
      %3938 = vadd.xlane.f32.xlu0 %v3937
      %v3939 = vpop.xlane.xlu0 %3938
      %v3940 = vsel %vm3663, %v3849, 0.0
      %3941 = vadd.xlane.f32.xlu0 %v3940
      %v3942 = vpop.xlane.xlu0 %3941
      %v3943 = vsel %vm3663, %v3851, 0.0
      %3944 = vadd.xlane.f32.xlu0 %v3943
      %v3945 = vpop.xlane.xlu0 %3944
      %v3946 = vsel %vm3663, %v3853, 0.0
      %3947 = vadd.xlane.f32.xlu0 %v3946
      %v3948 = vpop.xlane.xlu0 %3947
      %v3949 = vsel %vm3663, %v3855, 0.0
      %3950 = vadd.xlane.f32.xlu0 %v3949
      %v3951 = vpop.xlane.xlu0 %3950
      %v3952 = vrcp.pop %v3858
      %v3953 = vrcp.pop %v3861
      %v3954 = vrcp.pop %v3864
      %v3955 = vrcp.pop %v3867
      %v3956 = vrcp.pop %v3870
      %v3957 = vrcp.pop %v3873
      %v3958 = vrcp.pop %v3876
      %v3959 = vrcp.pop %v3879
      %v3960 = vrcp.pop %v3882
      %v3961 = vrcp.pop %v3885
      %v3962 = vrcp.pop %v3888
      %v3963 = vrcp.pop %v3891
      %v3964 = vrcp.pop %v3894
      %v3965 = vrcp.pop %v3897
      %v3966 = vrcp.pop %v3900
      %v3967 = vrcp.pop %v3903
      %v3968 = vrcp.pop %v3906
      %v3969 = vrcp.pop %v3909
      %v3970 = vrcp.pop %v3912
      %v3971 = vrcp.pop %v3915
      %v3972 = vrcp.pop %v3918
      %v3973 = vrcp.pop %v3921
      %v3974 = vrcp.pop %v3924
      %v3975 = vrcp.pop %v3927
      %v3976 = vrcp.pop %v3930
      %v3977 = vrcp.pop %v3933
      %v3978 = vrcp.pop %v3936
      %v3979 = vrcp.pop %v3939
      %v3980 = vrcp.pop %v3942
      %v3981 = vrcp.pop %v3945
      %v3982 = vrcp.pop %v3948
      %v3983 = vrcp.pop %v3951
      %v3984 = vmul.f32 %v3793, %v3952
      %v3985 = vmul.f32 %v3795, %v3953
      %v3986 = vmul.f32 %v3797, %v3954
      %v3987 = vmul.f32 %v3799, %v3955
      %v3988 = vmul.f32 %v3801, %v3956
      %v3989 = vmul.f32 %v3803, %v3957
      %v3990 = vmul.f32 %v3805, %v3958
      %v3991 = vmul.f32 %v3807, %v3959
      %v3992 = vmul.f32 %v3809, %v3960
      %v3993 = vmul.f32 %v3811, %v3961
      %v3994 = vmul.f32 %v3813, %v3962
      %v3995 = vmul.f32 %v3815, %v3963
      %v3996 = vmul.f32 %v3817, %v3964
      %v3997 = vmul.f32 %v3819, %v3965
      %v3998 = vmul.f32 %v3821, %v3966
      %v3999 = vmul.f32 %v3823, %v3967
      %v4000 = vmul.f32 %v3825, %v3968
      %v4001 = vmul.f32 %v3827, %v3969
      %v4002 = vmul.f32 %v3829, %v3970
      %v4003 = vmul.f32 %v3831, %v3971
      %v4004 = vmul.f32 %v3833, %v3972
      %v4005 = vmul.f32 %v3835, %v3973
      %v4006 = vmul.f32 %v3837, %v3974
      %v4007 = vmul.f32 %v3839, %v3975
      %v4008 = vmul.f32 %v3841, %v3976
      %v4009 = vmul.f32 %v3843, %v3977
      %v4010 = vmul.f32 %v3845, %v3978
      %v4011 = vmul.f32 %v3847, %v3979
      %v4012 = vmul.f32 %v3849, %v3980
      %v4013 = vmul.f32 %v3851, %v3981
      %v4014 = vmul.f32 %v3853, %v3982
      %v4015 = vmul.f32 %v3855, %v3983
      %vm4016 = vcmask 1048064
      %v4017 = vsel %vm4016, %v3473, -inf
      %4018 = vmax.xlane.f32.xlu0 %v4017
      %v4019 = vpop.xlane.xlu0 %4018
      %v4020 = vsel %vm4016, %v3479, -inf
      %4021 = vmax.xlane.f32.xlu0 %v4020
      %v4022 = vpop.xlane.xlu0 %4021
      %v4023 = vsel %vm4016, %v3485, -inf
      %4024 = vmax.xlane.f32.xlu0 %v4023
      %v4025 = vpop.xlane.xlu0 %4024
      %v4026 = vsel %vm4016, %v3491, -inf
      %4027 = vmax.xlane.f32.xlu0 %v4026
      %v4028 = vpop.xlane.xlu0 %4027
      %v4029 = vsel %vm4016, %v3497, -inf
      %4030 = vmax.xlane.f32.xlu0 %v4029
      %v4031 = vpop.xlane.xlu0 %4030
      %v4032 = vsel %vm4016, %v3503, -inf
      %4033 = vmax.xlane.f32.xlu0 %v4032
      %v4034 = vpop.xlane.xlu0 %4033
      %v4035 = vsel %vm4016, %v3509, -inf
      %4036 = vmax.xlane.f32.xlu0 %v4035
      %v4037 = vpop.xlane.xlu0 %4036
      %v4038 = vsel %vm4016, %v3515, -inf
      %4039 = vmax.xlane.f32.xlu0 %v4038
      %v4040 = vpop.xlane.xlu0 %4039
      %v4041 = vsel %vm4016, %v3521, -inf
      %4042 = vmax.xlane.f32.xlu0 %v4041
      %v4043 = vpop.xlane.xlu0 %4042
      %v4044 = vsel %vm4016, %v3527, -inf
      %4045 = vmax.xlane.f32.xlu0 %v4044
      %v4046 = vpop.xlane.xlu0 %4045
      %v4047 = vsel %vm4016, %v3533, -inf
      %4048 = vmax.xlane.f32.xlu0 %v4047
      %v4049 = vpop.xlane.xlu0 %4048
      %v4050 = vsel %vm4016, %v3539, -inf
      %4051 = vmax.xlane.f32.xlu0 %v4050
      %v4052 = vpop.xlane.xlu0 %4051
      %v4053 = vsel %vm4016, %v3545, -inf
      %4054 = vmax.xlane.f32.xlu0 %v4053
      %v4055 = vpop.xlane.xlu0 %4054
      %v4056 = vsel %vm4016, %v3551, -inf
      %4057 = vmax.xlane.f32.xlu0 %v4056
      %v4058 = vpop.xlane.xlu0 %4057
      %v4059 = vsel %vm4016, %v3557, -inf
      %4060 = vmax.xlane.f32.xlu0 %v4059
      %v4061 = vpop.xlane.xlu0 %4060
      %v4062 = vsel %vm4016, %v3563, -inf
      %4063 = vmax.xlane.f32.xlu0 %v4062
      %v4064 = vpop.xlane.xlu0 %4063
      %v4065 = vsel %vm4016, %v3569, -inf
      %4066 = vmax.xlane.f32.xlu0 %v4065
      %v4067 = vpop.xlane.xlu0 %4066
      %v4068 = vsel %vm4016, %v3575, -inf
      %4069 = vmax.xlane.f32.xlu0 %v4068
      %v4070 = vpop.xlane.xlu0 %4069
      %v4071 = vsel %vm4016, %v3581, -inf
      %4072 = vmax.xlane.f32.xlu0 %v4071
      %v4073 = vpop.xlane.xlu0 %4072
      %v4074 = vsel %vm4016, %v3587, -inf
      %4075 = vmax.xlane.f32.xlu0 %v4074
      %v4076 = vpop.xlane.xlu0 %4075
      %v4077 = vsel %vm4016, %v3593, -inf
      %4078 = vmax.xlane.f32.xlu0 %v4077
      %v4079 = vpop.xlane.xlu0 %4078
      %v4080 = vsel %vm4016, %v3599, -inf
      %4081 = vmax.xlane.f32.xlu0 %v4080
      %v4082 = vpop.xlane.xlu0 %4081
      %v4083 = vsel %vm4016, %v3605, -inf
      %4084 = vmax.xlane.f32.xlu0 %v4083
      %v4085 = vpop.xlane.xlu0 %4084
      %v4086 = vsel %vm4016, %v3611, -inf
      %4087 = vmax.xlane.f32.xlu0 %v4086
      %v4088 = vpop.xlane.xlu0 %4087
      %v4089 = vsel %vm4016, %v3617, -inf
      %4090 = vmax.xlane.f32.xlu0 %v4089
      %v4091 = vpop.xlane.xlu0 %4090
      %v4092 = vsel %vm4016, %v3623, -inf
      %4093 = vmax.xlane.f32.xlu0 %v4092
      %v4094 = vpop.xlane.xlu0 %4093
      %v4095 = vsel %vm4016, %v3629, -inf
      %4096 = vmax.xlane.f32.xlu0 %v4095
      %v4097 = vpop.xlane.xlu0 %4096
      %v4098 = vsel %vm4016, %v3635, -inf
      %4099 = vmax.xlane.f32.xlu0 %v4098
      %v4100 = vpop.xlane.xlu0 %4099
      %v4101 = vsel %vm4016, %v3641, -inf
      %4102 = vmax.xlane.f32.xlu0 %v4101
      %v4103 = vpop.xlane.xlu0 %4102
      %v4104 = vsel %vm4016, %v3647, -inf
      %4105 = vmax.xlane.f32.xlu0 %v4104
      %v4106 = vpop.xlane.xlu0 %4105
      %v4107 = vsel %vm4016, %v3653, -inf
      %4108 = vmax.xlane.f32.xlu0 %v4107
      %v4109 = vpop.xlane.xlu0 %4108
      %v4110 = vsel %vm4016, %v3659, -inf
      %4111 = vmax.xlane.f32.xlu0 %v4110
      %v4112 = vpop.xlane.xlu0 %4111
      %v4113 = vsub.f32 %v3473, %v4019
      %v4114 = vsub.f32 %v3479, %v4022
      %v4115 = vsub.f32 %v3485, %v4025
      %v4116 = vsub.f32 %v3491, %v4028
      %v4117 = vsub.f32 %v3497, %v4031
      %v4118 = vsub.f32 %v3503, %v4034
      %v4119 = vsub.f32 %v3509, %v4037
      %v4120 = vsub.f32 %v3515, %v4040
      %v4121 = vsub.f32 %v3521, %v4043
      %v4122 = vsub.f32 %v3527, %v4046
      %v4123 = vsub.f32 %v3533, %v4049
      %v4124 = vsub.f32 %v3539, %v4052
      %v4125 = vsub.f32 %v3545, %v4055
      %v4126 = vsub.f32 %v3551, %v4058
      %v4127 = vsub.f32 %v3557, %v4061
      %v4128 = vsub.f32 %v3563, %v4064
      %v4129 = vsub.f32 %v3569, %v4067
      %v4130 = vsub.f32 %v3575, %v4070
      %v4131 = vsub.f32 %v3581, %v4073
      %v4132 = vsub.f32 %v3587, %v4076
      %v4133 = vsub.f32 %v3593, %v4079
      %v4134 = vsub.f32 %v3599, %v4082
      %v4135 = vsub.f32 %v3605, %v4085
      %v4136 = vsub.f32 %v3611, %v4088
      %v4137 = vsub.f32 %v3617, %v4091
      %v4138 = vsub.f32 %v3623, %v4094
      %v4139 = vsub.f32 %v3629, %v4097
      %v4140 = vsub.f32 %v3635, %v4100
      %v4141 = vsub.f32 %v3641, %v4103
      %v4142 = vsub.f32 %v3647, %v4106
      %v4143 = vsub.f32 %v3653, %v4109
      %v4144 = vsub.f32 %v3659, %v4112
      %v4145 = vmul.f32 %v4113, 1.442695
      %v4146 = vpow.pop %v4145
      %v4147 = vmul.f32 %v4114, 1.442695
      %v4148 = vpow.pop %v4147
      %v4149 = vmul.f32 %v4115, 1.442695
      %v4150 = vpow.pop %v4149
      %v4151 = vmul.f32 %v4116, 1.442695
      %v4152 = vpow.pop %v4151
      %v4153 = vmul.f32 %v4117, 1.442695
      %v4154 = vpow.pop %v4153
      %v4155 = vmul.f32 %v4118, 1.442695
      %v4156 = vpow.pop %v4155
      %v4157 = vmul.f32 %v4119, 1.442695
      %v4158 = vpow.pop %v4157
      %v4159 = vmul.f32 %v4120, 1.442695
      %v4160 = vpow.pop %v4159
      %v4161 = vmul.f32 %v4121, 1.442695
      %v4162 = vpow.pop %v4161
      %v4163 = vmul.f32 %v4122, 1.442695
      %v4164 = vpow.pop %v4163
      %v4165 = vmul.f32 %v4123, 1.442695
      %v4166 = vpow.pop %v4165
      %v4167 = vmul.f32 %v4124, 1.442695
      %v4168 = vpow.pop %v4167
      %v4169 = vmul.f32 %v4125, 1.442695
      %v4170 = vpow.pop %v4169
      %v4171 = vmul.f32 %v4126, 1.442695
      %v4172 = vpow.pop %v4171
      %v4173 = vmul.f32 %v4127, 1.442695
      %v4174 = vpow.pop %v4173
      %v4175 = vmul.f32 %v4128, 1.442695
      %v4176 = vpow.pop %v4175
      %v4177 = vmul.f32 %v4129, 1.442695
      %v4178 = vpow.pop %v4177
      %v4179 = vmul.f32 %v4130, 1.442695
      %v4180 = vpow.pop %v4179
      %v4181 = vmul.f32 %v4131, 1.442695
      %v4182 = vpow.pop %v4181
      %v4183 = vmul.f32 %v4132, 1.442695
      %v4184 = vpow.pop %v4183
      %v4185 = vmul.f32 %v4133, 1.442695
      %v4186 = vpow.pop %v4185
      %v4187 = vmul.f32 %v4134, 1.442695
      %v4188 = vpow.pop %v4187
      %v4189 = vmul.f32 %v4135, 1.442695
      %v4190 = vpow.pop %v4189
      %v4191 = vmul.f32 %v4136, 1.442695
      %v4192 = vpow.pop %v4191
      %v4193 = vmul.f32 %v4137, 1.442695
      %v4194 = vpow.pop %v4193
      %v4195 = vmul.f32 %v4138, 1.442695
      %v4196 = vpow.pop %v4195
      %v4197 = vmul.f32 %v4139, 1.442695
      %v4198 = vpow.pop %v4197
      %v4199 = vmul.f32 %v4140, 1.442695
      %v4200 = vpow.pop %v4199
      %v4201 = vmul.f32 %v4141, 1.442695
      %v4202 = vpow.pop %v4201
      %v4203 = vmul.f32 %v4142, 1.442695
      %v4204 = vpow.pop %v4203
      %v4205 = vmul.f32 %v4143, 1.442695
      %v4206 = vpow.pop %v4205
      %v4207 = vmul.f32 %v4144, 1.442695
      %v4208 = vpow.pop %v4207
      %4241 = vrot.lane.b32.xlu0 %v4146, 64
      %v4242 = vpop.permute.xlu0 %4241
      %4243 = vrot.lane.b32.xlu0 %v4148, 64
      %v4244 = vpop.permute.xlu0 %4243
      %4245 = vrot.lane.b32.xlu0 %v4150, 64
      %v4246 = vpop.permute.xlu0 %4245
      %4247 = vrot.lane.b32.xlu0 %v4152, 64
      %v4248 = vpop.permute.xlu0 %4247
      %4249 = vrot.lane.b32.xlu0 %v4154, 64
      %v4250 = vpop.permute.xlu0 %4249
      %4251 = vrot.lane.b32.xlu0 %v4156, 64
      %v4252 = vpop.permute.xlu0 %4251
      %4253 = vrot.lane.b32.xlu0 %v4158, 64
      %v4254 = vpop.permute.xlu0 %4253
      %4255 = vrot.lane.b32.xlu0 %v4160, 64
      %v4256 = vpop.permute.xlu0 %4255
      %4257 = vrot.lane.b32.xlu0 %v4162, 64
      %v4258 = vpop.permute.xlu0 %4257
      %4259 = vrot.lane.b32.xlu0 %v4164, 64
      %v4260 = vpop.permute.xlu0 %4259
      %4261 = vrot.lane.b32.xlu0 %v4166, 64
      %v4262 = vpop.permute.xlu0 %4261
      %4263 = vrot.lane.b32.xlu0 %v4168, 64
      %v4264 = vpop.permute.xlu0 %4263
      %4265 = vrot.lane.b32.xlu0 %v4170, 64
      %v4266 = vpop.permute.xlu0 %4265
      %4267 = vrot.lane.b32.xlu0 %v4172, 64
      %v4268 = vpop.permute.xlu0 %4267
      %4269 = vrot.lane.b32.xlu0 %v4174, 64
      %v4270 = vpop.permute.xlu0 %4269
      %4271 = vrot.lane.b32.xlu0 %v4176, 64
      %v4272 = vpop.permute.xlu0 %4271
      %4273 = vrot.lane.b32.xlu0 %v4178, 64
      %v4274 = vpop.permute.xlu0 %4273
      %4275 = vrot.lane.b32.xlu0 %v4180, 64
      %v4276 = vpop.permute.xlu0 %4275
      %4277 = vrot.lane.b32.xlu0 %v4182, 64
      %v4278 = vpop.permute.xlu0 %4277
      %4279 = vrot.lane.b32.xlu0 %v4184, 64
      %v4280 = vpop.permute.xlu0 %4279
      %4281 = vrot.lane.b32.xlu0 %v4186, 64
      %v4282 = vpop.permute.xlu0 %4281
      %4283 = vrot.lane.b32.xlu0 %v4188, 64
      %v4284 = vpop.permute.xlu0 %4283
      %4285 = vrot.lane.b32.xlu0 %v4190, 64
      %v4286 = vpop.permute.xlu0 %4285
      %4287 = vrot.lane.b32.xlu0 %v4192, 64
      %v4288 = vpop.permute.xlu0 %4287
      %4289 = vrot.lane.b32.xlu0 %v4194, 64
      %v4290 = vpop.permute.xlu0 %4289
      %4291 = vrot.lane.b32.xlu0 %v4196, 64
      %v4292 = vpop.permute.xlu0 %4291
      %4293 = vrot.lane.b32.xlu0 %v4198, 64
      %v4294 = vpop.permute.xlu0 %4293
      %4295 = vrot.lane.b32.xlu0 %v4200, 64
      %v4296 = vpop.permute.xlu0 %4295
      %4297 = vrot.lane.b32.xlu0 %v4202, 64
      %v4298 = vpop.permute.xlu0 %4297
      %4299 = vrot.lane.b32.xlu0 %v4204, 64
      %v4300 = vpop.permute.xlu0 %4299
      %4301 = vrot.lane.b32.xlu0 %v4206, 64
      %v4302 = vpop.permute.xlu0 %4301
      %4303 = vrot.lane.b32.xlu0 %v4208, 64
      %v4304 = vpop.permute.xlu0 %4303
      %v4337 = vsel %vm3663, %v4242, 0.0
      %4338 = vadd.xlane.f32.xlu0 %v4337
      %v4339 = vpop.xlane.xlu0 %4338
      %v4340 = vsel %vm3663, %v4244, 0.0
      %4341 = vadd.xlane.f32.xlu0 %v4340
      %v4342 = vpop.xlane.xlu0 %4341
      %v4343 = vsel %vm3663, %v4246, 0.0
      %4344 = vadd.xlane.f32.xlu0 %v4343
      %v4345 = vpop.xlane.xlu0 %4344
      %v4346 = vsel %vm3663, %v4248, 0.0
      %4347 = vadd.xlane.f32.xlu0 %v4346
      %v4348 = vpop.xlane.xlu0 %4347
      %v4349 = vsel %vm3663, %v4250, 0.0
      %4350 = vadd.xlane.f32.xlu0 %v4349
      %v4351 = vpop.xlane.xlu0 %4350
      %v4352 = vsel %vm3663, %v4252, 0.0
      %4353 = vadd.xlane.f32.xlu0 %v4352
      %v4354 = vpop.xlane.xlu0 %4353
      %v4355 = vsel %vm3663, %v4254, 0.0
      %4356 = vadd.xlane.f32.xlu0 %v4355
      %v4357 = vpop.xlane.xlu0 %4356
      %v4358 = vsel %vm3663, %v4256, 0.0
      %4359 = vadd.xlane.f32.xlu0 %v4358
      %v4360 = vpop.xlane.xlu0 %4359
      %v4361 = vsel %vm3663, %v4258, 0.0
      %4362 = vadd.xlane.f32.xlu0 %v4361
      %v4363 = vpop.xlane.xlu0 %4362
      %v4364 = vsel %vm3663, %v4260, 0.0
      %4365 = vadd.xlane.f32.xlu0 %v4364
      %v4366 = vpop.xlane.xlu0 %4365
      %v4367 = vsel %vm3663, %v4262, 0.0
      %4368 = vadd.xlane.f32.xlu0 %v4367
      %v4369 = vpop.xlane.xlu0 %4368
      %v4370 = vsel %vm3663, %v4264, 0.0
      %4371 = vadd.xlane.f32.xlu0 %v4370
      %v4372 = vpop.xlane.xlu0 %4371
      %v4373 = vsel %vm3663, %v4266, 0.0
      %4374 = vadd.xlane.f32.xlu0 %v4373
      %v4375 = vpop.xlane.xlu0 %4374
      %v4376 = vsel %vm3663, %v4268, 0.0
      %4377 = vadd.xlane.f32.xlu0 %v4376
      %v4378 = vpop.xlane.xlu0 %4377
      %v4379 = vsel %vm3663, %v4270, 0.0
      %4380 = vadd.xlane.f32.xlu0 %v4379
      %v4381 = vpop.xlane.xlu0 %4380
      %v4382 = vsel %vm3663, %v4272, 0.0
      %4383 = vadd.xlane.f32.xlu0 %v4382
      %v4384 = vpop.xlane.xlu0 %4383
      %v4385 = vsel %vm3663, %v4274, 0.0
      %4386 = vadd.xlane.f32.xlu0 %v4385
      %v4387 = vpop.xlane.xlu0 %4386
      %v4388 = vsel %vm3663, %v4276, 0.0
      %4389 = vadd.xlane.f32.xlu0 %v4388
      %v4390 = vpop.xlane.xlu0 %4389
      %v4391 = vsel %vm3663, %v4278, 0.0
      %4392 = vadd.xlane.f32.xlu0 %v4391
      %v4393 = vpop.xlane.xlu0 %4392
      %v4394 = vsel %vm3663, %v4280, 0.0
      %4395 = vadd.xlane.f32.xlu0 %v4394
      %v4396 = vpop.xlane.xlu0 %4395
      %v4397 = vsel %vm3663, %v4282, 0.0
      %4398 = vadd.xlane.f32.xlu0 %v4397
      %v4399 = vpop.xlane.xlu0 %4398
      %v4400 = vsel %vm3663, %v4284, 0.0
      %4401 = vadd.xlane.f32.xlu0 %v4400
      %v4402 = vpop.xlane.xlu0 %4401
      %v4403 = vsel %vm3663, %v4286, 0.0
      %4404 = vadd.xlane.f32.xlu0 %v4403
      %v4405 = vpop.xlane.xlu0 %4404
      %v4406 = vsel %vm3663, %v4288, 0.0
      %4407 = vadd.xlane.f32.xlu0 %v4406
      %v4408 = vpop.xlane.xlu0 %4407
      %v4409 = vsel %vm3663, %v4290, 0.0
      %4410 = vadd.xlane.f32.xlu0 %v4409
      %v4411 = vpop.xlane.xlu0 %4410
      %v4412 = vsel %vm3663, %v4292, 0.0
      %4413 = vadd.xlane.f32.xlu0 %v4412
      %v4414 = vpop.xlane.xlu0 %4413
      %v4415 = vsel %vm3663, %v4294, 0.0
      %4416 = vadd.xlane.f32.xlu0 %v4415
      %v4417 = vpop.xlane.xlu0 %4416
      %v4418 = vsel %vm3663, %v4296, 0.0
      %4419 = vadd.xlane.f32.xlu0 %v4418
      %v4420 = vpop.xlane.xlu0 %4419
      %v4421 = vsel %vm3663, %v4298, 0.0
      %4422 = vadd.xlane.f32.xlu0 %v4421
      %v4423 = vpop.xlane.xlu0 %4422
      %v4424 = vsel %vm3663, %v4300, 0.0
      %4425 = vadd.xlane.f32.xlu0 %v4424
      %v4426 = vpop.xlane.xlu0 %4425
      %v4427 = vsel %vm3663, %v4302, 0.0
      %4428 = vadd.xlane.f32.xlu0 %v4427
      %v4429 = vpop.xlane.xlu0 %4428
      %v4430 = vsel %vm3663, %v4304, 0.0
      %4431 = vadd.xlane.f32.xlu0 %v4430
      %v4432 = vpop.xlane.xlu0 %4431
      %v4433 = vrcp.pop %v4339
      %v4434 = vrcp.pop %v4342
      %v4435 = vrcp.pop %v4345
      %v4436 = vrcp.pop %v4348
      %v4437 = vrcp.pop %v4351
      %v4438 = vrcp.pop %v4354
      %v4439 = vrcp.pop %v4357
      %v4440 = vrcp.pop %v4360
      %v4441 = vrcp.pop %v4363
      %v4442 = vrcp.pop %v4366
      %v4443 = vrcp.pop %v4369
      %v4444 = vrcp.pop %v4372
      %v4445 = vrcp.pop %v4375
      %v4446 = vrcp.pop %v4378
      %v4447 = vrcp.pop %v4381
      %v4448 = vrcp.pop %v4384
      %v4449 = vrcp.pop %v4387
      %v4450 = vrcp.pop %v4390
      %v4451 = vrcp.pop %v4393
      %v4452 = vrcp.pop %v4396
      %v4453 = vrcp.pop %v4399
      %v4454 = vrcp.pop %v4402
      %v4455 = vrcp.pop %v4405
      %v4456 = vrcp.pop %v4408
      %v4457 = vrcp.pop %v4411
      %v4458 = vrcp.pop %v4414
      %v4459 = vrcp.pop %v4417
      %v4460 = vrcp.pop %v4420
      %v4461 = vrcp.pop %v4423
      %v4462 = vrcp.pop %v4426
      %v4463 = vrcp.pop %v4429
      %v4464 = vrcp.pop %v4432
      %v4465 = vmul.f32 %v4146, %v4433
      %v4466 = vmul.f32 %v4148, %v4434
      %v4467 = vmul.f32 %v4150, %v4435
      %v4468 = vmul.f32 %v4152, %v4436
      %v4469 = vmul.f32 %v4154, %v4437
      %v4470 = vmul.f32 %v4156, %v4438
      %v4471 = vmul.f32 %v4158, %v4439
      %v4472 = vmul.f32 %v4160, %v4440
      %v4473 = vmul.f32 %v4162, %v4441
      %v4474 = vmul.f32 %v4164, %v4442
      %v4475 = vmul.f32 %v4166, %v4443
      %v4476 = vmul.f32 %v4168, %v4444
      %v4477 = vmul.f32 %v4170, %v4445
      %v4478 = vmul.f32 %v4172, %v4446
      %v4479 = vmul.f32 %v4174, %v4447
      %v4480 = vmul.f32 %v4176, %v4448
      %v4481 = vmul.f32 %v4178, %v4449
      %v4482 = vmul.f32 %v4180, %v4450
      %v4483 = vmul.f32 %v4182, %v4451
      %v4484 = vmul.f32 %v4184, %v4452
      %v4485 = vmul.f32 %v4186, %v4453
      %v4486 = vmul.f32 %v4188, %v4454
      %v4487 = vmul.f32 %v4190, %v4455
      %v4488 = vmul.f32 %v4192, %v4456
      %v4489 = vmul.f32 %v4194, %v4457
      %v4490 = vmul.f32 %v4196, %v4458
      %v4491 = vmul.f32 %v4198, %v4459
      %v4492 = vmul.f32 %v4200, %v4460
      %v4493 = vmul.f32 %v4202, %v4461
      %v4494 = vmul.f32 %v4204, %v4462
      %v4495 = vmul.f32 %v4206, %v4463
      %v4496 = vmul.f32 %v4208, %v4464
      %v4497 = vsel %vm3663, %v3475, -inf
      %4498 = vmax.xlane.f32.xlu0 %v4497
      %v4499 = vpop.xlane.xlu0 %4498
      %v4500 = vsel %vm3663, %v3481, -inf
      %4501 = vmax.xlane.f32.xlu0 %v4500
      %v4502 = vpop.xlane.xlu0 %4501
      %v4503 = vsel %vm3663, %v3487, -inf
      %4504 = vmax.xlane.f32.xlu0 %v4503
      %v4505 = vpop.xlane.xlu0 %4504
      %v4506 = vsel %vm3663, %v3493, -inf
      %4507 = vmax.xlane.f32.xlu0 %v4506
      %v4508 = vpop.xlane.xlu0 %4507
      %v4509 = vsel %vm3663, %v3499, -inf
      %4510 = vmax.xlane.f32.xlu0 %v4509
      %v4511 = vpop.xlane.xlu0 %4510
      %v4512 = vsel %vm3663, %v3505, -inf
      %4513 = vmax.xlane.f32.xlu0 %v4512
      %v4514 = vpop.xlane.xlu0 %4513
      %v4515 = vsel %vm3663, %v3511, -inf
      %4516 = vmax.xlane.f32.xlu0 %v4515
      %v4517 = vpop.xlane.xlu0 %4516
      %v4518 = vsel %vm3663, %v3517, -inf
      %4519 = vmax.xlane.f32.xlu0 %v4518
      %v4520 = vpop.xlane.xlu0 %4519
      %v4521 = vsel %vm3663, %v3523, -inf
      %4522 = vmax.xlane.f32.xlu0 %v4521
      %v4523 = vpop.xlane.xlu0 %4522
      %v4524 = vsel %vm3663, %v3529, -inf
      %4525 = vmax.xlane.f32.xlu0 %v4524
      %v4526 = vpop.xlane.xlu0 %4525
      %v4527 = vsel %vm3663, %v3535, -inf
      %4528 = vmax.xlane.f32.xlu0 %v4527
      %v4529 = vpop.xlane.xlu0 %4528
      %v4530 = vsel %vm3663, %v3541, -inf
      %4531 = vmax.xlane.f32.xlu0 %v4530
      %v4532 = vpop.xlane.xlu0 %4531
      %v4533 = vsel %vm3663, %v3547, -inf
      %4534 = vmax.xlane.f32.xlu0 %v4533
      %v4535 = vpop.xlane.xlu0 %4534
      %v4536 = vsel %vm3663, %v3553, -inf
      %4537 = vmax.xlane.f32.xlu0 %v4536
      %v4538 = vpop.xlane.xlu0 %4537
      %v4539 = vsel %vm3663, %v3559, -inf
      %4540 = vmax.xlane.f32.xlu0 %v4539
      %v4541 = vpop.xlane.xlu0 %4540
      %v4542 = vsel %vm3663, %v3565, -inf
      %4543 = vmax.xlane.f32.xlu0 %v4542
      %v4544 = vpop.xlane.xlu0 %4543
      %v4545 = vsel %vm3663, %v3571, -inf
      %4546 = vmax.xlane.f32.xlu0 %v4545
      %v4547 = vpop.xlane.xlu0 %4546
      %v4548 = vsel %vm3663, %v3577, -inf
      %4549 = vmax.xlane.f32.xlu0 %v4548
      %v4550 = vpop.xlane.xlu0 %4549
      %v4551 = vsel %vm3663, %v3583, -inf
      %4552 = vmax.xlane.f32.xlu0 %v4551
      %v4553 = vpop.xlane.xlu0 %4552
      %v4554 = vsel %vm3663, %v3589, -inf
      %4555 = vmax.xlane.f32.xlu0 %v4554
      %v4556 = vpop.xlane.xlu0 %4555
      %v4557 = vsel %vm3663, %v3595, -inf
      %4558 = vmax.xlane.f32.xlu0 %v4557
      %v4559 = vpop.xlane.xlu0 %4558
      %v4560 = vsel %vm3663, %v3601, -inf
      %4561 = vmax.xlane.f32.xlu0 %v4560
      %v4562 = vpop.xlane.xlu0 %4561
      %v4563 = vsel %vm3663, %v3607, -inf
      %4564 = vmax.xlane.f32.xlu0 %v4563
      %v4565 = vpop.xlane.xlu0 %4564
      %v4566 = vsel %vm3663, %v3613, -inf
      %4567 = vmax.xlane.f32.xlu0 %v4566
      %v4568 = vpop.xlane.xlu0 %4567
      %v4569 = vsel %vm3663, %v3619, -inf
      %4570 = vmax.xlane.f32.xlu0 %v4569
      %v4571 = vpop.xlane.xlu0 %4570
      %v4572 = vsel %vm3663, %v3625, -inf
      %4573 = vmax.xlane.f32.xlu0 %v4572
      %v4574 = vpop.xlane.xlu0 %4573
      %v4575 = vsel %vm3663, %v3631, -inf
      %4576 = vmax.xlane.f32.xlu0 %v4575
      %v4577 = vpop.xlane.xlu0 %4576
      %v4578 = vsel %vm3663, %v3637, -inf
      %4579 = vmax.xlane.f32.xlu0 %v4578
      %v4580 = vpop.xlane.xlu0 %4579
      %v4581 = vsel %vm3663, %v3643, -inf
      %4582 = vmax.xlane.f32.xlu0 %v4581
      %v4583 = vpop.xlane.xlu0 %4582
      %v4584 = vsel %vm3663, %v3649, -inf
      %4585 = vmax.xlane.f32.xlu0 %v4584
      %v4586 = vpop.xlane.xlu0 %4585
      %v4587 = vsel %vm3663, %v3655, -inf
      %4588 = vmax.xlane.f32.xlu0 %v4587
      %v4589 = vpop.xlane.xlu0 %4588
      %v4590 = vsel %vm3663, %v3661, -inf
      %4591 = vmax.xlane.f32.xlu0 %v4590
      %v4592 = vpop.xlane.xlu0 %4591
      %v4593 = vsub.f32 %v3475, %v4499
      %v4594 = vsub.f32 %v3481, %v4502
      %v4595 = vsub.f32 %v3487, %v4505
      %v4596 = vsub.f32 %v3493, %v4508
      %v4597 = vsub.f32 %v3499, %v4511
      %v4598 = vsub.f32 %v3505, %v4514
      %v4599 = vsub.f32 %v3511, %v4517
      %v4600 = vsub.f32 %v3517, %v4520
      %v4601 = vsub.f32 %v3523, %v4523
      %v4602 = vsub.f32 %v3529, %v4526
      %v4603 = vsub.f32 %v3535, %v4529
      %v4604 = vsub.f32 %v3541, %v4532
      %v4605 = vsub.f32 %v3547, %v4535
      %v4606 = vsub.f32 %v3553, %v4538
      %v4607 = vsub.f32 %v3559, %v4541
      %v4608 = vsub.f32 %v3565, %v4544
      %v4609 = vsub.f32 %v3571, %v4547
      %v4610 = vsub.f32 %v3577, %v4550
      %v4611 = vsub.f32 %v3583, %v4553
      %v4612 = vsub.f32 %v3589, %v4556
      %v4613 = vsub.f32 %v3595, %v4559
      %v4614 = vsub.f32 %v3601, %v4562
      %v4615 = vsub.f32 %v3607, %v4565
      %v4616 = vsub.f32 %v3613, %v4568
      %v4617 = vsub.f32 %v3619, %v4571
      %v4618 = vsub.f32 %v3625, %v4574
      %v4619 = vsub.f32 %v3631, %v4577
      %v4620 = vsub.f32 %v3637, %v4580
      %v4621 = vsub.f32 %v3643, %v4583
      %v4622 = vsub.f32 %v3649, %v4586
      %v4623 = vsub.f32 %v3655, %v4589
      %v4624 = vsub.f32 %v3661, %v4592
      %v4625 = vmul.f32 %v4593, 1.442695
      %v4626 = vpow.pop %v4625
      %v4627 = vmul.f32 %v4594, 1.442695
      %v4628 = vpow.pop %v4627
      %v4629 = vmul.f32 %v4595, 1.442695
      %v4630 = vpow.pop %v4629
      %v4631 = vmul.f32 %v4596, 1.442695
      %v4632 = vpow.pop %v4631
      %v4633 = vmul.f32 %v4597, 1.442695
      %v4634 = vpow.pop %v4633
      %v4635 = vmul.f32 %v4598, 1.442695
      %v4636 = vpow.pop %v4635
      %v4637 = vmul.f32 %v4599, 1.442695
      %v4638 = vpow.pop %v4637
      %v4639 = vmul.f32 %v4600, 1.442695
      %v4640 = vpow.pop %v4639
      %v4641 = vmul.f32 %v4601, 1.442695
      %v4642 = vpow.pop %v4641
      %v4643 = vmul.f32 %v4602, 1.442695
      %v4644 = vpow.pop %v4643
      %v4645 = vmul.f32 %v4603, 1.442695
      %v4646 = vpow.pop %v4645
      %v4647 = vmul.f32 %v4604, 1.442695
      %v4648 = vpow.pop %v4647
      %v4649 = vmul.f32 %v4605, 1.442695
      %v4650 = vpow.pop %v4649
      %v4651 = vmul.f32 %v4606, 1.442695
      %v4652 = vpow.pop %v4651
      %v4653 = vmul.f32 %v4607, 1.442695
      %v4654 = vpow.pop %v4653
      %v4655 = vmul.f32 %v4608, 1.442695
      %v4656 = vpow.pop %v4655
      %v4657 = vmul.f32 %v4609, 1.442695
      %v4658 = vpow.pop %v4657
      %v4659 = vmul.f32 %v4610, 1.442695
      %v4660 = vpow.pop %v4659
      %v4661 = vmul.f32 %v4611, 1.442695
      %v4662 = vpow.pop %v4661
      %v4663 = vmul.f32 %v4612, 1.442695
      %v4664 = vpow.pop %v4663
      %v4665 = vmul.f32 %v4613, 1.442695
      %v4666 = vpow.pop %v4665
      %v4667 = vmul.f32 %v4614, 1.442695
      %v4668 = vpow.pop %v4667
      %v4669 = vmul.f32 %v4615, 1.442695
      %v4670 = vpow.pop %v4669
      %v4671 = vmul.f32 %v4616, 1.442695
      %v4672 = vpow.pop %v4671
      %v4673 = vmul.f32 %v4617, 1.442695
      %v4674 = vpow.pop %v4673
      %v4675 = vmul.f32 %v4618, 1.442695
      %v4676 = vpow.pop %v4675
      %v4677 = vmul.f32 %v4619, 1.442695
      %v4678 = vpow.pop %v4677
      %v4679 = vmul.f32 %v4620, 1.442695
      %v4680 = vpow.pop %v4679
      %v4681 = vmul.f32 %v4621, 1.442695
      %v4682 = vpow.pop %v4681
      %v4683 = vmul.f32 %v4622, 1.442695
      %v4684 = vpow.pop %v4683
      %v4685 = vmul.f32 %v4623, 1.442695
      %v4686 = vpow.pop %v4685
      %v4687 = vmul.f32 %v4624, 1.442695
      %v4688 = vpow.pop %v4687
      %v4689 = vsel %vm3663, %v4626, 0.0
      %4690 = vadd.xlane.f32.xlu0 %v4689
      %v4691 = vpop.xlane.xlu0 %4690
      %v4692 = vsel %vm3663, %v4628, 0.0
      %4693 = vadd.xlane.f32.xlu0 %v4692
      %v4694 = vpop.xlane.xlu0 %4693
      %v4695 = vsel %vm3663, %v4630, 0.0
      %4696 = vadd.xlane.f32.xlu0 %v4695
      %v4697 = vpop.xlane.xlu0 %4696
      %v4698 = vsel %vm3663, %v4632, 0.0
      %4699 = vadd.xlane.f32.xlu0 %v4698
      %v4700 = vpop.xlane.xlu0 %4699
      %v4701 = vsel %vm3663, %v4634, 0.0
      %4702 = vadd.xlane.f32.xlu0 %v4701
      %v4703 = vpop.xlane.xlu0 %4702
      %v4704 = vsel %vm3663, %v4636, 0.0
      %4705 = vadd.xlane.f32.xlu0 %v4704
      %v4706 = vpop.xlane.xlu0 %4705
      %v4707 = vsel %vm3663, %v4638, 0.0
      %4708 = vadd.xlane.f32.xlu0 %v4707
      %v4709 = vpop.xlane.xlu0 %4708
      %v4710 = vsel %vm3663, %v4640, 0.0
      %4711 = vadd.xlane.f32.xlu0 %v4710
      %v4712 = vpop.xlane.xlu0 %4711
      %v4713 = vsel %vm3663, %v4642, 0.0
      %4714 = vadd.xlane.f32.xlu0 %v4713
      %v4715 = vpop.xlane.xlu0 %4714
      %v4716 = vsel %vm3663, %v4644, 0.0
      %4717 = vadd.xlane.f32.xlu0 %v4716
      %v4718 = vpop.xlane.xlu0 %4717
      %v4719 = vsel %vm3663, %v4646, 0.0
      %4720 = vadd.xlane.f32.xlu0 %v4719
      %v4721 = vpop.xlane.xlu0 %4720
      %v4722 = vsel %vm3663, %v4648, 0.0
      %4723 = vadd.xlane.f32.xlu0 %v4722
      %v4724 = vpop.xlane.xlu0 %4723
      %v4725 = vsel %vm3663, %v4650, 0.0
      %4726 = vadd.xlane.f32.xlu0 %v4725
      %v4727 = vpop.xlane.xlu0 %4726
      %v4728 = vsel %vm3663, %v4652, 0.0
      %4729 = vadd.xlane.f32.xlu0 %v4728
      %v4730 = vpop.xlane.xlu0 %4729
      %v4731 = vsel %vm3663, %v4654, 0.0
      %4732 = vadd.xlane.f32.xlu0 %v4731
      %v4733 = vpop.xlane.xlu0 %4732
      %v4734 = vsel %vm3663, %v4656, 0.0
      %4735 = vadd.xlane.f32.xlu0 %v4734
      %v4736 = vpop.xlane.xlu0 %4735
      %v4737 = vsel %vm3663, %v4658, 0.0
      %4738 = vadd.xlane.f32.xlu0 %v4737
      %v4739 = vpop.xlane.xlu0 %4738
      %v4740 = vsel %vm3663, %v4660, 0.0
      %4741 = vadd.xlane.f32.xlu0 %v4740
      %v4742 = vpop.xlane.xlu0 %4741
      %v4743 = vsel %vm3663, %v4662, 0.0
      %4744 = vadd.xlane.f32.xlu0 %v4743
      %v4745 = vpop.xlane.xlu0 %4744
      %v4746 = vsel %vm3663, %v4664, 0.0
      %4747 = vadd.xlane.f32.xlu0 %v4746
      %v4748 = vpop.xlane.xlu0 %4747
      %v4749 = vsel %vm3663, %v4666, 0.0
      %4750 = vadd.xlane.f32.xlu0 %v4749
      %v4751 = vpop.xlane.xlu0 %4750
      %v4752 = vsel %vm3663, %v4668, 0.0
      %4753 = vadd.xlane.f32.xlu0 %v4752
      %v4754 = vpop.xlane.xlu0 %4753
      %v4755 = vsel %vm3663, %v4670, 0.0
      %4756 = vadd.xlane.f32.xlu0 %v4755
      %v4757 = vpop.xlane.xlu0 %4756
      %v4758 = vsel %vm3663, %v4672, 0.0
      %4759 = vadd.xlane.f32.xlu0 %v4758
      %v4760 = vpop.xlane.xlu0 %4759
      %v4761 = vsel %vm3663, %v4674, 0.0
      %4762 = vadd.xlane.f32.xlu0 %v4761
      %v4763 = vpop.xlane.xlu0 %4762
      %v4764 = vsel %vm3663, %v4676, 0.0
      %4765 = vadd.xlane.f32.xlu0 %v4764
      %v4766 = vpop.xlane.xlu0 %4765
      %v4767 = vsel %vm3663, %v4678, 0.0
      %4768 = vadd.xlane.f32.xlu0 %v4767
      %v4769 = vpop.xlane.xlu0 %4768
      %v4770 = vsel %vm3663, %v4680, 0.0
      %4771 = vadd.xlane.f32.xlu0 %v4770
      %v4772 = vpop.xlane.xlu0 %4771
      %v4773 = vsel %vm3663, %v4682, 0.0
      %4774 = vadd.xlane.f32.xlu0 %v4773
      %v4775 = vpop.xlane.xlu0 %4774
      %v4776 = vsel %vm3663, %v4684, 0.0
      %4777 = vadd.xlane.f32.xlu0 %v4776
      %v4778 = vpop.xlane.xlu0 %4777
      %v4779 = vsel %vm3663, %v4686, 0.0
      %4780 = vadd.xlane.f32.xlu0 %v4779
      %v4781 = vpop.xlane.xlu0 %4780
      %v4782 = vsel %vm3663, %v4688, 0.0
      %4783 = vadd.xlane.f32.xlu0 %v4782
      %v4784 = vpop.xlane.xlu0 %4783
      %v4785 = vrcp.pop %v4691
      %v4786 = vrcp.pop %v4694
      %v4787 = vrcp.pop %v4697
      %v4788 = vrcp.pop %v4700
      %v4789 = vrcp.pop %v4703
      %v4790 = vrcp.pop %v4706
      %v4791 = vrcp.pop %v4709
      %v4792 = vrcp.pop %v4712
      %v4793 = vrcp.pop %v4715
      %v4794 = vrcp.pop %v4718
      %v4795 = vrcp.pop %v4721
      %v4796 = vrcp.pop %v4724
      %v4797 = vrcp.pop %v4727
      %v4798 = vrcp.pop %v4730
      %v4799 = vrcp.pop %v4733
      %v4800 = vrcp.pop %v4736
      %v4801 = vrcp.pop %v4739
      %v4802 = vrcp.pop %v4742
      %v4803 = vrcp.pop %v4745
      %v4804 = vrcp.pop %v4748
      %v4805 = vrcp.pop %v4751
      %v4806 = vrcp.pop %v4754
      %v4807 = vrcp.pop %v4757
      %v4808 = vrcp.pop %v4760
      %v4809 = vrcp.pop %v4763
      %v4810 = vrcp.pop %v4766
      %v4811 = vrcp.pop %v4769
      %v4812 = vrcp.pop %v4772
      %v4813 = vrcp.pop %v4775
      %v4814 = vrcp.pop %v4778
      %v4815 = vrcp.pop %v4781
      %v4816 = vrcp.pop %v4784
      %v4817 = vmul.f32 %v4626, %v4785
      %v4818 = vmul.f32 %v4628, %v4786
      %v4819 = vmul.f32 %v4630, %v4787
      %v4820 = vmul.f32 %v4632, %v4788
      %v4821 = vmul.f32 %v4634, %v4789
      %v4822 = vmul.f32 %v4636, %v4790
      %v4823 = vmul.f32 %v4638, %v4791
      %v4824 = vmul.f32 %v4640, %v4792
      %v4825 = vmul.f32 %v4642, %v4793
      %v4826 = vmul.f32 %v4644, %v4794
      %v4827 = vmul.f32 %v4646, %v4795
      %v4828 = vmul.f32 %v4648, %v4796
      %v4829 = vmul.f32 %v4650, %v4797
      %v4830 = vmul.f32 %v4652, %v4798
      %v4831 = vmul.f32 %v4654, %v4799
      %v4832 = vmul.f32 %v4656, %v4800
      %v4833 = vmul.f32 %v4658, %v4801
      %v4834 = vmul.f32 %v4660, %v4802
      %v4835 = vmul.f32 %v4662, %v4803
      %v4836 = vmul.f32 %v4664, %v4804
      %v4837 = vmul.f32 %v4666, %v4805
      %v4838 = vmul.f32 %v4668, %v4806
      %v4839 = vmul.f32 %v4670, %v4807
      %v4840 = vmul.f32 %v4672, %v4808
      %v4841 = vmul.f32 %v4674, %v4809
      %v4842 = vmul.f32 %v4676, %v4810
      %v4843 = vmul.f32 %v4678, %v4811
      %v4844 = vmul.f32 %v4680, %v4812
      %v4845 = vmul.f32 %v4682, %v4813
      %v4846 = vmul.f32 %v4684, %v4814
      %v4847 = vmul.f32 %v4686, %v4815
      %v4848 = vmul.f32 %v4688, %v4816
      %v4849 = vsel %vm4016, %v3475, -inf
      %4850 = vmax.xlane.f32.xlu0 %v4849
      %v4851 = vpop.xlane.xlu0 %4850
      %v4852 = vsel %vm4016, %v3481, -inf
      %4853 = vmax.xlane.f32.xlu0 %v4852
      %v4854 = vpop.xlane.xlu0 %4853
      %v4855 = vsel %vm4016, %v3487, -inf
      %4856 = vmax.xlane.f32.xlu0 %v4855
      %v4857 = vpop.xlane.xlu0 %4856
      %v4858 = vsel %vm4016, %v3493, -inf
      %4859 = vmax.xlane.f32.xlu0 %v4858
      %v4860 = vpop.xlane.xlu0 %4859
      %v4861 = vsel %vm4016, %v3499, -inf
      %4862 = vmax.xlane.f32.xlu0 %v4861
      %v4863 = vpop.xlane.xlu0 %4862
      %v4864 = vsel %vm4016, %v3505, -inf
      %4865 = vmax.xlane.f32.xlu0 %v4864
      %v4866 = vpop.xlane.xlu0 %4865
      %v4867 = vsel %vm4016, %v3511, -inf
      %4868 = vmax.xlane.f32.xlu0 %v4867
      %v4869 = vpop.xlane.xlu0 %4868
      %v4870 = vsel %vm4016, %v3517, -inf
      %4871 = vmax.xlane.f32.xlu0 %v4870
      %v4872 = vpop.xlane.xlu0 %4871
      %v4873 = vsel %vm4016, %v3523, -inf
      %4874 = vmax.xlane.f32.xlu0 %v4873
      %v4875 = vpop.xlane.xlu0 %4874
      %v4876 = vsel %vm4016, %v3529, -inf
      %4877 = vmax.xlane.f32.xlu0 %v4876
      %v4878 = vpop.xlane.xlu0 %4877
      %v4879 = vsel %vm4016, %v3535, -inf
      %4880 = vmax.xlane.f32.xlu0 %v4879
      %v4881 = vpop.xlane.xlu0 %4880
      %v4882 = vsel %vm4016, %v3541, -inf
      %4883 = vmax.xlane.f32.xlu0 %v4882
      %v4884 = vpop.xlane.xlu0 %4883
      %v4885 = vsel %vm4016, %v3547, -inf
      %4886 = vmax.xlane.f32.xlu0 %v4885
      %v4887 = vpop.xlane.xlu0 %4886
      %v4888 = vsel %vm4016, %v3553, -inf
      %4889 = vmax.xlane.f32.xlu0 %v4888
      %v4890 = vpop.xlane.xlu0 %4889
      %v4891 = vsel %vm4016, %v3559, -inf
      %4892 = vmax.xlane.f32.xlu0 %v4891
      %v4893 = vpop.xlane.xlu0 %4892
      %v4894 = vsel %vm4016, %v3565, -inf
      %4895 = vmax.xlane.f32.xlu0 %v4894
      %v4896 = vpop.xlane.xlu0 %4895
      %v4897 = vsel %vm4016, %v3571, -inf
      %4898 = vmax.xlane.f32.xlu0 %v4897
      %v4899 = vpop.xlane.xlu0 %4898
      %v4900 = vsel %vm4016, %v3577, -inf
      %4901 = vmax.xlane.f32.xlu0 %v4900
      %v4902 = vpop.xlane.xlu0 %4901
      %v4903 = vsel %vm4016, %v3583, -inf
      %4904 = vmax.xlane.f32.xlu0 %v4903
      %v4905 = vpop.xlane.xlu0 %4904
      %v4906 = vsel %vm4016, %v3589, -inf
      %4907 = vmax.xlane.f32.xlu0 %v4906
      %v4908 = vpop.xlane.xlu0 %4907
      %v4909 = vsel %vm4016, %v3595, -inf
      %4910 = vmax.xlane.f32.xlu0 %v4909
      %v4911 = vpop.xlane.xlu0 %4910
      %v4912 = vsel %vm4016, %v3601, -inf
      %4913 = vmax.xlane.f32.xlu0 %v4912
      %v4914 = vpop.xlane.xlu0 %4913
      %v4915 = vsel %vm4016, %v3607, -inf
      %4916 = vmax.xlane.f32.xlu0 %v4915
      %v4917 = vpop.xlane.xlu0 %4916
      %v4918 = vsel %vm4016, %v3613, -inf
      %4919 = vmax.xlane.f32.xlu0 %v4918
      %v4920 = vpop.xlane.xlu0 %4919
      %v4921 = vsel %vm4016, %v3619, -inf
      %4922 = vmax.xlane.f32.xlu0 %v4921
      %v4923 = vpop.xlane.xlu0 %4922
      %v4924 = vsel %vm4016, %v3625, -inf
      %4925 = vmax.xlane.f32.xlu0 %v4924
      %v4926 = vpop.xlane.xlu0 %4925
      %v4927 = vsel %vm4016, %v3631, -inf
      %4928 = vmax.xlane.f32.xlu0 %v4927
      %v4929 = vpop.xlane.xlu0 %4928
      %v4930 = vsel %vm4016, %v3637, -inf
      %4931 = vmax.xlane.f32.xlu0 %v4930
      %v4932 = vpop.xlane.xlu0 %4931
      %v4933 = vsel %vm4016, %v3643, -inf
      %4934 = vmax.xlane.f32.xlu0 %v4933
      %v4935 = vpop.xlane.xlu0 %4934
      %v4936 = vsel %vm4016, %v3649, -inf
      %4937 = vmax.xlane.f32.xlu0 %v4936
      %v4938 = vpop.xlane.xlu0 %4937
      %v4939 = vsel %vm4016, %v3655, -inf
      %4940 = vmax.xlane.f32.xlu0 %v4939
      %v4941 = vpop.xlane.xlu0 %4940
      %v4942 = vsel %vm4016, %v3661, -inf
      %4943 = vmax.xlane.f32.xlu0 %v4942
      %v4944 = vpop.xlane.xlu0 %4943
      %v4945 = vsub.f32 %v3475, %v4851
      %v4946 = vsub.f32 %v3481, %v4854
      %v4947 = vsub.f32 %v3487, %v4857
      %v4948 = vsub.f32 %v3493, %v4860
      %v4949 = vsub.f32 %v3499, %v4863
      %v4950 = vsub.f32 %v3505, %v4866
      %v4951 = vsub.f32 %v3511, %v4869
      %v4952 = vsub.f32 %v3517, %v4872
      %v4953 = vsub.f32 %v3523, %v4875
      %v4954 = vsub.f32 %v3529, %v4878
      %v4955 = vsub.f32 %v3535, %v4881
      %v4956 = vsub.f32 %v3541, %v4884
      %v4957 = vsub.f32 %v3547, %v4887
      %v4958 = vsub.f32 %v3553, %v4890
      %v4959 = vsub.f32 %v3559, %v4893
      %v4960 = vsub.f32 %v3565, %v4896
      %v4961 = vsub.f32 %v3571, %v4899
      %v4962 = vsub.f32 %v3577, %v4902
      %v4963 = vsub.f32 %v3583, %v4905
      %v4964 = vsub.f32 %v3589, %v4908
      %v4965 = vsub.f32 %v3595, %v4911
      %v4966 = vsub.f32 %v3601, %v4914
      %v4967 = vsub.f32 %v3607, %v4917
      %v4968 = vsub.f32 %v3613, %v4920
      %v4969 = vsub.f32 %v3619, %v4923
      %v4970 = vsub.f32 %v3625, %v4926
      %v4971 = vsub.f32 %v3631, %v4929
      %v4972 = vsub.f32 %v3637, %v4932
      %v4973 = vsub.f32 %v3643, %v4935
      %v4974 = vsub.f32 %v3649, %v4938
      %v4975 = vsub.f32 %v3655, %v4941
      %v4976 = vsub.f32 %v3661, %v4944
      %v4977 = vmul.f32 %v4945, 1.442695
      %v4978 = vpow.pop %v4977
      %v4979 = vmul.f32 %v4946, 1.442695
      %v4980 = vpow.pop %v4979
      %v4981 = vmul.f32 %v4947, 1.442695
      %v4982 = vpow.pop %v4981
      %v4983 = vmul.f32 %v4948, 1.442695
      %v4984 = vpow.pop %v4983
      %v4985 = vmul.f32 %v4949, 1.442695
      %v4986 = vpow.pop %v4985
      %v4987 = vmul.f32 %v4950, 1.442695
      %v4988 = vpow.pop %v4987
      %v4989 = vmul.f32 %v4951, 1.442695
      %v4990 = vpow.pop %v4989
      %v4991 = vmul.f32 %v4952, 1.442695
      %v4992 = vpow.pop %v4991
      %v4993 = vmul.f32 %v4953, 1.442695
      %v4994 = vpow.pop %v4993
      %v4995 = vmul.f32 %v4954, 1.442695
      %v4996 = vpow.pop %v4995
      %v4997 = vmul.f32 %v4955, 1.442695
      %v4998 = vpow.pop %v4997
      %v4999 = vmul.f32 %v4956, 1.442695
      %v5000 = vpow.pop %v4999
      %v5001 = vmul.f32 %v4957, 1.442695
      %v5002 = vpow.pop %v5001
      %v5003 = vmul.f32 %v4958, 1.442695
      %v5004 = vpow.pop %v5003
      %v5005 = vmul.f32 %v4959, 1.442695
      %v5006 = vpow.pop %v5005
      %v5007 = vmul.f32 %v4960, 1.442695
      %v5008 = vpow.pop %v5007
      %v5009 = vmul.f32 %v4961, 1.442695
      %v5010 = vpow.pop %v5009
      %v5011 = vmul.f32 %v4962, 1.442695
      %v5012 = vpow.pop %v5011
      %v5013 = vmul.f32 %v4963, 1.442695
      %v5014 = vpow.pop %v5013
      %v5015 = vmul.f32 %v4964, 1.442695
      %v5016 = vpow.pop %v5015
      %v5017 = vmul.f32 %v4965, 1.442695
      %v5018 = vpow.pop %v5017
      %v5019 = vmul.f32 %v4966, 1.442695
      %v5020 = vpow.pop %v5019
      %v5021 = vmul.f32 %v4967, 1.442695
      %v5022 = vpow.pop %v5021
      %v5023 = vmul.f32 %v4968, 1.442695
      %v5024 = vpow.pop %v5023
      %v5025 = vmul.f32 %v4969, 1.442695
      %v5026 = vpow.pop %v5025
      %v5027 = vmul.f32 %v4970, 1.442695
      %v5028 = vpow.pop %v5027
      %v5029 = vmul.f32 %v4971, 1.442695
      %v5030 = vpow.pop %v5029
      %v5031 = vmul.f32 %v4972, 1.442695
      %v5032 = vpow.pop %v5031
      %v5033 = vmul.f32 %v4973, 1.442695
      %v5034 = vpow.pop %v5033
      %v5035 = vmul.f32 %v4974, 1.442695
      %v5036 = vpow.pop %v5035
      %v5037 = vmul.f32 %v4975, 1.442695
      %v5038 = vpow.pop %v5037
      %v5039 = vmul.f32 %v4976, 1.442695
      %v5040 = vpow.pop %v5039
      %5073 = vrot.lane.b32.xlu0 %v4978, 64
      %v5074 = vpop.permute.xlu0 %5073
      %5075 = vrot.lane.b32.xlu0 %v4980, 64
      %v5076 = vpop.permute.xlu0 %5075
      %5077 = vrot.lane.b32.xlu0 %v4982, 64
      %v5078 = vpop.permute.xlu0 %5077
      %5079 = vrot.lane.b32.xlu0 %v4984, 64
      %v5080 = vpop.permute.xlu0 %5079
      %5081 = vrot.lane.b32.xlu0 %v4986, 64
      %v5082 = vpop.permute.xlu0 %5081
      %5083 = vrot.lane.b32.xlu0 %v4988, 64
      %v5084 = vpop.permute.xlu0 %5083
      %5085 = vrot.lane.b32.xlu0 %v4990, 64
      %v5086 = vpop.permute.xlu0 %5085
      %5087 = vrot.lane.b32.xlu0 %v4992, 64
      %v5088 = vpop.permute.xlu0 %5087
      %5089 = vrot.lane.b32.xlu0 %v4994, 64
      %v5090 = vpop.permute.xlu0 %5089
      %5091 = vrot.lane.b32.xlu0 %v4996, 64
      %v5092 = vpop.permute.xlu0 %5091
      %5093 = vrot.lane.b32.xlu0 %v4998, 64
      %v5094 = vpop.permute.xlu0 %5093
      %5095 = vrot.lane.b32.xlu0 %v5000, 64
      %v5096 = vpop.permute.xlu0 %5095
      %5097 = vrot.lane.b32.xlu0 %v5002, 64
      %v5098 = vpop.permute.xlu0 %5097
      %5099 = vrot.lane.b32.xlu0 %v5004, 64
      %v5100 = vpop.permute.xlu0 %5099
      %5101 = vrot.lane.b32.xlu0 %v5006, 64
      %v5102 = vpop.permute.xlu0 %5101
      %5103 = vrot.lane.b32.xlu0 %v5008, 64
      %v5104 = vpop.permute.xlu0 %5103
      %5105 = vrot.lane.b32.xlu0 %v5010, 64
      %v5106 = vpop.permute.xlu0 %5105
      %5107 = vrot.lane.b32.xlu0 %v5012, 64
      %v5108 = vpop.permute.xlu0 %5107
      %5109 = vrot.lane.b32.xlu0 %v5014, 64
      %v5110 = vpop.permute.xlu0 %5109
      %5111 = vrot.lane.b32.xlu0 %v5016, 64
      %v5112 = vpop.permute.xlu0 %5111
      %5113 = vrot.lane.b32.xlu0 %v5018, 64
      %v5114 = vpop.permute.xlu0 %5113
      %5115 = vrot.lane.b32.xlu0 %v5020, 64
      %v5116 = vpop.permute.xlu0 %5115
      %5117 = vrot.lane.b32.xlu0 %v5022, 64
      %v5118 = vpop.permute.xlu0 %5117
      %5119 = vrot.lane.b32.xlu0 %v5024, 64
      %v5120 = vpop.permute.xlu0 %5119
      %5121 = vrot.lane.b32.xlu0 %v5026, 64
      %v5122 = vpop.permute.xlu0 %5121
      %5123 = vrot.lane.b32.xlu0 %v5028, 64
      %v5124 = vpop.permute.xlu0 %5123
      %5125 = vrot.lane.b32.xlu0 %v5030, 64
      %v5126 = vpop.permute.xlu0 %5125
      %5127 = vrot.lane.b32.xlu0 %v5032, 64
      %v5128 = vpop.permute.xlu0 %5127
      %5129 = vrot.lane.b32.xlu0 %v5034, 64
      %v5130 = vpop.permute.xlu0 %5129
      %5131 = vrot.lane.b32.xlu0 %v5036, 64
      %v5132 = vpop.permute.xlu0 %5131
      %5133 = vrot.lane.b32.xlu0 %v5038, 64
      %v5134 = vpop.permute.xlu0 %5133
      %5135 = vrot.lane.b32.xlu0 %v5040, 64
      %v5136 = vpop.permute.xlu0 %5135
      %v5169 = vsel %vm3663, %v5074, 0.0
      %5170 = vadd.xlane.f32.xlu0 %v5169
      %v5171 = vpop.xlane.xlu0 %5170
      %v5172 = vsel %vm3663, %v5076, 0.0
      %5173 = vadd.xlane.f32.xlu0 %v5172
      %v5174 = vpop.xlane.xlu0 %5173
      %v5175 = vsel %vm3663, %v5078, 0.0
      %5176 = vadd.xlane.f32.xlu0 %v5175
      %v5177 = vpop.xlane.xlu0 %5176
      %v5178 = vsel %vm3663, %v5080, 0.0
      %5179 = vadd.xlane.f32.xlu0 %v5178
      %v5180 = vpop.xlane.xlu0 %5179
      %v5181 = vsel %vm3663, %v5082, 0.0
      %5182 = vadd.xlane.f32.xlu0 %v5181
      %v5183 = vpop.xlane.xlu0 %5182
      %v5184 = vsel %vm3663, %v5084, 0.0
      %5185 = vadd.xlane.f32.xlu0 %v5184
      %v5186 = vpop.xlane.xlu0 %5185
      %v5187 = vsel %vm3663, %v5086, 0.0
      %5188 = vadd.xlane.f32.xlu0 %v5187
      %v5189 = vpop.xlane.xlu0 %5188
      %v5190 = vsel %vm3663, %v5088, 0.0
      %5191 = vadd.xlane.f32.xlu0 %v5190
      %v5192 = vpop.xlane.xlu0 %5191
      %v5193 = vsel %vm3663, %v5090, 0.0
      %5194 = vadd.xlane.f32.xlu0 %v5193
      %v5195 = vpop.xlane.xlu0 %5194
      %v5196 = vsel %vm3663, %v5092, 0.0
      %5197 = vadd.xlane.f32.xlu0 %v5196
      %v5198 = vpop.xlane.xlu0 %5197
      %v5199 = vsel %vm3663, %v5094, 0.0
      %5200 = vadd.xlane.f32.xlu0 %v5199
      %v5201 = vpop.xlane.xlu0 %5200
      %v5202 = vsel %vm3663, %v5096, 0.0
      %5203 = vadd.xlane.f32.xlu0 %v5202
      %v5204 = vpop.xlane.xlu0 %5203
      %v5205 = vsel %vm3663, %v5098, 0.0
      %5206 = vadd.xlane.f32.xlu0 %v5205
      %v5207 = vpop.xlane.xlu0 %5206
      %v5208 = vsel %vm3663, %v5100, 0.0
      %5209 = vadd.xlane.f32.xlu0 %v5208
      %v5210 = vpop.xlane.xlu0 %5209
      %v5211 = vsel %vm3663, %v5102, 0.0
      %5212 = vadd.xlane.f32.xlu0 %v5211
      %v5213 = vpop.xlane.xlu0 %5212
      %v5214 = vsel %vm3663, %v5104, 0.0
      %5215 = vadd.xlane.f32.xlu0 %v5214
      %v5216 = vpop.xlane.xlu0 %5215
      %v5217 = vsel %vm3663, %v5106, 0.0
      %5218 = vadd.xlane.f32.xlu0 %v5217
      %v5219 = vpop.xlane.xlu0 %5218
      %v5220 = vsel %vm3663, %v5108, 0.0
      %5221 = vadd.xlane.f32.xlu0 %v5220
      %v5222 = vpop.xlane.xlu0 %5221
      %v5223 = vsel %vm3663, %v5110, 0.0
      %5224 = vadd.xlane.f32.xlu0 %v5223
      %v5225 = vpop.xlane.xlu0 %5224
      %v5226 = vsel %vm3663, %v5112, 0.0
      %5227 = vadd.xlane.f32.xlu0 %v5226
      %v5228 = vpop.xlane.xlu0 %5227
      %v5229 = vsel %vm3663, %v5114, 0.0
      %5230 = vadd.xlane.f32.xlu0 %v5229
      %v5231 = vpop.xlane.xlu0 %5230
      %v5232 = vsel %vm3663, %v5116, 0.0
      %5233 = vadd.xlane.f32.xlu0 %v5232
      %v5234 = vpop.xlane.xlu0 %5233
      %v5235 = vsel %vm3663, %v5118, 0.0
      %5236 = vadd.xlane.f32.xlu0 %v5235
      %v5237 = vpop.xlane.xlu0 %5236
      %v5238 = vsel %vm3663, %v5120, 0.0
      %5239 = vadd.xlane.f32.xlu0 %v5238
      %v5240 = vpop.xlane.xlu0 %5239
      %v5241 = vsel %vm3663, %v5122, 0.0
      %5242 = vadd.xlane.f32.xlu0 %v5241
      %v5243 = vpop.xlane.xlu0 %5242
      %v5244 = vsel %vm3663, %v5124, 0.0
      %5245 = vadd.xlane.f32.xlu0 %v5244
      %v5246 = vpop.xlane.xlu0 %5245
      %v5247 = vsel %vm3663, %v5126, 0.0
      %5248 = vadd.xlane.f32.xlu0 %v5247
      %v5249 = vpop.xlane.xlu0 %5248
      %v5250 = vsel %vm3663, %v5128, 0.0
      %5251 = vadd.xlane.f32.xlu0 %v5250
      %v5252 = vpop.xlane.xlu0 %5251
      %v5253 = vsel %vm3663, %v5130, 0.0
      %5254 = vadd.xlane.f32.xlu0 %v5253
      %v5255 = vpop.xlane.xlu0 %5254
      %v5256 = vsel %vm3663, %v5132, 0.0
      %5257 = vadd.xlane.f32.xlu0 %v5256
      %v5258 = vpop.xlane.xlu0 %5257
      %v5259 = vsel %vm3663, %v5134, 0.0
      %5260 = vadd.xlane.f32.xlu0 %v5259
      %v5261 = vpop.xlane.xlu0 %5260
      %v5262 = vsel %vm3663, %v5136, 0.0
      %5263 = vadd.xlane.f32.xlu0 %v5262
      %v5264 = vpop.xlane.xlu0 %5263
      %v5265 = vrcp.pop %v5171
      %v5266 = vrcp.pop %v5174
      %v5267 = vrcp.pop %v5177
      %v5268 = vrcp.pop %v5180
      %v5269 = vrcp.pop %v5183
      %v5270 = vrcp.pop %v5186
      %v5271 = vrcp.pop %v5189
      %v5272 = vrcp.pop %v5192
      %v5273 = vrcp.pop %v5195
      %v5274 = vrcp.pop %v5198
      %v5275 = vrcp.pop %v5201
      %v5276 = vrcp.pop %v5204
      %v5277 = vrcp.pop %v5207
      %v5278 = vrcp.pop %v5210
      %v5279 = vrcp.pop %v5213
      %v5280 = vrcp.pop %v5216
      %v5281 = vrcp.pop %v5219
      %v5282 = vrcp.pop %v5222
      %v5283 = vrcp.pop %v5225
      %v5284 = vrcp.pop %v5228
      %v5285 = vrcp.pop %v5231
      %v5286 = vrcp.pop %v5234
      %v5287 = vrcp.pop %v5237
      %v5288 = vrcp.pop %v5240
      %v5289 = vrcp.pop %v5243
      %v5290 = vrcp.pop %v5246
      %v5291 = vrcp.pop %v5249
      %v5292 = vrcp.pop %v5252
      %v5293 = vrcp.pop %v5255
      %v5294 = vrcp.pop %v5258
      %v5295 = vrcp.pop %v5261
      %v5296 = vrcp.pop %v5264
      %v5297 = vmul.f32 %v4978, %v5265
      %v5298 = vmul.f32 %v4980, %v5266
      %v5299 = vmul.f32 %v4982, %v5267
      %v5300 = vmul.f32 %v4984, %v5268
      %v5301 = vmul.f32 %v4986, %v5269
      %v5302 = vmul.f32 %v4988, %v5270
      %v5303 = vmul.f32 %v4990, %v5271
      %v5304 = vmul.f32 %v4992, %v5272
      %v5305 = vmul.f32 %v4994, %v5273
      %v5306 = vmul.f32 %v4996, %v5274
      %v5307 = vmul.f32 %v4998, %v5275
      %v5308 = vmul.f32 %v5000, %v5276
      %v5309 = vmul.f32 %v5002, %v5277
      %v5310 = vmul.f32 %v5004, %v5278
      %v5311 = vmul.f32 %v5006, %v5279
      %v5312 = vmul.f32 %v5008, %v5280
      %v5313 = vmul.f32 %v5010, %v5281
      %v5314 = vmul.f32 %v5012, %v5282
      %v5315 = vmul.f32 %v5014, %v5283
      %v5316 = vmul.f32 %v5016, %v5284
      %v5317 = vmul.f32 %v5018, %v5285
      %v5318 = vmul.f32 %v5020, %v5286
      %v5319 = vmul.f32 %v5022, %v5287
      %v5320 = vmul.f32 %v5024, %v5288
      %v5321 = vmul.f32 %v5026, %v5289
      %v5322 = vmul.f32 %v5028, %v5290
      %v5323 = vmul.f32 %v5030, %v5291
      %v5324 = vmul.f32 %v5032, %v5292
      %v5325 = vmul.f32 %v5034, %v5293
      %v5326 = vmul.f32 %v5036, %v5294
      %v5327 = vmul.f32 %v5038, %v5295
      %v5328 = vmul.f32 %v5040, %v5296
      %v5329 = vsel %vm3663, %v3984, %v4465
      %v5330 = vsel %vm3663, %v3985, %v4466
      %v5331 = vsel %vm3663, %v3986, %v4467
      %v5332 = vsel %vm3663, %v3987, %v4468
      %v5333 = vsel %vm3663, %v3988, %v4469
      %v5334 = vsel %vm3663, %v3989, %v4470
      %v5335 = vsel %vm3663, %v3990, %v4471
      %v5336 = vsel %vm3663, %v3991, %v4472
      %v5337 = vsel %vm3663, %v3992, %v4473
      %v5338 = vsel %vm3663, %v3993, %v4474
      %v5339 = vsel %vm3663, %v3994, %v4475
      %v5340 = vsel %vm3663, %v3995, %v4476
      %v5341 = vsel %vm3663, %v3996, %v4477
      %v5342 = vsel %vm3663, %v3997, %v4478
      %v5343 = vsel %vm3663, %v3998, %v4479
      %v5344 = vsel %vm3663, %v3999, %v4480
      %v5345 = vsel %vm3663, %v4000, %v4481
      %v5346 = vsel %vm3663, %v4001, %v4482
      %v5347 = vsel %vm3663, %v4002, %v4483
      %v5348 = vsel %vm3663, %v4003, %v4484
      %v5349 = vsel %vm3663, %v4004, %v4485
      %v5350 = vsel %vm3663, %v4005, %v4486
      %v5351 = vsel %vm3663, %v4006, %v4487
      %v5352 = vsel %vm3663, %v4007, %v4488
      %v5353 = vsel %vm3663, %v4008, %v4489
      %v5354 = vsel %vm3663, %v4009, %v4490
      %v5355 = vsel %vm3663, %v4010, %v4491
      %v5356 = vsel %vm3663, %v4011, %v4492
      %v5357 = vsel %vm3663, %v4012, %v4493
      %v5358 = vsel %vm3663, %v4013, %v4494
      %v5359 = vsel %vm3663, %v4014, %v4495
      %v5360 = vsel %vm3663, %v4015, %v4496
      %v5361 = vsel %vm3663, %v4817, %v5297
      %v5362 = vsel %vm3663, %v4818, %v5298
      %v5363 = vsel %vm3663, %v4819, %v5299
      %v5364 = vsel %vm3663, %v4820, %v5300
      %v5365 = vsel %vm3663, %v4821, %v5301
      %v5366 = vsel %vm3663, %v4822, %v5302
      %v5367 = vsel %vm3663, %v4823, %v5303
      %v5368 = vsel %vm3663, %v4824, %v5304
      %v5369 = vsel %vm3663, %v4825, %v5305
      %v5370 = vsel %vm3663, %v4826, %v5306
      %v5371 = vsel %vm3663, %v4827, %v5307
      %v5372 = vsel %vm3663, %v4828, %v5308
      %v5373 = vsel %vm3663, %v4829, %v5309
      %v5374 = vsel %vm3663, %v4830, %v5310
      %v5375 = vsel %vm3663, %v4831, %v5311
      %v5376 = vsel %vm3663, %v4832, %v5312
      %v5377 = vsel %vm3663, %v4833, %v5313
      %v5378 = vsel %vm3663, %v4834, %v5314
      %v5379 = vsel %vm3663, %v4835, %v5315
      %v5380 = vsel %vm3663, %v4836, %v5316
      %v5381 = vsel %vm3663, %v4837, %v5317
      %v5382 = vsel %vm3663, %v4838, %v5318
      %v5383 = vsel %vm3663, %v4839, %v5319
      %v5384 = vsel %vm3663, %v4840, %v5320
      %v5385 = vsel %vm3663, %v4841, %v5321
      %v5386 = vsel %vm3663, %v4842, %v5322
      %v5387 = vsel %vm3663, %v4843, %v5323
      %v5388 = vsel %vm3663, %v4844, %v5324
      %v5389 = vsel %vm3663, %v4845, %v5325
      %v5390 = vsel %vm3663, %v4846, %v5326
      %v5391 = vsel %vm3663, %v4847, %v5327
      %v5392 = vsel %vm3663, %v4848, %v5328
      %5393 = vmatprep.subr.mxu0 0.0
      %5394 = vmatpush1.msra.mxu0 %v3118
      %5395 = vmatprep.subr.mxu0 0.0
      %5396 = vmatpush1.msra.mxu0 %v3119
      %5397 = vmatprep.subr.mxu0 0.0
      %5398 = vmatpush1.msra.mxu0 %v3120
      %5399 = vmatprep.subr.mxu0 0.0
      %5400 = vmatpush1.msra.mxu0 %v3121
      %5401 = vmatprep.subr.mxu0 0.0
      %5402 = vmatpush1.msra.mxu0 %v3122
      %5403 = vmatprep.subr.mxu0 0.0
      %5404 = vmatpush1.msra.mxu0 %v3123
      %5405 = vmatprep.subr.mxu0 0.0
      %5406 = vmatpush1.msra.mxu0 %v3124
      %5407 = vmatprep.subr.mxu0 0.0
      %5408 = vmatpush1.msra.mxu0 %v3125
      %5409 = vmatprep.subr.mxu0 0.0
      %5410 = vmatpush1.msra.mxu0 %v3126
      %5411 = vmatprep.subr.mxu0 0.0
      %5412 = vmatpush1.msra.mxu0 %v3127
      %5413 = vmatprep.subr.mxu0 0.0
      %5414 = vmatpush1.msra.mxu0 %v3128
      %5415 = vmatprep.subr.mxu0 0.0
      %5416 = vmatpush1.msra.mxu0 %v3129
      %5417 = vmatprep.subr.mxu0 0.0
      %5418 = vmatpush1.msra.mxu0 %v3130
      %5419 = vmatprep.subr.mxu0 0.0
      %5420 = vmatpush1.msra.mxu0 %v3131
      %5421 = vmatprep.subr.mxu0 0.0
      %5422 = vmatpush1.msra.mxu0 %v3132
      %5423 = vmatprep.subr.mxu0 0.0
      %5424 = vmatpush1.msra.mxu0 %v3133
      %5425 = vmatprep.subr.mxu0 0.0
      %5426 = vmatpush1.msra.mxu0 %v3134
      %5427 = vmatprep.subr.mxu0 0.0
      %5428 = vmatpush1.msra.mxu0 %v3135
      %5429 = vmatprep.subr.mxu0 0.0
      %5430 = vmatpush1.msra.mxu0 %v3136
      %5431 = vmatprep.subr.mxu0 0.0
      %5432 = vmatpush1.msra.mxu0 %v3137
      %5433 = vmatprep.subr.mxu0 0.0
      %5434 = vmatpush1.msra.mxu0 %v3138
      %5435 = vmatprep.subr.mxu0 0.0
      %5436 = vmatpush1.msra.mxu0 %v3139
      %5437 = vmatprep.subr.mxu0 0.0
      %5438 = vmatpush1.msra.mxu0 %v3140
      %5439 = vmatprep.subr.mxu0 0.0
      %5440 = vmatpush1.msra.mxu0 %v3141
      %5441 = vmatprep.subr.mxu0 0.0
      %5442 = vmatpush1.msra.mxu0 %v3142
      %5443 = vmatprep.subr.mxu0 0.0
      %5444 = vmatpush1.msra.mxu0 %v3143
      %5445 = vmatprep.subr.mxu0 0.0
      %5446 = vmatpush1.msra.mxu0 %v3144
      %5447 = vmatprep.subr.mxu0 0.0
      %5448 = vmatpush1.msra.mxu0 %v3145
      %5449 = vmatprep.subr.mxu0 0.0
      %5450 = vmatpush1.msra.mxu0 %v3146
      %5451 = vmatprep.subr.mxu0 0.0
      %5452 = vmatpush1.msra.mxu0 %v3147
      %5453 = vmatprep.subr.mxu0 0.0
      %5454 = vmatpush1.msra.mxu0 %v3148
      %5455 = vmatprep.subr.mxu0 0.0
      %5456 = vmatpush1.msra.mxu0 %v3149
      %5457 = vmatprep.mubr.f32.mxu0 %v5361
      %5458 = vmatmul.mubr.f32.gmra.mrb[0].mxu0 %v5329
      %v5459 = vpop.f32.mrb[0].mxu0
      %v5460 = vadd.f32 0.0, %v5459
      %v5461 = vpop.f32.mrb[0].mxu0
      %5462 = vmatprep.mubr.f32.mxu0 %v5362
      %5463 = vmatmul.mubr.f32.gmra.mrb[0].mxu0 %v5330
      %v5464 = vpop.f32.mrb[0].mxu0
      %v5465 = vadd.f32 0.0, %v5464
      %v5466 = vpop.f32.mrb[0].mxu0
      %5467 = vmatprep.mubr.f32.mxu0 %v5363
      %5468 = vmatmul.mubr.f32.gmra.mrb[0].mxu0 %v5331
      %v5469 = vpop.f32.mrb[0].mxu0
      %v5470 = vadd.f32 0.0, %v5469
      %v5471 = vpop.f32.mrb[0].mxu0
      %5472 = vmatprep.mubr.f32.mxu0 %v5364
      %5473 = vmatmul.mubr.f32.gmra.mrb[0].mxu0 %v5332
      %v5474 = vpop.f32.mrb[0].mxu0
      %v5475 = vadd.f32 0.0, %v5474
      %v5476 = vpop.f32.mrb[0].mxu0
      %5477 = vmatprep.mubr.f32.mxu0 %v5365
      %5478 = vmatmul.mubr.f32.gmra.mrb[0].mxu0 %v5333
      %v5479 = vpop.f32.mrb[0].mxu0
      %v5480 = vadd.f32 0.0, %v5479
      %v5481 = vpop.f32.mrb[0].mxu0
      %5482 = vmatprep.mubr.f32.mxu0 %v5366
      %5483 = vmatmul.mubr.f32.gmra.mrb[0].mxu0 %v5334
      %v5484 = vpop.f32.mrb[0].mxu0
      %v5485 = vadd.f32 0.0, %v5484
      %v5486 = vpop.f32.mrb[0].mxu0
      %5487 = vmatprep.mubr.f32.mxu0 %v5367
      %5488 = vmatmul.mubr.f32.gmra.mrb[0].mxu0 %v5335
      %v5489 = vpop.f32.mrb[0].mxu0
      %v5490 = vadd.f32 0.0, %v5489
      %v5491 = vpop.f32.mrb[0].mxu0
      %5492 = vmatprep.mubr.f32.mxu0 %v5368
      %5493 = vmatmul.mubr.f32.gmra.mrb[0].mxu0 %v5336
      %v5494 = vpop.f32.mrb[0].mxu0
      %v5495 = vadd.f32 0.0, %v5494
      %v5496 = vpop.f32.mrb[0].mxu0
      %5497 = vmatprep.mubr.f32.mxu0 %v5369
      %5498 = vmatmul.mubr.f32.gmra.mrb[0].mxu0 %v5337
      %v5499 = vpop.f32.mrb[0].mxu0
      %v5500 = vadd.f32 0.0, %v5499
      %v5501 = vpop.f32.mrb[0].mxu0
      %5502 = vmatprep.mubr.f32.mxu0 %v5370
      %5503 = vmatmul.mubr.f32.gmra.mrb[0].mxu0 %v5338
      %v5504 = vpop.f32.mrb[0].mxu0
      %v5505 = vadd.f32 0.0, %v5504
      %v5506 = vpop.f32.mrb[0].mxu0
      %5507 = vmatprep.mubr.f32.mxu0 %v5371
      %5508 = vmatmul.mubr.f32.gmra.mrb[0].mxu0 %v5339
      %v5509 = vpop.f32.mrb[0].mxu0
      %v5510 = vadd.f32 0.0, %v5509
      %v5511 = vpop.f32.mrb[0].mxu0
      %5512 = vmatprep.mubr.f32.mxu0 %v5372
      %5513 = vmatmul.mubr.f32.gmra.mrb[0].mxu0 %v5340
      %v5514 = vpop.f32.mrb[0].mxu0
      %v5515 = vadd.f32 0.0, %v5514
      %v5516 = vpop.f32.mrb[0].mxu0
      %5517 = vmatprep.mubr.f32.mxu0 %v5373
      %5518 = vmatmul.mubr.f32.gmra.mrb[0].mxu0 %v5341
      %v5519 = vpop.f32.mrb[0].mxu0
      %v5520 = vadd.f32 0.0, %v5519
      %v5521 = vpop.f32.mrb[0].mxu0
      %5522 = vmatprep.mubr.f32.mxu0 %v5374
      %5523 = vmatmul.mubr.f32.gmra.mrb[0].mxu0 %v5342
      %v5524 = vpop.f32.mrb[0].mxu0
      %v5525 = vadd.f32 0.0, %v5524
      %v5526 = vpop.f32.mrb[0].mxu0
      %5527 = vmatprep.mubr.f32.mxu0 %v5375
      %5528 = vmatmul.mubr.f32.gmra.mrb[0].mxu0 %v5343
      %v5529 = vpop.f32.mrb[0].mxu0
      %v5530 = vadd.f32 0.0, %v5529
      %v5531 = vpop.f32.mrb[0].mxu0
      %5532 = vmatprep.mubr.f32.mxu0 %v5376
      %5533 = vmatmul.mubr.f32.gmra.mrb[0].mxu0 %v5344
      %v5534 = vpop.f32.mrb[0].mxu0
      %v5535 = vadd.f32 0.0, %v5534
      %v5536 = vpop.f32.mrb[0].mxu0
      %5537 = vmatprep.mubr.f32.mxu0 %v5377
      %5538 = vmatmul.mubr.f32.gmra.mrb[0].mxu0 %v5345
      %v5539 = vpop.f32.mrb[0].mxu0
      %v5540 = vadd.f32 0.0, %v5539
      %v5541 = vpop.f32.mrb[0].mxu0
      %5542 = vmatprep.mubr.f32.mxu0 %v5378
      %5543 = vmatmul.mubr.f32.gmra.mrb[0].mxu0 %v5346
      %v5544 = vpop.f32.mrb[0].mxu0
      %v5545 = vadd.f32 0.0, %v5544
      %v5546 = vpop.f32.mrb[0].mxu0
      %5547 = vmatprep.mubr.f32.mxu0 %v5379
      %5548 = vmatmul.mubr.f32.gmra.mrb[0].mxu0 %v5347
      %v5549 = vpop.f32.mrb[0].mxu0
      %v5550 = vadd.f32 0.0, %v5549
      %v5551 = vpop.f32.mrb[0].mxu0
      %5552 = vmatprep.mubr.f32.mxu0 %v5380
      %5553 = vmatmul.mubr.f32.gmra.mrb[0].mxu0 %v5348
      %v5554 = vpop.f32.mrb[0].mxu0
      %v5555 = vadd.f32 0.0, %v5554
      %v5556 = vpop.f32.mrb[0].mxu0
      %5557 = vmatprep.mubr.f32.mxu0 %v5381
      %5558 = vmatmul.mubr.f32.gmra.mrb[0].mxu0 %v5349
      %v5559 = vpop.f32.mrb[0].mxu0
      %v5560 = vadd.f32 0.0, %v5559
      %v5561 = vpop.f32.mrb[0].mxu0
      %5562 = vmatprep.mubr.f32.mxu0 %v5382
      %5563 = vmatmul.mubr.f32.gmra.mrb[0].mxu0 %v5350
      %v5564 = vpop.f32.mrb[0].mxu0
      %v5565 = vadd.f32 0.0, %v5564
      %v5566 = vpop.f32.mrb[0].mxu0
      %5567 = vmatprep.mubr.f32.mxu0 %v5383
      %5568 = vmatmul.mubr.f32.gmra.mrb[0].mxu0 %v5351
      %v5569 = vpop.f32.mrb[0].mxu0
      %v5570 = vadd.f32 0.0, %v5569
      %v5571 = vpop.f32.mrb[0].mxu0
      %5572 = vmatprep.mubr.f32.mxu0 %v5384
      %5573 = vmatmul.mubr.f32.gmra.mrb[0].mxu0 %v5352
      %v5574 = vpop.f32.mrb[0].mxu0
      %v5575 = vadd.f32 0.0, %v5574
      %v5576 = vpop.f32.mrb[0].mxu0
      %5577 = vmatprep.mubr.f32.mxu0 %v5385
      %5578 = vmatmul.mubr.f32.gmra.mrb[0].mxu0 %v5353
      %v5579 = vpop.f32.mrb[0].mxu0
      %v5580 = vadd.f32 0.0, %v5579
      %v5581 = vpop.f32.mrb[0].mxu0
      %5582 = vmatprep.mubr.f32.mxu0 %v5386
      %5583 = vmatmul.mubr.f32.gmra.mrb[0].mxu0 %v5354
      %v5584 = vpop.f32.mrb[0].mxu0
      %v5585 = vadd.f32 0.0, %v5584
      %v5586 = vpop.f32.mrb[0].mxu0
      %5587 = vmatprep.mubr.f32.mxu0 %v5387
      %5588 = vmatmul.mubr.f32.gmra.mrb[0].mxu0 %v5355
      %v5589 = vpop.f32.mrb[0].mxu0
      %v5590 = vadd.f32 0.0, %v5589
      %v5591 = vpop.f32.mrb[0].mxu0
      %5592 = vmatprep.mubr.f32.mxu0 %v5388
      %5593 = vmatmul.mubr.f32.gmra.mrb[0].mxu0 %v5356
      %v5594 = vpop.f32.mrb[0].mxu0
      %v5595 = vadd.f32 0.0, %v5594
      %v5596 = vpop.f32.mrb[0].mxu0
      %5597 = vmatprep.mubr.f32.mxu0 %v5389
      %5598 = vmatmul.mubr.f32.gmra.mrb[0].mxu0 %v5357
      %v5599 = vpop.f32.mrb[0].mxu0
      %v5600 = vadd.f32 0.0, %v5599
      %v5601 = vpop.f32.mrb[0].mxu0
      %5602 = vmatprep.mubr.f32.mxu0 %v5390
      %5603 = vmatmul.mubr.f32.gmra.mrb[0].mxu0 %v5358
      %v5604 = vpop.f32.mrb[0].mxu0
      %v5605 = vadd.f32 0.0, %v5604
      %v5606 = vpop.f32.mrb[0].mxu0
      %5607 = vmatprep.mubr.f32.mxu0 %v5391
      %5608 = vmatmul.mubr.f32.gmra.mrb[0].mxu0 %v5359
      %v5609 = vpop.f32.mrb[0].mxu0
      %v5610 = vadd.f32 0.0, %v5609
      %v5611 = vpop.f32.mrb[0].mxu0
      %5612 = vmatprep.mubr.f32.mxu0 %v5392
      %5613 = vmatmul.mubr.f32.gmra.mrb[0].mxu0 %v5360
      %v5614 = vpop.f32.mrb[0].mxu0
      %v5615 = vadd.f32 0.0, %v5614
      %v5616 = vpop.f32.mrb[0].mxu0
      %5617 = vdwg.mxu0
      %v5618 = vld [vmem:[%s14] sm:$0xff]
      %v5619 = vld [vmem:[%s14 + $0x8] sm:$0xff]
      %v5620 = vld [vmem:[%s14 + $0x10] sm:$0xff]
      %v5621 = vld [vmem:[%s14 + $0x18] sm:$0xff]
      %v5622 = vld [vmem:[%s15] sm:$0x1]
      %v5624 = vlaneseq
      %v5625 = vshrl.u32 %v5624, 7
      %v5626 = vsub.s32 0, %v5625
      %v5627 = vrot.slane %v5622, %v5626
      %v5630 = vsel %vm1746, %v5460, 0
      %v5633 = vsel %vm1746, %v5465, 0
      %v5636 = vsel %vm1746, %v5470, 0
      %v5639 = vsel %vm1746, %v5475, 0
      %v5642 = vsel %vm1746, %v5480, 0
      %v5645 = vsel %vm1746, %v5485, 0
      %v5648 = vsel %vm1746, %v5490, 0
      %v5651 = vsel %vm1746, %v5495, 0
      %v5654 = vsel %vm1746, %v5500, 0
      %v5657 = vsel %vm1746, %v5505, 0
      %v5660 = vsel %vm1746, %v5510, 0
      %v5663 = vsel %vm1746, %v5515, 0
      %v5666 = vsel %vm1746, %v5520, 0
      %v5669 = vsel %vm1746, %v5525, 0
      %v5672 = vsel %vm1746, %v5530, 0
      %v5675 = vsel %vm1746, %v5535, 0
      %v5678 = vsel %vm1746, %v5540, 0
      %v5681 = vsel %vm1746, %v5545, 0
      %v5684 = vsel %vm1746, %v5550, 0
      %v5687 = vsel %vm1746, %v5555, 0
      %v5690 = vsel %vm1746, %v5560, 0
      %v5693 = vsel %vm1746, %v5565, 0
      %v5696 = vsel %vm1746, %v5570, 0
      %v5699 = vsel %vm1746, %v5575, 0
      %v5702 = vsel %vm1746, %v5580, 0
      %v5705 = vsel %vm1746, %v5585, 0
      %v5708 = vsel %vm1746, %v5590, 0
      %v5711 = vsel %vm1746, %v5595, 0
      %v5714 = vsel %vm1746, %v5600, 0
      %v5717 = vsel %vm1746, %v5605, 0
      %v5720 = vsel %vm1746, %v5610, 0
      %v5723 = vsel %vm1746, %v5615, 0
      %5725 = vmatprep.subr.mxu0 0.0
      %5726 = vmatpush1.msra.mxu0 %v5618
      %5727 = vmatprep.subr.mxu0 0.0
      %5728 = vmatpush1.msra.mxu0 %v5619
      %5729 = vmatprep.subr.mxu0 0.0
      %5730 = vmatpush1.msra.mxu0 %v5620
      %5731 = vmatprep.subr.mxu0 0.0
      %5732 = vmatpush1.msra.mxu0 %v5621
      %5733 = vmatprep.subr.mxu0 0.0
      %5734 = vmatpush1.msra.mxu0 0.0
      %5735 = vmatprep.subr.mxu0 0.0
      %5736 = vmatpush1.msra.mxu0 0.0
      %5737 = vmatprep.subr.mxu0 0.0
      %5738 = vmatpush1.msra.mxu0 0.0
      %5739 = vmatprep.subr.mxu0 0.0
      %5740 = vmatpush1.msra.mxu0 0.0
      %5741 = vmatprep.subr.mxu0 0.0
      %5742 = vmatpush1.msra.mxu0 0.0
      %5743 = vmatprep.subr.mxu0 0.0
      %5744 = vmatpush1.msra.mxu0 0.0
      %5745 = vmatprep.subr.mxu0 0.0
      %5746 = vmatpush1.msra.mxu0 0.0
      %5747 = vmatprep.subr.mxu0 0.0
      %5748 = vmatpush1.msra.mxu0 0.0
      %5749 = vmatprep.subr.mxu0 0.0
      %5750 = vmatpush1.msra.mxu0 0.0
      %5751 = vmatprep.subr.mxu0 0.0
      %5752 = vmatpush1.msra.mxu0 0.0
      %5753 = vmatprep.subr.mxu0 0.0
      %5754 = vmatpush1.msra.mxu0 0.0
      %5755 = vmatprep.subr.mxu0 0.0
      %5756 = vmatpush1.msra.mxu0 0.0
      %5757 = vmatprep.subr.mxu0 0.0
      %5758 = vmatpush1.msra.mxu0 0.0
      %5759 = vmatprep.subr.mxu0 0.0
      %5760 = vmatpush1.msra.mxu0 0.0
      %5761 = vmatprep.subr.mxu0 0.0
      %5762 = vmatpush1.msra.mxu0 0.0
      %5763 = vmatprep.subr.mxu0 0.0
      %5764 = vmatpush1.msra.mxu0 0.0
      %5765 = vmatprep.subr.mxu0 0.0
      %5766 = vmatpush1.msra.mxu0 0.0
      %5767 = vmatprep.subr.mxu0 0.0
      %5768 = vmatpush1.msra.mxu0 0.0
      %5769 = vmatprep.subr.mxu0 0.0
      %5770 = vmatpush1.msra.mxu0 0.0
      %5771 = vmatprep.subr.mxu0 0.0
      %5772 = vmatpush1.msra.mxu0 0.0
      %5773 = vmatprep.subr.mxu0 0.0
      %5774 = vmatpush1.msra.mxu0 0.0
      %5775 = vmatprep.subr.mxu0 0.0
      %5776 = vmatpush1.msra.mxu0 0.0
      %5777 = vmatprep.subr.mxu0 0.0
      %5778 = vmatpush1.msra.mxu0 0.0
      %5779 = vmatprep.subr.mxu0 0.0
      %5780 = vmatpush1.msra.mxu0 0.0
      %5781 = vmatprep.subr.mxu0 0.0
      %5782 = vmatpush1.msra.mxu0 0.0
      %5783 = vmatprep.subr.mxu0 0.0
      %5784 = vmatpush1.msra.mxu0 0.0
      %5785 = vmatprep.subr.mxu0 0.0
      %5786 = vmatpush1.msra.mxu0 0.0
      %5787 = vmatprep.subr.mxu0 0.0
      %5788 = vmatpush1.msra.mxu0 0.0
      %5789 = vmatprep.mubr.f32.mxu0 0.0
      %5790 = vmatmul.mubr.f32.gmra.mrb[0].mxu0 %v5630
      %v5791 = vpop.f32.mrb[0].mxu0
      %v5792 = vadd.f32 %v5627, %v5791
      %v5793 = vpop.f32.mrb[0].mxu0
      %5794 = vmatprep.mubr.f32.mxu0 0.0
      %5795 = vmatmul.mubr.f32.gmra.mrb[0].mxu0 %v5633
      %v5796 = vpop.f32.mrb[0].mxu0
      %v5797 = vadd.f32 %v5627, %v5796
      %v5798 = vpop.f32.mrb[0].mxu0
      %5799 = vmatprep.mubr.f32.mxu0 0.0
      %5800 = vmatmul.mubr.f32.gmra.mrb[0].mxu0 %v5636
      %v5801 = vpop.f32.mrb[0].mxu0
      %v5802 = vadd.f32 %v5627, %v5801
      %v5803 = vpop.f32.mrb[0].mxu0
      %5804 = vmatprep.mubr.f32.mxu0 0.0
      %5805 = vmatmul.mubr.f32.gmra.mrb[0].mxu0 %v5639
      %v5806 = vpop.f32.mrb[0].mxu0
      %v5807 = vadd.f32 %v5627, %v5806
      %v5808 = vpop.f32.mrb[0].mxu0
      %5809 = vmatprep.mubr.f32.mxu0 0.0
      %5810 = vmatmul.mubr.f32.gmra.mrb[0].mxu0 %v5642
      %v5811 = vpop.f32.mrb[0].mxu0
      %v5812 = vadd.f32 %v5627, %v5811
      %v5813 = vpop.f32.mrb[0].mxu0
      %5814 = vmatprep.mubr.f32.mxu0 0.0
      %5815 = vmatmul.mubr.f32.gmra.mrb[0].mxu0 %v5645
      %v5816 = vpop.f32.mrb[0].mxu0
      %v5817 = vadd.f32 %v5627, %v5816
      %v5818 = vpop.f32.mrb[0].mxu0
      %5819 = vmatprep.mubr.f32.mxu0 0.0
      %5820 = vmatmul.mubr.f32.gmra.mrb[0].mxu0 %v5648
      %v5821 = vpop.f32.mrb[0].mxu0
      %v5822 = vadd.f32 %v5627, %v5821
      %v5823 = vpop.f32.mrb[0].mxu0
      %5824 = vmatprep.mubr.f32.mxu0 0.0
      %5825 = vmatmul.mubr.f32.gmra.mrb[0].mxu0 %v5651
      %v5826 = vpop.f32.mrb[0].mxu0
      %v5827 = vadd.f32 %v5627, %v5826
      %v5828 = vpop.f32.mrb[0].mxu0
      %5829 = vmatprep.mubr.f32.mxu0 0.0
      %5830 = vmatmul.mubr.f32.gmra.mrb[0].mxu0 %v5654
      %v5831 = vpop.f32.mrb[0].mxu0
      %v5832 = vadd.f32 %v5627, %v5831
      %v5833 = vpop.f32.mrb[0].mxu0
      %5834 = vmatprep.mubr.f32.mxu0 0.0
      %5835 = vmatmul.mubr.f32.gmra.mrb[0].mxu0 %v5657
      %v5836 = vpop.f32.mrb[0].mxu0
      %v5837 = vadd.f32 %v5627, %v5836
      %v5838 = vpop.f32.mrb[0].mxu0
      %5839 = vmatprep.mubr.f32.mxu0 0.0
      %5840 = vmatmul.mubr.f32.gmra.mrb[0].mxu0 %v5660
      %v5841 = vpop.f32.mrb[0].mxu0
      %v5842 = vadd.f32 %v5627, %v5841
      %v5843 = vpop.f32.mrb[0].mxu0
      %5844 = vmatprep.mubr.f32.mxu0 0.0
      %5845 = vmatmul.mubr.f32.gmra.mrb[0].mxu0 %v5663
      %v5846 = vpop.f32.mrb[0].mxu0
      %v5847 = vadd.f32 %v5627, %v5846
      %v5848 = vpop.f32.mrb[0].mxu0
      %5849 = vmatprep.mubr.f32.mxu0 0.0
      %5850 = vmatmul.mubr.f32.gmra.mrb[0].mxu0 %v5666
      %v5851 = vpop.f32.mrb[0].mxu0
      %v5852 = vadd.f32 %v5627, %v5851
      %v5853 = vpop.f32.mrb[0].mxu0
      %5854 = vmatprep.mubr.f32.mxu0 0.0
      %5855 = vmatmul.mubr.f32.gmra.mrb[0].mxu0 %v5669
      %v5856 = vpop.f32.mrb[0].mxu0
      %v5857 = vadd.f32 %v5627, %v5856
      %v5858 = vpop.f32.mrb[0].mxu0
      %5859 = vmatprep.mubr.f32.mxu0 0.0
      %5860 = vmatmul.mubr.f32.gmra.mrb[0].mxu0 %v5672
      %v5861 = vpop.f32.mrb[0].mxu0
      %v5862 = vadd.f32 %v5627, %v5861
      %v5863 = vpop.f32.mrb[0].mxu0
      %5864 = vmatprep.mubr.f32.mxu0 0.0
      %5865 = vmatmul.mubr.f32.gmra.mrb[0].mxu0 %v5675
      %v5866 = vpop.f32.mrb[0].mxu0
      %v5867 = vadd.f32 %v5627, %v5866
      %v5868 = vpop.f32.mrb[0].mxu0
      %5869 = vmatprep.mubr.f32.mxu0 0.0
      %5870 = vmatmul.mubr.f32.gmra.mrb[0].mxu0 %v5678
      %v5871 = vpop.f32.mrb[0].mxu0
      %v5872 = vadd.f32 %v5627, %v5871
      %v5873 = vpop.f32.mrb[0].mxu0
      %5874 = vmatprep.mubr.f32.mxu0 0.0
      %5875 = vmatmul.mubr.f32.gmra.mrb[0].mxu0 %v5681
      %v5876 = vpop.f32.mrb[0].mxu0
      %v5877 = vadd.f32 %v5627, %v5876
      %v5878 = vpop.f32.mrb[0].mxu0
      %5879 = vmatprep.mubr.f32.mxu0 0.0
      %5880 = vmatmul.mubr.f32.gmra.mrb[0].mxu0 %v5684
      %v5881 = vpop.f32.mrb[0].mxu0
      %v5882 = vadd.f32 %v5627, %v5881
      %v5883 = vpop.f32.mrb[0].mxu0
      %5884 = vmatprep.mubr.f32.mxu0 0.0
      %5885 = vmatmul.mubr.f32.gmra.mrb[0].mxu0 %v5687
      %v5886 = vpop.f32.mrb[0].mxu0
      %v5887 = vadd.f32 %v5627, %v5886
      %v5888 = vpop.f32.mrb[0].mxu0
      %5889 = vmatprep.mubr.f32.mxu0 0.0
      %5890 = vmatmul.mubr.f32.gmra.mrb[0].mxu0 %v5690
      %v5891 = vpop.f32.mrb[0].mxu0
      %v5892 = vadd.f32 %v5627, %v5891
      %v5893 = vpop.f32.mrb[0].mxu0
      %5894 = vmatprep.mubr.f32.mxu0 0.0
      %5895 = vmatmul.mubr.f32.gmra.mrb[0].mxu0 %v5693
      %v5896 = vpop.f32.mrb[0].mxu0
      %v5897 = vadd.f32 %v5627, %v5896
      %v5898 = vpop.f32.mrb[0].mxu0
      %5899 = vmatprep.mubr.f32.mxu0 0.0
      %5900 = vmatmul.mubr.f32.gmra.mrb[0].mxu0 %v5696
      %v5901 = vpop.f32.mrb[0].mxu0
      %v5902 = vadd.f32 %v5627, %v5901
      %v5903 = vpop.f32.mrb[0].mxu0
      %5904 = vmatprep.mubr.f32.mxu0 0.0
      %5905 = vmatmul.mubr.f32.gmra.mrb[0].mxu0 %v5699
      %v5906 = vpop.f32.mrb[0].mxu0
      %v5907 = vadd.f32 %v5627, %v5906
      %v5908 = vpop.f32.mrb[0].mxu0
      %5909 = vmatprep.mubr.f32.mxu0 0.0
      %5910 = vmatmul.mubr.f32.gmra.mrb[0].mxu0 %v5702
      %v5911 = vpop.f32.mrb[0].mxu0
      %v5912 = vadd.f32 %v5627, %v5911
      %v5913 = vpop.f32.mrb[0].mxu0
      %5914 = vmatprep.mubr.f32.mxu0 0.0
      %5915 = vmatmul.mubr.f32.gmra.mrb[0].mxu0 %v5705
      %v5916 = vpop.f32.mrb[0].mxu0
      %v5917 = vadd.f32 %v5627, %v5916
      %v5918 = vpop.f32.mrb[0].mxu0
      %5919 = vmatprep.mubr.f32.mxu0 0.0
      %5920 = vmatmul.mubr.f32.gmra.mrb[0].mxu0 %v5708
      %v5921 = vpop.f32.mrb[0].mxu0
      %v5922 = vadd.f32 %v5627, %v5921
      %v5923 = vpop.f32.mrb[0].mxu0
      %5924 = vmatprep.mubr.f32.mxu0 0.0
      %5925 = vmatmul.mubr.f32.gmra.mrb[0].mxu0 %v5711
      %v5926 = vpop.f32.mrb[0].mxu0
      %v5927 = vadd.f32 %v5627, %v5926
      %v5928 = vpop.f32.mrb[0].mxu0
      %5929 = vmatprep.mubr.f32.mxu0 0.0
      %5930 = vmatmul.mubr.f32.gmra.mrb[0].mxu0 %v5714
      %v5931 = vpop.f32.mrb[0].mxu0
      %v5932 = vadd.f32 %v5627, %v5931
      %v5933 = vpop.f32.mrb[0].mxu0
      %5934 = vmatprep.mubr.f32.mxu0 0.0
      %5935 = vmatmul.mubr.f32.gmra.mrb[0].mxu0 %v5717
      %v5936 = vpop.f32.mrb[0].mxu0
      %v5937 = vadd.f32 %v5627, %v5936
      %v5938 = vpop.f32.mrb[0].mxu0
      %5939 = vmatprep.mubr.f32.mxu0 0.0
      %5940 = vmatmul.mubr.f32.gmra.mrb[0].mxu0 %v5720
      %v5941 = vpop.f32.mrb[0].mxu0
      %v5942 = vadd.f32 %v5627, %v5941
      %v5943 = vpop.f32.mrb[0].mxu0
      %5944 = vmatprep.mubr.f32.mxu0 0.0
      %5945 = vmatmul.mubr.f32.gmra.mrb[0].mxu0 %v5723
      %v5946 = vpop.f32.mrb[0].mxu0
      %v5947 = vadd.f32 %v5627, %v5946
      %v5948 = vpop.f32.mrb[0].mxu0
      %5949 = vdwg.mxu0
      %v5950 = vadd.f32 %v539, %v5792
      %v5951 = vadd.f32 %v540, %v5797
      %v5952 = vadd.f32 %v541, %v5802
      %v5953 = vadd.f32 %v542, %v5807
      %v5954 = vadd.f32 %v543, %v5812
      %v5955 = vadd.f32 %v544, %v5817
      %v5956 = vadd.f32 %v545, %v5822
      %v5957 = vadd.f32 %v546, %v5827
      %v5958 = vadd.f32 %v547, %v5832
      %v5959 = vadd.f32 %v548, %v5837
      %v5960 = vadd.f32 %v549, %v5842
      %v5961 = vadd.f32 %v550, %v5847
      %v5962 = vadd.f32 %v551, %v5852
      %v5963 = vadd.f32 %v552, %v5857
      %v5964 = vadd.f32 %v553, %v5862
      %v5965 = vadd.f32 %v554, %v5867
      %v5966 = vadd.f32 %v555, %v5872
      %v5967 = vadd.f32 %v556, %v5877
      %v5968 = vadd.f32 %v557, %v5882
      %v5969 = vadd.f32 %v558, %v5887
      %v5970 = vadd.f32 %v559, %v5892
      %v5971 = vadd.f32 %v560, %v5897
      %v5972 = vadd.f32 %v561, %v5902
      %v5973 = vadd.f32 %v562, %v5907
      %v5974 = vadd.f32 %v563, %v5912
      %v5975 = vadd.f32 %v564, %v5917
      %v5976 = vadd.f32 %v565, %v5922
      %v5977 = vadd.f32 %v566, %v5927
      %v5978 = vadd.f32 %v567, %v5932
      %v5979 = vadd.f32 %v568, %v5937
      %v5980 = vadd.f32 %v569, %v5942
      %v5981 = vadd.f32 %v570, %v5947
      %5982 = vst.msk [vmem:[%s538] sm:$0xff] %vm1746, %v5950
      %5983 = vst.msk [vmem:[%s538 + $0x8] sm:$0xff] %vm1746, %v5951
      %5984 = vst.msk [vmem:[%s538 + $0x10] sm:$0xff] %vm1746, %v5952
      %5985 = vst.msk [vmem:[%s538 + $0x18] sm:$0xff] %vm1746, %v5953
      %5986 = vst.msk [vmem:[%s538 + $0x20] sm:$0xff] %vm1746, %v5954
      %5987 = vst.msk [vmem:[%s538 + $0x28] sm:$0xff] %vm1746, %v5955
      %5988 = vst.msk [vmem:[%s538 + $0x30] sm:$0xff] %vm1746, %v5956
      %5989 = vst.msk [vmem:[%s538 + $0x38] sm:$0xff] %vm1746, %v5957
      %5990 = vst.msk [vmem:[%s538 + $0x40] sm:$0xff] %vm1746, %v5958
      %5991 = vst.msk [vmem:[%s538 + $0x48] sm:$0xff] %vm1746, %v5959
      %5992 = vst.msk [vmem:[%s538 + $0x50] sm:$0xff] %vm1746, %v5960
      %5993 = vst.msk [vmem:[%s538 + $0x58] sm:$0xff] %vm1746, %v5961
      %5994 = vst.msk [vmem:[%s538 + $0x60] sm:$0xff] %vm1746, %v5962
      %5995 = vst.msk [vmem:[%s538 + $0x68] sm:$0xff] %vm1746, %v5963
      %5996 = vst.msk [vmem:[%s538 + $0x70] sm:$0xff] %vm1746, %v5964
      %5997 = vst.msk [vmem:[%s538 + $0x78] sm:$0xff] %vm1746, %v5965
      %5998 = vst.msk [vmem:[%s538 + $0x80] sm:$0xff] %vm1746, %v5966
      %5999 = vst.msk [vmem:[%s538 + $0x88] sm:$0xff] %vm1746, %v5967
      %6000 = vst.msk [vmem:[%s538 + $0x90] sm:$0xff] %vm1746, %v5968
      %6001 = vst.msk [vmem:[%s538 + $0x98] sm:$0xff] %vm1746, %v5969
      %6002 = vst.msk [vmem:[%s538 + $0xa0] sm:$0xff] %vm1746, %v5970
      %6003 = vst.msk [vmem:[%s538 + $0xa8] sm:$0xff] %vm1746, %v5971
      %6004 = vst.msk [vmem:[%s538 + $0xb0] sm:$0xff] %vm1746, %v5972
      %6005 = vst.msk [vmem:[%s538 + $0xb8] sm:$0xff] %vm1746, %v5973
      %6006 = vst.msk [vmem:[%s538 + $0xc0] sm:$0xff] %vm1746, %v5974
      %6007 = vst.msk [vmem:[%s538 + $0xc8] sm:$0xff] %vm1746, %v5975
      %6008 = vst.msk [vmem:[%s538 + $0xd0] sm:$0xff] %vm1746, %v5976
      %6009 = vst.msk [vmem:[%s538 + $0xd8] sm:$0xff] %vm1746, %v5977
      %6010 = vst.msk [vmem:[%s538 + $0xe0] sm:$0xff] %vm1746, %v5978
      %6011 = vst.msk [vmem:[%s538 + $0xe8] sm:$0xff] %vm1746, %v5979
      %6012 = vst.msk [vmem:[%s538 + $0xf0] sm:$0xff] %vm1746, %v5980
      %6013 = vst.msk [vmem:[%s538 + $0xf8] sm:$0xff] %vm1746, %v5981
      %p6014 = scmp.lt.s32.totalorder %s27, 1
      %s6015 = scalar_select %p6014, %s27, 1
      %s6016 = smul.addr %s6015, 32
      %s6017 = smul.addr %s6016, 8
      %s6018 = scalar_lea.vmem %s16, %s6017
      // Predicated region
      $region85: #{transformer_block_forward.2} parent=83 // pred_check
        %p6019 = pneg %p391
      $region86: #{transformer_block_forward.2} parent=83 // pred_check_branch
        %6021 = sbr.rel (%p6019) target = $region88
      $region87: #{transformer_block_forward.2} parent=83 // pred_region
        _
      $region88: #{transformer_block_forward.2} parent=83 // pred_fallthru
        _
    $region84: #{transformer_block_forward.2} parent=5 // pred_fallthru
      _
    %p6022 = scmp.le.s32.totalorder 2, %s22
    // Predicated region
    $region89: #{transformer_block_forward.2} parent=5 // pred_check
      %p6023 = pneg %p6022
    $region90: #{transformer_block_forward.2} parent=5 // pred_check_branch
      %6025 = sbr.rel (%p6023) target = $region92
    $region91: #{transformer_block_forward.2} parent=5 // pred_region
      %s6026 = ssub.s32 %s22, 2
      // Predicated region
      $region93: #{transformer_block_forward.2} parent=91 // pred_check
        %p6027 = pneg %p397
      $region94: #{transformer_block_forward.2} parent=91 // pred_check_branch
        %6029 = sbr.rel (%p6027) target = $region96
      $region95: #{transformer_block_forward.2} parent=91 // pred_region
        %p6030 = scmp.lt.s32.totalorder %s28, 1
        %s6031 = scalar_select %p6030, %s28, 1
        %s6032 = smul.addr %s6031, 32
        %s6033 = smul.addr %s6032, 8
        %s6034 = scalar_lea.vmem %s16, %s6033
      $region96: #{transformer_block_forward.2} parent=91 // pred_fallthru
        _
    $region92: #{transformer_block_forward.2} parent=5 // pred_fallthru
      _
  $region6: #{transformer_block_forward.2} parent=0 // loop_footer
    %s26 = sadd.s32 1, %s22
  $region7: #{transformer_block_forward.2} parent=0 // loop_footer_branch
    %21 = sbr.rel target = $region3
  $region8: #{transformer_block_forward.2} parent=0 // loop_exit
    _

</llo_original>
